<compile_context>
chip_gen: v7x
topology: tpu7x:2x2x1
jax: 0.10.0
libtpu: 0.0.40
codegen_flags: <defaults>
</compile_context>

<pallas_src>
import functools

import jax
import jax.numpy as jnp
from jax.experimental import pallas as pl
from jax.experimental.pallas import tpu as pltpu


# --------------------------------------------------------------------------
# Fused decoder kernel
# --------------------------------------------------------------------------
def make_decoder_kernel(T, V, K, kt, C1, C2, C3P):
    pad = (kt - 1) // 2
    f32 = jnp.float32
    TV = T * V

    def temporal_conv(hpad_ref, wt_ref, bt_ref, cin):
        # ConvTranspose2d((kt,1), stride 1, pad (pad,0)) over the padded scratch.
        cout = wt_ref.shape[-1]
        acc = jnp.zeros((TV, cout), f32)
        for k in range(kt):
            s = 2 * pad - k                                  # t_in = t_out + pad - k
            sh = hpad_ref[s:s + T, :, :cin].reshape(TV, cin)
            acc = acc + jnp.dot(sh, wt_ref[k], preferred_element_type=f32)
        return acc + bt_ref[...]

    def graph_conv(x_rows, ma_ref, wg_ref, bgr_ref):
        # sum_k kron(I_T, A_k^T) @ (x @ wg_k)   (+ folded BN/bias, ReLU)
        cout = wg_ref.shape[-1]
        acc = jnp.zeros((TV, cout), f32)
        for k in range(K):
            y = jnp.dot(x_rows, wg_ref[k], preferred_element_type=f32)   # (TV, Cout)
            acc = acc + jnp.dot(ma_ref[k], y, preferred_element_type=f32)
        return jnp.maximum(acc + bgr_ref[...], 0.0)

    def kernel(zc_ref, wfcn_ref, bfcn_ref, asum_ref, ma_ref,
               wg1_ref, bg1_ref, wt1_ref, bt1_ref,
               wg2_ref, bg2_ref, wt2_ref, bt2_ref, wr2_ref, br2_ref,
               wg3_ref, bg3_ref, wt3_ref, bt3_ref, wr3_ref, br3_ref,
               dsc_ref, dsh_ref,
               o_ref, hpad_ref):
        # Zero the temporal-padding scratch; pad rows stay zero afterwards.
        hpad_ref[...] = jnp.zeros(hpad_ref.shape, f32)

        # fcn: ConvTranspose2d(n_z, 32, 1) applied to the (z, l) row.
        h0 = jnp.dot(zc_ref[...], wfcn_ref[...],
                     preferred_element_type=f32) + bfcn_ref[...]          # (1, C1)

        # ---- layer 1 (32 -> 32, identity residual) -------------------------
        # Input is h0 broadcast over (T, V): the graph conv collapses to a
        # single-row compute + per-node scaling by sum_v A[k, v, w].
        acc1 = jnp.zeros((V, C1), f32)
        for k in range(K):
            yk = jnp.dot(h0, wg1_ref[k], preferred_element_type=f32)      # (1, C1)
            acc1 = acc1 + asum_ref[:, k:k + 1] * yk                       # (V, C1)
        h1 = jnp.maximum(acc1 + bg1_ref[...], 0.0)                        # (V, C1)
        hpad_ref[pad:pad + T, :, :C1] = jnp.broadcast_to(h1[None, :, :], (T, V, C1))
        z1 = temporal_conv(hpad_ref, wt1_ref, bt1_ref, C1)
        x1 = jnp.maximum(z1 + jnp.broadcast_to(h0, (TV, C1)), 0.0)        # (TV, C1)

        # ---- layer 2 (32 -> 64) ---------------------------------------------
        h2 = graph_conv(x1, ma_ref, wg2_ref, bg2_ref)                     # (TV, C2)
        hpad_ref[pad:pad + T, :, :C2] = h2.reshape(T, V, C2)
        z2 = temporal_conv(hpad_ref, wt2_ref, bt2_ref, C2)
        res2 = jnp.dot(x1, wr2_ref[...], preferred_element_type=f32) + br2_ref[...]
        x2 = jnp.maximum(z2 + res2, 0.0)                                  # (TV, C2)

        # ---- layer 3 (64 -> C_in, channel-padded to C3P) --------------------
        h3 = graph_conv(x2, ma_ref, wg3_ref, bg3_ref)                     # (TV, C3P)
        hpad_ref[pad:pad + T, :, :C3P] = h3.reshape(T, V, C3P)
        z3 = temporal_conv(hpad_ref, wt3_ref, bt3_ref, C3P)
        res3 = jnp.dot(x2, wr3_ref[...], preferred_element_type=f32) + br3_ref[...]
        x3 = jnp.maximum(z3 + res3, 0.0)                                  # (TV, C3P)

        # data_bn (folded, per (v, c)), then lane-dense (C3P, T*V) store.
        y = x3 * dsc_ref[...] + dsh_ref[...]
        o_ref[...] = jnp.transpose(y).astype(o_ref.dtype)

    return kernel


# --------------------------------------------------------------------------
# Wrapper
# --------------------------------------------------------------------------
def decoder_forward(z, l, params, *, T, V, c_out):
    N = z.shape[0]
    zc = jnp.concatenate([z, l], axis=1)[:, None, :].astype(jnp.float32)  # (N, 1, n_z)
    n_z = zc.shape[-1]
    K = params["asum"].shape[1]
    kt = params["wt1"].shape[0]
    C1 = params["wg1"].shape[-1]
    C2 = params["wg2"].shape[-1]
    C3P = params["wg3"].shape[-1]
    TV = T * V
    pad = (kt - 1) // 2

    kern = make_decoder_kernel(T, V, K, kt, C1, C2, C3P)

    weight_names = ["wfcn", "bfcn", "asum", "ma",
                    "wg1", "bg1", "wt1", "bt1",
                    "wg2", "bg2", "wt2", "bt2", "wr2", "br2",
                    "wg3", "bg3", "wt3", "bt3", "wr3", "br3",
                    "dsc", "dsh"]
    weights = [params[k] for k in weight_names]

    def const_spec(x):
        nd = x.ndim
        return pl.BlockSpec(x.shape, lambda n, _nd=nd: (0,) * _nd)

    in_specs = [pl.BlockSpec((None, 1, n_z), lambda n: (n, 0, 0))] + \
               [const_spec(w) for w in weights]
    out_spec = pl.BlockSpec((None, C3P, TV), lambda n: (n, 0, 0))

    out = pl.pallas_call(
        kern,
        out_shape=jax.ShapeDtypeStruct((N, C3P, TV), jnp.float32),
        grid=(N,),
        in_specs=in_specs,
        out_specs=out_spec,
        scratch_shapes=[pltpu.VMEM((T + 2 * pad, V, max(C1, C2, C3P)), jnp.float32)],
        compiler_params=pltpu.CompilerParams(dimension_semantics=("parallel",)),
    )(zc, *weights)

    # (N, C3P, T*V) -> (N, C, T, V, M=1); drop the zero-padded channels.
    return out[:, :c_out, :].reshape(N, c_out, T, V)[..., None]


# --------------------------------------------------------------------------
# Parameter construction (deterministic, synthetic) + host-side folding
# --------------------------------------------------------------------------
def bn_affine(key, c, eps=1e-5):
    k1, k2, k3, k4 = jax.random.split(key, 4)
    gamma = 1.0 + 0.1 * jax.random.normal(k1, (c,))
    beta = 0.1 * jax.random.normal(k2, (c,))
    mean = 0.1 * jax.random.normal(k3, (c,))
    var = jax.random.uniform(k4, (c,), minval=0.5, maxval=1.5)
    scale = gamma / jnp.sqrt(var + eps)
    shift = beta - mean * scale
    return scale.astype(jnp.float32), shift.astype(jnp.float32)


def make_raw_layer(key, Cin, Cout, K, kt, identity_residual):
    ks = jax.random.split(key, 8)
    raw = dict(
        wg=(jax.random.normal(ks[0], (K, Cin, Cout)) / jnp.sqrt(Cin)).astype(jnp.float32),
        bg=(0.05 * jax.random.normal(ks[1], (K, Cout))).astype(jnp.float32),
        wt=(jax.random.normal(ks[3], (kt, Cout, Cout)) /
            jnp.sqrt(Cout * kt)).astype(jnp.float32),
        bt=(0.05 * jax.random.normal(ks[4], (Cout,))).astype(jnp.float32),
        identity_residual=identity_residual,
    )
    raw["s1"], raw["b1"] = bn_affine(ks[2], Cout)
    raw["s2"], raw["b2"] = bn_affine(ks[5], Cout)
    if not identity_residual:
        raw["wr"] = (jax.random.normal(ks[6], (Cin, Cout)) / jnp.sqrt(Cin)).astype(jnp.float32)
        raw["br"] = (0.05 * jax.random.normal(ks[7], (Cout,))).astype(jnp.float32)
        raw["sr"], raw["shr"] = bn_affine(jax.random.fold_in(key, 99), Cout)
    return raw


def fold_layer(raw, A, pad_cout=None):
    """Fold inference-mode BatchNorms into the conv weights (exact algebra)."""
    s1, b1, s2, b2 = raw["s1"], raw["b1"], raw["s2"], raw["b2"]
    wg_f = raw["wg"] * s1[None, None, :]
    asum = jnp.sum(A, axis=1).T                                   # (V, K)
    bias_g = asum @ (raw["bg"] * s1[None, :]) + b1[None, :]       # (V, Cout)
    wt_f = raw["wt"] * s2[None, None, :]
    bt_f = (raw["bt"] * s2 + b2)[None, :]
    out = dict(wg=wg_f, bias_g=bias_g, wt=wt_f, bt=bt_f)
    if not raw["identity_residual"]:
        out["wr"] = raw["wr"] * raw["sr"][None, :]
        out["br"] = (raw["br"] * raw["sr"] + raw["shr"])[None, :]
    cout = raw["wg"].shape[-1]
    if pad_cout is not None and pad_cout > cout:
        p = pad_cout - cout
        out["wg"] = jnp.pad(out["wg"], ((0, 0), (0, 0), (0, p)))
        out["bias_g"] = jnp.pad(out["bias_g"], ((0, 0), (0, p)))
        out["wt"] = jnp.pad(out["wt"], ((0, 0), (0, p), (0, p)))
        out["bt"] = jnp.pad(out["bt"], ((0, 0), (0, p)))
        out["wr"] = jnp.pad(out["wr"], ((0, 0), (0, p)))
        out["br"] = jnp.pad(out["br"], ((0, 0), (0, p)))
    return out


def build_params(key, T, V, K, kt, C_in, n_z):
    ks = jax.random.split(key, 8)

    # synthetic graph adjacency A: (K, V, V), row-normalized.
    A = jax.random.uniform(ks[0], (K, V, V), minval=0.0, maxval=1.0)
    A = (A / jnp.sum(A, axis=-1, keepdims=True)).astype(jnp.float32)
    aT = jnp.transpose(A, (0, 2, 1))                      # aT[k, w, v] = A[k, v, w]
    asum = jnp.sum(A, axis=1).T.astype(jnp.float32)       # (V, K)
    eyeT = jnp.eye(T, dtype=jnp.float32)
    ma = jnp.stack([jnp.kron(eyeT, aT[k]) for k in range(K)], 0)  # (K, T*V, T*V)

    # fcn: ConvTranspose2d(n_z, 32, kernel_size=1)
    W_fcn = (jax.random.normal(ks[1], (n_z, 32)) / jnp.sqrt(n_z)).astype(jnp.float32)
    b_fcn = (0.05 * jax.random.normal(ks[2], (32,))).astype(jnp.float32)[None, :]

    # data_bn = BatchNorm1d(in_channels * V); channel index = v*C + c
    dbn_s, dbn_b = bn_affine(ks[3], C_in * V)
    dbn_s = dbn_s.reshape(V, C_in)
    dbn_b = dbn_b.reshape(V, C_in)

    raw1 = make_raw_layer(ks[4], 32, 32, K, kt, identity_residual=True)
    raw2 = make_raw_layer(ks[5], 32, 64, K, kt, identity_residual=False)
    raw3 = make_raw_layer(ks[6], 64, C_in, K, kt, identity_residual=False)

    C3P = 8                                  # pad 3 output channels to 8 lanes
    f1 = fold_layer(raw1, A)
    f2 = fold_layer(raw2, A)
    f3 = fold_layer(raw3, A, pad_cout=C3P)

    params = dict(
        wfcn=W_fcn, bfcn=b_fcn, asum=asum, ma=ma,
        # layer 1 keeps the (V, C) bias (broadcast path); layers 2/3 use
        # host-tiled per-row biases so the kernel does plain elementwise adds.
        wg1=f1["wg"], bg1=f1["bias_g"], wt1=f1["wt"], bt1=f1["bt"],
        wg2=f2["wg"], bg2=jnp.tile(f2["bias_g"], (T, 1)),
        wt2=f2["wt"], bt2=f2["bt"], wr2=f2["wr"], br2=f2["br"],
        wg3=f3["wg"], bg3=jnp.tile(f3["bias_g"], (T, 1)),
        wt3=f3["wt"], bt3=f3["bt"], wr3=f3["wr"], br3=f3["br"],
        dsc=jnp.tile(jnp.pad(dbn_s, ((0, 0), (0, C3P - C_in))), (T, 1)),
        dsh=jnp.tile(jnp.pad(dbn_b, ((0, 0), (0, C3P - C_in))), (T, 1)),
    )
    return params


# --------------------------------------------------------------------------
if __name__ == "__main__":
    key = jax.random.PRNGKey(0)
    ks = jax.random.split(key, 3)

    # small shapes consistent with the module
    N, T, V = 2, 8, 16
    K, kt = 3, 5                 # spatial kernel (A.size(0)), temporal kernel (odd)
    z_dim, l_dim = 8, 4
    C_in = 3                     # Decoder `in_channels` (final output channels)

    z = jax.random.normal(ks[0], (N, z_dim), jnp.float32)
    l = jax.random.normal(ks[1], (N, l_dim), jnp.float32)

    params = build_params(ks[2], T, V, K, kt, C_in, n_z=z_dim + l_dim)

    fwd = jax.jit(functools.partial(decoder_forward, T=T, V=V, c_out=C_in))
    out = fwd(z, l, params)
    out = jax.block_until_ready(out)
    assert out.shape == (N, C_in, T, V, 1), out.shape
    assert bool(jnp.all(jnp.isfinite(out)))
    print("KERNEL_OK")
</pallas_src>

<mosaic_0001>
module attributes {stable_mosaic.version = 11 : i64} {
  func.func @kernel(%arg0: i32, %arg1: memref<1x1x12xf32, #tpu.memory_space<vmem>>, %arg2: memref<12x32xf32, #tpu.memory_space<vmem>>, %arg3: memref<1x32xf32, #tpu.memory_space<vmem>>, %arg4: memref<16x3xf32, #tpu.memory_space<vmem>>, %arg5: memref<3x128x128xf32, #tpu.memory_space<vmem>>, %arg6: memref<3x32x32xf32, #tpu.memory_space<vmem>>, %arg7: memref<16x32xf32, #tpu.memory_space<vmem>>, %arg8: memref<5x32x32xf32, #tpu.memory_space<vmem>>, %arg9: memref<1x32xf32, #tpu.memory_space<vmem>>, %arg10: memref<3x32x64xf32, #tpu.memory_space<vmem>>, %arg11: memref<128x64xf32, #tpu.memory_space<vmem>>, %arg12: memref<5x64x64xf32, #tpu.memory_space<vmem>>, %arg13: memref<1x64xf32, #tpu.memory_space<vmem>>, %arg14: memref<32x64xf32, #tpu.memory_space<vmem>>, %arg15: memref<1x64xf32, #tpu.memory_space<vmem>>, %arg16: memref<3x64x8xf32, #tpu.memory_space<vmem>>, %arg17: memref<128x8xf32, #tpu.memory_space<vmem>>, %arg18: memref<5x8x8xf32, #tpu.memory_space<vmem>>, %arg19: memref<1x8xf32, #tpu.memory_space<vmem>>, %arg20: memref<64x8xf32, #tpu.memory_space<vmem>>, %arg21: memref<1x8xf32, #tpu.memory_space<vmem>>, %arg22: memref<128x8xf32, #tpu.memory_space<vmem>>, %arg23: memref<128x8xf32, #tpu.memory_space<vmem>>, %arg24: memref<1x8x128xf32, #tpu.memory_space<vmem>>, %arg25: memref<12x16x64xf32, #tpu.memory_space<vmem>>) attributes {dimension_semantics = [#tpu.dimension_semantics<parallel>], iteration_bounds = array<i64: 2>, scalar_prefetch = 0 : i64, scratch_operands = 1 : i64, tpu.core_type = #tpu.core_type<tc>, window_params = [{transform_indices = @transform_0, window_bounds = array<i64: 1, 1, 12>}, {pipeline_mode = #tpu.pipeline_mode<synchronous>, transform_indices = @transform_1, window_bounds = array<i64: 12, 32>}, {pipeline_mode = #tpu.pipeline_mode<synchronous>, transform_indices = @transform_2, window_bounds = array<i64: 1, 32>}, {pipeline_mode = #tpu.pipeline_mode<synchronous>, transform_indices = @transform_3, window_bounds = array<i64: 16, 3>}, {pipeline_mode = #tpu.pipeline_mode<synchronous>, transform_indices = @transform_4, window_bounds = array<i64: 3, 128, 128>}, {pipeline_mode = #tpu.pipeline_mode<synchronous>, transform_indices = @transform_5, window_bounds = array<i64: 3, 32, 32>}, {pipeline_mode = #tpu.pipeline_mode<synchronous>, transform_indices = @transform_6, window_bounds = array<i64: 16, 32>}, {pipeline_mode = #tpu.pipeline_mode<synchronous>, transform_indices = @transform_7, window_bounds = array<i64: 5, 32, 32>}, {pipeline_mode = #tpu.pipeline_mode<synchronous>, transform_indices = @transform_8, window_bounds = array<i64: 1, 32>}, {pipeline_mode = #tpu.pipeline_mode<synchronous>, transform_indices = @transform_9, window_bounds = array<i64: 3, 32, 64>}, {pipeline_mode = #tpu.pipeline_mode<synchronous>, transform_indices = @transform_10, window_bounds = array<i64: 128, 64>}, {pipeline_mode = #tpu.pipeline_mode<synchronous>, transform_indices = @transform_11, window_bounds = array<i64: 5, 64, 64>}, {pipeline_mode = #tpu.pipeline_mode<synchronous>, transform_indices = @transform_12, window_bounds = array<i64: 1, 64>}, {pipeline_mode = #tpu.pipeline_mode<synchronous>, transform_indices = @transform_13, window_bounds = array<i64: 32, 64>}, {pipeline_mode = #tpu.pipeline_mode<synchronous>, transform_indices = @transform_14, window_bounds = array<i64: 1, 64>}, {pipeline_mode = #tpu.pipeline_mode<synchronous>, transform_indices = @transform_15, window_bounds = array<i64: 3, 64, 8>}, {pipeline_mode = #tpu.pipeline_mode<synchronous>, transform_indices = @transform_16, window_bounds = array<i64: 128, 8>}, {pipeline_mode = #tpu.pipeline_mode<synchronous>, transform_indices = @transform_17, window_bounds = array<i64: 5, 8, 8>}, {pipeline_mode = #tpu.pipeline_mode<synchronous>, transform_indices = @transform_18, window_bounds = array<i64: 1, 8>}, {pipeline_mode = #tpu.pipeline_mode<synchronous>, transform_indices = @transform_19, window_bounds = array<i64: 64, 8>}, {pipeline_mode = #tpu.pipeline_mode<synchronous>, transform_indices = @transform_20, window_bounds = array<i64: 1, 8>}, {pipeline_mode = #tpu.pipeline_mode<synchronous>, transform_indices = @transform_21, window_bounds = array<i64: 128, 8>}, {pipeline_mode = #tpu.pipeline_mode<synchronous>, transform_indices = @transform_22, window_bounds = array<i64: 128, 8>}, {transform_indices = @transform_23, window_bounds = array<i64: 1, 8, 128>}]} {
    %cst = arith.constant 0.000000e+00 : f32
    %0 = vector.broadcast %cst : f32 to vector<12x16x64xf32>
    %c0 = arith.constant 0 : index
    %c0_0 = arith.constant 0 : index
    %c0_1 = arith.constant 0 : index
    %1 = vector.load %arg25[%c0, %c0_0, %c0_1] : memref<12x16x64xf32, #tpu.memory_space<vmem>>, vector<12x16x64xf32>
    tpu.vector_store %arg25[%c0, %c0_0, %c0_1], %0 {strides = array<i32>} : memref<12x16x64xf32, #tpu.memory_space<vmem>>, vector<12x16x64xf32>,
    %c0_2 = arith.constant 0 : index
    %c0_3 = arith.constant 0 : index
    %c0_4 = arith.constant 0 : index
    %2 = vector.load %arg1[%c0_2, %c0_3, %c0_4] : memref<1x1x12xf32, #tpu.memory_space<vmem>>, vector<1x1x12xf32>
    %3 = vector.shape_cast %2 : vector<1x1x12xf32> to vector<1x12xf32>
    %c0_5 = arith.constant 0 : index
    %c0_6 = arith.constant 0 : index
    %4 = vector.load %arg2[%c0_5, %c0_6] : memref<12x32xf32, #tpu.memory_space<vmem>>, vector<12x32xf32>
    %cst_7 = arith.constant dense<0.000000e+00> : vector<1x32xf32>
    %5 = tpu.matmul %3, %4, %cst_7 {dimension_numbers = #tpu.dot_dimension_numbers<[1], [0], [0], [1], [0, 0, 1, 1], [], []>} : vector<1x12xf32>, vector<12x32xf32>, vector<1x32xf32> -> vector<1x32xf32>
    %c0_8 = arith.constant 0 : index
    %c0_9 = arith.constant 0 : index
    %6 = vector.load %arg3[%c0_8, %c0_9] : memref<1x32xf32, #tpu.memory_space<vmem>>, vector<1x32xf32>
    %7 = arith.addf %5, %6 : vector<1x32xf32>
    %cst_10 = arith.constant 0.000000e+00 : f32
    %8 = vector.broadcast %cst_10 : f32 to vector<16x32xf32>
    %c0_11 = arith.constant 0 : index
    %c0_12 = arith.constant 0 : index
    %c0_13 = arith.constant 0 : index
    %9 = vector.load %arg6[%c0_11, %c0_12, %c0_13] : memref<3x32x32xf32, #tpu.memory_space<vmem>>, vector<1x32x32xf32>
    %10 = vector.shape_cast %9 : vector<1x32x32xf32> to vector<32x32xf32>
    %cst_14 = arith.constant dense<0.000000e+00> : vector<1x32xf32>
    %11 = tpu.matmul %7, %10, %cst_14 {dimension_numbers = #tpu.dot_dimension_numbers<[1], [0], [0], [1], [0, 0, 1, 1], [], []>} : vector<1x32xf32>, vector<32x32xf32>, vector<1x32xf32> -> vector<1x32xf32>
    %c0_15 = arith.constant 0 : index
    %c0_16 = arith.constant 0 : index
    %12 = vector.load %arg4[%c0_15, %c0_16] : memref<16x3xf32, #tpu.memory_space<vmem>>, vector<16x1xf32>
    %13 = vector.broadcast %12 : vector<16x1xf32> to vector<16x32xf32>
    %14 = vector.broadcast %11 : vector<1x32xf32> to vector<16x32xf32>
    %15 = arith.mulf %13, %14 : vector<16x32xf32>
    %16 = arith.addf %8, %15 : vector<16x32xf32>
    %c1 = arith.constant 1 : index
    %c0_17 = arith.constant 0 : index
    %c0_18 = arith.constant 0 : index
    %17 = vector.load %arg6[%c1, %c0_17, %c0_18] : memref<3x32x32xf32, #tpu.memory_space<vmem>>, vector<1x32x32xf32>
    %18 = vector.shape_cast %17 : vector<1x32x32xf32> to vector<32x32xf32>
    %cst_19 = arith.constant dense<0.000000e+00> : vector<1x32xf32>
    %19 = tpu.matmul %7, %18, %cst_19 {dimension_numbers = #tpu.dot_dimension_numbers<[1], [0], [0], [1], [0, 0, 1, 1], [], []>} : vector<1x32xf32>, vector<32x32xf32>, vector<1x32xf32> -> vector<1x32xf32>
    %c0_20 = arith.constant 0 : index
    %c1_21 = arith.constant 1 : index
    %20 = vector.load %arg4[%c0_20, %c1_21] : memref<16x3xf32, #tpu.memory_space<vmem>>, vector<16x1xf32>
    %21 = vector.broadcast %20 : vector<16x1xf32> to vector<16x32xf32>
    %22 = vector.broadcast %19 : vector<1x32xf32> to vector<16x32xf32>
    %23 = arith.mulf %21, %22 : vector<16x32xf32>
    %24 = arith.addf %16, %23 : vector<16x32xf32>
    %c2 = arith.constant 2 : index
    %c0_22 = arith.constant 0 : index
    %c0_23 = arith.constant 0 : index
    %25 = vector.load %arg6[%c2, %c0_22, %c0_23] : memref<3x32x32xf32, #tpu.memory_space<vmem>>, vector<1x32x32xf32>
    %26 = vector.shape_cast %25 : vector<1x32x32xf32> to vector<32x32xf32>
    %cst_24 = arith.constant dense<0.000000e+00> : vector<1x32xf32>
    %27 = tpu.matmul %7, %26, %cst_24 {dimension_numbers = #tpu.dot_dimension_numbers<[1], [0], [0], [1], [0, 0, 1, 1], [], []>} : vector<1x32xf32>, vector<32x32xf32>, vector<1x32xf32> -> vector<1x32xf32>
    %c0_25 = arith.constant 0 : index
    %c2_26 = arith.constant 2 : index
    %28 = vector.load %arg4[%c0_25, %c2_26] : memref<16x3xf32, #tpu.memory_space<vmem>>, vector<16x1xf32>
    %29 = vector.broadcast %28 : vector<16x1xf32> to vector<16x32xf32>
    %30 = vector.broadcast %27 : vector<1x32xf32> to vector<16x32xf32>
    %31 = arith.mulf %29, %30 : vector<16x32xf32>
    %32 = arith.addf %24, %31 : vector<16x32xf32>
    %c0_27 = arith.constant 0 : index
    %c0_28 = arith.constant 0 : index
    %33 = vector.load %arg7[%c0_27, %c0_28] : memref<16x32xf32, #tpu.memory_space<vmem>>, vector<16x32xf32>
    %34 = arith.addf %32, %33 : vector<16x32xf32>
    %cst_29 = arith.constant 0.000000e+00 : f32
    %35 = vector.broadcast %cst_29 : f32 to vector<16x32xf32>
    %36 = arith.maximumf %34, %35 : vector<16x32xf32>
    %37 = vector.shape_cast %36 : vector<16x32xf32> to vector<1x16x32xf32>
    %38 = vector.shape_cast %37 : vector<1x16x32xf32> to vector<1x16x32xf32>
    %39 = vector.broadcast %38 : vector<1x16x32xf32> to vector<8x16x32xf32>
    %c2_30 = arith.constant 2 : index
    %c0_31 = arith.constant 0 : index
    %c0_32 = arith.constant 0 : index
    %40 = vector.load %arg25[%c2_30, %c0_31, %c0_32] : memref<12x16x64xf32, #tpu.memory_space<vmem>>, vector<8x16x32xf32>
    tpu.vector_store %arg25[%c2_30, %c0_31, %c0_32], %39 {strides = array<i32>} : memref<12x16x64xf32, #tpu.memory_space<vmem>>, vector<8x16x32xf32>,
    %cst_33 = arith.constant 0.000000e+00 : f32
    %41 = vector.broadcast %cst_33 : f32 to vector<128x32xf32>
    %c4 = arith.constant 4 : index
    %c0_34 = arith.constant 0 : index
    %c0_35 = arith.constant 0 : index
    %42 = vector.load %arg25[%c4, %c0_34, %c0_35] : memref<12x16x64xf32, #tpu.memory_space<vmem>>, vector<8x16x32xf32>
    %43 = vector.shape_cast %42 : vector<8x16x32xf32> to vector<128x32xf32>
    %c0_36 = arith.constant 0 : index
    %c0_37 = arith.constant 0 : index
    %c0_38 = arith.constant 0 : index
    %44 = vector.load %arg8[%c0_36, %c0_37, %c0_38] : memref<5x32x32xf32, #tpu.memory_space<vmem>>, vector<1x32x32xf32>
    %45 = vector.shape_cast %44 : vector<1x32x32xf32> to vector<32x32xf32>
    %cst_39 = arith.constant dense<0.000000e+00> : vector<128x32xf32>
    %46 = tpu.matmul %43, %45, %cst_39 {dimension_numbers = #tpu.dot_dimension_numbers<[1], [0], [0], [1], [0, 0, 1, 1], [], []>} : vector<128x32xf32>, vector<32x32xf32>, vector<128x32xf32> -> vector<128x32xf32>
    %47 = arith.addf %41, %46 : vector<128x32xf32>
    %c3 = arith.constant 3 : index
    %c0_40 = arith.constant 0 : index
    %c0_41 = arith.constant 0 : index
    %48 = vector.load %arg25[%c3, %c0_40, %c0_41] : memref<12x16x64xf32, #tpu.memory_space<vmem>>, vector<8x16x32xf32>
    %49 = vector.shape_cast %48 : vector<8x16x32xf32> to vector<128x32xf32>
    %c1_42 = arith.constant 1 : index
    %c0_43 = arith.constant 0 : index
    %c0_44 = arith.constant 0 : index
    %50 = vector.load %arg8[%c1_42, %c0_43, %c0_44] : memref<5x32x32xf32, #tpu.memory_space<vmem>>, vector<1x32x32xf32>
    %51 = vector.shape_cast %50 : vector<1x32x32xf32> to vector<32x32xf32>
    %cst_45 = arith.constant dense<0.000000e+00> : vector<128x32xf32>
    %52 = tpu.matmul %49, %51, %cst_45 {dimension_numbers = #tpu.dot_dimension_numbers<[1], [0], [0], [1], [0, 0, 1, 1], [], []>} : vector<128x32xf32>, vector<32x32xf32>, vector<128x32xf32> -> vector<128x32xf32>
    %53 = arith.addf %47, %52 : vector<128x32xf32>
    %c2_46 = arith.constant 2 : index
    %c0_47 = arith.constant 0 : index
    %c0_48 = arith.constant 0 : index
    %54 = vector.load %arg25[%c2_46, %c0_47, %c0_48] : memref<12x16x64xf32, #tpu.memory_space<vmem>>, vector<8x16x32xf32>
    %55 = vector.shape_cast %54 : vector<8x16x32xf32> to vector<128x32xf32>
    %c2_49 = arith.constant 2 : index
    %c0_50 = arith.constant 0 : index
    %c0_51 = arith.constant 0 : index
    %56 = vector.load %arg8[%c2_49, %c0_50, %c0_51] : memref<5x32x32xf32, #tpu.memory_space<vmem>>, vector<1x32x32xf32>
    %57 = vector.shape_cast %56 : vector<1x32x32xf32> to vector<32x32xf32>
    %cst_52 = arith.constant dense<0.000000e+00> : vector<128x32xf32>
    %58 = tpu.matmul %55, %57, %cst_52 {dimension_numbers = #tpu.dot_dimension_numbers<[1], [0], [0], [1], [0, 0, 1, 1], [], []>} : vector<128x32xf32>, vector<32x32xf32>, vector<128x32xf32> -> vector<128x32xf32>
    %59 = arith.addf %53, %58 : vector<128x32xf32>
    %c1_53 = arith.constant 1 : index
    %c0_54 = arith.constant 0 : index
    %c0_55 = arith.constant 0 : index
    %60 = vector.load %arg25[%c1_53, %c0_54, %c0_55] : memref<12x16x64xf32, #tpu.memory_space<vmem>>, vector<8x16x32xf32>
    %61 = vector.shape_cast %60 : vector<8x16x32xf32> to vector<128x32xf32>
    %c3_56 = arith.constant 3 : index
    %c0_57 = arith.constant 0 : index
    %c0_58 = arith.constant 0 : index
    %62 = vector.load %arg8[%c3_56, %c0_57, %c0_58] : memref<5x32x32xf32, #tpu.memory_space<vmem>>, vector<1x32x32xf32>
    %63 = vector.shape_cast %62 : vector<1x32x32xf32> to vector<32x32xf32>
    %cst_59 = arith.constant dense<0.000000e+00> : vector<128x32xf32>
    %64 = tpu.matmul %61, %63, %cst_59 {dimension_numbers = #tpu.dot_dimension_numbers<[1], [0], [0], [1], [0, 0, 1, 1], [], []>} : vector<128x32xf32>, vector<32x32xf32>, vector<128x32xf32> -> vector<128x32xf32>
    %65 = arith.addf %59, %64 : vector<128x32xf32>
    %c0_60 = arith.constant 0 : index
    %c0_61 = arith.constant 0 : index
    %c0_62 = arith.constant 0 : index
    %66 = vector.load %arg25[%c0_60, %c0_61, %c0_62] : memref<12x16x64xf32, #tpu.memory_space<vmem>>, vector<8x16x32xf32>
    %67 = vector.shape_cast %66 : vector<8x16x32xf32> to vector<128x32xf32>
    %c4_63 = arith.constant 4 : index
    %c0_64 = arith.constant 0 : index
    %c0_65 = arith.constant 0 : index
    %68 = vector.load %arg8[%c4_63, %c0_64, %c0_65] : memref<5x32x32xf32, #tpu.memory_space<vmem>>, vector<1x32x32xf32>
    %69 = vector.shape_cast %68 : vector<1x32x32xf32> to vector<32x32xf32>
    %cst_66 = arith.constant dense<0.000000e+00> : vector<128x32xf32>
    %70 = tpu.matmul %67, %69, %cst_66 {dimension_numbers = #tpu.dot_dimension_numbers<[1], [0], [0], [1], [0, 0, 1, 1], [], []>} : vector<128x32xf32>, vector<32x32xf32>, vector<128x32xf32> -> vector<128x32xf32>
    %71 = arith.addf %65, %70 : vector<128x32xf32>
    %c0_67 = arith.constant 0 : index
    %c0_68 = arith.constant 0 : index
    %72 = vector.load %arg9[%c0_67, %c0_68] : memref<1x32xf32, #tpu.memory_space<vmem>>, vector<1x32xf32>
    %73 = vector.broadcast %72 : vector<1x32xf32> to vector<128x32xf32>
    %74 = arith.addf %71, %73 : vector<128x32xf32>
    %75 = vector.shape_cast %7 : vector<1x32xf32> to vector<1x32xf32>
    %76 = vector.broadcast %75 : vector<1x32xf32> to vector<128x32xf32>
    %77 = arith.addf %74, %76 : vector<128x32xf32>
    %cst_69 = arith.constant 0.000000e+00 : f32
    %78 = vector.broadcast %cst_69 : f32 to vector<128x32xf32>
    %79 = arith.maximumf %77, %78 : vector<128x32xf32>
    %cst_70 = arith.constant 0.000000e+00 : f32
    %80 = vector.broadcast %cst_70 : f32 to vector<128x64xf32>
    %c0_71 = arith.constant 0 : index
    %c0_72 = arith.constant 0 : index
    %c0_73 = arith.constant 0 : index
    %81 = vector.load %arg10[%c0_71, %c0_72, %c0_73] : memref<3x32x64xf32, #tpu.memory_space<vmem>>, vector<1x32x64xf32>
    %82 = vector.shape_cast %81 : vector<1x32x64xf32> to vector<32x64xf32>
    %cst_74 = arith.constant dense<0.000000e+00> : vector<128x64xf32>
    %83 = tpu.matmul %79, %82, %cst_74 {dimension_numbers = #tpu.dot_dimension_numbers<[1], [0], [0], [1], [0, 0, 1, 1], [], []>} : vector<128x32xf32>, vector<32x64xf32>, vector<128x64xf32> -> vector<128x64xf32>
    %c0_75 = arith.constant 0 : index
    %c0_76 = arith.constant 0 : index
    %c0_77 = arith.constant 0 : index
    %84 = vector.load %arg5[%c0_75, %c0_76, %c0_77] : memref<3x128x128xf32, #tpu.memory_space<vmem>>, vector<1x128x128xf32>
    %85 = vector.shape_cast %84 : vector<1x128x128xf32> to vector<128x128xf32>
    %cst_78 = arith.constant dense<0.000000e+00> : vector<128x64xf32>
    %86 = tpu.matmul %85, %83, %cst_78 {dimension_numbers = #tpu.dot_dimension_numbers<[1], [0], [0], [1], [0, 0, 1, 1], [], []>} : vector<128x128xf32>, vector<128x64xf32>, vector<128x64xf32> -> vector<128x64xf32>
    %87 = arith.addf %80, %86 : vector<128x64xf32>
    %c1_79 = arith.constant 1 : index
    %c0_80 = arith.constant 0 : index
    %c0_81 = arith.constant 0 : index
    %88 = vector.load %arg10[%c1_79, %c0_80, %c0_81] : memref<3x32x64xf32, #tpu.memory_space<vmem>>, vector<1x32x64xf32>
    %89 = vector.shape_cast %88 : vector<1x32x64xf32> to vector<32x64xf32>
    %cst_82 = arith.constant dense<0.000000e+00> : vector<128x64xf32>
    %90 = tpu.matmul %79, %89, %cst_82 {dimension_numbers = #tpu.dot_dimension_numbers<[1], [0], [0], [1], [0, 0, 1, 1], [], []>} : vector<128x32xf32>, vector<32x64xf32>, vector<128x64xf32> -> vector<128x64xf32>
    %c1_83 = arith.constant 1 : index
    %c0_84 = arith.constant 0 : index
    %c0_85 = arith.constant 0 : index
    %91 = vector.load %arg5[%c1_83, %c0_84, %c0_85] : memref<3x128x128xf32, #tpu.memory_space<vmem>>, vector<1x128x128xf32>
    %92 = vector.shape_cast %91 : vector<1x128x128xf32> to vector<128x128xf32>
    %cst_86 = arith.constant dense<0.000000e+00> : vector<128x64xf32>
    %93 = tpu.matmul %92, %90, %cst_86 {dimension_numbers = #tpu.dot_dimension_numbers<[1], [0], [0], [1], [0, 0, 1, 1], [], []>} : vector<128x128xf32>, vector<128x64xf32>, vector<128x64xf32> -> vector<128x64xf32>
    %94 = arith.addf %87, %93 : vector<128x64xf32>
    %c2_87 = arith.constant 2 : index
    %c0_88 = arith.constant 0 : index
    %c0_89 = arith.constant 0 : index
    %95 = vector.load %arg10[%c2_87, %c0_88, %c0_89] : memref<3x32x64xf32, #tpu.memory_space<vmem>>, vector<1x32x64xf32>
    %96 = vector.shape_cast %95 : vector<1x32x64xf32> to vector<32x64xf32>
    %cst_90 = arith.constant dense<0.000000e+00> : vector<128x64xf32>
    %97 = tpu.matmul %79, %96, %cst_90 {dimension_numbers = #tpu.dot_dimension_numbers<[1], [0], [0], [1], [0, 0, 1, 1], [], []>} : vector<128x32xf32>, vector<32x64xf32>, vector<128x64xf32> -> vector<128x64xf32>
    %c2_91 = arith.constant 2 : index
    %c0_92 = arith.constant 0 : index
    %c0_93 = arith.constant 0 : index
    %98 = vector.load %arg5[%c2_91, %c0_92, %c0_93] : memref<3x128x128xf32, #tpu.memory_space<vmem>>, vector<1x128x128xf32>
    %99 = vector.shape_cast %98 : vector<1x128x128xf32> to vector<128x128xf32>
    %cst_94 = arith.constant dense<0.000000e+00> : vector<128x64xf32>
    %100 = tpu.matmul %99, %97, %cst_94 {dimension_numbers = #tpu.dot_dimension_numbers<[1], [0], [0], [1], [0, 0, 1, 1], [], []>} : vector<128x128xf32>, vector<128x64xf32>, vector<128x64xf32> -> vector<128x64xf32>
    %101 = arith.addf %94, %100 : vector<128x64xf32>
    %c0_95 = arith.constant 0 : index
    %c0_96 = arith.constant 0 : index
    %102 = vector.load %arg11[%c0_95, %c0_96] : memref<128x64xf32, #tpu.memory_space<vmem>>, vector<128x64xf32>
    %103 = arith.addf %101, %102 : vector<128x64xf32>
    %cst_97 = arith.constant 0.000000e+00 : f32
    %104 = vector.broadcast %cst_97 : f32 to vector<128x64xf32>
    %105 = arith.maximumf %103, %104 : vector<128x64xf32>
    %106 = vector.shape_cast %105 : vector<128x64xf32> to vector<8x16x64xf32>
    %c2_98 = arith.constant 2 : index
    %c0_99 = arith.constant 0 : index
    %c0_100 = arith.constant 0 : index
    %107 = vector.load %arg25[%c2_98, %c0_99, %c0_100] : memref<12x16x64xf32, #tpu.memory_space<vmem>>, vector<8x16x64xf32>
    tpu.vector_store %arg25[%c2_98, %c0_99, %c0_100], %106 {strides = array<i32>} : memref<12x16x64xf32, #tpu.memory_space<vmem>>, vector<8x16x64xf32>,
    %cst_101 = arith.constant 0.000000e+00 : f32
    %108 = vector.broadcast %cst_101 : f32 to vector<128x64xf32>
    %c4_102 = arith.constant 4 : index
    %c0_103 = arith.constant 0 : index
    %c0_104 = arith.constant 0 : index
    %109 = vector.load %arg25[%c4_102, %c0_103, %c0_104] : memref<12x16x64xf32, #tpu.memory_space<vmem>>, vector<8x16x64xf32>
    %110 = vector.shape_cast %109 : vector<8x16x64xf32> to vector<128x64xf32>
    %c0_105 = arith.constant 0 : index
    %c0_106 = arith.constant 0 : index
    %c0_107 = arith.constant 0 : index
    %111 = vector.load %arg12[%c0_105, %c0_106, %c0_107] : memref<5x64x64xf32, #tpu.memory_space<vmem>>, vector<1x64x64xf32>
    %112 = vector.shape_cast %111 : vector<1x64x64xf32> to vector<64x64xf32>
    %cst_108 = arith.constant dense<0.000000e+00> : vector<128x64xf32>
    %113 = tpu.matmul %110, %112, %cst_108 {dimension_numbers = #tpu.dot_dimension_numbers<[1], [0], [0], [1], [0, 0, 1, 1], [], []>} : vector<128x64xf32>, vector<64x64xf32>, vector<128x64xf32> -> vector<128x64xf32>
    %114 = arith.addf %108, %113 : vector<128x64xf32>
    %c3_109 = arith.constant 3 : index
    %c0_110 = arith.constant 0 : index
    %c0_111 = arith.constant 0 : index
    %115 = vector.load %arg25[%c3_109, %c0_110, %c0_111] : memref<12x16x64xf32, #tpu.memory_space<vmem>>, vector<8x16x64xf32>
    %116 = vector.shape_cast %115 : vector<8x16x64xf32> to vector<128x64xf32>
    %c1_112 = arith.constant 1 : index
    %c0_113 = arith.constant 0 : index
    %c0_114 = arith.constant 0 : index
    %117 = vector.load %arg12[%c1_112, %c0_113, %c0_114] : memref<5x64x64xf32, #tpu.memory_space<vmem>>, vector<1x64x64xf32>
    %118 = vector.shape_cast %117 : vector<1x64x64xf32> to vector<64x64xf32>
    %cst_115 = arith.constant dense<0.000000e+00> : vector<128x64xf32>
    %119 = tpu.matmul %116, %118, %cst_115 {dimension_numbers = #tpu.dot_dimension_numbers<[1], [0], [0], [1], [0, 0, 1, 1], [], []>} : vector<128x64xf32>, vector<64x64xf32>, vector<128x64xf32> -> vector<128x64xf32>
    %120 = arith.addf %114, %119 : vector<128x64xf32>
    %c2_116 = arith.constant 2 : index
    %c0_117 = arith.constant 0 : index
    %c0_118 = arith.constant 0 : index
    %121 = vector.load %arg25[%c2_116, %c0_117, %c0_118] : memref<12x16x64xf32, #tpu.memory_space<vmem>>, vector<8x16x64xf32>
    %122 = vector.shape_cast %121 : vector<8x16x64xf32> to vector<128x64xf32>
    %c2_119 = arith.constant 2 : index
    %c0_120 = arith.constant 0 : index
    %c0_121 = arith.constant 0 : index
    %123 = vector.load %arg12[%c2_119, %c0_120, %c0_121] : memref<5x64x64xf32, #tpu.memory_space<vmem>>, vector<1x64x64xf32>
    %124 = vector.shape_cast %123 : vector<1x64x64xf32> to vector<64x64xf32>
    %cst_122 = arith.constant dense<0.000000e+00> : vector<128x64xf32>
    %125 = tpu.matmul %122, %124, %cst_122 {dimension_numbers = #tpu.dot_dimension_numbers<[1], [0], [0], [1], [0, 0, 1, 1], [], []>} : vector<128x64xf32>, vector<64x64xf32>, vector<128x64xf32> -> vector<128x64xf32>
    %126 = arith.addf %120, %125 : vector<128x64xf32>
    %c1_123 = arith.constant 1 : index
    %c0_124 = arith.constant 0 : index
    %c0_125 = arith.constant 0 : index
    %127 = vector.load %arg25[%c1_123, %c0_124, %c0_125] : memref<12x16x64xf32, #tpu.memory_space<vmem>>, vector<8x16x64xf32>
    %128 = vector.shape_cast %127 : vector<8x16x64xf32> to vector<128x64xf32>
    %c3_126 = arith.constant 3 : index
    %c0_127 = arith.constant 0 : index
    %c0_128 = arith.constant 0 : index
    %129 = vector.load %arg12[%c3_126, %c0_127, %c0_128] : memref<5x64x64xf32, #tpu.memory_space<vmem>>, vector<1x64x64xf32>
    %130 = vector.shape_cast %129 : vector<1x64x64xf32> to vector<64x64xf32>
    %cst_129 = arith.constant dense<0.000000e+00> : vector<128x64xf32>
    %131 = tpu.matmul %128, %130, %cst_129 {dimension_numbers = #tpu.dot_dimension_numbers<[1], [0], [0], [1], [0, 0, 1, 1], [], []>} : vector<128x64xf32>, vector<64x64xf32>, vector<128x64xf32> -> vector<128x64xf32>
    %132 = arith.addf %126, %131 : vector<128x64xf32>
    %c0_130 = arith.constant 0 : index
    %c0_131 = arith.constant 0 : index
    %c0_132 = arith.constant 0 : index
    %133 = vector.load %arg25[%c0_130, %c0_131, %c0_132] : memref<12x16x64xf32, #tpu.memory_space<vmem>>, vector<8x16x64xf32>
    %134 = vector.shape_cast %133 : vector<8x16x64xf32> to vector<128x64xf32>
    %c4_133 = arith.constant 4 : index
    %c0_134 = arith.constant 0 : index
    %c0_135 = arith.constant 0 : index
    %135 = vector.load %arg12[%c4_133, %c0_134, %c0_135] : memref<5x64x64xf32, #tpu.memory_space<vmem>>, vector<1x64x64xf32>
    %136 = vector.shape_cast %135 : vector<1x64x64xf32> to vector<64x64xf32>
    %cst_136 = arith.constant dense<0.000000e+00> : vector<128x64xf32>
    %137 = tpu.matmul %134, %136, %cst_136 {dimension_numbers = #tpu.dot_dimension_numbers<[1], [0], [0], [1], [0, 0, 1, 1], [], []>} : vector<128x64xf32>, vector<64x64xf32>, vector<128x64xf32> -> vector<128x64xf32>
    %138 = arith.addf %132, %137 : vector<128x64xf32>
    %c0_137 = arith.constant 0 : index
    %c0_138 = arith.constant 0 : index
    %139 = vector.load %arg13[%c0_137, %c0_138] : memref<1x64xf32, #tpu.memory_space<vmem>>, vector<1x64xf32>
    %140 = vector.broadcast %139 : vector<1x64xf32> to vector<128x64xf32>
    %141 = arith.addf %138, %140 : vector<128x64xf32>
    %c0_139 = arith.constant 0 : index
    %c0_140 = arith.constant 0 : index
    %142 = vector.load %arg14[%c0_139, %c0_140] : memref<32x64xf32, #tpu.memory_space<vmem>>, vector<32x64xf32>
    %cst_141 = arith.constant dense<0.000000e+00> : vector<128x64xf32>
    %143 = tpu.matmul %79, %142, %cst_141 {dimension_numbers = #tpu.dot_dimension_numbers<[1], [0], [0], [1], [0, 0, 1, 1], [], []>} : vector<128x32xf32>, vector<32x64xf32>, vector<128x64xf32> -> vector<128x64xf32>
    %c0_142 = arith.constant 0 : index
    %c0_143 = arith.constant 0 : index
    %144 = vector.load %arg15[%c0_142, %c0_143] : memref<1x64xf32, #tpu.memory_space<vmem>>, vector<1x64xf32>
    %145 = vector.broadcast %144 : vector<1x64xf32> to vector<128x64xf32>
    %146 = arith.addf %143, %145 : vector<128x64xf32>
    %147 = arith.addf %141, %146 : vector<128x64xf32>
    %cst_144 = arith.constant 0.000000e+00 : f32
    %148 = vector.broadcast %cst_144 : f32 to vector<128x64xf32>
    %149 = arith.maximumf %147, %148 : vector<128x64xf32>
    %cst_145 = arith.constant 0.000000e+00 : f32
    %150 = vector.broadcast %cst_145 : f32 to vector<128x8xf32>
    %c0_146 = arith.constant 0 : index
    %c0_147 = arith.constant 0 : index
    %c0_148 = arith.constant 0 : index
    %151 = vector.load %arg16[%c0_146, %c0_147, %c0_148] : memref<3x64x8xf32, #tpu.memory_space<vmem>>, vector<1x64x8xf32>
    %152 = vector.shape_cast %151 : vector<1x64x8xf32> to vector<64x8xf32>
    %cst_149 = arith.constant dense<0.000000e+00> : vector<128x8xf32>
    %153 = tpu.matmul %149, %152, %cst_149 {dimension_numbers = #tpu.dot_dimension_numbers<[1], [0], [0], [1], [0, 0, 1, 1], [], []>} : vector<128x64xf32>, vector<64x8xf32>, vector<128x8xf32> -> vector<128x8xf32>
    %c0_150 = arith.constant 0 : index
    %c0_151 = arith.constant 0 : index
    %c0_152 = arith.constant 0 : index
    %154 = vector.load %arg5[%c0_150, %c0_151, %c0_152] : memref<3x128x128xf32, #tpu.memory_space<vmem>>, vector<1x128x128xf32>
    %155 = vector.shape_cast %154 : vector<1x128x128xf32> to vector<128x128xf32>
    %cst_153 = arith.constant dense<0.000000e+00> : vector<128x8xf32>
    %156 = tpu.matmul %155, %153, %cst_153 {dimension_numbers = #tpu.dot_dimension_numbers<[1], [0], [0], [1], [0, 0, 1, 1], [], []>} : vector<128x128xf32>, vector<128x8xf32>, vector<128x8xf32> -> vector<128x8xf32>
    %157 = arith.addf %150, %156 : vector<128x8xf32>
    %c1_154 = arith.constant 1 : index
    %c0_155 = arith.constant 0 : index
    %c0_156 = arith.constant 0 : index
    %158 = vector.load %arg16[%c1_154, %c0_155, %c0_156] : memref<3x64x8xf32, #tpu.memory_space<vmem>>, vector<1x64x8xf32>
    %159 = vector.shape_cast %158 : vector<1x64x8xf32> to vector<64x8xf32>
    %cst_157 = arith.constant dense<0.000000e+00> : vector<128x8xf32>
    %160 = tpu.matmul %149, %159, %cst_157 {dimension_numbers = #tpu.dot_dimension_numbers<[1], [0], [0], [1], [0, 0, 1, 1], [], []>} : vector<128x64xf32>, vector<64x8xf32>, vector<128x8xf32> -> vector<128x8xf32>
    %c1_158 = arith.constant 1 : index
    %c0_159 = arith.constant 0 : index
    %c0_160 = arith.constant 0 : index
    %161 = vector.load %arg5[%c1_158, %c0_159, %c0_160] : memref<3x128x128xf32, #tpu.memory_space<vmem>>, vector<1x128x128xf32>
    %162 = vector.shape_cast %161 : vector<1x128x128xf32> to vector<128x128xf32>
    %cst_161 = arith.constant dense<0.000000e+00> : vector<128x8xf32>
    %163 = tpu.matmul %162, %160, %cst_161 {dimension_numbers = #tpu.dot_dimension_numbers<[1], [0], [0], [1], [0, 0, 1, 1], [], []>} : vector<128x128xf32>, vector<128x8xf32>, vector<128x8xf32> -> vector<128x8xf32>
    %164 = arith.addf %157, %163 : vector<128x8xf32>
    %c2_162 = arith.constant 2 : index
    %c0_163 = arith.constant 0 : index
    %c0_164 = arith.constant 0 : index
    %165 = vector.load %arg16[%c2_162, %c0_163, %c0_164] : memref<3x64x8xf32, #tpu.memory_space<vmem>>, vector<1x64x8xf32>
    %166 = vector.shape_cast %165 : vector<1x64x8xf32> to vector<64x8xf32>
    %cst_165 = arith.constant dense<0.000000e+00> : vector<128x8xf32>
    %167 = tpu.matmul %149, %166, %cst_165 {dimension_numbers = #tpu.dot_dimension_numbers<[1], [0], [0], [1], [0, 0, 1, 1], [], []>} : vector<128x64xf32>, vector<64x8xf32>, vector<128x8xf32> -> vector<128x8xf32>
    %c2_166 = arith.constant 2 : index
    %c0_167 = arith.constant 0 : index
    %c0_168 = arith.constant 0 : index
    %168 = vector.load %arg5[%c2_166, %c0_167, %c0_168] : memref<3x128x128xf32, #tpu.memory_space<vmem>>, vector<1x128x128xf32>
    %169 = vector.shape_cast %168 : vector<1x128x128xf32> to vector<128x128xf32>
    %cst_169 = arith.constant dense<0.000000e+00> : vector<128x8xf32>
    %170 = tpu.matmul %169, %167, %cst_169 {dimension_numbers = #tpu.dot_dimension_numbers<[1], [0], [0], [1], [0, 0, 1, 1], [], []>} : vector<128x128xf32>, vector<128x8xf32>, vector<128x8xf32> -> vector<128x8xf32>
    %171 = arith.addf %164, %170 : vector<128x8xf32>
    %c0_170 = arith.constant 0 : index
    %c0_171 = arith.constant 0 : index
    %172 = vector.load %arg17[%c0_170, %c0_171] : memref<128x8xf32, #tpu.memory_space<vmem>>, vector<128x8xf32>
    %173 = arith.addf %171, %172 : vector<128x8xf32>
    %cst_172 = arith.constant 0.000000e+00 : f32
    %174 = vector.broadcast %cst_172 : f32 to vector<128x8xf32>
    %175 = arith.maximumf %173, %174 : vector<128x8xf32>
    %176 = vector.shape_cast %175 : vector<128x8xf32> to vector<8x16x8xf32>
    %c2_173 = arith.constant 2 : index
    %c0_174 = arith.constant 0 : index
    %c0_175 = arith.constant 0 : index
    %177 = vector.load %arg25[%c2_173, %c0_174, %c0_175] : memref<12x16x64xf32, #tpu.memory_space<vmem>>, vector<8x16x8xf32>
    tpu.vector_store %arg25[%c2_173, %c0_174, %c0_175], %176 {strides = array<i32>} : memref<12x16x64xf32, #tpu.memory_space<vmem>>, vector<8x16x8xf32>,
    %cst_176 = arith.constant 0.000000e+00 : f32
    %178 = vector.broadcast %cst_176 : f32 to vector<128x8xf32>
    %c4_177 = arith.constant 4 : index
    %c0_178 = arith.constant 0 : index
    %c0_179 = arith.constant 0 : index
    %179 = vector.load %arg25[%c4_177, %c0_178, %c0_179] : memref<12x16x64xf32, #tpu.memory_space<vmem>>, vector<8x16x8xf32>
    %180 = vector.shape_cast %179 : vector<8x16x8xf32> to vector<128x8xf32>
    %c0_180 = arith.constant 0 : index
    %c0_181 = arith.constant 0 : index
    %c0_182 = arith.constant 0 : index
    %181 = vector.load %arg18[%c0_180, %c0_181, %c0_182] : memref<5x8x8xf32, #tpu.memory_space<vmem>>, vector<1x8x8xf32>
    %182 = vector.shape_cast %181 : vector<1x8x8xf32> to vector<8x8xf32>
    %cst_183 = arith.constant dense<0.000000e+00> : vector<128x8xf32>
    %183 = tpu.matmul %180, %182, %cst_183 {dimension_numbers = #tpu.dot_dimension_numbers<[1], [0], [0], [1], [0, 0, 1, 1], [], []>} : vector<128x8xf32>, vector<8x8xf32>, vector<128x8xf32> -> vector<128x8xf32>
    %184 = arith.addf %178, %183 : vector<128x8xf32>
    %c3_184 = arith.constant 3 : index
    %c0_185 = arith.constant 0 : index
    %c0_186 = arith.constant 0 : index
    %185 = vector.load %arg25[%c3_184, %c0_185, %c0_186] : memref<12x16x64xf32, #tpu.memory_space<vmem>>, vector<8x16x8xf32>
    %186 = vector.shape_cast %185 : vector<8x16x8xf32> to vector<128x8xf32>
    %c1_187 = arith.constant 1 : index
    %c0_188 = arith.constant 0 : index
    %c0_189 = arith.constant 0 : index
    %187 = vector.load %arg18[%c1_187, %c0_188, %c0_189] : memref<5x8x8xf32, #tpu.memory_space<vmem>>, vector<1x8x8xf32>
    %188 = vector.shape_cast %187 : vector<1x8x8xf32> to vector<8x8xf32>
    %cst_190 = arith.constant dense<0.000000e+00> : vector<128x8xf32>
    %189 = tpu.matmul %186, %188, %cst_190 {dimension_numbers = #tpu.dot_dimension_numbers<[1], [0], [0], [1], [0, 0, 1, 1], [], []>} : vector<128x8xf32>, vector<8x8xf32>, vector<128x8xf32> -> vector<128x8xf32>
    %190 = arith.addf %184, %189 : vector<128x8xf32>
    %c2_191 = arith.constant 2 : index
    %c0_192 = arith.constant 0 : index
    %c0_193 = arith.constant 0 : index
    %191 = vector.load %arg25[%c2_191, %c0_192, %c0_193] : memref<12x16x64xf32, #tpu.memory_space<vmem>>, vector<8x16x8xf32>
    %192 = vector.shape_cast %191 : vector<8x16x8xf32> to vector<128x8xf32>
    %c2_194 = arith.constant 2 : index
    %c0_195 = arith.constant 0 : index
    %c0_196 = arith.constant 0 : index
    %193 = vector.load %arg18[%c2_194, %c0_195, %c0_196] : memref<5x8x8xf32, #tpu.memory_space<vmem>>, vector<1x8x8xf32>
    %194 = vector.shape_cast %193 : vector<1x8x8xf32> to vector<8x8xf32>
    %cst_197 = arith.constant dense<0.000000e+00> : vector<128x8xf32>
    %195 = tpu.matmul %192, %194, %cst_197 {dimension_numbers = #tpu.dot_dimension_numbers<[1], [0], [0], [1], [0, 0, 1, 1], [], []>} : vector<128x8xf32>, vector<8x8xf32>, vector<128x8xf32> -> vector<128x8xf32>
    %196 = arith.addf %190, %195 : vector<128x8xf32>
    %c1_198 = arith.constant 1 : index
    %c0_199 = arith.constant 0 : index
    %c0_200 = arith.constant 0 : index
    %197 = vector.load %arg25[%c1_198, %c0_199, %c0_200] : memref<12x16x64xf32, #tpu.memory_space<vmem>>, vector<8x16x8xf32>
    %198 = vector.shape_cast %197 : vector<8x16x8xf32> to vector<128x8xf32>
    %c3_201 = arith.constant 3 : index
    %c0_202 = arith.constant 0 : index
    %c0_203 = arith.constant 0 : index
    %199 = vector.load %arg18[%c3_201, %c0_202, %c0_203] : memref<5x8x8xf32, #tpu.memory_space<vmem>>, vector<1x8x8xf32>
    %200 = vector.shape_cast %199 : vector<1x8x8xf32> to vector<8x8xf32>
    %cst_204 = arith.constant dense<0.000000e+00> : vector<128x8xf32>
    %201 = tpu.matmul %198, %200, %cst_204 {dimension_numbers = #tpu.dot_dimension_numbers<[1], [0], [0], [1], [0, 0, 1, 1], [], []>} : vector<128x8xf32>, vector<8x8xf32>, vector<128x8xf32> -> vector<128x8xf32>
    %202 = arith.addf %196, %201 : vector<128x8xf32>
    %c0_205 = arith.constant 0 : index
    %c0_206 = arith.constant 0 : index
    %c0_207 = arith.constant 0 : index
    %203 = vector.load %arg25[%c0_205, %c0_206, %c0_207] : memref<12x16x64xf32, #tpu.memory_space<vmem>>, vector<8x16x8xf32>
    %204 = vector.shape_cast %203 : vector<8x16x8xf32> to vector<128x8xf32>
    %c4_208 = arith.constant 4 : index
    %c0_209 = arith.constant 0 : index
    %c0_210 = arith.constant 0 : index
    %205 = vector.load %arg18[%c4_208, %c0_209, %c0_210] : memref<5x8x8xf32, #tpu.memory_space<vmem>>, vector<1x8x8xf32>
    %206 = vector.shape_cast %205 : vector<1x8x8xf32> to vector<8x8xf32>
    %cst_211 = arith.constant dense<0.000000e+00> : vector<128x8xf32>
    %207 = tpu.matmul %204, %206, %cst_211 {dimension_numbers = #tpu.dot_dimension_numbers<[1], [0], [0], [1], [0, 0, 1, 1], [], []>} : vector<128x8xf32>, vector<8x8xf32>, vector<128x8xf32> -> vector<128x8xf32>
    %208 = arith.addf %202, %207 : vector<128x8xf32>
    %c0_212 = arith.constant 0 : index
    %c0_213 = arith.constant 0 : index
    %209 = vector.load %arg19[%c0_212, %c0_213] : memref<1x8xf32, #tpu.memory_space<vmem>>, vector<1x8xf32>
    %210 = vector.broadcast %209 : vector<1x8xf32> to vector<128x8xf32>
    %211 = arith.addf %208, %210 : vector<128x8xf32>
    %c0_214 = arith.constant 0 : index
    %c0_215 = arith.constant 0 : index
    %212 = vector.load %arg20[%c0_214, %c0_215] : memref<64x8xf32, #tpu.memory_space<vmem>>, vector<64x8xf32>
    %cst_216 = arith.constant dense<0.000000e+00> : vector<128x8xf32>
    %213 = tpu.matmul %149, %212, %cst_216 {dimension_numbers = #tpu.dot_dimension_numbers<[1], [0], [0], [1], [0, 0, 1, 1], [], []>} : vector<128x64xf32>, vector<64x8xf32>, vector<128x8xf32> -> vector<128x8xf32>
    %c0_217 = arith.constant 0 : index
    %c0_218 = arith.constant 0 : index
    %214 = vector.load %arg21[%c0_217, %c0_218] : memref<1x8xf32, #tpu.memory_space<vmem>>, vector<1x8xf32>
    %215 = vector.broadcast %214 : vector<1x8xf32> to vector<128x8xf32>
    %216 = arith.addf %213, %215 : vector<128x8xf32>
    %217 = arith.addf %211, %216 : vector<128x8xf32>
    %cst_219 = arith.constant 0.000000e+00 : f32
    %218 = vector.broadcast %cst_219 : f32 to vector<128x8xf32>
    %219 = arith.maximumf %217, %218 : vector<128x8xf32>
    %c0_220 = arith.constant 0 : index
    %c0_221 = arith.constant 0 : index
    %220 = vector.load %arg22[%c0_220, %c0_221] : memref<128x8xf32, #tpu.memory_space<vmem>>, vector<128x8xf32>
    %221 = arith.mulf %219, %220 : vector<128x8xf32>
    %c0_222 = arith.constant 0 : index
    %c0_223 = arith.constant 0 : index
    %222 = vector.load %arg23[%c0_222, %c0_223] : memref<128x8xf32, #tpu.memory_space<vmem>>, vector<128x8xf32>
    %223 = arith.addf %221, %222 : vector<128x8xf32>
    %224 = tpu.transpose %223, [1, 0] : vector<128x8xf32> -> vector<8x128xf32>
    %c0_224 = arith.constant 0 : index
    %c0_225 = arith.constant 0 : index
    %c0_226 = arith.constant 0 : index
    %225 = vector.load %arg24[%c0_224, %c0_225, %c0_226] : memref<1x8x128xf32, #tpu.memory_space<vmem>>, vector<1x8x128xf32>
    %226 = vector.shape_cast %225 : vector<1x8x128xf32> to vector<8x128xf32>
    %227 = vector.shape_cast %224 : vector<8x128xf32> to vector<1x8x128xf32>
    tpu.vector_store %arg24[%c0_224, %c0_225, %c0_226], %227 {strides = array<i32>} : memref<1x8x128xf32, #tpu.memory_space<vmem>>, vector<1x8x128xf32>,
    return
  }
  func.func @transform_0(%arg0: i32) -> (i32, i32, i32) {
    %c0_i32 = arith.constant 0 : i32
    %c0_i32_0 = arith.constant 0 : i32
    %c0_i32_1 = arith.constant 0 : i32
    return %arg0, %c0_i32, %c0_i32_0 : i32, i32, i32
  }
  func.func @transform_1(%arg0: i32) -> (i32, i32) {
    %c0_i32 = arith.constant 0 : i32
    %c0_i32_0 = arith.constant 0 : i32
    %c0_i32_1 = arith.constant 0 : i32
    return %c0_i32, %c0_i32_0 : i32, i32
  }
  func.func @transform_2(%arg0: i32) -> (i32, i32) {
    %c0_i32 = arith.constant 0 : i32
    %c0_i32_0 = arith.constant 0 : i32
    %c0_i32_1 = arith.constant 0 : i32
    return %c0_i32, %c0_i32_0 : i32, i32
  }
  func.func @transform_3(%arg0: i32) -> (i32, i32) {
    %c0_i32 = arith.constant 0 : i32
    %c0_i32_0 = arith.constant 0 : i32
    %c0_i32_1 = arith.constant 0 : i32
    return %c0_i32, %c0_i32_0 : i32, i32
  }
  func.func @transform_4(%arg0: i32) -> (i32, i32, i32) {
    %c0_i32 = arith.constant 0 : i32
    %c0_i32_0 = arith.constant 0 : i32
    %c0_i32_1 = arith.constant 0 : i32
    %c0_i32_2 = arith.constant 0 : i32
    return %c0_i32, %c0_i32_0, %c0_i32_1 : i32, i32, i32
  }
  func.func @transform_5(%arg0: i32) -> (i32, i32, i32) {
    %c0_i32 = arith.constant 0 : i32
    %c0_i32_0 = arith.constant 0 : i32
    %c0_i32_1 = arith.constant 0 : i32
    %c0_i32_2 = arith.constant 0 : i32
    return %c0_i32, %c0_i32_0, %c0_i32_1 : i32, i32, i32
  }
  func.func @transform_6(%arg0: i32) -> (i32, i32) {
    %c0_i32 = arith.constant 0 : i32
    %c0_i32_0 = arith.constant 0 : i32
    %c0_i32_1 = arith.constant 0 : i32
    return %c0_i32, %c0_i32_0 : i32, i32
  }
  func.func @transform_7(%arg0: i32) -> (i32, i32, i32) {
    %c0_i32 = arith.constant 0 : i32
    %c0_i32_0 = arith.constant 0 : i32
    %c0_i32_1 = arith.constant 0 : i32
    %c0_i32_2 = arith.constant 0 : i32
    return %c0_i32, %c0_i32_0, %c0_i32_1 : i32, i32, i32
  }
  func.func @transform_8(%arg0: i32) -> (i32, i32) {
    %c0_i32 = arith.constant 0 : i32
    %c0_i32_0 = arith.constant 0 : i32
    %c0_i32_1 = arith.constant 0 : i32
    return %c0_i32, %c0_i32_0 : i32, i32
  }
  func.func @transform_9(%arg0: i32) -> (i32, i32, i32) {
    %c0_i32 = arith.constant 0 : i32
    %c0_i32_0 = arith.constant 0 : i32
    %c0_i32_1 = arith.constant 0 : i32
    %c0_i32_2 = arith.constant 0 : i32
    return %c0_i32, %c0_i32_0, %c0_i32_1 : i32, i32, i32
  }
  func.func @transform_10(%arg0: i32) -> (i32, i32) {
    %c0_i32 = arith.constant 0 : i32
    %c0_i32_0 = arith.constant 0 : i32
    %c0_i32_1 = arith.constant 0 : i32
    return %c0_i32, %c0_i32_0 : i32, i32
  }
  func.func @transform_11(%arg0: i32) -> (i32, i32, i32) {
    %c0_i32 = arith.constant 0 : i32
    %c0_i32_0 = arith.constant 0 : i32
    %c0_i32_1 = arith.constant 0 : i32
    %c0_i32_2 = arith.constant 0 : i32
    return %c0_i32, %c0_i32_0, %c0_i32_1 : i32, i32, i32
  }
  func.func @transform_12(%arg0: i32) -> (i32, i32) {
    %c0_i32 = arith.constant 0 : i32
    %c0_i32_0 = arith.constant 0 : i32
    %c0_i32_1 = arith.constant 0 : i32
    return %c0_i32, %c0_i32_0 : i32, i32
  }
  func.func @transform_13(%arg0: i32) -> (i32, i32) {
    %c0_i32 = arith.constant 0 : i32
    %c0_i32_0 = arith.constant 0 : i32
    %c0_i32_1 = arith.constant 0 : i32
    return %c0_i32, %c0_i32_0 : i32, i32
  }
  func.func @transform_14(%arg0: i32) -> (i32, i32) {
    %c0_i32 = arith.constant 0 : i32
    %c0_i32_0 = arith.constant 0 : i32
    %c0_i32_1 = arith.constant 0 : i32
    return %c0_i32, %c0_i32_0 : i32, i32
  }
  func.func @transform_15(%arg0: i32) -> (i32, i32, i32) {
    %c0_i32 = arith.constant 0 : i32
    %c0_i32_0 = arith.constant 0 : i32
    %c0_i32_1 = arith.constant 0 : i32
    %c0_i32_2 = arith.constant 0 : i32
    return %c0_i32, %c0_i32_0, %c0_i32_1 : i32, i32, i32
  }
  func.func @transform_16(%arg0: i32) -> (i32, i32) {
    %c0_i32 = arith.constant 0 : i32
    %c0_i32_0 = arith.constant 0 : i32
    %c0_i32_1 = arith.constant 0 : i32
    return %c0_i32, %c0_i32_0 : i32, i32
  }
  func.func @transform_17(%arg0: i32) -> (i32, i32, i32) {
    %c0_i32 = arith.constant 0 : i32
    %c0_i32_0 = arith.constant 0 : i32
    %c0_i32_1 = arith.constant 0 : i32
    %c0_i32_2 = arith.constant 0 : i32
    return %c0_i32, %c0_i32_0, %c0_i32_1 : i32, i32, i32
  }
  func.func @transform_18(%arg0: i32) -> (i32, i32) {
    %c0_i32 = arith.constant 0 : i32
    %c0_i32_0 = arith.constant 0 : i32
    %c0_i32_1 = arith.constant 0 : i32
    return %c0_i32, %c0_i32_0 : i32, i32
  }
  func.func @transform_19(%arg0: i32) -> (i32, i32) {
    %c0_i32 = arith.constant 0 : i32
    %c0_i32_0 = arith.constant 0 : i32
    %c0_i32_1 = arith.constant 0 : i32
    return %c0_i32, %c0_i32_0 : i32, i32
  }
  func.func @transform_20(%arg0: i32) -> (i32, i32) {
    %c0_i32 = arith.constant 0 : i32
    %c0_i32_0 = arith.constant 0 : i32
    %c0_i32_1 = arith.constant 0 : i32
    return %c0_i32, %c0_i32_0 : i32, i32
  }
  func.func @transform_21(%arg0: i32) -> (i32, i32) {
    %c0_i32 = arith.constant 0 : i32
    %c0_i32_0 = arith.constant 0 : i32
    %c0_i32_1 = arith.constant 0 : i32
    return %c0_i32, %c0_i32_0 : i32, i32
  }
  func.func @transform_22(%arg0: i32) -> (i32, i32) {
    %c0_i32 = arith.constant 0 : i32
    %c0_i32_0 = arith.constant 0 : i32
    %c0_i32_1 = arith.constant 0 : i32
    return %c0_i32, %c0_i32_0 : i32, i32
  }
  func.func @transform_23(%arg0: i32) -> (i32, i32, i32) {
    %c0_i32 = arith.constant 0 : i32
    %c0_i32_0 = arith.constant 0 : i32
    %c0_i32_1 = arith.constant 0 : i32
    return %arg0, %c0_i32, %c0_i32_0 : i32, i32, i32
  }
}

</mosaic_0001>

<llo_original>
// kernel: decoder_forward.1
$region0: #{decoder_forward.1}
  #allocation0 [shape = 'u32[]', space=smem, size = 0x4, offset = 0x4, fixed_abs, tag = 'smem constant byte address 0x4 - core index']
  #allocation1 [shape = 'u32[144,128]{1,0:T(1,128)}', space=vmem, size = 0x12000, scoped, tag = 'internal scratch']
  #allocation2 [shape = 'f32[12,16,64]{2,1,0:T(8,128)}', space=vmem, size = 0x18000, scoped, tag = 'scratch operand']
  %s0 = inlined_call_operand.vmem [shape: f32[2,1,12], index: 0, kind: input, shape index: {}]
  %s1 = inlined_call_operand.hbm [shape: f32[12,32], index: 1, kind: input, shape index: {}]
  %s2 = inlined_call_operand.vmem [shape: f32[1,32], index: 2, kind: input, shape index: {}]
  %s3 = inlined_call_operand.vmem [shape: f32[16,3], index: 3, kind: input, shape index: {}]
  %s4 = inlined_call_operand.vmem [shape: f32[3,128,128], index: 4, kind: input, shape index: {}]
  %s5 = inlined_call_operand.vmem [shape: f32[3,32,32], index: 5, kind: input, shape index: {}]
  %s6 = inlined_call_operand.hbm [shape: f32[16,32], index: 6, kind: input, shape index: {}]
  %s7 = inlined_call_operand.vmem [shape: f32[5,32,32], index: 7, kind: input, shape index: {}]
  %s8 = inlined_call_operand.hbm [shape: f32[1,32], index: 8, kind: input, shape index: {}]
  %s9 = inlined_call_operand.hbm [shape: f32[3,32,64], index: 9, kind: input, shape index: {}]
  %s10 = inlined_call_operand.vmem [shape: f32[128,64], index: 10, kind: input, shape index: {}]
  %s11 = inlined_call_operand.vmem [shape: f32[5,64,64], index: 11, kind: input, shape index: {}]
  %s12 = inlined_call_operand.hbm [shape: f32[1,64], index: 12, kind: input, shape index: {}]
  %s13 = inlined_call_operand.hbm [shape: f32[32,64], index: 13, kind: input, shape index: {}]
  %s14 = inlined_call_operand.hbm [shape: f32[1,64], index: 14, kind: input, shape index: {}]
  %s15 = inlined_call_operand.vmem [shape: f32[3,64,8], index: 15, kind: input, shape index: {}]
  %s16 = inlined_call_operand.vmem [shape: f32[128,8], index: 16, kind: input, shape index: {}]
  %s17 = inlined_call_operand.vmem [shape: f32[5,8,8], index: 17, kind: input, shape index: {}]
  %s18 = inlined_call_operand.hbm [shape: f32[1,8], index: 18, kind: input, shape index: {}]
  %s19 = inlined_call_operand.vmem [shape: f32[64,8], index: 19, kind: input, shape index: {}]
  %s20 = inlined_call_operand.hbm [shape: f32[1,8], index: 20, kind: input, shape index: {}]
  %s21 = inlined_call_operand.vmem [shape: f32[128,8], index: 21, kind: input, shape index: {}]
  %s22 = inlined_call_operand.vmem [shape: f32[128,8], index: 22, kind: input, shape index: {}]
  %s23 = inlined_call_operand.vmem [shape: f32[2,8,128], index: 23, kind: output, shape index: {}]
  %s24 = sld [smem:[#allocation0]]
  $region161: #{decoder_forward.1} parent=0
    _
  %s26 = ssub.s32 1, %s24
  %s27 = scalar_select 0, %s26, %s24
  $region1: #{decoder_forward.1} parent=0
    #allocation3 [shape = 'u8[8192]{0}', space=vmem, size = 0x2000, scoped, tag = 'input window, operand 1, single buffered']
    #allocation4 [shape = 's32[2]{0}', space=sflag, size = 0x8, scoped, tag = 'scoped memory for decoder_forward.1']
    #allocation5 [shape = 'u8[8192]{0}', space=vmem, size = 0x2000, scoped, tag = 'input window, operand 6, single buffered']
    #allocation6 [shape = 's32[1]{0}', space=sflag, size = 0x4, scoped, tag = 'scoped memory for decoder_forward.1']
    #allocation7 [shape = 'u8[512]{0}', space=vmem, size = 0x400, scoped, tag = 'input window, operand 8, single buffered']
    #allocation8 [shape = 'u8[49152]{0}', space=vmem, size = 0xc000, scoped, tag = 'input window, operand 9, single buffered']
    #allocation9 [shape = 's32[1]{0}', space=sflag, size = 0x4, scoped, tag = 'scoped memory for decoder_forward.1']
    #allocation10 [shape = 'u8[512]{0}', space=vmem, size = 0x400, scoped, tag = 'input window, operand 12, single buffered']
    #allocation11 [shape = 'u8[16384]{0}', space=vmem, size = 0x4000, scoped, tag = 'input window, operand 13, single buffered']
    #allocation12 [shape = 's32[1]{0}', space=sflag, size = 0x4, scoped, tag = 'scoped memory for decoder_forward.1']
    #allocation13 [shape = 'u8[512]{0}', space=vmem, size = 0x400, scoped, tag = 'input window, operand 14, single buffered']
    #allocation14 [shape = 'u8[512]{0}', space=vmem, size = 0x400, scoped, tag = 'input window, operand 18, single buffered']
    #allocation15 [shape = 's32[1]{0}', space=sflag, size = 0x4, scoped, tag = 'scoped memory for decoder_forward.1']
    #allocation16 [shape = 'u8[512]{0}', space=vmem, size = 0x400, scoped, tag = 'input window, operand 20, single buffered']
    %28 = vsyncpa [#allocation4], 0
    %29 = vsyncpa [#allocation6], 0
    %30 = vsyncpa [#allocation9], 0
    %31 = vsyncpa [#allocation12], 0
    %32 = vsyncpa [#allocation15], 0
    loop: start=0, step=1, limit=4
    $region2: #{decoder_forward.1} parent=1 // loop_pre_header
      _
    $region3: #{decoder_forward.1} parent=1 // loop_header
      %s34 = sphi 0, %s38
      %p35 = scmp.ge.s32.totalorder %s34, 4
      %s44 = sphi 0, %s46
      %s47 = sphi 0, %s44
      %s48 = sphi 0, %s47
      %s64 = sphi 0, %s48
      %s68 = sphi 0, %s68
      %s70 = sphi 0, %s68
      %s71 = sphi 0, %s70
      %s85 = sphi 0, %s71
      %s89 = sphi 0, %s89
      %s91 = sphi 0, %s89
      %s92 = sphi 0, %s91
      %s106 = sphi 0, %s92
      %s110 = sphi 0, %s110
      %s112 = sphi 0, %s110
      %s113 = sphi 0, %s112
      %s127 = sphi 0, %s113
      %s131 = sphi 0, %s131
      %s133 = sphi 0, %s131
      %s134 = sphi 0, %s133
      %s148 = sphi 0, %s134
      %s152 = sphi 0, %s152
      %s154 = sphi 0, %s152
      %s155 = sphi 0, %s154
      %s169 = sphi 0, %s155
      %s173 = sphi 0, %s173
      %s175 = sphi 0, %s173
      %s176 = sphi 0, %s175
      %s190 = sphi 0, %s176
      %s194 = sphi 0, %s194
      %s196 = sphi 0, %s194
      %s197 = sphi 0, %s196
      %s211 = sphi 0, %s197
      %s215 = sphi 0, %s215
      %s217 = sphi 0, %s215
      %s218 = sphi 0, %s217
      %s232 = sphi 0, %s218
      %s236 = sphi 0, %s236
      %s238 = sphi 0, %s236
      %s239 = sphi 0, %s238
      %s253 = sphi 0, %s239
      %s257 = sphi 0, %s257
      %s259 = sphi 0, %s257
      %s260 = sphi 0, %s259
      %s274 = sphi 0, %s260
      %s278 = sphi 0, %s278
      %s280 = sphi 0, %s278
      %s281 = sphi 0, %s280
      %s295 = sphi 0, %s281
      %s299 = sphi 0, %s299
      %s301 = sphi 0, %s299
      %s302 = sphi 0, %s301
      %s316 = sphi 0, %s302
      %s320 = sphi 0, %s320
      %s322 = sphi 0, %s320
      %s323 = sphi 0, %s322
      %s337 = sphi 0, %s323
      %s341 = sphi 0, %s341
      %s343 = sphi 0, %s341
      %s344 = sphi 0, %s343
      %s358 = sphi 0, %s344
      %s362 = sphi 0, %s362
      %s364 = sphi 0, %s362
      %s365 = sphi 0, %s364
      %s379 = sphi 0, %s365
      %s383 = sphi 0, %s383
      %s385 = sphi 0, %s383
      %s386 = sphi 0, %s385
      %s400 = sphi 0, %s386
      %s404 = sphi 0, %s404
      %s406 = sphi 0, %s404
      %s407 = sphi 0, %s406
      %s421 = sphi 0, %s407
      %s425 = sphi 0, %s425
      %s427 = sphi 0, %s425
      %s428 = sphi 0, %s427
      %s442 = sphi 0, %s428
      %s446 = sphi 0, %s446
      %s448 = sphi 0, %s446
      %s449 = sphi 0, %s448
      %s463 = sphi 0, %s449
      %s467 = sphi 0, %s467
      %s469 = sphi 0, %s467
      %s470 = sphi 0, %s469
      %s484 = sphi 0, %s470
      %s488 = sphi 0, %s488
      %s490 = sphi 0, %s488
      %s491 = sphi 0, %s490
      %s505 = sphi 0, %s491
      %s509 = sphi 0, %s509
      %s511 = sphi 0, %s509
      %s512 = sphi 0, %s511
      %s526 = sphi 0, %s512
      %s532 = sphi 0, %s534
      %s535 = sphi 0, %s532
      %s536 = sphi 0, %s535
      %s552 = sphi 0, %s536
    $region4: #{decoder_forward.1} parent=1 // loop_header_branch
      %37 = sbr.rel (%p35) target = $region8
    $region5: #{decoder_forward.1} parent=1 // loop_body
      %s39 = ssub.s32 %s34, 1
      %s40 = ssub.s32 %s34, 2
      %s41 = sadd.s32 %s34, 1
      %s42 = ssub.s32 %s34, %s41
      %p43 = scmp.eq.s32.totalorder %s42, 0
      %s45 = sadd.s32 %s44, 1
      %s46 = scalar_select %p43, %s44, %s45
      %p49 = pneg %p43
      %p50 = scmp.eq.s32.totalorder %s34, 1
      %p51 = por %p49, %p50
      %p52 = scmp.ne.s32.totalorder %s44, %s47
      %p53 = scmp.eq.s32.totalorder %s34, 0
      %p54 = por %p52, %p53
      %p55 = scmp.ne.s32.totalorder %s44, %s47
      %p56 = scmp.eq.s32.totalorder %s39, 1
      %p57 = por %p55, %p56
      %p58 = scmp.ne.s32.totalorder %s47, %s48
      %p59 = scmp.eq.s32.totalorder %s39, 0
      %p60 = por %p58, %p59
      %p61 = scmp.ne.s32.totalorder %s47, %s48
      %p62 = scmp.eq.s32.totalorder %s40, 1
      %p63 = por %p61, %p62
      %p65 = scmp.ne.s32.totalorder %s48, %s64
      %p66 = scmp.eq.s32.totalorder %s40, 0
      %p67 = por %p65, %p66
      %s69 = sadd.s32 %s68, 1
      %p72 = scmp.eq.s32.totalorder %s34, 1
      %p73 = scmp.ne.s32.totalorder %s68, %s70
      %p74 = scmp.eq.s32.totalorder %s34, 0
      %p75 = por %p73, %p74
      %p76 = scmp.ne.s32.totalorder %s68, %s70
      %p77 = scmp.eq.s32.totalorder %s39, 1
      %p78 = por %p76, %p77
      %p79 = scmp.ne.s32.totalorder %s70, %s71
      %p80 = scmp.eq.s32.totalorder %s39, 0
      %p81 = por %p79, %p80
      %p82 = scmp.ne.s32.totalorder %s70, %s71
      %p83 = scmp.eq.s32.totalorder %s40, 1
      %p84 = por %p82, %p83
      %p86 = scmp.ne.s32.totalorder %s71, %s85
      %p87 = scmp.eq.s32.totalorder %s40, 0
      %p88 = por %p86, %p87
      %s90 = sadd.s32 %s89, 1
      %p93 = scmp.eq.s32.totalorder %s34, 1
      %p94 = scmp.ne.s32.totalorder %s89, %s91
      %p95 = scmp.eq.s32.totalorder %s34, 0
      %p96 = por %p94, %p95
      %p97 = scmp.ne.s32.totalorder %s89, %s91
      %p98 = scmp.eq.s32.totalorder %s39, 1
      %p99 = por %p97, %p98
      %p100 = scmp.ne.s32.totalorder %s91, %s92
      %p101 = scmp.eq.s32.totalorder %s39, 0
      %p102 = por %p100, %p101
      %p103 = scmp.ne.s32.totalorder %s91, %s92
      %p104 = scmp.eq.s32.totalorder %s40, 1
      %p105 = por %p103, %p104
      %p107 = scmp.ne.s32.totalorder %s92, %s106
      %p108 = scmp.eq.s32.totalorder %s40, 0
      %p109 = por %p107, %p108
      %s111 = sadd.s32 %s110, 1
      %p114 = scmp.eq.s32.totalorder %s34, 1
      %p115 = scmp.ne.s32.totalorder %s110, %s112
      %p116 = scmp.eq.s32.totalorder %s34, 0
      %p117 = por %p115, %p116
      %p118 = scmp.ne.s32.totalorder %s110, %s112
      %p119 = scmp.eq.s32.totalorder %s39, 1
      %p120 = por %p118, %p119
      %p121 = scmp.ne.s32.totalorder %s112, %s113
      %p122 = scmp.eq.s32.totalorder %s39, 0
      %p123 = por %p121, %p122
      %p124 = scmp.ne.s32.totalorder %s112, %s113
      %p125 = scmp.eq.s32.totalorder %s40, 1
      %p126 = por %p124, %p125
      %p128 = scmp.ne.s32.totalorder %s113, %s127
      %p129 = scmp.eq.s32.totalorder %s40, 0
      %p130 = por %p128, %p129
      %s132 = sadd.s32 %s131, 1
      %p135 = scmp.eq.s32.totalorder %s34, 1
      %p136 = scmp.ne.s32.totalorder %s131, %s133
      %p137 = scmp.eq.s32.totalorder %s34, 0
      %p138 = por %p136, %p137
      %p139 = scmp.ne.s32.totalorder %s131, %s133
      %p140 = scmp.eq.s32.totalorder %s39, 1
      %p141 = por %p139, %p140
      %p142 = scmp.ne.s32.totalorder %s133, %s134
      %p143 = scmp.eq.s32.totalorder %s39, 0
      %p144 = por %p142, %p143
      %p145 = scmp.ne.s32.totalorder %s133, %s134
      %p146 = scmp.eq.s32.totalorder %s40, 1
      %p147 = por %p145, %p146
      %p149 = scmp.ne.s32.totalorder %s134, %s148
      %p150 = scmp.eq.s32.totalorder %s40, 0
      %p151 = por %p149, %p150
      %s153 = sadd.s32 %s152, 1
      %p156 = scmp.eq.s32.totalorder %s34, 1
      %p157 = scmp.ne.s32.totalorder %s152, %s154
      %p158 = scmp.eq.s32.totalorder %s34, 0
      %p159 = por %p157, %p158
      %p160 = scmp.ne.s32.totalorder %s152, %s154
      %p161 = scmp.eq.s32.totalorder %s39, 1
      %p162 = por %p160, %p161
      %p163 = scmp.ne.s32.totalorder %s154, %s155
      %p164 = scmp.eq.s32.totalorder %s39, 0
      %p165 = por %p163, %p164
      %p166 = scmp.ne.s32.totalorder %s154, %s155
      %p167 = scmp.eq.s32.totalorder %s40, 1
      %p168 = por %p166, %p167
      %p170 = scmp.ne.s32.totalorder %s155, %s169
      %p171 = scmp.eq.s32.totalorder %s40, 0
      %p172 = por %p170, %p171
      %s174 = sadd.s32 %s173, 1
      %p177 = scmp.eq.s32.totalorder %s34, 1
      %p178 = scmp.ne.s32.totalorder %s173, %s175
      %p179 = scmp.eq.s32.totalorder %s34, 0
      %p180 = por %p178, %p179
      %p181 = scmp.ne.s32.totalorder %s173, %s175
      %p182 = scmp.eq.s32.totalorder %s39, 1
      %p183 = por %p181, %p182
      %p184 = scmp.ne.s32.totalorder %s175, %s176
      %p185 = scmp.eq.s32.totalorder %s39, 0
      %p186 = por %p184, %p185
      %p187 = scmp.ne.s32.totalorder %s175, %s176
      %p188 = scmp.eq.s32.totalorder %s40, 1
      %p189 = por %p187, %p188
      %p191 = scmp.ne.s32.totalorder %s176, %s190
      %p192 = scmp.eq.s32.totalorder %s40, 0
      %p193 = por %p191, %p192
      %s195 = sadd.s32 %s194, 1
      %p198 = scmp.eq.s32.totalorder %s34, 1
      %p199 = scmp.ne.s32.totalorder %s194, %s196
      %p200 = scmp.eq.s32.totalorder %s34, 0
      %p201 = por %p199, %p200
      %p202 = scmp.ne.s32.totalorder %s194, %s196
      %p203 = scmp.eq.s32.totalorder %s39, 1
      %p204 = por %p202, %p203
      %p205 = scmp.ne.s32.totalorder %s196, %s197
      %p206 = scmp.eq.s32.totalorder %s39, 0
      %p207 = por %p205, %p206
      %p208 = scmp.ne.s32.totalorder %s196, %s197
      %p209 = scmp.eq.s32.totalorder %s40, 1
      %p210 = por %p208, %p209
      %p212 = scmp.ne.s32.totalorder %s197, %s211
      %p213 = scmp.eq.s32.totalorder %s40, 0
      %p214 = por %p212, %p213
      %s216 = sadd.s32 %s215, 1
      %p219 = scmp.eq.s32.totalorder %s34, 1
      %p220 = scmp.ne.s32.totalorder %s215, %s217
      %p221 = scmp.eq.s32.totalorder %s34, 0
      %p222 = por %p220, %p221
      %p223 = scmp.ne.s32.totalorder %s215, %s217
      %p224 = scmp.eq.s32.totalorder %s39, 1
      %p225 = por %p223, %p224
      %p226 = scmp.ne.s32.totalorder %s217, %s218
      %p227 = scmp.eq.s32.totalorder %s39, 0
      %p228 = por %p226, %p227
      %p229 = scmp.ne.s32.totalorder %s217, %s218
      %p230 = scmp.eq.s32.totalorder %s40, 1
      %p231 = por %p229, %p230
      %p233 = scmp.ne.s32.totalorder %s218, %s232
      %p234 = scmp.eq.s32.totalorder %s40, 0
      %p235 = por %p233, %p234
      %s237 = sadd.s32 %s236, 1
      %p240 = scmp.eq.s32.totalorder %s34, 1
      %p241 = scmp.ne.s32.totalorder %s236, %s238
      %p242 = scmp.eq.s32.totalorder %s34, 0
      %p243 = por %p241, %p242
      %p244 = scmp.ne.s32.totalorder %s236, %s238
      %p245 = scmp.eq.s32.totalorder %s39, 1
      %p246 = por %p244, %p245
      %p247 = scmp.ne.s32.totalorder %s238, %s239
      %p248 = scmp.eq.s32.totalorder %s39, 0
      %p249 = por %p247, %p248
      %p250 = scmp.ne.s32.totalorder %s238, %s239
      %p251 = scmp.eq.s32.totalorder %s40, 1
      %p252 = por %p250, %p251
      %p254 = scmp.ne.s32.totalorder %s239, %s253
      %p255 = scmp.eq.s32.totalorder %s40, 0
      %p256 = por %p254, %p255
      %s258 = sadd.s32 %s257, 1
      %p261 = scmp.eq.s32.totalorder %s34, 1
      %p262 = scmp.ne.s32.totalorder %s257, %s259
      %p263 = scmp.eq.s32.totalorder %s34, 0
      %p264 = por %p262, %p263
      %p265 = scmp.ne.s32.totalorder %s257, %s259
      %p266 = scmp.eq.s32.totalorder %s39, 1
      %p267 = por %p265, %p266
      %p268 = scmp.ne.s32.totalorder %s259, %s260
      %p269 = scmp.eq.s32.totalorder %s39, 0
      %p270 = por %p268, %p269
      %p271 = scmp.ne.s32.totalorder %s259, %s260
      %p272 = scmp.eq.s32.totalorder %s40, 1
      %p273 = por %p271, %p272
      %p275 = scmp.ne.s32.totalorder %s260, %s274
      %p276 = scmp.eq.s32.totalorder %s40, 0
      %p277 = por %p275, %p276
      %s279 = sadd.s32 %s278, 1
      %p282 = scmp.eq.s32.totalorder %s34, 1
      %p283 = scmp.ne.s32.totalorder %s278, %s280
      %p284 = scmp.eq.s32.totalorder %s34, 0
      %p285 = por %p283, %p284
      %p286 = scmp.ne.s32.totalorder %s278, %s280
      %p287 = scmp.eq.s32.totalorder %s39, 1
      %p288 = por %p286, %p287
      %p289 = scmp.ne.s32.totalorder %s280, %s281
      %p290 = scmp.eq.s32.totalorder %s39, 0
      %p291 = por %p289, %p290
      %p292 = scmp.ne.s32.totalorder %s280, %s281
      %p293 = scmp.eq.s32.totalorder %s40, 1
      %p294 = por %p292, %p293
      %p296 = scmp.ne.s32.totalorder %s281, %s295
      %p297 = scmp.eq.s32.totalorder %s40, 0
      %p298 = por %p296, %p297
      %s300 = sadd.s32 %s299, 1
      %p303 = scmp.eq.s32.totalorder %s34, 1
      %p304 = scmp.ne.s32.totalorder %s299, %s301
      %p305 = scmp.eq.s32.totalorder %s34, 0
      %p306 = por %p304, %p305
      %p307 = scmp.ne.s32.totalorder %s299, %s301
      %p308 = scmp.eq.s32.totalorder %s39, 1
      %p309 = por %p307, %p308
      %p310 = scmp.ne.s32.totalorder %s301, %s302
      %p311 = scmp.eq.s32.totalorder %s39, 0
      %p312 = por %p310, %p311
      %p313 = scmp.ne.s32.totalorder %s301, %s302
      %p314 = scmp.eq.s32.totalorder %s40, 1
      %p315 = por %p313, %p314
      %p317 = scmp.ne.s32.totalorder %s302, %s316
      %p318 = scmp.eq.s32.totalorder %s40, 0
      %p319 = por %p317, %p318
      %s321 = sadd.s32 %s320, 1
      %p324 = scmp.eq.s32.totalorder %s34, 1
      %p325 = scmp.ne.s32.totalorder %s320, %s322
      %p326 = scmp.eq.s32.totalorder %s34, 0
      %p327 = por %p325, %p326
      %p328 = scmp.ne.s32.totalorder %s320, %s322
      %p329 = scmp.eq.s32.totalorder %s39, 1
      %p330 = por %p328, %p329
      %p331 = scmp.ne.s32.totalorder %s322, %s323
      %p332 = scmp.eq.s32.totalorder %s39, 0
      %p333 = por %p331, %p332
      %p334 = scmp.ne.s32.totalorder %s322, %s323
      %p335 = scmp.eq.s32.totalorder %s40, 1
      %p336 = por %p334, %p335
      %p338 = scmp.ne.s32.totalorder %s323, %s337
      %p339 = scmp.eq.s32.totalorder %s40, 0
      %p340 = por %p338, %p339
      %s342 = sadd.s32 %s341, 1
      %p345 = scmp.eq.s32.totalorder %s34, 1
      %p346 = scmp.ne.s32.totalorder %s341, %s343
      %p347 = scmp.eq.s32.totalorder %s34, 0
      %p348 = por %p346, %p347
      %p349 = scmp.ne.s32.totalorder %s341, %s343
      %p350 = scmp.eq.s32.totalorder %s39, 1
      %p351 = por %p349, %p350
      %p352 = scmp.ne.s32.totalorder %s343, %s344
      %p353 = scmp.eq.s32.totalorder %s39, 0
      %p354 = por %p352, %p353
      %p355 = scmp.ne.s32.totalorder %s343, %s344
      %p356 = scmp.eq.s32.totalorder %s40, 1
      %p357 = por %p355, %p356
      %p359 = scmp.ne.s32.totalorder %s344, %s358
      %p360 = scmp.eq.s32.totalorder %s40, 0
      %p361 = por %p359, %p360
      %s363 = sadd.s32 %s362, 1
      %p366 = scmp.eq.s32.totalorder %s34, 1
      %p367 = scmp.ne.s32.totalorder %s362, %s364
      %p368 = scmp.eq.s32.totalorder %s34, 0
      %p369 = por %p367, %p368
      %p370 = scmp.ne.s32.totalorder %s362, %s364
      %p371 = scmp.eq.s32.totalorder %s39, 1
      %p372 = por %p370, %p371
      %p373 = scmp.ne.s32.totalorder %s364, %s365
      %p374 = scmp.eq.s32.totalorder %s39, 0
      %p375 = por %p373, %p374
      %p376 = scmp.ne.s32.totalorder %s364, %s365
      %p377 = scmp.eq.s32.totalorder %s40, 1
      %p378 = por %p376, %p377
      %p380 = scmp.ne.s32.totalorder %s365, %s379
      %p381 = scmp.eq.s32.totalorder %s40, 0
      %p382 = por %p380, %p381
      %s384 = sadd.s32 %s383, 1
      %p387 = scmp.eq.s32.totalorder %s34, 1
      %p388 = scmp.ne.s32.totalorder %s383, %s385
      %p389 = scmp.eq.s32.totalorder %s34, 0
      %p390 = por %p388, %p389
      %p391 = scmp.ne.s32.totalorder %s383, %s385
      %p392 = scmp.eq.s32.totalorder %s39, 1
      %p393 = por %p391, %p392
      %p394 = scmp.ne.s32.totalorder %s385, %s386
      %p395 = scmp.eq.s32.totalorder %s39, 0
      %p396 = por %p394, %p395
      %p397 = scmp.ne.s32.totalorder %s385, %s386
      %p398 = scmp.eq.s32.totalorder %s40, 1
      %p399 = por %p397, %p398
      %p401 = scmp.ne.s32.totalorder %s386, %s400
      %p402 = scmp.eq.s32.totalorder %s40, 0
      %p403 = por %p401, %p402
      %s405 = sadd.s32 %s404, 1
      %p408 = scmp.eq.s32.totalorder %s34, 1
      %p409 = scmp.ne.s32.totalorder %s404, %s406
      %p410 = scmp.eq.s32.totalorder %s34, 0
      %p411 = por %p409, %p410
      %p412 = scmp.ne.s32.totalorder %s404, %s406
      %p413 = scmp.eq.s32.totalorder %s39, 1
      %p414 = por %p412, %p413
      %p415 = scmp.ne.s32.totalorder %s406, %s407
      %p416 = scmp.eq.s32.totalorder %s39, 0
      %p417 = por %p415, %p416
      %p418 = scmp.ne.s32.totalorder %s406, %s407
      %p419 = scmp.eq.s32.totalorder %s40, 1
      %p420 = por %p418, %p419
      %p422 = scmp.ne.s32.totalorder %s407, %s421
      %p423 = scmp.eq.s32.totalorder %s40, 0
      %p424 = por %p422, %p423
      %s426 = sadd.s32 %s425, 1
      %p429 = scmp.eq.s32.totalorder %s34, 1
      %p430 = scmp.ne.s32.totalorder %s425, %s427
      %p431 = scmp.eq.s32.totalorder %s34, 0
      %p432 = por %p430, %p431
      %p433 = scmp.ne.s32.totalorder %s425, %s427
      %p434 = scmp.eq.s32.totalorder %s39, 1
      %p435 = por %p433, %p434
      %p436 = scmp.ne.s32.totalorder %s427, %s428
      %p437 = scmp.eq.s32.totalorder %s39, 0
      %p438 = por %p436, %p437
      %p439 = scmp.ne.s32.totalorder %s427, %s428
      %p440 = scmp.eq.s32.totalorder %s40, 1
      %p441 = por %p439, %p440
      %p443 = scmp.ne.s32.totalorder %s428, %s442
      %p444 = scmp.eq.s32.totalorder %s40, 0
      %p445 = por %p443, %p444
      %s447 = sadd.s32 %s446, 1
      %p450 = scmp.eq.s32.totalorder %s34, 1
      %p451 = scmp.ne.s32.totalorder %s446, %s448
      %p452 = scmp.eq.s32.totalorder %s34, 0
      %p453 = por %p451, %p452
      %p454 = scmp.ne.s32.totalorder %s446, %s448
      %p455 = scmp.eq.s32.totalorder %s39, 1
      %p456 = por %p454, %p455
      %p457 = scmp.ne.s32.totalorder %s448, %s449
      %p458 = scmp.eq.s32.totalorder %s39, 0
      %p459 = por %p457, %p458
      %p460 = scmp.ne.s32.totalorder %s448, %s449
      %p461 = scmp.eq.s32.totalorder %s40, 1
      %p462 = por %p460, %p461
      %p464 = scmp.ne.s32.totalorder %s449, %s463
      %p465 = scmp.eq.s32.totalorder %s40, 0
      %p466 = por %p464, %p465
      %s468 = sadd.s32 %s467, 1
      %p471 = scmp.eq.s32.totalorder %s34, 1
      %p472 = scmp.ne.s32.totalorder %s467, %s469
      %p473 = scmp.eq.s32.totalorder %s34, 0
      %p474 = por %p472, %p473
      %p475 = scmp.ne.s32.totalorder %s467, %s469
      %p476 = scmp.eq.s32.totalorder %s39, 1
      %p477 = por %p475, %p476
      %p478 = scmp.ne.s32.totalorder %s469, %s470
      %p479 = scmp.eq.s32.totalorder %s39, 0
      %p480 = por %p478, %p479
      %p481 = scmp.ne.s32.totalorder %s469, %s470
      %p482 = scmp.eq.s32.totalorder %s40, 1
      %p483 = por %p481, %p482
      %p485 = scmp.ne.s32.totalorder %s470, %s484
      %p486 = scmp.eq.s32.totalorder %s40, 0
      %p487 = por %p485, %p486
      %s489 = sadd.s32 %s488, 1
      %p492 = scmp.eq.s32.totalorder %s34, 1
      %p493 = scmp.ne.s32.totalorder %s488, %s490
      %p494 = scmp.eq.s32.totalorder %s34, 0
      %p495 = por %p493, %p494
      %p496 = scmp.ne.s32.totalorder %s488, %s490
      %p497 = scmp.eq.s32.totalorder %s39, 1
      %p498 = por %p496, %p497
      %p499 = scmp.ne.s32.totalorder %s490, %s491
      %p500 = scmp.eq.s32.totalorder %s39, 0
      %p501 = por %p499, %p500
      %p502 = scmp.ne.s32.totalorder %s490, %s491
      %p503 = scmp.eq.s32.totalorder %s40, 1
      %p504 = por %p502, %p503
      %p506 = scmp.ne.s32.totalorder %s491, %s505
      %p507 = scmp.eq.s32.totalorder %s40, 0
      %p508 = por %p506, %p507
      %s510 = sadd.s32 %s509, 1
      %p513 = scmp.eq.s32.totalorder %s34, 1
      %p514 = scmp.ne.s32.totalorder %s509, %s511
      %p515 = scmp.eq.s32.totalorder %s34, 0
      %p516 = por %p514, %p515
      %p517 = scmp.ne.s32.totalorder %s509, %s511
      %p518 = scmp.eq.s32.totalorder %s39, 1
      %p519 = por %p517, %p518
      %p520 = scmp.ne.s32.totalorder %s511, %s512
      %p521 = scmp.eq.s32.totalorder %s39, 0
      %p522 = por %p520, %p521
      %p523 = scmp.ne.s32.totalorder %s511, %s512
      %p524 = scmp.eq.s32.totalorder %s40, 1
      %p525 = por %p523, %p524
      %p527 = scmp.ne.s32.totalorder %s512, %s526
      %p528 = scmp.eq.s32.totalorder %s40, 0
      %p529 = por %p527, %p528
      %s530 = ssub.s32 %s34, %s41
      %p531 = scmp.eq.s32.totalorder %s530, 0
      %s533 = sadd.s32 %s532, 1
      %s534 = scalar_select %p531, %s532, %s533
      %p537 = pneg %p531
      %p538 = scmp.eq.s32.totalorder %s34, 1
      %p539 = por %p537, %p538
      %p540 = scmp.ne.s32.totalorder %s532, %s535
      %p541 = scmp.eq.s32.totalorder %s34, 0
      %p542 = por %p540, %p541
      %p543 = scmp.ne.s32.totalorder %s532, %s535
      %p544 = scmp.eq.s32.totalorder %s39, 1
      %p545 = por %p543, %p544
      %p546 = scmp.ne.s32.totalorder %s535, %s536
      %p547 = scmp.eq.s32.totalorder %s39, 0
      %p548 = por %p546, %p547
      %p549 = scmp.ne.s32.totalorder %s535, %s536
      %p550 = scmp.eq.s32.totalorder %s40, 1
      %p551 = por %p549, %p550
      %p553 = scmp.ne.s32.totalorder %s536, %s552
      %p554 = scmp.eq.s32.totalorder %s40, 0
      %p555 = por %p553, %p554
      %p556 = scmp.le.s32.totalorder 1, %s34
      %p557 = scmp.lt.s32.totalorder %s34, 3
      %p558 = pnand %p556, %p557
      %p559 = pneg %p558
      // Predicated region
      $region9: #{decoder_forward.1} parent=5 // pred_check
        _
      $region10: #{decoder_forward.1} parent=5 // pred_check_branch
        %561 = sbr.rel (%p558) target = $region12
      $region11: #{decoder_forward.1} parent=5 // pred_region
        %s562 = ssub.s32 %s34, 1
        // Predicated region
        $region13: #{decoder_forward.1} parent=11 // pred_check
          %p563 = pneg %p81
        $region14: #{decoder_forward.1} parent=11 // pred_check_branch
          %565 = sbr.rel (%p563) target = $region16
        $region15: #{decoder_forward.1} parent=11 // pred_region
          %s567 = ssub.s32 256, 256
          %568 = vsyncadd [#allocation4], %s567
          %s569 = sshll.u32 [#allocation3], 4
          %s570 = int_to_ptr.vmem [resolvable:$true] %s569
          %575 = dma.hbm_to_vmem [thread:$0]  %s1, 256, %s570, [#allocation4], 128, 128, 8
        $region16: #{decoder_forward.1} parent=11 // pred_fallthru
          _
        // Predicated region
        $region17: #{decoder_forward.1} parent=11 // pred_check
          %p576 = pneg %p102
        $region18: #{decoder_forward.1} parent=11 // pred_check_branch
          %578 = sbr.rel (%p576) target = $region20
        $region19: #{decoder_forward.1} parent=11 // pred_region
          _
        $region20: #{decoder_forward.1} parent=11 // pred_fallthru
          _
        // Predicated region
        $region21: #{decoder_forward.1} parent=11 // pred_check
          %p579 = pneg %p123
        $region22: #{decoder_forward.1} parent=11 // pred_check_branch
          %581 = sbr.rel (%p579) target = $region24
        $region23: #{decoder_forward.1} parent=11 // pred_region
          _
        $region24: #{decoder_forward.1} parent=11 // pred_fallthru
          _
        // Predicated region
        $region25: #{decoder_forward.1} parent=11 // pred_check
          %p582 = pneg %p144
        $region26: #{decoder_forward.1} parent=11 // pred_check_branch
          %584 = sbr.rel (%p582) target = $region28
        $region27: #{decoder_forward.1} parent=11 // pred_region
          _
        $region28: #{decoder_forward.1} parent=11 // pred_fallthru
          _
        // Predicated region
        $region29: #{decoder_forward.1} parent=11 // pred_check
          %p585 = pneg %p165
        $region30: #{decoder_forward.1} parent=11 // pred_check_branch
          %587 = sbr.rel (%p585) target = $region32
        $region31: #{decoder_forward.1} parent=11 // pred_region
          _
        $region32: #{decoder_forward.1} parent=11 // pred_fallthru
          _
        // Predicated region
        $region33: #{decoder_forward.1} parent=11 // pred_check
          %p588 = pneg %p186
        $region34: #{decoder_forward.1} parent=11 // pred_check_branch
          %590 = sbr.rel (%p588) target = $region36
        $region35: #{decoder_forward.1} parent=11 // pred_region
          %s592 = ssub.s32 256, 256
          %593 = vsyncadd [#allocation6], %s592
          %s594 = sshll.u32 [#allocation5], 4
          %s595 = int_to_ptr.vmem [resolvable:$true] %s594
          %600 = dma.hbm_to_vmem [thread:$0]  %s6, 256, %s595, [#allocation6], 128, 128, 8
        $region36: #{decoder_forward.1} parent=11 // pred_fallthru
          _
        // Predicated region
        $region37: #{decoder_forward.1} parent=11 // pred_check
          %p601 = pneg %p207
        $region38: #{decoder_forward.1} parent=11 // pred_check_branch
          %603 = sbr.rel (%p601) target = $region40
        $region39: #{decoder_forward.1} parent=11 // pred_region
          _
        $region40: #{decoder_forward.1} parent=11 // pred_fallthru
          _
        // Predicated region
        $region41: #{decoder_forward.1} parent=11 // pred_check
          %p604 = pneg %p228
        $region42: #{decoder_forward.1} parent=11 // pred_check_branch
          %606 = sbr.rel (%p604) target = $region44
        $region43: #{decoder_forward.1} parent=11 // pred_region
          %s608 = ssub.s32 16, 16
          %609 = vsyncadd [#allocation6], %s608
          %s611 = sshll.u32 [#allocation7], 4
          %s612 = int_to_ptr.vmem [resolvable:$true] %s611
          %614 = dma.hbm_to_vmem [thread:$0]  %s8, 16, %s612, [#allocation6]
        $region44: #{decoder_forward.1} parent=11 // pred_fallthru
          _
        // Predicated region
        $region45: #{decoder_forward.1} parent=11 // pred_check
          %p615 = pneg %p249
        $region46: #{decoder_forward.1} parent=11 // pred_check_branch
          %617 = sbr.rel (%p615) target = $region48
        $region47: #{decoder_forward.1} parent=11 // pred_region
          %s619 = ssub.s32 1536, 1536
          %620 = vsyncadd [#allocation9], %s619
          %s621 = sshll.u32 [#allocation8], 4
          %s622 = int_to_ptr.vmem [resolvable:$true] %s621
          %627 = dma.hbm_to_vmem [thread:$0]  %s9, 1536, %s622, [#allocation9], 128, 128, 8
        $region48: #{decoder_forward.1} parent=11 // pred_fallthru
          _
        // Predicated region
        $region49: #{decoder_forward.1} parent=11 // pred_check
          %p628 = pneg %p270
        $region50: #{decoder_forward.1} parent=11 // pred_check_branch
          %630 = sbr.rel (%p628) target = $region52
        $region51: #{decoder_forward.1} parent=11 // pred_region
          _
        $region52: #{decoder_forward.1} parent=11 // pred_fallthru
          _
        // Predicated region
        $region53: #{decoder_forward.1} parent=11 // pred_check
          %p631 = pneg %p291
        $region54: #{decoder_forward.1} parent=11 // pred_check_branch
          %633 = sbr.rel (%p631) target = $region56
        $region55: #{decoder_forward.1} parent=11 // pred_region
          _
        $region56: #{decoder_forward.1} parent=11 // pred_fallthru
          _
        // Predicated region
        $region57: #{decoder_forward.1} parent=11 // pred_check
          %p634 = pneg %p312
        $region58: #{decoder_forward.1} parent=11 // pred_check_branch
          %636 = sbr.rel (%p634) target = $region60
        $region59: #{decoder_forward.1} parent=11 // pred_region
          %s638 = ssub.s32 16, 16
          %639 = vsyncadd [#allocation9], %s638
          %s641 = sshll.u32 [#allocation10], 4
          %s642 = int_to_ptr.vmem [resolvable:$true] %s641
          %644 = dma.hbm_to_vmem [thread:$0]  %s12, 16, %s642, [#allocation9]
        $region60: #{decoder_forward.1} parent=11 // pred_fallthru
          _
        // Predicated region
        $region61: #{decoder_forward.1} parent=11 // pred_check
          %p645 = pneg %p333
        $region62: #{decoder_forward.1} parent=11 // pred_check_branch
          %647 = sbr.rel (%p645) target = $region64
        $region63: #{decoder_forward.1} parent=11 // pred_region
          %s649 = ssub.s32 512, 512
          %650 = vsyncadd [#allocation12], %s649
          %s651 = sshll.u32 [#allocation11], 4
          %s652 = int_to_ptr.vmem [resolvable:$true] %s651
          %657 = dma.hbm_to_vmem [thread:$0]  %s13, 512, %s652, [#allocation12], 128, 128, 8
        $region64: #{decoder_forward.1} parent=11 // pred_fallthru
          _
        // Predicated region
        $region65: #{decoder_forward.1} parent=11 // pred_check
          %p658 = pneg %p354
        $region66: #{decoder_forward.1} parent=11 // pred_check_branch
          %660 = sbr.rel (%p658) target = $region68
        $region67: #{decoder_forward.1} parent=11 // pred_region
          %s662 = ssub.s32 16, 16
          %663 = vsyncadd [#allocation12], %s662
          %s665 = sshll.u32 [#allocation13], 4
          %s666 = int_to_ptr.vmem [resolvable:$true] %s665
          %668 = dma.hbm_to_vmem [thread:$0]  %s14, 16, %s666, [#allocation12]
        $region68: #{decoder_forward.1} parent=11 // pred_fallthru
          _
        // Predicated region
        $region69: #{decoder_forward.1} parent=11 // pred_check
          %p669 = pneg %p375
        $region70: #{decoder_forward.1} parent=11 // pred_check_branch
          %671 = sbr.rel (%p669) target = $region72
        $region71: #{decoder_forward.1} parent=11 // pred_region
          _
        $region72: #{decoder_forward.1} parent=11 // pred_fallthru
          _
        // Predicated region
        $region73: #{decoder_forward.1} parent=11 // pred_check
          %p672 = pneg %p396
        $region74: #{decoder_forward.1} parent=11 // pred_check_branch
          %674 = sbr.rel (%p672) target = $region76
        $region75: #{decoder_forward.1} parent=11 // pred_region
          _
        $region76: #{decoder_forward.1} parent=11 // pred_fallthru
          _
        // Predicated region
        $region77: #{decoder_forward.1} parent=11 // pred_check
          %p675 = pneg %p417
        $region78: #{decoder_forward.1} parent=11 // pred_check_branch
          %677 = sbr.rel (%p675) target = $region80
        $region79: #{decoder_forward.1} parent=11 // pred_region
          _
        $region80: #{decoder_forward.1} parent=11 // pred_fallthru
          _
        // Predicated region
        $region81: #{decoder_forward.1} parent=11 // pred_check
          %p678 = pneg %p438
        $region82: #{decoder_forward.1} parent=11 // pred_check_branch
          %680 = sbr.rel (%p678) target = $region84
        $region83: #{decoder_forward.1} parent=11 // pred_region
          %s682 = ssub.s32 16, 16
          %683 = vsyncadd [#allocation15], %s682
          %s685 = sshll.u32 [#allocation14], 4
          %s686 = int_to_ptr.vmem [resolvable:$true] %s685
          %688 = dma.hbm_to_vmem [thread:$0]  %s18, 16, %s686, [#allocation15]
        $region84: #{decoder_forward.1} parent=11 // pred_fallthru
          _
        // Predicated region
        $region85: #{decoder_forward.1} parent=11 // pred_check
          %p689 = pneg %p459
        $region86: #{decoder_forward.1} parent=11 // pred_check_branch
          %691 = sbr.rel (%p689) target = $region88
        $region87: #{decoder_forward.1} parent=11 // pred_region
          _
        $region88: #{decoder_forward.1} parent=11 // pred_fallthru
          _
        // Predicated region
        $region89: #{decoder_forward.1} parent=11 // pred_check
          %p692 = pneg %p480
        $region90: #{decoder_forward.1} parent=11 // pred_check_branch
          %694 = sbr.rel (%p692) target = $region92
        $region91: #{decoder_forward.1} parent=11 // pred_region
          %s696 = ssub.s32 16, 16
          %697 = vsyncadd [#allocation15], %s696
          %s699 = sshll.u32 [#allocation16], 4
          %s700 = int_to_ptr.vmem [resolvable:$true] %s699
          %702 = dma.hbm_to_vmem [thread:$0]  %s20, 16, %s700, [#allocation15]
        $region92: #{decoder_forward.1} parent=11 // pred_fallthru
          _
        // Predicated region
        $region93: #{decoder_forward.1} parent=11 // pred_check
          %p703 = pneg %p501
        $region94: #{decoder_forward.1} parent=11 // pred_check_branch
          %705 = sbr.rel (%p703) target = $region96
        $region95: #{decoder_forward.1} parent=11 // pred_region
          _
        $region96: #{decoder_forward.1} parent=11 // pred_fallthru
          _
        // Predicated region
        $region97: #{decoder_forward.1} parent=11 // pred_check
          %p706 = pneg %p522
        $region98: #{decoder_forward.1} parent=11 // pred_check_branch
          %708 = sbr.rel (%p706) target = $region100
        $region99: #{decoder_forward.1} parent=11 // pred_region
          _
        $region100: #{decoder_forward.1} parent=11 // pred_fallthru
          _
      $region12: #{decoder_forward.1} parent=5 // pred_fallthru
        _
      %p709 = scmp.lt.s32.totalorder %s34, 2
      // Predicated region
      $region101: #{decoder_forward.1} parent=5 // pred_check
        %p710 = pneg %p709
      $region102: #{decoder_forward.1} parent=5 // pred_check_branch
        %712 = sbr.rel (%p710) target = $region104
      $region103: #{decoder_forward.1} parent=5 // pred_region
        // Predicated region
        $region105: #{decoder_forward.1} parent=103 // pred_check
          %p713 = pneg %p54
        $region106: #{decoder_forward.1} parent=103 // pred_check_branch
          %715 = sbr.rel (%p713) target = $region108
        $region107: #{decoder_forward.1} parent=103 // pred_region
          %p716 = scmp.lt.s32.totalorder %s34, 1
          %s717 = scalar_select %p716, %s34, 1
          %s718 = scalar_lea.vmem %s0, %s717
        $region108: #{decoder_forward.1} parent=103 // pred_fallthru
          _
      $region104: #{decoder_forward.1} parent=5 // pred_fallthru
        _
      %p719 = scmp.le.s32.totalorder 1, %s34
      %p720 = scmp.lt.s32.totalorder %s34, 3
      %p721 = pnand %p719, %p720
      %p722 = pneg %p721
      // Predicated region
      $region109: #{decoder_forward.1} parent=5 // pred_check
        _
      $region110: #{decoder_forward.1} parent=5 // pred_check_branch
        %724 = sbr.rel (%p721) target = $region112
      $region111: #{decoder_forward.1} parent=5 // pred_region
        %s725 = ssub.s32 %s34, 1
        // Predicated region
        $region113: #{decoder_forward.1} parent=111 // pred_check
          %p726 = pneg %p81
        $region114: #{decoder_forward.1} parent=111 // pred_check_branch
          %728 = sbr.rel (%p726) target = $region116
        $region115: #{decoder_forward.1} parent=111 // pred_region
          %729 = dma.done [#allocation4], 256
        $region116: #{decoder_forward.1} parent=111 // pred_fallthru
          _
        // Predicated region
        $region117: #{decoder_forward.1} parent=111 // pred_check
          %p730 = pneg %p186
        $region118: #{decoder_forward.1} parent=111 // pred_check_branch
          %732 = sbr.rel (%p730) target = $region120
        $region119: #{decoder_forward.1} parent=111 // pred_region
          %733 = dma.done [#allocation6], 256
        $region120: #{decoder_forward.1} parent=111 // pred_fallthru
          _
        // Predicated region
        $region121: #{decoder_forward.1} parent=111 // pred_check
          %p734 = pneg %p228
        $region122: #{decoder_forward.1} parent=111 // pred_check_branch
          %736 = sbr.rel (%p734) target = $region124
        $region123: #{decoder_forward.1} parent=111 // pred_region
          %737 = dma.done [#allocation6], 16
        $region124: #{decoder_forward.1} parent=111 // pred_fallthru
          _
        // Predicated region
        $region125: #{decoder_forward.1} parent=111 // pred_check
          %p738 = pneg %p249
        $region126: #{decoder_forward.1} parent=111 // pred_check_branch
          %740 = sbr.rel (%p738) target = $region128
        $region127: #{decoder_forward.1} parent=111 // pred_region
          %741 = dma.done [#allocation9], 1536
        $region128: #{decoder_forward.1} parent=111 // pred_fallthru
          _
        // Predicated region
        $region129: #{decoder_forward.1} parent=111 // pred_check
          %p742 = pneg %p312
        $region130: #{decoder_forward.1} parent=111 // pred_check_branch
          %744 = sbr.rel (%p742) target = $region132
        $region131: #{decoder_forward.1} parent=111 // pred_region
          %745 = dma.done [#allocation9], 16
        $region132: #{decoder_forward.1} parent=111 // pred_fallthru
          _
        // Predicated region
        $region133: #{decoder_forward.1} parent=111 // pred_check
          %p746 = pneg %p333
        $region134: #{decoder_forward.1} parent=111 // pred_check_branch
          %748 = sbr.rel (%p746) target = $region136
        $region135: #{decoder_forward.1} parent=111 // pred_region
          %749 = dma.done [#allocation12], 512
        $region136: #{decoder_forward.1} parent=111 // pred_fallthru
          _
        // Predicated region
        $region137: #{decoder_forward.1} parent=111 // pred_check
          %p750 = pneg %p354
        $region138: #{decoder_forward.1} parent=111 // pred_check_branch
          %752 = sbr.rel (%p750) target = $region140
        $region139: #{decoder_forward.1} parent=111 // pred_region
          %753 = dma.done [#allocation12], 16
        $region140: #{decoder_forward.1} parent=111 // pred_fallthru
          _
        // Predicated region
        $region141: #{decoder_forward.1} parent=111 // pred_check
          %p754 = pneg %p438
        $region142: #{decoder_forward.1} parent=111 // pred_check_branch
          %756 = sbr.rel (%p754) target = $region144
        $region143: #{decoder_forward.1} parent=111 // pred_region
          %757 = dma.done [#allocation15], 16
        $region144: #{decoder_forward.1} parent=111 // pred_fallthru
          _
        // Predicated region
        $region145: #{decoder_forward.1} parent=111 // pred_check
          %p758 = pneg %p480
        $region146: #{decoder_forward.1} parent=111 // pred_check_branch
          %760 = sbr.rel (%p758) target = $region148
        $region147: #{decoder_forward.1} parent=111 // pred_region
          %761 = dma.done [#allocation15], 16
        $region148: #{decoder_forward.1} parent=111 // pred_fallthru
          _
        %p762 = scmp.lt.s32.totalorder %s39, 1
        %s763 = scalar_select %p762, %s39, 1
        %s764 = scalar_lea.vmem %s0, %s763
        %p765 = pneg %p60
        %p766 = pneg %p57
        %p767 = pneg %p81
        %p768 = pneg %p78
        %p769 = pneg %p102
        %p770 = pneg %p99
        %p771 = pneg %p123
        %p772 = pneg %p120
        %p773 = pneg %p144
        %p774 = pneg %p141
        %p775 = pneg %p165
        %p776 = pneg %p162
        %p777 = pneg %p186
        %p778 = pneg %p183
        %p779 = pneg %p207
        %p780 = pneg %p204
        %p781 = pneg %p228
        %p782 = pneg %p225
        %p783 = pneg %p249
        %p784 = pneg %p246
        %p785 = pneg %p270
        %p786 = pneg %p267
        %p787 = pneg %p291
        %p788 = pneg %p288
        %p789 = pneg %p312
        %p790 = pneg %p309
        %p791 = pneg %p333
        %p792 = pneg %p330
        %p793 = pneg %p354
        %p794 = pneg %p351
        %p795 = pneg %p375
        %p796 = pneg %p372
        %p797 = pneg %p396
        %p798 = pneg %p393
        %p799 = pneg %p417
        %p800 = pneg %p414
        %p801 = pneg %p438
        %p802 = pneg %p435
        %p803 = pneg %p459
        %p804 = pneg %p456
        %p805 = pneg %p480
        %p806 = pneg %p477
        %p807 = pneg %p501
        %p808 = pneg %p498
        %p809 = pneg %p522
        %p810 = pneg %p519
        %p811 = pneg %p548
        %p812 = pneg %p545
        %p813 = scmp.lt.s32.totalorder %s39, 1
        %s814 = scalar_select %p813, %s39, 1
        %s815 = smul.addr %s814, 8
        %s816 = scalar_lea.vmem %s23, %s815
        %p817 = scmp.lt.s32.totalorder %s39, 1
        %s818 = scalar_select %p817, %s39, 1
        %s819 = scalar_lea.vmem %s0, %s818
        %p820 = scmp.lt.s32.totalorder %s39, 1
        %s821 = scalar_select %p820, %s39, 1
        %s822 = smul.addr %s821, 8
        %s823 = scalar_lea.vmem %s23, %s822
        %vm824 = vcmask 523264
        %825 = vst.msk [vmem:[#allocation2] sm:$0xff] %vm824, 0.0
        %826 = vst.msk [vmem:[#allocation2 + $0x8] sm:$0xff] %vm824, 0.0
        %827 = vst.msk [vmem:[#allocation2 + $0x10] sm:$0xff] %vm824, 0.0
        %828 = vst.msk [vmem:[#allocation2 + $0x18] sm:$0xff] %vm824, 0.0
        %829 = vst.msk [vmem:[#allocation2 + $0x20] sm:$0xff] %vm824, 0.0
        %830 = vst.msk [vmem:[#allocation2 + $0x28] sm:$0xff] %vm824, 0.0
        %831 = vst.msk [vmem:[#allocation2 + $0x30] sm:$0xff] %vm824, 0.0
        %832 = vst.msk [vmem:[#allocation2 + $0x38] sm:$0xff] %vm824, 0.0
        %833 = vst.msk [vmem:[#allocation2 + $0x40] sm:$0xff] %vm824, 0.0
        %834 = vst.msk [vmem:[#allocation2 + $0x48] sm:$0xff] %vm824, 0.0
        %835 = vst.msk [vmem:[#allocation2 + $0x50] sm:$0xff] %vm824, 0.0
        %836 = vst.msk [vmem:[#allocation2 + $0x58] sm:$0xff] %vm824, 0.0
        %837 = vst.msk [vmem:[#allocation2 + $0x60] sm:$0xff] %vm824, 0.0
        %838 = vst.msk [vmem:[#allocation2 + $0x68] sm:$0xff] %vm824, 0.0
        %839 = vst.msk [vmem:[#allocation2 + $0x70] sm:$0xff] %vm824, 0.0
        %840 = vst.msk [vmem:[#allocation2 + $0x78] sm:$0xff] %vm824, 0.0
        %841 = vst.msk [vmem:[#allocation2 + $0x80] sm:$0xff] %vm824, 0.0
        %842 = vst.msk [vmem:[#allocation2 + $0x88] sm:$0xff] %vm824, 0.0
        %843 = vst.msk [vmem:[#allocation2 + $0x90] sm:$0xff] %vm824, 0.0
        %844 = vst.msk [vmem:[#allocation2 + $0x98] sm:$0xff] %vm824, 0.0
        %845 = vst.msk [vmem:[#allocation2 + $0xa0] sm:$0xff] %vm824, 0.0
        %846 = vst.msk [vmem:[#allocation2 + $0xa8] sm:$0xff] %vm824, 0.0
        %847 = vst.msk [vmem:[#allocation2 + $0xb0] sm:$0xff] %vm824, 0.0
        %848 = vst.msk [vmem:[#allocation2 + $0xb8] sm:$0xff] %vm824, 0.0
        %v849 = vld [vmem:[%s819] sm:$0x1]
        %v850 = vld [vmem:[#allocation3] sm:$0xff]
        %v851 = vld [vmem:[#allocation3 + $0x8] sm:$0xf]
        %v852 = vld [vmem:[%s2] sm:$0x1]
        %vm853 = vcmask 97280
        %v855 = vsel %vm853, %v849, 0
        %vm857 = vcmask 1043456
        %v859 = vsel %vm857, %v851, 0
        %861 = vmatprep.subr.mxu0 0.0
        %862 = vmatpush1.msra.mxu0 %v850
        %863 = vmatprep.subr.mxu0 0.0
        %864 = vmatpush1.msra.mxu0 %v859
        %865 = vmatprep.subr.mxu0 0.0
        %866 = vmatpush1.msra.mxu0 0.0
        %867 = vmatprep.subr.mxu0 0.0
        %868 = vmatpush1.msra.mxu0 0.0
        %869 = vmatprep.subr.mxu0 0.0
        %870 = vmatpush1.msra.mxu0 0.0
        %871 = vmatprep.subr.mxu0 0.0
        %872 = vmatpush1.msra.mxu0 0.0
        %873 = vmatprep.subr.mxu0 0.0
        %874 = vmatpush1.msra.mxu0 0.0
        %875 = vmatprep.subr.mxu0 0.0
        %876 = vmatpush1.msra.mxu0 0.0
        %877 = vmatprep.subr.mxu0 0.0
        %878 = vmatpush1.msra.mxu0 0.0
        %879 = vmatprep.subr.mxu0 0.0
        %880 = vmatpush1.msra.mxu0 0.0
        %881 = vmatprep.subr.mxu0 0.0
        %882 = vmatpush1.msra.mxu0 0.0
        %883 = vmatprep.subr.mxu0 0.0
        %884 = vmatpush1.msra.mxu0 0.0
        %885 = vmatprep.subr.mxu0 0.0
        %886 = vmatpush1.msra.mxu0 0.0
        %887 = vmatprep.subr.mxu0 0.0
        %888 = vmatpush1.msra.mxu0 0.0
        %889 = vmatprep.subr.mxu0 0.0
        %890 = vmatpush1.msra.mxu0 0.0
        %891 = vmatprep.subr.mxu0 0.0
        %892 = vmatpush1.msra.mxu0 0.0
        %893 = vmatprep.subr.mxu0 0.0
        %894 = vmatpush1.msra.mxu0 0.0
        %895 = vmatprep.subr.mxu0 0.0
        %896 = vmatpush1.msra.mxu0 0.0
        %897 = vmatprep.subr.mxu0 0.0
        %898 = vmatpush1.msra.mxu0 0.0
        %899 = vmatprep.subr.mxu0 0.0
        %900 = vmatpush1.msra.mxu0 0.0
        %901 = vmatprep.subr.mxu0 0.0
        %902 = vmatpush1.msra.mxu0 0.0
        %903 = vmatprep.subr.mxu0 0.0
        %904 = vmatpush1.msra.mxu0 0.0
        %905 = vmatprep.subr.mxu0 0.0
        %906 = vmatpush1.msra.mxu0 0.0
        %907 = vmatprep.subr.mxu0 0.0
        %908 = vmatpush1.msra.mxu0 0.0
        %909 = vmatprep.subr.mxu0 0.0
        %910 = vmatpush1.msra.mxu0 0.0
        %911 = vmatprep.subr.mxu0 0.0
        %912 = vmatpush1.msra.mxu0 0.0
        %913 = vmatprep.subr.mxu0 0.0
        %914 = vmatpush1.msra.mxu0 0.0
        %915 = vmatprep.subr.mxu0 0.0
        %916 = vmatpush1.msra.mxu0 0.0
        %917 = vmatprep.subr.mxu0 0.0
        %918 = vmatpush1.msra.mxu0 0.0
        %919 = vmatprep.subr.mxu0 0.0
        %920 = vmatpush1.msra.mxu0 0.0
        %921 = vmatprep.subr.mxu0 0.0
        %922 = vmatpush1.msra.mxu0 0.0
        %923 = vmatprep.subr.mxu0 0.0
        %924 = vmatpush1.msra.mxu0 0.0
        %925 = vmatprep.mubr.f32.mxu0 0.0
        %926 = vmatmul.mubr.f32.gmra.mrb[0].mxu0 %v855
        %v927 = vpop.f32.mrb[0].mxu0
        %v928 = vadd.f32 %v852, %v927
        %v929 = vpop.f32.mrb[0].mxu0
        %930 = vdwg.mxu0
        %v931 = vld [vmem:[%s5] sm:$0xff]
        %v932 = vld [vmem:[%s5 + $0x8] sm:$0xff]
        %v933 = vld [vmem:[%s5 + $0x10] sm:$0xff]
        %v934 = vld [vmem:[%s5 + $0x18] sm:$0xff]
        %vm935 = vcmask 261120
        %v937 = vsel %vm935, %v928, 0
        %939 = vmatprep.subr.mxu0 0.0
        %940 = vmatpush1.msra.mxu0 %v931
        %941 = vmatprep.subr.mxu0 0.0
        %942 = vmatpush1.msra.mxu0 %v932
        %943 = vmatprep.subr.mxu0 0.0
        %944 = vmatpush1.msra.mxu0 %v933
        %945 = vmatprep.subr.mxu0 0.0
        %946 = vmatpush1.msra.mxu0 %v934
        %947 = vmatprep.subr.mxu0 0.0
        %948 = vmatpush1.msra.mxu0 0.0
        %949 = vmatprep.subr.mxu0 0.0
        %950 = vmatpush1.msra.mxu0 0.0
        %951 = vmatprep.subr.mxu0 0.0
        %952 = vmatpush1.msra.mxu0 0.0
        %953 = vmatprep.subr.mxu0 0.0
        %954 = vmatpush1.msra.mxu0 0.0
        %955 = vmatprep.subr.mxu0 0.0
        %956 = vmatpush1.msra.mxu0 0.0
        %957 = vmatprep.subr.mxu0 0.0
        %958 = vmatpush1.msra.mxu0 0.0
        %959 = vmatprep.subr.mxu0 0.0
        %960 = vmatpush1.msra.mxu0 0.0
        %961 = vmatprep.subr.mxu0 0.0
        %962 = vmatpush1.msra.mxu0 0.0
        %963 = vmatprep.subr.mxu0 0.0
        %964 = vmatpush1.msra.mxu0 0.0
        %965 = vmatprep.subr.mxu0 0.0
        %966 = vmatpush1.msra.mxu0 0.0
        %967 = vmatprep.subr.mxu0 0.0
        %968 = vmatpush1.msra.mxu0 0.0
        %969 = vmatprep.subr.mxu0 0.0
        %970 = vmatpush1.msra.mxu0 0.0
        %971 = vmatprep.subr.mxu0 0.0
        %972 = vmatpush1.msra.mxu0 0.0
        %973 = vmatprep.subr.mxu0 0.0
        %974 = vmatpush1.msra.mxu0 0.0
        %975 = vmatprep.subr.mxu0 0.0
        %976 = vmatpush1.msra.mxu0 0.0
        %977 = vmatprep.subr.mxu0 0.0
        %978 = vmatpush1.msra.mxu0 0.0
        %979 = vmatprep.subr.mxu0 0.0
        %980 = vmatpush1.msra.mxu0 0.0
        %981 = vmatprep.subr.mxu0 0.0
        %982 = vmatpush1.msra.mxu0 0.0
        %983 = vmatprep.subr.mxu0 0.0
        %984 = vmatpush1.msra.mxu0 0.0
        %985 = vmatprep.subr.mxu0 0.0
        %986 = vmatpush1.msra.mxu0 0.0
        %987 = vmatprep.subr.mxu0 0.0
        %988 = vmatpush1.msra.mxu0 0.0
        %989 = vmatprep.subr.mxu0 0.0
        %990 = vmatpush1.msra.mxu0 0.0
        %991 = vmatprep.subr.mxu0 0.0
        %992 = vmatpush1.msra.mxu0 0.0
        %993 = vmatprep.subr.mxu0 0.0
        %994 = vmatpush1.msra.mxu0 0.0
        %995 = vmatprep.subr.mxu0 0.0
        %996 = vmatpush1.msra.mxu0 0.0
        %997 = vmatprep.subr.mxu0 0.0
        %998 = vmatpush1.msra.mxu0 0.0
        %999 = vmatprep.subr.mxu0 0.0
        %1000 = vmatpush1.msra.mxu0 0.0
        %1001 = vmatprep.subr.mxu0 0.0
        %1002 = vmatpush1.msra.mxu0 0.0
        %1003 = vmatprep.mubr.f32.mxu0 0.0
        %1004 = vmatmul.mubr.f32.gmra.mrb[0].mxu0 %v937
        %v1005 = vpop.f32.mrb[0].mxu0
        %v1006 = vadd.f32 0.0, %v1005
        %v1007 = vpop.f32.mrb[0].mxu0
        %1008 = vdwg.mxu0
        %v1009 = vld [vmem:[%s3] sm:$0xff]
        %v1010 = vld [vmem:[%s3 + $0x8] sm:$0xff]
        %1012 = vset.pattern.permute.xlu0 0
        %1013 = vperm.xlu0 %1012, %v1009
        %v1014 = vpop.permute.xlu0 %1013
        %1017 = vset.pattern.permute.xlu0 0
        %1018 = vperm.xlu0 %1017, %v1010
        %v1019 = vpop.permute.xlu0 %1018
        %v1021 = vlaneseq
        %v1022 = vshrl.u32 %v1021, 7
        %v1023 = vsub.s32 0, %v1022
        %v1024 = vrot.slane %v1006, %v1023
        %v1025 = vmul.f32 %v1014, %v1024
        %v1026 = vmul.f32 %v1019, %v1024
        %v1027 = vadd.f32 %v1025, 0.0
        %v1028 = vadd.f32 %v1026, 0.0
        %s1029 = scalar_lea.vmem %s5, 32
        %v1030 = vld [vmem:[%s1029] sm:$0xff]
        %v1031 = vld [vmem:[%s1029 + $0x8] sm:$0xff]
        %v1032 = vld [vmem:[%s1029 + $0x10] sm:$0xff]
        %v1033 = vld [vmem:[%s1029 + $0x18] sm:$0xff]
        %1034 = vmatprep.subr.mxu0 0.0
        %1035 = vmatpush1.msra.mxu0 %v1030
        %1036 = vmatprep.subr.mxu0 0.0
        %1037 = vmatpush1.msra.mxu0 %v1031
        %1038 = vmatprep.subr.mxu0 0.0
        %1039 = vmatpush1.msra.mxu0 %v1032
        %1040 = vmatprep.subr.mxu0 0.0
        %1041 = vmatpush1.msra.mxu0 %v1033
        %1042 = vmatprep.subr.mxu0 0.0
        %1043 = vmatpush1.msra.mxu0 0.0
        %1044 = vmatprep.subr.mxu0 0.0
        %1045 = vmatpush1.msra.mxu0 0.0
        %1046 = vmatprep.subr.mxu0 0.0
        %1047 = vmatpush1.msra.mxu0 0.0
        %1048 = vmatprep.subr.mxu0 0.0
        %1049 = vmatpush1.msra.mxu0 0.0
        %1050 = vmatprep.subr.mxu0 0.0
        %1051 = vmatpush1.msra.mxu0 0.0
        %1052 = vmatprep.subr.mxu0 0.0
        %1053 = vmatpush1.msra.mxu0 0.0
        %1054 = vmatprep.subr.mxu0 0.0
        %1055 = vmatpush1.msra.mxu0 0.0
        %1056 = vmatprep.subr.mxu0 0.0
        %1057 = vmatpush1.msra.mxu0 0.0
        %1058 = vmatprep.subr.mxu0 0.0
        %1059 = vmatpush1.msra.mxu0 0.0
        %1060 = vmatprep.subr.mxu0 0.0
        %1061 = vmatpush1.msra.mxu0 0.0
        %1062 = vmatprep.subr.mxu0 0.0
        %1063 = vmatpush1.msra.mxu0 0.0
        %1064 = vmatprep.subr.mxu0 0.0
        %1065 = vmatpush1.msra.mxu0 0.0
        %1066 = vmatprep.subr.mxu0 0.0
        %1067 = vmatpush1.msra.mxu0 0.0
        %1068 = vmatprep.subr.mxu0 0.0
        %1069 = vmatpush1.msra.mxu0 0.0
        %1070 = vmatprep.subr.mxu0 0.0
        %1071 = vmatpush1.msra.mxu0 0.0
        %1072 = vmatprep.subr.mxu0 0.0
        %1073 = vmatpush1.msra.mxu0 0.0
        %1074 = vmatprep.subr.mxu0 0.0
        %1075 = vmatpush1.msra.mxu0 0.0
        %1076 = vmatprep.subr.mxu0 0.0
        %1077 = vmatpush1.msra.mxu0 0.0
        %1078 = vmatprep.subr.mxu0 0.0
        %1079 = vmatpush1.msra.mxu0 0.0
        %1080 = vmatprep.subr.mxu0 0.0
        %1081 = vmatpush1.msra.mxu0 0.0
        %1082 = vmatprep.subr.mxu0 0.0
        %1083 = vmatpush1.msra.mxu0 0.0
        %1084 = vmatprep.subr.mxu0 0.0
        %1085 = vmatpush1.msra.mxu0 0.0
        %1086 = vmatprep.subr.mxu0 0.0
        %1087 = vmatpush1.msra.mxu0 0.0
        %1088 = vmatprep.subr.mxu0 0.0
        %1089 = vmatpush1.msra.mxu0 0.0
        %1090 = vmatprep.subr.mxu0 0.0
        %1091 = vmatpush1.msra.mxu0 0.0
        %1092 = vmatprep.subr.mxu0 0.0
        %1093 = vmatpush1.msra.mxu0 0.0
        %1094 = vmatprep.subr.mxu0 0.0
        %1095 = vmatpush1.msra.mxu0 0.0
        %1096 = vmatprep.subr.mxu0 0.0
        %1097 = vmatpush1.msra.mxu0 0.0
        %1098 = vmatprep.mubr.f32.mxu0 0.0
        %1099 = vmatmul.mubr.f32.gmra.mrb[0].mxu0 %v937
        %v1100 = vpop.f32.mrb[0].mxu0
        %v1101 = vadd.f32 0.0, %v1100
        %v1102 = vpop.f32.mrb[0].mxu0
        %1103 = vdwg.mxu0
        %1104 = vset.pattern.permute.xlu0 1
        %1105 = vperm.xlu0 %1104, %v1009
        %v1106 = vpop.permute.xlu0 %1105
        %1108 = vset.pattern.permute.xlu0 1
        %1109 = vperm.xlu0 %1108, %v1010
        %v1110 = vpop.permute.xlu0 %1109
        %v1112 = vlaneseq
        %v1113 = vshrl.u32 %v1112, 7
        %v1114 = vsub.s32 0, %v1113
        %v1115 = vrot.slane %v1101, %v1114
        %v1116 = vmul.f32 %v1106, %v1115
        %v1117 = vmul.f32 %v1110, %v1115
        %v1118 = vadd.f32 %v1027, %v1116
        %v1119 = vadd.f32 %v1028, %v1117
        %s1120 = scalar_lea.vmem %s5, 64
        %v1121 = vld [vmem:[%s1120] sm:$0xff]
        %v1122 = vld [vmem:[%s1120 + $0x8] sm:$0xff]
        %v1123 = vld [vmem:[%s1120 + $0x10] sm:$0xff]
        %v1124 = vld [vmem:[%s1120 + $0x18] sm:$0xff]
        %1125 = vmatprep.subr.mxu0 0.0
        %1126 = vmatpush1.msra.mxu0 %v1121
        %1127 = vmatprep.subr.mxu0 0.0
        %1128 = vmatpush1.msra.mxu0 %v1122
        %1129 = vmatprep.subr.mxu0 0.0
        %1130 = vmatpush1.msra.mxu0 %v1123
        %1131 = vmatprep.subr.mxu0 0.0
        %1132 = vmatpush1.msra.mxu0 %v1124
        %1133 = vmatprep.subr.mxu0 0.0
        %1134 = vmatpush1.msra.mxu0 0.0
        %1135 = vmatprep.subr.mxu0 0.0
        %1136 = vmatpush1.msra.mxu0 0.0
        %1137 = vmatprep.subr.mxu0 0.0
        %1138 = vmatpush1.msra.mxu0 0.0
        %1139 = vmatprep.subr.mxu0 0.0
        %1140 = vmatpush1.msra.mxu0 0.0
        %1141 = vmatprep.subr.mxu0 0.0
        %1142 = vmatpush1.msra.mxu0 0.0
        %1143 = vmatprep.subr.mxu0 0.0
        %1144 = vmatpush1.msra.mxu0 0.0
        %1145 = vmatprep.subr.mxu0 0.0
        %1146 = vmatpush1.msra.mxu0 0.0
        %1147 = vmatprep.subr.mxu0 0.0
        %1148 = vmatpush1.msra.mxu0 0.0
        %1149 = vmatprep.subr.mxu0 0.0
        %1150 = vmatpush1.msra.mxu0 0.0
        %1151 = vmatprep.subr.mxu0 0.0
        %1152 = vmatpush1.msra.mxu0 0.0
        %1153 = vmatprep.subr.mxu0 0.0
        %1154 = vmatpush1.msra.mxu0 0.0
        %1155 = vmatprep.subr.mxu0 0.0
        %1156 = vmatpush1.msra.mxu0 0.0
        %1157 = vmatprep.subr.mxu0 0.0
        %1158 = vmatpush1.msra.mxu0 0.0
        %1159 = vmatprep.subr.mxu0 0.0
        %1160 = vmatpush1.msra.mxu0 0.0
        %1161 = vmatprep.subr.mxu0 0.0
        %1162 = vmatpush1.msra.mxu0 0.0
        %1163 = vmatprep.subr.mxu0 0.0
        %1164 = vmatpush1.msra.mxu0 0.0
        %1165 = vmatprep.subr.mxu0 0.0
        %1166 = vmatpush1.msra.mxu0 0.0
        %1167 = vmatprep.subr.mxu0 0.0
        %1168 = vmatpush1.msra.mxu0 0.0
        %1169 = vmatprep.subr.mxu0 0.0
        %1170 = vmatpush1.msra.mxu0 0.0
        %1171 = vmatprep.subr.mxu0 0.0
        %1172 = vmatpush1.msra.mxu0 0.0
        %1173 = vmatprep.subr.mxu0 0.0
        %1174 = vmatpush1.msra.mxu0 0.0
        %1175 = vmatprep.subr.mxu0 0.0
        %1176 = vmatpush1.msra.mxu0 0.0
        %1177 = vmatprep.subr.mxu0 0.0
        %1178 = vmatpush1.msra.mxu0 0.0
        %1179 = vmatprep.subr.mxu0 0.0
        %1180 = vmatpush1.msra.mxu0 0.0
        %1181 = vmatprep.subr.mxu0 0.0
        %1182 = vmatpush1.msra.mxu0 0.0
        %1183 = vmatprep.subr.mxu0 0.0
        %1184 = vmatpush1.msra.mxu0 0.0
        %1185 = vmatprep.subr.mxu0 0.0
        %1186 = vmatpush1.msra.mxu0 0.0
        %1187 = vmatprep.subr.mxu0 0.0
        %1188 = vmatpush1.msra.mxu0 0.0
        %1189 = vmatprep.mubr.f32.mxu0 0.0
        %1190 = vmatmul.mubr.f32.gmra.mrb[0].mxu0 %v937
        %v1191 = vpop.f32.mrb[0].mxu0
        %v1192 = vadd.f32 0.0, %v1191
        %v1193 = vpop.f32.mrb[0].mxu0
        %1194 = vdwg.mxu0
        %1195 = vset.pattern.permute.xlu0 2
        %1196 = vperm.xlu0 %1195, %v1009
        %v1197 = vpop.permute.xlu0 %1196
        %1199 = vset.pattern.permute.xlu0 2
        %1200 = vperm.xlu0 %1199, %v1010
        %v1201 = vpop.permute.xlu0 %1200
        %v1203 = vlaneseq
        %v1204 = vshrl.u32 %v1203, 7
        %v1205 = vsub.s32 0, %v1204
        %v1206 = vrot.slane %v1192, %v1205
        %v1207 = vmul.f32 %v1197, %v1206
        %v1208 = vmul.f32 %v1201, %v1206
        %v1209 = vadd.f32 %v1118, %v1207
        %v1210 = vadd.f32 %v1119, %v1208
        %v1211 = vld [vmem:[#allocation5] sm:$0xff]
        %v1212 = vld [vmem:[#allocation5 + $0x8] sm:$0xff]
        %v1213 = vadd.f32 %v1209, %v1211
        %v1214 = vadd.f32 %v1210, %v1212
        %v1215 = vmax.f32 %v1213, 0.0
        %v1216 = vmax.f32 %v1214, 0.0
        %s1217 = scalar_lea.vmem [#allocation2], 32
        %1218 = vst.msk [vmem:[%s1217] sm:$0xff] %vm935, %v1215
        %1219 = vst.msk [vmem:[%s1217 + $0x8] sm:$0xff] %vm935, %v1216
        %1220 = vst.msk [vmem:[%s1217 + $0x10] sm:$0xff] %vm935, %v1215
        %1221 = vst.msk [vmem:[%s1217 + $0x18] sm:$0xff] %vm935, %v1216
        %1222 = vst.msk [vmem:[%s1217 + $0x20] sm:$0xff] %vm935, %v1215
        %1223 = vst.msk [vmem:[%s1217 + $0x28] sm:$0xff] %vm935, %v1216
        %1224 = vst.msk [vmem:[%s1217 + $0x30] sm:$0xff] %vm935, %v1215
        %1225 = vst.msk [vmem:[%s1217 + $0x38] sm:$0xff] %vm935, %v1216
        %1226 = vst.msk [vmem:[%s1217 + $0x40] sm:$0xff] %vm935, %v1215
        %1227 = vst.msk [vmem:[%s1217 + $0x48] sm:$0xff] %vm935, %v1216
        %1228 = vst.msk [vmem:[%s1217 + $0x50] sm:$0xff] %vm935, %v1215
        %1229 = vst.msk [vmem:[%s1217 + $0x58] sm:$0xff] %vm935, %v1216
        %1230 = vst.msk [vmem:[%s1217 + $0x60] sm:$0xff] %vm935, %v1215
        %1231 = vst.msk [vmem:[%s1217 + $0x68] sm:$0xff] %vm935, %v1216
        %1232 = vst.msk [vmem:[%s1217 + $0x70] sm:$0xff] %vm935, %v1215
        %1233 = vst.msk [vmem:[%s1217 + $0x78] sm:$0xff] %vm935, %v1216
        %s1234 = scalar_lea.vmem [#allocation2], 64
        %v1235 = vld [vmem:[%s1234] sm:$0xff]
        %v1236 = vld [vmem:[%s1234 + $0x8] sm:$0xff]
        %v1237 = vld [vmem:[%s1234 + $0x10] sm:$0xff]
        %v1238 = vld [vmem:[%s1234 + $0x18] sm:$0xff]
        %v1239 = vld [vmem:[%s1234 + $0x20] sm:$0xff]
        %v1240 = vld [vmem:[%s1234 + $0x28] sm:$0xff]
        %v1241 = vld [vmem:[%s1234 + $0x30] sm:$0xff]
        %v1242 = vld [vmem:[%s1234 + $0x38] sm:$0xff]
        %v1243 = vld [vmem:[%s1234 + $0x40] sm:$0xff]
        %v1244 = vld [vmem:[%s1234 + $0x48] sm:$0xff]
        %v1245 = vld [vmem:[%s1234 + $0x50] sm:$0xff]
        %v1246 = vld [vmem:[%s1234 + $0x58] sm:$0xff]
        %v1247 = vld [vmem:[%s1234 + $0x60] sm:$0xff]
        %v1248 = vld [vmem:[%s1234 + $0x68] sm:$0xff]
        %v1249 = vld [vmem:[%s1234 + $0x70] sm:$0xff]
        %v1250 = vld [vmem:[%s1234 + $0x78] sm:$0xff]
        %v1251 = vld [vmem:[%s7] sm:$0xff]
        %v1252 = vld [vmem:[%s7 + $0x8] sm:$0xff]
        %v1253 = vld [vmem:[%s7 + $0x10] sm:$0xff]
        %v1254 = vld [vmem:[%s7 + $0x18] sm:$0xff]
        %s1255 = scalar_lea.vmem [#allocation2], 48
        %v1256 = vld [vmem:[%s1255] sm:$0xff]
        %v1257 = vld [vmem:[%s1255 + $0x8] sm:$0xff]
        %v1258 = vld [vmem:[%s1255 + $0x10] sm:$0xff]
        %v1259 = vld [vmem:[%s1255 + $0x18] sm:$0xff]
        %v1260 = vld [vmem:[%s1255 + $0x20] sm:$0xff]
        %v1261 = vld [vmem:[%s1255 + $0x28] sm:$0xff]
        %v1262 = vld [vmem:[%s1255 + $0x30] sm:$0xff]
        %v1263 = vld [vmem:[%s1255 + $0x38] sm:$0xff]
        %v1264 = vld [vmem:[%s1255 + $0x40] sm:$0xff]
        %v1265 = vld [vmem:[%s1255 + $0x48] sm:$0xff]
        %v1266 = vld [vmem:[%s1255 + $0x50] sm:$0xff]
        %v1267 = vld [vmem:[%s1255 + $0x58] sm:$0xff]
        %v1268 = vld [vmem:[%s1255 + $0x60] sm:$0xff]
        %v1269 = vld [vmem:[%s1255 + $0x68] sm:$0xff]
        %v1270 = vld [vmem:[%s1255 + $0x70] sm:$0xff]
        %v1271 = vld [vmem:[%s1255 + $0x78] sm:$0xff]
        %s1272 = scalar_lea.vmem %s7, 32
        %v1273 = vld [vmem:[%s1272] sm:$0xff]
        %v1274 = vld [vmem:[%s1272 + $0x8] sm:$0xff]
        %v1275 = vld [vmem:[%s1272 + $0x10] sm:$0xff]
        %v1276 = vld [vmem:[%s1272 + $0x18] sm:$0xff]
        %v1278 = vsel %vm935, %v1256, 0
        %v1281 = vsel %vm935, %v1257, 0
        %v1284 = vsel %vm935, %v1258, 0
        %v1287 = vsel %vm935, %v1259, 0
        %v1290 = vsel %vm935, %v1260, 0
        %v1293 = vsel %vm935, %v1261, 0
        %v1296 = vsel %vm935, %v1262, 0
        %v1299 = vsel %vm935, %v1263, 0
        %v1302 = vsel %vm935, %v1264, 0
        %v1305 = vsel %vm935, %v1265, 0
        %v1308 = vsel %vm935, %v1266, 0
        %v1311 = vsel %vm935, %v1267, 0
        %v1314 = vsel %vm935, %v1268, 0
        %v1317 = vsel %vm935, %v1269, 0
        %v1320 = vsel %vm935, %v1270, 0
        %v1323 = vsel %vm935, %v1271, 0
        %1325 = vmatprep.subr.mxu0 0.0
        %1326 = vmatpush1.msra.mxu0 %v1273
        %1327 = vmatprep.subr.mxu0 0.0
        %1328 = vmatpush1.msra.mxu0 %v1274
        %1329 = vmatprep.subr.mxu0 0.0
        %1330 = vmatpush1.msra.mxu0 %v1275
        %1331 = vmatprep.subr.mxu0 0.0
        %1332 = vmatpush1.msra.mxu0 %v1276
        %1333 = vmatprep.subr.mxu0 0.0
        %1334 = vmatpush1.msra.mxu0 0.0
        %1335 = vmatprep.subr.mxu0 0.0
        %1336 = vmatpush1.msra.mxu0 0.0
        %1337 = vmatprep.subr.mxu0 0.0
        %1338 = vmatpush1.msra.mxu0 0.0
        %1339 = vmatprep.subr.mxu0 0.0
        %1340 = vmatpush1.msra.mxu0 0.0
        %1341 = vmatprep.subr.mxu0 0.0
        %1342 = vmatpush1.msra.mxu0 0.0
        %1343 = vmatprep.subr.mxu0 0.0
        %1344 = vmatpush1.msra.mxu0 0.0
        %1345 = vmatprep.subr.mxu0 0.0
        %1346 = vmatpush1.msra.mxu0 0.0
        %1347 = vmatprep.subr.mxu0 0.0
        %1348 = vmatpush1.msra.mxu0 0.0
        %1349 = vmatprep.subr.mxu0 0.0
        %1350 = vmatpush1.msra.mxu0 0.0
        %1351 = vmatprep.subr.mxu0 0.0
        %1352 = vmatpush1.msra.mxu0 0.0
        %1353 = vmatprep.subr.mxu0 0.0
        %1354 = vmatpush1.msra.mxu0 0.0
        %1355 = vmatprep.subr.mxu0 0.0
        %1356 = vmatpush1.msra.mxu0 0.0
        %1357 = vmatprep.subr.mxu0 0.0
        %1358 = vmatpush1.msra.mxu0 0.0
        %1359 = vmatprep.subr.mxu0 0.0
        %1360 = vmatpush1.msra.mxu0 0.0
        %1361 = vmatprep.subr.mxu0 0.0
        %1362 = vmatpush1.msra.mxu0 0.0
        %1363 = vmatprep.subr.mxu0 0.0
        %1364 = vmatpush1.msra.mxu0 0.0
        %1365 = vmatprep.subr.mxu0 0.0
        %1366 = vmatpush1.msra.mxu0 0.0
        %1367 = vmatprep.subr.mxu0 0.0
        %1368 = vmatpush1.msra.mxu0 0.0
        %1369 = vmatprep.subr.mxu0 0.0
        %1370 = vmatpush1.msra.mxu0 0.0
        %1371 = vmatprep.subr.mxu0 0.0
        %1372 = vmatpush1.msra.mxu0 0.0
        %1373 = vmatprep.subr.mxu0 0.0
        %1374 = vmatpush1.msra.mxu0 0.0
        %1375 = vmatprep.subr.mxu0 0.0
        %1376 = vmatpush1.msra.mxu0 0.0
        %1377 = vmatprep.subr.mxu0 0.0
        %1378 = vmatpush1.msra.mxu0 0.0
        %1379 = vmatprep.subr.mxu0 0.0
        %1380 = vmatpush1.msra.mxu0 0.0
        %1381 = vmatprep.subr.mxu0 0.0
        %1382 = vmatpush1.msra.mxu0 0.0
        %1383 = vmatprep.subr.mxu0 0.0
        %1384 = vmatpush1.msra.mxu0 0.0
        %1385 = vmatprep.subr.mxu0 0.0
        %1386 = vmatpush1.msra.mxu0 0.0
        %1387 = vmatprep.subr.mxu0 0.0
        %1388 = vmatpush1.msra.mxu0 0.0
        %1389 = vmatprep.mubr.f32.mxu0 0.0
        %1390 = vmatmul.mubr.f32.gmra.mrb[0].mxu0 %v1278
        %v1391 = vpop.f32.mrb[0].mxu0
        %v1392 = vadd.f32 0.0, %v1391
        %v1393 = vpop.f32.mrb[0].mxu0
        %1394 = vmatprep.mubr.f32.mxu0 0.0
        %1395 = vmatmul.mubr.f32.gmra.mrb[0].mxu0 %v1281
        %v1396 = vpop.f32.mrb[0].mxu0
        %v1397 = vadd.f32 0.0, %v1396
        %v1398 = vpop.f32.mrb[0].mxu0
        %1399 = vmatprep.mubr.f32.mxu0 0.0
        %1400 = vmatmul.mubr.f32.gmra.mrb[0].mxu0 %v1284
        %v1401 = vpop.f32.mrb[0].mxu0
        %v1402 = vadd.f32 0.0, %v1401
        %v1403 = vpop.f32.mrb[0].mxu0
        %1404 = vmatprep.mubr.f32.mxu0 0.0
        %1405 = vmatmul.mubr.f32.gmra.mrb[0].mxu0 %v1287
        %v1406 = vpop.f32.mrb[0].mxu0
        %v1407 = vadd.f32 0.0, %v1406
        %v1408 = vpop.f32.mrb[0].mxu0
        %1409 = vmatprep.mubr.f32.mxu0 0.0
        %1410 = vmatmul.mubr.f32.gmra.mrb[0].mxu0 %v1290
        %v1411 = vpop.f32.mrb[0].mxu0
        %v1412 = vadd.f32 0.0, %v1411
        %v1413 = vpop.f32.mrb[0].mxu0
        %1414 = vmatprep.mubr.f32.mxu0 0.0
        %1415 = vmatmul.mubr.f32.gmra.mrb[0].mxu0 %v1293
        %v1416 = vpop.f32.mrb[0].mxu0
        %v1417 = vadd.f32 0.0, %v1416
        %v1418 = vpop.f32.mrb[0].mxu0
        %1419 = vmatprep.mubr.f32.mxu0 0.0
        %1420 = vmatmul.mubr.f32.gmra.mrb[0].mxu0 %v1296
        %v1421 = vpop.f32.mrb[0].mxu0
        %v1422 = vadd.f32 0.0, %v1421
        %v1423 = vpop.f32.mrb[0].mxu0
        %1424 = vmatprep.mubr.f32.mxu0 0.0
        %1425 = vmatmul.mubr.f32.gmra.mrb[0].mxu0 %v1299
        %v1426 = vpop.f32.mrb[0].mxu0
        %v1427 = vadd.f32 0.0, %v1426
        %v1428 = vpop.f32.mrb[0].mxu0
        %1429 = vmatprep.mubr.f32.mxu0 0.0
        %1430 = vmatmul.mubr.f32.gmra.mrb[0].mxu0 %v1302
        %v1431 = vpop.f32.mrb[0].mxu0
        %v1432 = vadd.f32 0.0, %v1431
        %v1433 = vpop.f32.mrb[0].mxu0
        %1434 = vmatprep.mubr.f32.mxu0 0.0
        %1435 = vmatmul.mubr.f32.gmra.mrb[0].mxu0 %v1305
        %v1436 = vpop.f32.mrb[0].mxu0
        %v1437 = vadd.f32 0.0, %v1436
        %v1438 = vpop.f32.mrb[0].mxu0
        %1439 = vmatprep.mubr.f32.mxu0 0.0
        %1440 = vmatmul.mubr.f32.gmra.mrb[0].mxu0 %v1308
        %v1441 = vpop.f32.mrb[0].mxu0
        %v1442 = vadd.f32 0.0, %v1441
        %v1443 = vpop.f32.mrb[0].mxu0
        %1444 = vmatprep.mubr.f32.mxu0 0.0
        %1445 = vmatmul.mubr.f32.gmra.mrb[0].mxu0 %v1311
        %v1446 = vpop.f32.mrb[0].mxu0
        %v1447 = vadd.f32 0.0, %v1446
        %v1448 = vpop.f32.mrb[0].mxu0
        %1449 = vmatprep.mubr.f32.mxu0 0.0
        %1450 = vmatmul.mubr.f32.gmra.mrb[0].mxu0 %v1314
        %v1451 = vpop.f32.mrb[0].mxu0
        %v1452 = vadd.f32 0.0, %v1451
        %v1453 = vpop.f32.mrb[0].mxu0
        %1454 = vmatprep.mubr.f32.mxu0 0.0
        %1455 = vmatmul.mubr.f32.gmra.mrb[0].mxu0 %v1317
        %v1456 = vpop.f32.mrb[0].mxu0
        %v1457 = vadd.f32 0.0, %v1456
        %v1458 = vpop.f32.mrb[0].mxu0
        %1459 = vmatprep.mubr.f32.mxu0 0.0
        %1460 = vmatmul.mubr.f32.gmra.mrb[0].mxu0 %v1320
        %v1461 = vpop.f32.mrb[0].mxu0
        %v1462 = vadd.f32 0.0, %v1461
        %v1463 = vpop.f32.mrb[0].mxu0
        %1464 = vmatprep.mubr.f32.mxu0 0.0
        %1465 = vmatmul.mubr.f32.gmra.mrb[0].mxu0 %v1323
        %v1466 = vpop.f32.mrb[0].mxu0
        %v1467 = vadd.f32 0.0, %v1466
        %v1468 = vpop.f32.mrb[0].mxu0
        %1469 = vdwg.mxu0
        %v1471 = vsel %vm935, %v1235, 0
        %v1474 = vsel %vm935, %v1236, 0
        %v1477 = vsel %vm935, %v1237, 0
        %v1480 = vsel %vm935, %v1238, 0
        %v1483 = vsel %vm935, %v1239, 0
        %v1486 = vsel %vm935, %v1240, 0
        %v1489 = vsel %vm935, %v1241, 0
        %v1492 = vsel %vm935, %v1242, 0
        %v1495 = vsel %vm935, %v1243, 0
        %v1498 = vsel %vm935, %v1244, 0
        %v1501 = vsel %vm935, %v1245, 0
        %v1504 = vsel %vm935, %v1246, 0
        %v1507 = vsel %vm935, %v1247, 0
        %v1510 = vsel %vm935, %v1248, 0
        %v1513 = vsel %vm935, %v1249, 0
        %v1516 = vsel %vm935, %v1250, 0
        %1518 = vmatprep.subr.mxu0 0.0
        %1519 = vmatpush1.msra.mxu0 %v1251
        %1520 = vmatprep.subr.mxu0 0.0
        %1521 = vmatpush1.msra.mxu0 %v1252
        %1522 = vmatprep.subr.mxu0 0.0
        %1523 = vmatpush1.msra.mxu0 %v1253
        %1524 = vmatprep.subr.mxu0 0.0
        %1525 = vmatpush1.msra.mxu0 %v1254
        %1526 = vmatprep.subr.mxu0 0.0
        %1527 = vmatpush1.msra.mxu0 0.0
        %1528 = vmatprep.subr.mxu0 0.0
        %1529 = vmatpush1.msra.mxu0 0.0
        %1530 = vmatprep.subr.mxu0 0.0
        %1531 = vmatpush1.msra.mxu0 0.0
        %1532 = vmatprep.subr.mxu0 0.0
        %1533 = vmatpush1.msra.mxu0 0.0
        %1534 = vmatprep.subr.mxu0 0.0
        %1535 = vmatpush1.msra.mxu0 0.0
        %1536 = vmatprep.subr.mxu0 0.0
        %1537 = vmatpush1.msra.mxu0 0.0
        %1538 = vmatprep.subr.mxu0 0.0
        %1539 = vmatpush1.msra.mxu0 0.0
        %1540 = vmatprep.subr.mxu0 0.0
        %1541 = vmatpush1.msra.mxu0 0.0
        %1542 = vmatprep.subr.mxu0 0.0
        %1543 = vmatpush1.msra.mxu0 0.0
        %1544 = vmatprep.subr.mxu0 0.0
        %1545 = vmatpush1.msra.mxu0 0.0
        %1546 = vmatprep.subr.mxu0 0.0
        %1547 = vmatpush1.msra.mxu0 0.0
        %1548 = vmatprep.subr.mxu0 0.0
        %1549 = vmatpush1.msra.mxu0 0.0
        %1550 = vmatprep.subr.mxu0 0.0
        %1551 = vmatpush1.msra.mxu0 0.0
        %1552 = vmatprep.subr.mxu0 0.0
        %1553 = vmatpush1.msra.mxu0 0.0
        %1554 = vmatprep.subr.mxu0 0.0
        %1555 = vmatpush1.msra.mxu0 0.0
        %1556 = vmatprep.subr.mxu0 0.0
        %1557 = vmatpush1.msra.mxu0 0.0
        %1558 = vmatprep.subr.mxu0 0.0
        %1559 = vmatpush1.msra.mxu0 0.0
        %1560 = vmatprep.subr.mxu0 0.0
        %1561 = vmatpush1.msra.mxu0 0.0
        %1562 = vmatprep.subr.mxu0 0.0
        %1563 = vmatpush1.msra.mxu0 0.0
        %1564 = vmatprep.subr.mxu0 0.0
        %1565 = vmatpush1.msra.mxu0 0.0
        %1566 = vmatprep.subr.mxu0 0.0
        %1567 = vmatpush1.msra.mxu0 0.0
        %1568 = vmatprep.subr.mxu0 0.0
        %1569 = vmatpush1.msra.mxu0 0.0
        %1570 = vmatprep.subr.mxu0 0.0
        %1571 = vmatpush1.msra.mxu0 0.0
        %1572 = vmatprep.subr.mxu0 0.0
        %1573 = vmatpush1.msra.mxu0 0.0
        %1574 = vmatprep.subr.mxu0 0.0
        %1575 = vmatpush1.msra.mxu0 0.0
        %1576 = vmatprep.subr.mxu0 0.0
        %1577 = vmatpush1.msra.mxu0 0.0
        %1578 = vmatprep.subr.mxu0 0.0
        %1579 = vmatpush1.msra.mxu0 0.0
        %1580 = vmatprep.subr.mxu0 0.0
        %1581 = vmatpush1.msra.mxu0 0.0
        %1582 = vmatprep.mubr.f32.mxu0 0.0
        %1583 = vmatmul.mubr.f32.gmra.mrb[0].mxu0 %v1471
        %v1584 = vpop.f32.mrb[0].mxu0
        %v1585 = vadd.f32 %v1392, %v1584
        %v1586 = vpop.f32.mrb[0].mxu0
        %1587 = vmatprep.mubr.f32.mxu0 0.0
        %1588 = vmatmul.mubr.f32.gmra.mrb[0].mxu0 %v1474
        %v1589 = vpop.f32.mrb[0].mxu0
        %v1590 = vadd.f32 %v1397, %v1589
        %v1591 = vpop.f32.mrb[0].mxu0
        %1592 = vmatprep.mubr.f32.mxu0 0.0
        %1593 = vmatmul.mubr.f32.gmra.mrb[0].mxu0 %v1477
        %v1594 = vpop.f32.mrb[0].mxu0
        %v1595 = vadd.f32 %v1402, %v1594
        %v1596 = vpop.f32.mrb[0].mxu0
        %1597 = vmatprep.mubr.f32.mxu0 0.0
        %1598 = vmatmul.mubr.f32.gmra.mrb[0].mxu0 %v1480
        %v1599 = vpop.f32.mrb[0].mxu0
        %v1600 = vadd.f32 %v1407, %v1599
        %v1601 = vpop.f32.mrb[0].mxu0
        %1602 = vmatprep.mubr.f32.mxu0 0.0
        %1603 = vmatmul.mubr.f32.gmra.mrb[0].mxu0 %v1483
        %v1604 = vpop.f32.mrb[0].mxu0
        %v1605 = vadd.f32 %v1412, %v1604
        %v1606 = vpop.f32.mrb[0].mxu0
        %1607 = vmatprep.mubr.f32.mxu0 0.0
        %1608 = vmatmul.mubr.f32.gmra.mrb[0].mxu0 %v1486
        %v1609 = vpop.f32.mrb[0].mxu0
        %v1610 = vadd.f32 %v1417, %v1609
        %v1611 = vpop.f32.mrb[0].mxu0
        %1612 = vmatprep.mubr.f32.mxu0 0.0
        %1613 = vmatmul.mubr.f32.gmra.mrb[0].mxu0 %v1489
        %v1614 = vpop.f32.mrb[0].mxu0
        %v1615 = vadd.f32 %v1422, %v1614
        %v1616 = vpop.f32.mrb[0].mxu0
        %1617 = vmatprep.mubr.f32.mxu0 0.0
        %1618 = vmatmul.mubr.f32.gmra.mrb[0].mxu0 %v1492
        %v1619 = vpop.f32.mrb[0].mxu0
        %v1620 = vadd.f32 %v1427, %v1619
        %v1621 = vpop.f32.mrb[0].mxu0
        %1622 = vmatprep.mubr.f32.mxu0 0.0
        %1623 = vmatmul.mubr.f32.gmra.mrb[0].mxu0 %v1495
        %v1624 = vpop.f32.mrb[0].mxu0
        %v1625 = vadd.f32 %v1432, %v1624
        %v1626 = vpop.f32.mrb[0].mxu0
        %1627 = vmatprep.mubr.f32.mxu0 0.0
        %1628 = vmatmul.mubr.f32.gmra.mrb[0].mxu0 %v1498
        %v1629 = vpop.f32.mrb[0].mxu0
        %v1630 = vadd.f32 %v1437, %v1629
        %v1631 = vpop.f32.mrb[0].mxu0
        %1632 = vmatprep.mubr.f32.mxu0 0.0
        %1633 = vmatmul.mubr.f32.gmra.mrb[0].mxu0 %v1501
        %v1634 = vpop.f32.mrb[0].mxu0
        %v1635 = vadd.f32 %v1442, %v1634
        %v1636 = vpop.f32.mrb[0].mxu0
        %1637 = vmatprep.mubr.f32.mxu0 0.0
        %1638 = vmatmul.mubr.f32.gmra.mrb[0].mxu0 %v1504
        %v1639 = vpop.f32.mrb[0].mxu0
        %v1640 = vadd.f32 %v1447, %v1639
        %v1641 = vpop.f32.mrb[0].mxu0
        %1642 = vmatprep.mubr.f32.mxu0 0.0
        %1643 = vmatmul.mubr.f32.gmra.mrb[0].mxu0 %v1507
        %v1644 = vpop.f32.mrb[0].mxu0
        %v1645 = vadd.f32 %v1452, %v1644
        %v1646 = vpop.f32.mrb[0].mxu0
        %1647 = vmatprep.mubr.f32.mxu0 0.0
        %1648 = vmatmul.mubr.f32.gmra.mrb[0].mxu0 %v1510
        %v1649 = vpop.f32.mrb[0].mxu0
        %v1650 = vadd.f32 %v1457, %v1649
        %v1651 = vpop.f32.mrb[0].mxu0
        %1652 = vmatprep.mubr.f32.mxu0 0.0
        %1653 = vmatmul.mubr.f32.gmra.mrb[0].mxu0 %v1513
        %v1654 = vpop.f32.mrb[0].mxu0
        %v1655 = vadd.f32 %v1462, %v1654
        %v1656 = vpop.f32.mrb[0].mxu0
        %1657 = vmatprep.mubr.f32.mxu0 0.0
        %1658 = vmatmul.mubr.f32.gmra.mrb[0].mxu0 %v1516
        %v1659 = vpop.f32.mrb[0].mxu0
        %v1660 = vadd.f32 %v1467, %v1659
        %v1661 = vpop.f32.mrb[0].mxu0
        %1662 = vdwg.mxu0
        %v1663 = vld [vmem:[%s1217] sm:$0xff]
        %v1664 = vld [vmem:[%s1217 + $0x8] sm:$0xff]
        %v1665 = vld [vmem:[%s1217 + $0x10] sm:$0xff]
        %v1666 = vld [vmem:[%s1217 + $0x18] sm:$0xff]
        %v1667 = vld [vmem:[%s1217 + $0x20] sm:$0xff]
        %v1668 = vld [vmem:[%s1217 + $0x28] sm:$0xff]
        %v1669 = vld [vmem:[%s1217 + $0x30] sm:$0xff]
        %v1670 = vld [vmem:[%s1217 + $0x38] sm:$0xff]
        %v1671 = vld [vmem:[%s1217 + $0x40] sm:$0xff]
        %v1672 = vld [vmem:[%s1217 + $0x48] sm:$0xff]
        %v1673 = vld [vmem:[%s1217 + $0x50] sm:$0xff]
        %v1674 = vld [vmem:[%s1217 + $0x58] sm:$0xff]
        %v1675 = vld [vmem:[%s1217 + $0x60] sm:$0xff]
        %v1676 = vld [vmem:[%s1217 + $0x68] sm:$0xff]
        %v1677 = vld [vmem:[%s1217 + $0x70] sm:$0xff]
        %v1678 = vld [vmem:[%s1217 + $0x78] sm:$0xff]
        %s1679 = scalar_lea.vmem %s7, 64
        %v1680 = vld [vmem:[%s1679] sm:$0xff]
        %v1681 = vld [vmem:[%s1679 + $0x8] sm:$0xff]
        %v1682 = vld [vmem:[%s1679 + $0x10] sm:$0xff]
        %v1683 = vld [vmem:[%s1679 + $0x18] sm:$0xff]
        %v1685 = vsel %vm935, %v1663, 0
        %v1688 = vsel %vm935, %v1664, 0
        %v1691 = vsel %vm935, %v1665, 0
        %v1694 = vsel %vm935, %v1666, 0
        %v1697 = vsel %vm935, %v1667, 0
        %v1700 = vsel %vm935, %v1668, 0
        %v1703 = vsel %vm935, %v1669, 0
        %v1706 = vsel %vm935, %v1670, 0
        %v1709 = vsel %vm935, %v1671, 0
        %v1712 = vsel %vm935, %v1672, 0
        %v1715 = vsel %vm935, %v1673, 0
        %v1718 = vsel %vm935, %v1674, 0
        %v1721 = vsel %vm935, %v1675, 0
        %v1724 = vsel %vm935, %v1676, 0
        %v1727 = vsel %vm935, %v1677, 0
        %v1730 = vsel %vm935, %v1678, 0
        %1732 = vmatprep.subr.mxu0 0.0
        %1733 = vmatpush1.msra.mxu0 %v1680
        %1734 = vmatprep.subr.mxu0 0.0
        %1735 = vmatpush1.msra.mxu0 %v1681
        %1736 = vmatprep.subr.mxu0 0.0
        %1737 = vmatpush1.msra.mxu0 %v1682
        %1738 = vmatprep.subr.mxu0 0.0
        %1739 = vmatpush1.msra.mxu0 %v1683
        %1740 = vmatprep.subr.mxu0 0.0
        %1741 = vmatpush1.msra.mxu0 0.0
        %1742 = vmatprep.subr.mxu0 0.0
        %1743 = vmatpush1.msra.mxu0 0.0
        %1744 = vmatprep.subr.mxu0 0.0
        %1745 = vmatpush1.msra.mxu0 0.0
        %1746 = vmatprep.subr.mxu0 0.0
        %1747 = vmatpush1.msra.mxu0 0.0
        %1748 = vmatprep.subr.mxu0 0.0
        %1749 = vmatpush1.msra.mxu0 0.0
        %1750 = vmatprep.subr.mxu0 0.0
        %1751 = vmatpush1.msra.mxu0 0.0
        %1752 = vmatprep.subr.mxu0 0.0
        %1753 = vmatpush1.msra.mxu0 0.0
        %1754 = vmatprep.subr.mxu0 0.0
        %1755 = vmatpush1.msra.mxu0 0.0
        %1756 = vmatprep.subr.mxu0 0.0
        %1757 = vmatpush1.msra.mxu0 0.0
        %1758 = vmatprep.subr.mxu0 0.0
        %1759 = vmatpush1.msra.mxu0 0.0
        %1760 = vmatprep.subr.mxu0 0.0
        %1761 = vmatpush1.msra.mxu0 0.0
        %1762 = vmatprep.subr.mxu0 0.0
        %1763 = vmatpush1.msra.mxu0 0.0
        %1764 = vmatprep.subr.mxu0 0.0
        %1765 = vmatpush1.msra.mxu0 0.0
        %1766 = vmatprep.subr.mxu0 0.0
        %1767 = vmatpush1.msra.mxu0 0.0
        %1768 = vmatprep.subr.mxu0 0.0
        %1769 = vmatpush1.msra.mxu0 0.0
        %1770 = vmatprep.subr.mxu0 0.0
        %1771 = vmatpush1.msra.mxu0 0.0
        %1772 = vmatprep.subr.mxu0 0.0
        %1773 = vmatpush1.msra.mxu0 0.0
        %1774 = vmatprep.subr.mxu0 0.0
        %1775 = vmatpush1.msra.mxu0 0.0
        %1776 = vmatprep.subr.mxu0 0.0
        %1777 = vmatpush1.msra.mxu0 0.0
        %1778 = vmatprep.subr.mxu0 0.0
        %1779 = vmatpush1.msra.mxu0 0.0
        %1780 = vmatprep.subr.mxu0 0.0
        %1781 = vmatpush1.msra.mxu0 0.0
        %1782 = vmatprep.subr.mxu0 0.0
        %1783 = vmatpush1.msra.mxu0 0.0
        %1784 = vmatprep.subr.mxu0 0.0
        %1785 = vmatpush1.msra.mxu0 0.0
        %1786 = vmatprep.subr.mxu0 0.0
        %1787 = vmatpush1.msra.mxu0 0.0
        %1788 = vmatprep.subr.mxu0 0.0
        %1789 = vmatpush1.msra.mxu0 0.0
        %1790 = vmatprep.subr.mxu0 0.0
        %1791 = vmatpush1.msra.mxu0 0.0
        %1792 = vmatprep.subr.mxu0 0.0
        %1793 = vmatpush1.msra.mxu0 0.0
        %1794 = vmatprep.subr.mxu0 0.0
        %1795 = vmatpush1.msra.mxu0 0.0
        %1796 = vmatprep.mubr.f32.mxu0 0.0
        %1797 = vmatmul.mubr.f32.gmra.mrb[0].mxu0 %v1685
        %v1798 = vpop.f32.mrb[0].mxu0
        %v1799 = vadd.f32 0.0, %v1798
        %v1800 = vpop.f32.mrb[0].mxu0
        %1801 = vmatprep.mubr.f32.mxu0 0.0
        %1802 = vmatmul.mubr.f32.gmra.mrb[0].mxu0 %v1688
        %v1803 = vpop.f32.mrb[0].mxu0
        %v1804 = vadd.f32 0.0, %v1803
        %v1805 = vpop.f32.mrb[0].mxu0
        %1806 = vmatprep.mubr.f32.mxu0 0.0
        %1807 = vmatmul.mubr.f32.gmra.mrb[0].mxu0 %v1691
        %v1808 = vpop.f32.mrb[0].mxu0
        %v1809 = vadd.f32 0.0, %v1808
        %v1810 = vpop.f32.mrb[0].mxu0
        %1811 = vmatprep.mubr.f32.mxu0 0.0
        %1812 = vmatmul.mubr.f32.gmra.mrb[0].mxu0 %v1694
        %v1813 = vpop.f32.mrb[0].mxu0
        %v1814 = vadd.f32 0.0, %v1813
        %v1815 = vpop.f32.mrb[0].mxu0
        %1816 = vmatprep.mubr.f32.mxu0 0.0
        %1817 = vmatmul.mubr.f32.gmra.mrb[0].mxu0 %v1697
        %v1818 = vpop.f32.mrb[0].mxu0
        %v1819 = vadd.f32 0.0, %v1818
        %v1820 = vpop.f32.mrb[0].mxu0
        %1821 = vmatprep.mubr.f32.mxu0 0.0
        %1822 = vmatmul.mubr.f32.gmra.mrb[0].mxu0 %v1700
        %v1823 = vpop.f32.mrb[0].mxu0
        %v1824 = vadd.f32 0.0, %v1823
        %v1825 = vpop.f32.mrb[0].mxu0
        %1826 = vmatprep.mubr.f32.mxu0 0.0
        %1827 = vmatmul.mubr.f32.gmra.mrb[0].mxu0 %v1703
        %v1828 = vpop.f32.mrb[0].mxu0
        %v1829 = vadd.f32 0.0, %v1828
        %v1830 = vpop.f32.mrb[0].mxu0
        %1831 = vmatprep.mubr.f32.mxu0 0.0
        %1832 = vmatmul.mubr.f32.gmra.mrb[0].mxu0 %v1706
        %v1833 = vpop.f32.mrb[0].mxu0
        %v1834 = vadd.f32 0.0, %v1833
        %v1835 = vpop.f32.mrb[0].mxu0
        %1836 = vmatprep.mubr.f32.mxu0 0.0
        %1837 = vmatmul.mubr.f32.gmra.mrb[0].mxu0 %v1709
        %v1838 = vpop.f32.mrb[0].mxu0
        %v1839 = vadd.f32 0.0, %v1838
        %v1840 = vpop.f32.mrb[0].mxu0
        %1841 = vmatprep.mubr.f32.mxu0 0.0
        %1842 = vmatmul.mubr.f32.gmra.mrb[0].mxu0 %v1712
        %v1843 = vpop.f32.mrb[0].mxu0
        %v1844 = vadd.f32 0.0, %v1843
        %v1845 = vpop.f32.mrb[0].mxu0
        %1846 = vmatprep.mubr.f32.mxu0 0.0
        %1847 = vmatmul.mubr.f32.gmra.mrb[0].mxu0 %v1715
        %v1848 = vpop.f32.mrb[0].mxu0
        %v1849 = vadd.f32 0.0, %v1848
        %v1850 = vpop.f32.mrb[0].mxu0
        %1851 = vmatprep.mubr.f32.mxu0 0.0
        %1852 = vmatmul.mubr.f32.gmra.mrb[0].mxu0 %v1718
        %v1853 = vpop.f32.mrb[0].mxu0
        %v1854 = vadd.f32 0.0, %v1853
        %v1855 = vpop.f32.mrb[0].mxu0
        %1856 = vmatprep.mubr.f32.mxu0 0.0
        %1857 = vmatmul.mubr.f32.gmra.mrb[0].mxu0 %v1721
        %v1858 = vpop.f32.mrb[0].mxu0
        %v1859 = vadd.f32 0.0, %v1858
        %v1860 = vpop.f32.mrb[0].mxu0
        %1861 = vmatprep.mubr.f32.mxu0 0.0
        %1862 = vmatmul.mubr.f32.gmra.mrb[0].mxu0 %v1724
        %v1863 = vpop.f32.mrb[0].mxu0
        %v1864 = vadd.f32 0.0, %v1863
        %v1865 = vpop.f32.mrb[0].mxu0
        %1866 = vmatprep.mubr.f32.mxu0 0.0
        %1867 = vmatmul.mubr.f32.gmra.mrb[0].mxu0 %v1727
        %v1868 = vpop.f32.mrb[0].mxu0
        %v1869 = vadd.f32 0.0, %v1868
        %v1870 = vpop.f32.mrb[0].mxu0
        %1871 = vmatprep.mubr.f32.mxu0 0.0
        %1872 = vmatmul.mubr.f32.gmra.mrb[0].mxu0 %v1730
        %v1873 = vpop.f32.mrb[0].mxu0
        %v1874 = vadd.f32 0.0, %v1873
        %v1875 = vpop.f32.mrb[0].mxu0
        %1876 = vdwg.mxu0
        %v1877 = vadd.f32 %v1585, %v1799
        %v1878 = vadd.f32 %v1590, %v1804
        %v1879 = vadd.f32 %v1595, %v1809
        %v1880 = vadd.f32 %v1600, %v1814
        %v1881 = vadd.f32 %v1605, %v1819
        %v1882 = vadd.f32 %v1610, %v1824
        %v1883 = vadd.f32 %v1615, %v1829
        %v1884 = vadd.f32 %v1620, %v1834
        %v1885 = vadd.f32 %v1625, %v1839
        %v1886 = vadd.f32 %v1630, %v1844
        %v1887 = vadd.f32 %v1635, %v1849
        %v1888 = vadd.f32 %v1640, %v1854
        %v1889 = vadd.f32 %v1645, %v1859
        %v1890 = vadd.f32 %v1650, %v1864
        %v1891 = vadd.f32 %v1655, %v1869
        %v1892 = vadd.f32 %v1660, %v1874
        %s1893 = scalar_lea.vmem [#allocation2], 16
        %v1894 = vld [vmem:[%s1893] sm:$0xff]
        %v1895 = vld [vmem:[%s1893 + $0x8] sm:$0xff]
        %v1896 = vld [vmem:[%s1893 + $0x10] sm:$0xff]
        %v1897 = vld [vmem:[%s1893 + $0x18] sm:$0xff]
        %v1898 = vld [vmem:[%s1893 + $0x20] sm:$0xff]
        %v1899 = vld [vmem:[%s1893 + $0x28] sm:$0xff]
        %v1900 = vld [vmem:[%s1893 + $0x30] sm:$0xff]
        %v1901 = vld [vmem:[%s1893 + $0x38] sm:$0xff]
        %v1902 = vld [vmem:[%s1893 + $0x40] sm:$0xff]
        %v1903 = vld [vmem:[%s1893 + $0x48] sm:$0xff]
        %v1904 = vld [vmem:[%s1893 + $0x50] sm:$0xff]
        %v1905 = vld [vmem:[%s1893 + $0x58] sm:$0xff]
        %v1906 = vld [vmem:[%s1893 + $0x60] sm:$0xff]
        %v1907 = vld [vmem:[%s1893 + $0x68] sm:$0xff]
        %v1908 = vld [vmem:[%s1893 + $0x70] sm:$0xff]
        %v1909 = vld [vmem:[%s1893 + $0x78] sm:$0xff]
        %s1910 = scalar_lea.vmem %s7, 96
        %v1911 = vld [vmem:[%s1910] sm:$0xff]
        %v1912 = vld [vmem:[%s1910 + $0x8] sm:$0xff]
        %v1913 = vld [vmem:[%s1910 + $0x10] sm:$0xff]
        %v1914 = vld [vmem:[%s1910 + $0x18] sm:$0xff]
        %v1916 = vsel %vm935, %v1894, 0
        %v1919 = vsel %vm935, %v1895, 0
        %v1922 = vsel %vm935, %v1896, 0
        %v1925 = vsel %vm935, %v1897, 0
        %v1928 = vsel %vm935, %v1898, 0
        %v1931 = vsel %vm935, %v1899, 0
        %v1934 = vsel %vm935, %v1900, 0
        %v1937 = vsel %vm935, %v1901, 0
        %v1940 = vsel %vm935, %v1902, 0
        %v1943 = vsel %vm935, %v1903, 0
        %v1946 = vsel %vm935, %v1904, 0
        %v1949 = vsel %vm935, %v1905, 0
        %v1952 = vsel %vm935, %v1906, 0
        %v1955 = vsel %vm935, %v1907, 0
        %v1958 = vsel %vm935, %v1908, 0
        %v1961 = vsel %vm935, %v1909, 0
        %1963 = vmatprep.subr.mxu0 0.0
        %1964 = vmatpush1.msra.mxu0 %v1911
        %1965 = vmatprep.subr.mxu0 0.0
        %1966 = vmatpush1.msra.mxu0 %v1912
        %1967 = vmatprep.subr.mxu0 0.0
        %1968 = vmatpush1.msra.mxu0 %v1913
        %1969 = vmatprep.subr.mxu0 0.0
        %1970 = vmatpush1.msra.mxu0 %v1914
        %1971 = vmatprep.subr.mxu0 0.0
        %1972 = vmatpush1.msra.mxu0 0.0
        %1973 = vmatprep.subr.mxu0 0.0
        %1974 = vmatpush1.msra.mxu0 0.0
        %1975 = vmatprep.subr.mxu0 0.0
        %1976 = vmatpush1.msra.mxu0 0.0
        %1977 = vmatprep.subr.mxu0 0.0
        %1978 = vmatpush1.msra.mxu0 0.0
        %1979 = vmatprep.subr.mxu0 0.0
        %1980 = vmatpush1.msra.mxu0 0.0
        %1981 = vmatprep.subr.mxu0 0.0
        %1982 = vmatpush1.msra.mxu0 0.0
        %1983 = vmatprep.subr.mxu0 0.0
        %1984 = vmatpush1.msra.mxu0 0.0
        %1985 = vmatprep.subr.mxu0 0.0
        %1986 = vmatpush1.msra.mxu0 0.0
        %1987 = vmatprep.subr.mxu0 0.0
        %1988 = vmatpush1.msra.mxu0 0.0
        %1989 = vmatprep.subr.mxu0 0.0
        %1990 = vmatpush1.msra.mxu0 0.0
        %1991 = vmatprep.subr.mxu0 0.0
        %1992 = vmatpush1.msra.mxu0 0.0
        %1993 = vmatprep.subr.mxu0 0.0
        %1994 = vmatpush1.msra.mxu0 0.0
        %1995 = vmatprep.subr.mxu0 0.0
        %1996 = vmatpush1.msra.mxu0 0.0
        %1997 = vmatprep.subr.mxu0 0.0
        %1998 = vmatpush1.msra.mxu0 0.0
        %1999 = vmatprep.subr.mxu0 0.0
        %2000 = vmatpush1.msra.mxu0 0.0
        %2001 = vmatprep.subr.mxu0 0.0
        %2002 = vmatpush1.msra.mxu0 0.0
        %2003 = vmatprep.subr.mxu0 0.0
        %2004 = vmatpush1.msra.mxu0 0.0
        %2005 = vmatprep.subr.mxu0 0.0
        %2006 = vmatpush1.msra.mxu0 0.0
        %2007 = vmatprep.subr.mxu0 0.0
        %2008 = vmatpush1.msra.mxu0 0.0
        %2009 = vmatprep.subr.mxu0 0.0
        %2010 = vmatpush1.msra.mxu0 0.0
        %2011 = vmatprep.subr.mxu0 0.0
        %2012 = vmatpush1.msra.mxu0 0.0
        %2013 = vmatprep.subr.mxu0 0.0
        %2014 = vmatpush1.msra.mxu0 0.0
        %2015 = vmatprep.subr.mxu0 0.0
        %2016 = vmatpush1.msra.mxu0 0.0
        %2017 = vmatprep.subr.mxu0 0.0
        %2018 = vmatpush1.msra.mxu0 0.0
        %2019 = vmatprep.subr.mxu0 0.0
        %2020 = vmatpush1.msra.mxu0 0.0
        %2021 = vmatprep.subr.mxu0 0.0
        %2022 = vmatpush1.msra.mxu0 0.0
        %2023 = vmatprep.subr.mxu0 0.0
        %2024 = vmatpush1.msra.mxu0 0.0
        %2025 = vmatprep.subr.mxu0 0.0
        %2026 = vmatpush1.msra.mxu0 0.0
        %2027 = vmatprep.mubr.f32.mxu0 0.0
        %2028 = vmatmul.mubr.f32.gmra.mrb[0].mxu0 %v1916
        %v2029 = vpop.f32.mrb[0].mxu0
        %v2030 = vadd.f32 0.0, %v2029
        %v2031 = vpop.f32.mrb[0].mxu0
        %2032 = vmatprep.mubr.f32.mxu0 0.0
        %2033 = vmatmul.mubr.f32.gmra.mrb[0].mxu0 %v1919
        %v2034 = vpop.f32.mrb[0].mxu0
        %v2035 = vadd.f32 0.0, %v2034
        %v2036 = vpop.f32.mrb[0].mxu0
        %2037 = vmatprep.mubr.f32.mxu0 0.0
        %2038 = vmatmul.mubr.f32.gmra.mrb[0].mxu0 %v1922
        %v2039 = vpop.f32.mrb[0].mxu0
        %v2040 = vadd.f32 0.0, %v2039
        %v2041 = vpop.f32.mrb[0].mxu0
        %2042 = vmatprep.mubr.f32.mxu0 0.0
        %2043 = vmatmul.mubr.f32.gmra.mrb[0].mxu0 %v1925
        %v2044 = vpop.f32.mrb[0].mxu0
        %v2045 = vadd.f32 0.0, %v2044
        %v2046 = vpop.f32.mrb[0].mxu0
        %2047 = vmatprep.mubr.f32.mxu0 0.0
        %2048 = vmatmul.mubr.f32.gmra.mrb[0].mxu0 %v1928
        %v2049 = vpop.f32.mrb[0].mxu0
        %v2050 = vadd.f32 0.0, %v2049
        %v2051 = vpop.f32.mrb[0].mxu0
        %2052 = vmatprep.mubr.f32.mxu0 0.0
        %2053 = vmatmul.mubr.f32.gmra.mrb[0].mxu0 %v1931
        %v2054 = vpop.f32.mrb[0].mxu0
        %v2055 = vadd.f32 0.0, %v2054
        %v2056 = vpop.f32.mrb[0].mxu0
        %2057 = vmatprep.mubr.f32.mxu0 0.0
        %2058 = vmatmul.mubr.f32.gmra.mrb[0].mxu0 %v1934
        %v2059 = vpop.f32.mrb[0].mxu0
        %v2060 = vadd.f32 0.0, %v2059
        %v2061 = vpop.f32.mrb[0].mxu0
        %2062 = vmatprep.mubr.f32.mxu0 0.0
        %2063 = vmatmul.mubr.f32.gmra.mrb[0].mxu0 %v1937
        %v2064 = vpop.f32.mrb[0].mxu0
        %v2065 = vadd.f32 0.0, %v2064
        %v2066 = vpop.f32.mrb[0].mxu0
        %2067 = vmatprep.mubr.f32.mxu0 0.0
        %2068 = vmatmul.mubr.f32.gmra.mrb[0].mxu0 %v1940
        %v2069 = vpop.f32.mrb[0].mxu0
        %v2070 = vadd.f32 0.0, %v2069
        %v2071 = vpop.f32.mrb[0].mxu0
        %2072 = vmatprep.mubr.f32.mxu0 0.0
        %2073 = vmatmul.mubr.f32.gmra.mrb[0].mxu0 %v1943
        %v2074 = vpop.f32.mrb[0].mxu0
        %v2075 = vadd.f32 0.0, %v2074
        %v2076 = vpop.f32.mrb[0].mxu0
        %2077 = vmatprep.mubr.f32.mxu0 0.0
        %2078 = vmatmul.mubr.f32.gmra.mrb[0].mxu0 %v1946
        %v2079 = vpop.f32.mrb[0].mxu0
        %v2080 = vadd.f32 0.0, %v2079
        %v2081 = vpop.f32.mrb[0].mxu0
        %2082 = vmatprep.mubr.f32.mxu0 0.0
        %2083 = vmatmul.mubr.f32.gmra.mrb[0].mxu0 %v1949
        %v2084 = vpop.f32.mrb[0].mxu0
        %v2085 = vadd.f32 0.0, %v2084
        %v2086 = vpop.f32.mrb[0].mxu0
        %2087 = vmatprep.mubr.f32.mxu0 0.0
        %2088 = vmatmul.mubr.f32.gmra.mrb[0].mxu0 %v1952
        %v2089 = vpop.f32.mrb[0].mxu0
        %v2090 = vadd.f32 0.0, %v2089
        %v2091 = vpop.f32.mrb[0].mxu0
        %2092 = vmatprep.mubr.f32.mxu0 0.0
        %2093 = vmatmul.mubr.f32.gmra.mrb[0].mxu0 %v1955
        %v2094 = vpop.f32.mrb[0].mxu0
        %v2095 = vadd.f32 0.0, %v2094
        %v2096 = vpop.f32.mrb[0].mxu0
        %2097 = vmatprep.mubr.f32.mxu0 0.0
        %2098 = vmatmul.mubr.f32.gmra.mrb[0].mxu0 %v1958
        %v2099 = vpop.f32.mrb[0].mxu0
        %v2100 = vadd.f32 0.0, %v2099
        %v2101 = vpop.f32.mrb[0].mxu0
        %2102 = vmatprep.mubr.f32.mxu0 0.0
        %2103 = vmatmul.mubr.f32.gmra.mrb[0].mxu0 %v1961
        %v2104 = vpop.f32.mrb[0].mxu0
        %v2105 = vadd.f32 0.0, %v2104
        %v2106 = vpop.f32.mrb[0].mxu0
        %2107 = vdwg.mxu0
        %v2108 = vadd.f32 %v1877, %v2030
        %v2109 = vadd.f32 %v1878, %v2035
        %v2110 = vadd.f32 %v1879, %v2040
        %v2111 = vadd.f32 %v1880, %v2045
        %v2112 = vadd.f32 %v1881, %v2050
        %v2113 = vadd.f32 %v1882, %v2055
        %v2114 = vadd.f32 %v1883, %v2060
        %v2115 = vadd.f32 %v1884, %v2065
        %v2116 = vadd.f32 %v1885, %v2070
        %v2117 = vadd.f32 %v1886, %v2075
        %v2118 = vadd.f32 %v1887, %v2080
        %v2119 = vadd.f32 %v1888, %v2085
        %v2120 = vadd.f32 %v1889, %v2090
        %v2121 = vadd.f32 %v1890, %v2095
        %v2122 = vadd.f32 %v1891, %v2100
        %v2123 = vadd.f32 %v1892, %v2105
        %v2124 = vld [vmem:[#allocation2] sm:$0xff]
        %v2125 = vld [vmem:[#allocation2 + $0x8] sm:$0xff]
        %v2126 = vld [vmem:[#allocation2 + $0x10] sm:$0xff]
        %v2127 = vld [vmem:[#allocation2 + $0x18] sm:$0xff]
        %v2128 = vld [vmem:[#allocation2 + $0x20] sm:$0xff]
        %v2129 = vld [vmem:[#allocation2 + $0x28] sm:$0xff]
        %v2130 = vld [vmem:[#allocation2 + $0x30] sm:$0xff]
        %v2131 = vld [vmem:[#allocation2 + $0x38] sm:$0xff]
        %v2132 = vld [vmem:[#allocation2 + $0x40] sm:$0xff]
        %v2133 = vld [vmem:[#allocation2 + $0x48] sm:$0xff]
        %v2134 = vld [vmem:[#allocation2 + $0x50] sm:$0xff]
        %v2135 = vld [vmem:[#allocation2 + $0x58] sm:$0xff]
        %v2136 = vld [vmem:[#allocation2 + $0x60] sm:$0xff]
        %v2137 = vld [vmem:[#allocation2 + $0x68] sm:$0xff]
        %v2138 = vld [vmem:[#allocation2 + $0x70] sm:$0xff]
        %v2139 = vld [vmem:[#allocation2 + $0x78] sm:$0xff]
        %s2140 = scalar_lea.vmem %s7, 128
        %v2141 = vld [vmem:[%s2140] sm:$0xff]
        %v2142 = vld [vmem:[%s2140 + $0x8] sm:$0xff]
        %v2143 = vld [vmem:[%s2140 + $0x10] sm:$0xff]
        %v2144 = vld [vmem:[%s2140 + $0x18] sm:$0xff]
        %v2146 = vsel %vm935, %v2124, 0
        %v2149 = vsel %vm935, %v2125, 0
        %v2152 = vsel %vm935, %v2126, 0
        %v2155 = vsel %vm935, %v2127, 0
        %v2158 = vsel %vm935, %v2128, 0
        %v2161 = vsel %vm935, %v2129, 0
        %v2164 = vsel %vm935, %v2130, 0
        %v2167 = vsel %vm935, %v2131, 0
        %v2170 = vsel %vm935, %v2132, 0
        %v2173 = vsel %vm935, %v2133, 0
        %v2176 = vsel %vm935, %v2134, 0
        %v2179 = vsel %vm935, %v2135, 0
        %v2182 = vsel %vm935, %v2136, 0
        %v2185 = vsel %vm935, %v2137, 0
        %v2188 = vsel %vm935, %v2138, 0
        %v2191 = vsel %vm935, %v2139, 0
        %2193 = vmatprep.subr.mxu0 0.0
        %2194 = vmatpush1.msra.mxu0 %v2141
        %2195 = vmatprep.subr.mxu0 0.0
        %2196 = vmatpush1.msra.mxu0 %v2142
        %2197 = vmatprep.subr.mxu0 0.0
        %2198 = vmatpush1.msra.mxu0 %v2143
        %2199 = vmatprep.subr.mxu0 0.0
        %2200 = vmatpush1.msra.mxu0 %v2144
        %2201 = vmatprep.subr.mxu0 0.0
        %2202 = vmatpush1.msra.mxu0 0.0
        %2203 = vmatprep.subr.mxu0 0.0
        %2204 = vmatpush1.msra.mxu0 0.0
        %2205 = vmatprep.subr.mxu0 0.0
        %2206 = vmatpush1.msra.mxu0 0.0
        %2207 = vmatprep.subr.mxu0 0.0
        %2208 = vmatpush1.msra.mxu0 0.0
        %2209 = vmatprep.subr.mxu0 0.0
        %2210 = vmatpush1.msra.mxu0 0.0
        %2211 = vmatprep.subr.mxu0 0.0
        %2212 = vmatpush1.msra.mxu0 0.0
        %2213 = vmatprep.subr.mxu0 0.0
        %2214 = vmatpush1.msra.mxu0 0.0
        %2215 = vmatprep.subr.mxu0 0.0
        %2216 = vmatpush1.msra.mxu0 0.0
        %2217 = vmatprep.subr.mxu0 0.0
        %2218 = vmatpush1.msra.mxu0 0.0
        %2219 = vmatprep.subr.mxu0 0.0
        %2220 = vmatpush1.msra.mxu0 0.0
        %2221 = vmatprep.subr.mxu0 0.0
        %2222 = vmatpush1.msra.mxu0 0.0
        %2223 = vmatprep.subr.mxu0 0.0
        %2224 = vmatpush1.msra.mxu0 0.0
        %2225 = vmatprep.subr.mxu0 0.0
        %2226 = vmatpush1.msra.mxu0 0.0
        %2227 = vmatprep.subr.mxu0 0.0
        %2228 = vmatpush1.msra.mxu0 0.0
        %2229 = vmatprep.subr.mxu0 0.0
        %2230 = vmatpush1.msra.mxu0 0.0
        %2231 = vmatprep.subr.mxu0 0.0
        %2232 = vmatpush1.msra.mxu0 0.0
        %2233 = vmatprep.subr.mxu0 0.0
        %2234 = vmatpush1.msra.mxu0 0.0
        %2235 = vmatprep.subr.mxu0 0.0
        %2236 = vmatpush1.msra.mxu0 0.0
        %2237 = vmatprep.subr.mxu0 0.0
        %2238 = vmatpush1.msra.mxu0 0.0
        %2239 = vmatprep.subr.mxu0 0.0
        %2240 = vmatpush1.msra.mxu0 0.0
        %2241 = vmatprep.subr.mxu0 0.0
        %2242 = vmatpush1.msra.mxu0 0.0
        %2243 = vmatprep.subr.mxu0 0.0
        %2244 = vmatpush1.msra.mxu0 0.0
        %2245 = vmatprep.subr.mxu0 0.0
        %2246 = vmatpush1.msra.mxu0 0.0
        %2247 = vmatprep.subr.mxu0 0.0
        %2248 = vmatpush1.msra.mxu0 0.0
        %2249 = vmatprep.subr.mxu0 0.0
        %2250 = vmatpush1.msra.mxu0 0.0
        %2251 = vmatprep.subr.mxu0 0.0
        %2252 = vmatpush1.msra.mxu0 0.0
        %2253 = vmatprep.subr.mxu0 0.0
        %2254 = vmatpush1.msra.mxu0 0.0
        %2255 = vmatprep.subr.mxu0 0.0
        %2256 = vmatpush1.msra.mxu0 0.0
        %2257 = vmatprep.mubr.f32.mxu0 0.0
        %2258 = vmatmul.mubr.f32.gmra.mrb[0].mxu0 %v2146
        %v2259 = vpop.f32.mrb[0].mxu0
        %v2260 = vadd.f32 0.0, %v2259
        %v2261 = vpop.f32.mrb[0].mxu0
        %2262 = vmatprep.mubr.f32.mxu0 0.0
        %2263 = vmatmul.mubr.f32.gmra.mrb[0].mxu0 %v2149
        %v2264 = vpop.f32.mrb[0].mxu0
        %v2265 = vadd.f32 0.0, %v2264
        %v2266 = vpop.f32.mrb[0].mxu0
        %2267 = vmatprep.mubr.f32.mxu0 0.0
        %2268 = vmatmul.mubr.f32.gmra.mrb[0].mxu0 %v2152
        %v2269 = vpop.f32.mrb[0].mxu0
        %v2270 = vadd.f32 0.0, %v2269
        %v2271 = vpop.f32.mrb[0].mxu0
        %2272 = vmatprep.mubr.f32.mxu0 0.0
        %2273 = vmatmul.mubr.f32.gmra.mrb[0].mxu0 %v2155
        %v2274 = vpop.f32.mrb[0].mxu0
        %v2275 = vadd.f32 0.0, %v2274
        %v2276 = vpop.f32.mrb[0].mxu0
        %2277 = vmatprep.mubr.f32.mxu0 0.0
        %2278 = vmatmul.mubr.f32.gmra.mrb[0].mxu0 %v2158
        %v2279 = vpop.f32.mrb[0].mxu0
        %v2280 = vadd.f32 0.0, %v2279
        %v2281 = vpop.f32.mrb[0].mxu0
        %2282 = vmatprep.mubr.f32.mxu0 0.0
        %2283 = vmatmul.mubr.f32.gmra.mrb[0].mxu0 %v2161
        %v2284 = vpop.f32.mrb[0].mxu0
        %v2285 = vadd.f32 0.0, %v2284
        %v2286 = vpop.f32.mrb[0].mxu0
        %2287 = vmatprep.mubr.f32.mxu0 0.0
        %2288 = vmatmul.mubr.f32.gmra.mrb[0].mxu0 %v2164
        %v2289 = vpop.f32.mrb[0].mxu0
        %v2290 = vadd.f32 0.0, %v2289
        %v2291 = vpop.f32.mrb[0].mxu0
        %2292 = vmatprep.mubr.f32.mxu0 0.0
        %2293 = vmatmul.mubr.f32.gmra.mrb[0].mxu0 %v2167
        %v2294 = vpop.f32.mrb[0].mxu0
        %v2295 = vadd.f32 0.0, %v2294
        %v2296 = vpop.f32.mrb[0].mxu0
        %2297 = vmatprep.mubr.f32.mxu0 0.0
        %2298 = vmatmul.mubr.f32.gmra.mrb[0].mxu0 %v2170
        %v2299 = vpop.f32.mrb[0].mxu0
        %v2300 = vadd.f32 0.0, %v2299
        %v2301 = vpop.f32.mrb[0].mxu0
        %2302 = vmatprep.mubr.f32.mxu0 0.0
        %2303 = vmatmul.mubr.f32.gmra.mrb[0].mxu0 %v2173
        %v2304 = vpop.f32.mrb[0].mxu0
        %v2305 = vadd.f32 0.0, %v2304
        %v2306 = vpop.f32.mrb[0].mxu0
        %2307 = vmatprep.mubr.f32.mxu0 0.0
        %2308 = vmatmul.mubr.f32.gmra.mrb[0].mxu0 %v2176
        %v2309 = vpop.f32.mrb[0].mxu0
        %v2310 = vadd.f32 0.0, %v2309
        %v2311 = vpop.f32.mrb[0].mxu0
        %2312 = vmatprep.mubr.f32.mxu0 0.0
        %2313 = vmatmul.mubr.f32.gmra.mrb[0].mxu0 %v2179
        %v2314 = vpop.f32.mrb[0].mxu0
        %v2315 = vadd.f32 0.0, %v2314
        %v2316 = vpop.f32.mrb[0].mxu0
        %2317 = vmatprep.mubr.f32.mxu0 0.0
        %2318 = vmatmul.mubr.f32.gmra.mrb[0].mxu0 %v2182
        %v2319 = vpop.f32.mrb[0].mxu0
        %v2320 = vadd.f32 0.0, %v2319
        %v2321 = vpop.f32.mrb[0].mxu0
        %2322 = vmatprep.mubr.f32.mxu0 0.0
        %2323 = vmatmul.mubr.f32.gmra.mrb[0].mxu0 %v2185
        %v2324 = vpop.f32.mrb[0].mxu0
        %v2325 = vadd.f32 0.0, %v2324
        %v2326 = vpop.f32.mrb[0].mxu0
        %2327 = vmatprep.mubr.f32.mxu0 0.0
        %2328 = vmatmul.mubr.f32.gmra.mrb[0].mxu0 %v2188
        %v2329 = vpop.f32.mrb[0].mxu0
        %v2330 = vadd.f32 0.0, %v2329
        %v2331 = vpop.f32.mrb[0].mxu0
        %2332 = vmatprep.mubr.f32.mxu0 0.0
        %2333 = vmatmul.mubr.f32.gmra.mrb[0].mxu0 %v2191
        %v2334 = vpop.f32.mrb[0].mxu0
        %v2335 = vadd.f32 0.0, %v2334
        %v2336 = vpop.f32.mrb[0].mxu0
        %2337 = vdwg.mxu0
        %v2338 = vadd.f32 %v2108, %v2260
        %v2339 = vadd.f32 %v2109, %v2265
        %v2340 = vadd.f32 %v2110, %v2270
        %v2341 = vadd.f32 %v2111, %v2275
        %v2342 = vadd.f32 %v2112, %v2280
        %v2343 = vadd.f32 %v2113, %v2285
        %v2344 = vadd.f32 %v2114, %v2290
        %v2345 = vadd.f32 %v2115, %v2295
        %v2346 = vadd.f32 %v2116, %v2300
        %v2347 = vadd.f32 %v2117, %v2305
        %v2348 = vadd.f32 %v2118, %v2310
        %v2349 = vadd.f32 %v2119, %v2315
        %v2350 = vadd.f32 %v2120, %v2320
        %v2351 = vadd.f32 %v2121, %v2325
        %v2352 = vadd.f32 %v2122, %v2330
        %v2353 = vadd.f32 %v2123, %v2335
        %v2354 = vld [vmem:[#allocation7] sm:$0x1]
        %v2356 = vlaneseq
        %v2357 = vshrl.u32 %v2356, 7
        %v2358 = vsub.s32 0, %v2357
        %v2359 = vrot.slane %v2354, %v2358
        %v2361 = vadd.f32 %v2338, %v2359
        %v2362 = vadd.f32 %v2339, %v2359
        %v2363 = vadd.f32 %v2340, %v2359
        %v2364 = vadd.f32 %v2341, %v2359
        %v2365 = vadd.f32 %v2342, %v2359
        %v2366 = vadd.f32 %v2343, %v2359
        %v2367 = vadd.f32 %v2344, %v2359
        %v2368 = vadd.f32 %v2345, %v2359
        %v2369 = vadd.f32 %v2346, %v2359
        %v2370 = vadd.f32 %v2347, %v2359
        %v2371 = vadd.f32 %v2348, %v2359
        %v2372 = vadd.f32 %v2349, %v2359
        %v2373 = vadd.f32 %v2350, %v2359
        %v2374 = vadd.f32 %v2351, %v2359
        %v2375 = vadd.f32 %v2352, %v2359
        %v2376 = vadd.f32 %v2353, %v2359
        %v2377 = vlaneseq
        %v2378 = vshrl.u32 %v2377, 7
        %v2379 = vsub.s32 0, %v2378
        %v2380 = vrot.slane %v928, %v2379
        %v2381 = vadd.f32 %v2361, %v2380
        %v2382 = vadd.f32 %v2362, %v2380
        %v2383 = vadd.f32 %v2363, %v2380
        %v2384 = vadd.f32 %v2364, %v2380
        %v2385 = vadd.f32 %v2365, %v2380
        %v2386 = vadd.f32 %v2366, %v2380
        %v2387 = vadd.f32 %v2367, %v2380
        %v2388 = vadd.f32 %v2368, %v2380
        %v2389 = vadd.f32 %v2369, %v2380
        %v2390 = vadd.f32 %v2370, %v2380
        %v2391 = vadd.f32 %v2371, %v2380
        %v2392 = vadd.f32 %v2372, %v2380
        %v2393 = vadd.f32 %v2373, %v2380
        %v2394 = vadd.f32 %v2374, %v2380
        %v2395 = vadd.f32 %v2375, %v2380
        %v2396 = vadd.f32 %v2376, %v2380
        %v2397 = vmax.f32 %v2381, 0.0
        %v2398 = vmax.f32 %v2382, 0.0
        %v2399 = vmax.f32 %v2383, 0.0
        %v2400 = vmax.f32 %v2384, 0.0
        %v2401 = vmax.f32 %v2385, 0.0
        %v2402 = vmax.f32 %v2386, 0.0
        %v2403 = vmax.f32 %v2387, 0.0
        %v2404 = vmax.f32 %v2388, 0.0
        %v2405 = vmax.f32 %v2389, 0.0
        %v2406 = vmax.f32 %v2390, 0.0
        %v2407 = vmax.f32 %v2391, 0.0
        %v2408 = vmax.f32 %v2392, 0.0
        %v2409 = vmax.f32 %v2393, 0.0
        %v2410 = vmax.f32 %v2394, 0.0
        %v2411 = vmax.f32 %v2395, 0.0
        %v2412 = vmax.f32 %v2396, 0.0
        %v2413 = vld [vmem:[#allocation8] sm:$0xff]
        %v2414 = vld [vmem:[#allocation8 + $0x8] sm:$0xff]
        %v2415 = vld [vmem:[#allocation8 + $0x10] sm:$0xff]
        %v2416 = vld [vmem:[#allocation8 + $0x18] sm:$0xff]
        %v2418 = vsel %vm935, %v2397, 0
        %v2421 = vsel %vm935, %v2398, 0
        %v2424 = vsel %vm935, %v2399, 0
        %v2427 = vsel %vm935, %v2400, 0
        %v2430 = vsel %vm935, %v2401, 0
        %v2433 = vsel %vm935, %v2402, 0
        %v2436 = vsel %vm935, %v2403, 0
        %v2439 = vsel %vm935, %v2404, 0
        %v2442 = vsel %vm935, %v2405, 0
        %v2445 = vsel %vm935, %v2406, 0
        %v2448 = vsel %vm935, %v2407, 0
        %v2451 = vsel %vm935, %v2408, 0
        %v2454 = vsel %vm935, %v2409, 0
        %v2457 = vsel %vm935, %v2410, 0
        %v2460 = vsel %vm935, %v2411, 0
        %v2463 = vsel %vm935, %v2412, 0
        %2465 = vmatprep.subr.mxu0 0.0
        %2466 = vmatpush1.msra.mxu0 %v2413
        %2467 = vmatprep.subr.mxu0 0.0
        %2468 = vmatpush1.msra.mxu0 %v2414
        %2469 = vmatprep.subr.mxu0 0.0
        %2470 = vmatpush1.msra.mxu0 %v2415
        %2471 = vmatprep.subr.mxu0 0.0
        %2472 = vmatpush1.msra.mxu0 %v2416
        %2473 = vmatprep.subr.mxu0 0.0
        %2474 = vmatpush1.msra.mxu0 0.0
        %2475 = vmatprep.subr.mxu0 0.0
        %2476 = vmatpush1.msra.mxu0 0.0
        %2477 = vmatprep.subr.mxu0 0.0
        %2478 = vmatpush1.msra.mxu0 0.0
        %2479 = vmatprep.subr.mxu0 0.0
        %2480 = vmatpush1.msra.mxu0 0.0
        %2481 = vmatprep.subr.mxu0 0.0
        %2482 = vmatpush1.msra.mxu0 0.0
        %2483 = vmatprep.subr.mxu0 0.0
        %2484 = vmatpush1.msra.mxu0 0.0
        %2485 = vmatprep.subr.mxu0 0.0
        %2486 = vmatpush1.msra.mxu0 0.0
        %2487 = vmatprep.subr.mxu0 0.0
        %2488 = vmatpush1.msra.mxu0 0.0
        %2489 = vmatprep.subr.mxu0 0.0
        %2490 = vmatpush1.msra.mxu0 0.0
        %2491 = vmatprep.subr.mxu0 0.0
        %2492 = vmatpush1.msra.mxu0 0.0
        %2493 = vmatprep.subr.mxu0 0.0
        %2494 = vmatpush1.msra.mxu0 0.0
        %2495 = vmatprep.subr.mxu0 0.0
        %2496 = vmatpush1.msra.mxu0 0.0
        %2497 = vmatprep.subr.mxu0 0.0
        %2498 = vmatpush1.msra.mxu0 0.0
        %2499 = vmatprep.subr.mxu0 0.0
        %2500 = vmatpush1.msra.mxu0 0.0
        %2501 = vmatprep.subr.mxu0 0.0
        %2502 = vmatpush1.msra.mxu0 0.0
        %2503 = vmatprep.subr.mxu0 0.0
        %2504 = vmatpush1.msra.mxu0 0.0
        %2505 = vmatprep.subr.mxu0 0.0
        %2506 = vmatpush1.msra.mxu0 0.0
        %2507 = vmatprep.subr.mxu0 0.0
        %2508 = vmatpush1.msra.mxu0 0.0
        %2509 = vmatprep.subr.mxu0 0.0
        %2510 = vmatpush1.msra.mxu0 0.0
        %2511 = vmatprep.subr.mxu0 0.0
        %2512 = vmatpush1.msra.mxu0 0.0
        %2513 = vmatprep.subr.mxu0 0.0
        %2514 = vmatpush1.msra.mxu0 0.0
        %2515 = vmatprep.subr.mxu0 0.0
        %2516 = vmatpush1.msra.mxu0 0.0
        %2517 = vmatprep.subr.mxu0 0.0
        %2518 = vmatpush1.msra.mxu0 0.0
        %2519 = vmatprep.subr.mxu0 0.0
        %2520 = vmatpush1.msra.mxu0 0.0
        %2521 = vmatprep.subr.mxu0 0.0
        %2522 = vmatpush1.msra.mxu0 0.0
        %2523 = vmatprep.subr.mxu0 0.0
        %2524 = vmatpush1.msra.mxu0 0.0
        %2525 = vmatprep.subr.mxu0 0.0
        %2526 = vmatpush1.msra.mxu0 0.0
        %2527 = vmatprep.subr.mxu0 0.0
        %2528 = vmatpush1.msra.mxu0 0.0
        %2529 = vmatprep.mubr.f32.mxu0 0.0
        %2530 = vmatmul.mubr.f32.gmra.mrb[0].mxu0 %v2418
        %v2531 = vpop.f32.mrb[0].mxu0
        %v2532 = vadd.f32 0.0, %v2531
        %v2533 = vpop.f32.mrb[0].mxu0
        %2534 = vmatprep.mubr.f32.mxu0 0.0
        %2535 = vmatmul.mubr.f32.gmra.mrb[0].mxu0 %v2421
        %v2536 = vpop.f32.mrb[0].mxu0
        %v2537 = vadd.f32 0.0, %v2536
        %v2538 = vpop.f32.mrb[0].mxu0
        %2539 = vmatprep.mubr.f32.mxu0 0.0
        %2540 = vmatmul.mubr.f32.gmra.mrb[0].mxu0 %v2424
        %v2541 = vpop.f32.mrb[0].mxu0
        %v2542 = vadd.f32 0.0, %v2541
        %v2543 = vpop.f32.mrb[0].mxu0
        %2544 = vmatprep.mubr.f32.mxu0 0.0
        %2545 = vmatmul.mubr.f32.gmra.mrb[0].mxu0 %v2427
        %v2546 = vpop.f32.mrb[0].mxu0
        %v2547 = vadd.f32 0.0, %v2546
        %v2548 = vpop.f32.mrb[0].mxu0
        %2549 = vmatprep.mubr.f32.mxu0 0.0
        %2550 = vmatmul.mubr.f32.gmra.mrb[0].mxu0 %v2430
        %v2551 = vpop.f32.mrb[0].mxu0
        %v2552 = vadd.f32 0.0, %v2551
        %v2553 = vpop.f32.mrb[0].mxu0
        %2554 = vmatprep.mubr.f32.mxu0 0.0
        %2555 = vmatmul.mubr.f32.gmra.mrb[0].mxu0 %v2433
        %v2556 = vpop.f32.mrb[0].mxu0
        %v2557 = vadd.f32 0.0, %v2556
        %v2558 = vpop.f32.mrb[0].mxu0
        %2559 = vmatprep.mubr.f32.mxu0 0.0
        %2560 = vmatmul.mubr.f32.gmra.mrb[0].mxu0 %v2436
        %v2561 = vpop.f32.mrb[0].mxu0
        %v2562 = vadd.f32 0.0, %v2561
        %v2563 = vpop.f32.mrb[0].mxu0
        %2564 = vmatprep.mubr.f32.mxu0 0.0
        %2565 = vmatmul.mubr.f32.gmra.mrb[0].mxu0 %v2439
        %v2566 = vpop.f32.mrb[0].mxu0
        %v2567 = vadd.f32 0.0, %v2566
        %v2568 = vpop.f32.mrb[0].mxu0
        %2569 = vmatprep.mubr.f32.mxu0 0.0
        %2570 = vmatmul.mubr.f32.gmra.mrb[0].mxu0 %v2442
        %v2571 = vpop.f32.mrb[0].mxu0
        %v2572 = vadd.f32 0.0, %v2571
        %v2573 = vpop.f32.mrb[0].mxu0
        %2574 = vmatprep.mubr.f32.mxu0 0.0
        %2575 = vmatmul.mubr.f32.gmra.mrb[0].mxu0 %v2445
        %v2576 = vpop.f32.mrb[0].mxu0
        %v2577 = vadd.f32 0.0, %v2576
        %v2578 = vpop.f32.mrb[0].mxu0
        %2579 = vmatprep.mubr.f32.mxu0 0.0
        %2580 = vmatmul.mubr.f32.gmra.mrb[0].mxu0 %v2448
        %v2581 = vpop.f32.mrb[0].mxu0
        %v2582 = vadd.f32 0.0, %v2581
        %v2583 = vpop.f32.mrb[0].mxu0
        %2584 = vmatprep.mubr.f32.mxu0 0.0
        %2585 = vmatmul.mubr.f32.gmra.mrb[0].mxu0 %v2451
        %v2586 = vpop.f32.mrb[0].mxu0
        %v2587 = vadd.f32 0.0, %v2586
        %v2588 = vpop.f32.mrb[0].mxu0
        %2589 = vmatprep.mubr.f32.mxu0 0.0
        %2590 = vmatmul.mubr.f32.gmra.mrb[0].mxu0 %v2454
        %v2591 = vpop.f32.mrb[0].mxu0
        %v2592 = vadd.f32 0.0, %v2591
        %v2593 = vpop.f32.mrb[0].mxu0
        %2594 = vmatprep.mubr.f32.mxu0 0.0
        %2595 = vmatmul.mubr.f32.gmra.mrb[0].mxu0 %v2457
        %v2596 = vpop.f32.mrb[0].mxu0
        %v2597 = vadd.f32 0.0, %v2596
        %v2598 = vpop.f32.mrb[0].mxu0
        %2599 = vmatprep.mubr.f32.mxu0 0.0
        %2600 = vmatmul.mubr.f32.gmra.mrb[0].mxu0 %v2460
        %v2601 = vpop.f32.mrb[0].mxu0
        %v2602 = vadd.f32 0.0, %v2601
        %v2603 = vpop.f32.mrb[0].mxu0
        %2604 = vmatprep.mubr.f32.mxu0 0.0
        %2605 = vmatmul.mubr.f32.gmra.mrb[0].mxu0 %v2463
        %v2606 = vpop.f32.mrb[0].mxu0
        %v2607 = vadd.f32 0.0, %v2606
        %v2608 = vpop.f32.mrb[0].mxu0
        %2609 = vdwg.mxu0
        %v2610 = vld [vmem:[%s4] sm:$0xff]
        %v2611 = vld [vmem:[%s4 + $0x8] sm:$0xff]
        %v2612 = vld [vmem:[%s4 + $0x10] sm:$0xff]
        %v2613 = vld [vmem:[%s4 + $0x18] sm:$0xff]
        %v2614 = vld [vmem:[%s4 + $0x20] sm:$0xff]
        %v2615 = vld [vmem:[%s4 + $0x28] sm:$0xff]
        %v2616 = vld [vmem:[%s4 + $0x30] sm:$0xff]
        %v2617 = vld [vmem:[%s4 + $0x38] sm:$0xff]
        %v2618 = vld [vmem:[%s4 + $0x40] sm:$0xff]
        %v2619 = vld [vmem:[%s4 + $0x48] sm:$0xff]
        %v2620 = vld [vmem:[%s4 + $0x50] sm:$0xff]
        %v2621 = vld [vmem:[%s4 + $0x58] sm:$0xff]
        %v2622 = vld [vmem:[%s4 + $0x60] sm:$0xff]
        %v2623 = vld [vmem:[%s4 + $0x68] sm:$0xff]
        %v2624 = vld [vmem:[%s4 + $0x70] sm:$0xff]
        %v2625 = vld [vmem:[%s4 + $0x78] sm:$0xff]
        %s2626 = scalar_lea.vmem [#allocation8], 32
        %v2627 = vld [vmem:[%s2626] sm:$0xff]
        %v2628 = vld [vmem:[%s2626 + $0x8] sm:$0xff]
        %v2629 = vld [vmem:[%s2626 + $0x10] sm:$0xff]
        %v2630 = vld [vmem:[%s2626 + $0x18] sm:$0xff]
        %2631 = vmatprep.subr.mxu0 0.0
        %2632 = vmatpush1.msra.mxu0 %v2627
        %2633 = vmatprep.subr.mxu0 0.0
        %2634 = vmatpush1.msra.mxu0 %v2628
        %2635 = vmatprep.subr.mxu0 0.0
        %2636 = vmatpush1.msra.mxu0 %v2629
        %2637 = vmatprep.subr.mxu0 0.0
        %2638 = vmatpush1.msra.mxu0 %v2630
        %2639 = vmatprep.subr.mxu0 0.0
        %2640 = vmatpush1.msra.mxu0 0.0
        %2641 = vmatprep.subr.mxu0 0.0
        %2642 = vmatpush1.msra.mxu0 0.0
        %2643 = vmatprep.subr.mxu0 0.0
        %2644 = vmatpush1.msra.mxu0 0.0
        %2645 = vmatprep.subr.mxu0 0.0
        %2646 = vmatpush1.msra.mxu0 0.0
        %2647 = vmatprep.subr.mxu0 0.0
        %2648 = vmatpush1.msra.mxu0 0.0
        %2649 = vmatprep.subr.mxu0 0.0
        %2650 = vmatpush1.msra.mxu0 0.0
        %2651 = vmatprep.subr.mxu0 0.0
        %2652 = vmatpush1.msra.mxu0 0.0
        %2653 = vmatprep.subr.mxu0 0.0
        %2654 = vmatpush1.msra.mxu0 0.0
        %2655 = vmatprep.subr.mxu0 0.0
        %2656 = vmatpush1.msra.mxu0 0.0
        %2657 = vmatprep.subr.mxu0 0.0
        %2658 = vmatpush1.msra.mxu0 0.0
        %2659 = vmatprep.subr.mxu0 0.0
        %2660 = vmatpush1.msra.mxu0 0.0
        %2661 = vmatprep.subr.mxu0 0.0
        %2662 = vmatpush1.msra.mxu0 0.0
        %2663 = vmatprep.subr.mxu0 0.0
        %2664 = vmatpush1.msra.mxu0 0.0
        %2665 = vmatprep.subr.mxu0 0.0
        %2666 = vmatpush1.msra.mxu0 0.0
        %2667 = vmatprep.subr.mxu0 0.0
        %2668 = vmatpush1.msra.mxu0 0.0
        %2669 = vmatprep.subr.mxu0 0.0
        %2670 = vmatpush1.msra.mxu0 0.0
        %2671 = vmatprep.subr.mxu0 0.0
        %2672 = vmatpush1.msra.mxu0 0.0
        %2673 = vmatprep.subr.mxu0 0.0
        %2674 = vmatpush1.msra.mxu0 0.0
        %2675 = vmatprep.subr.mxu0 0.0
        %2676 = vmatpush1.msra.mxu0 0.0
        %2677 = vmatprep.subr.mxu0 0.0
        %2678 = vmatpush1.msra.mxu0 0.0
        %2679 = vmatprep.subr.mxu0 0.0
        %2680 = vmatpush1.msra.mxu0 0.0
        %2681 = vmatprep.subr.mxu0 0.0
        %2682 = vmatpush1.msra.mxu0 0.0
        %2683 = vmatprep.subr.mxu0 0.0
        %2684 = vmatpush1.msra.mxu0 0.0
        %2685 = vmatprep.subr.mxu0 0.0
        %2686 = vmatpush1.msra.mxu0 0.0
        %2687 = vmatprep.subr.mxu0 0.0
        %2688 = vmatpush1.msra.mxu0 0.0
        %2689 = vmatprep.subr.mxu0 0.0
        %2690 = vmatpush1.msra.mxu0 0.0
        %2691 = vmatprep.subr.mxu0 0.0
        %2692 = vmatpush1.msra.mxu0 0.0
        %2693 = vmatprep.subr.mxu0 0.0
        %2694 = vmatpush1.msra.mxu0 0.0
        %2695 = vmatprep.mubr.f32.mxu0 0.0
        %2696 = vmatmul.mubr.f32.gmra.mrb[0].mxu0 %v2418
        %v2697 = vpop.f32.mrb[0].mxu0
        %v2698 = vadd.f32 0.0, %v2697
        %v2699 = vpop.f32.mrb[0].mxu0
        %2700 = vmatprep.mubr.f32.mxu0 0.0
        %2701 = vmatmul.mubr.f32.gmra.mrb[0].mxu0 %v2421
        %v2702 = vpop.f32.mrb[0].mxu0
        %v2703 = vadd.f32 0.0, %v2702
        %v2704 = vpop.f32.mrb[0].mxu0
        %2705 = vmatprep.mubr.f32.mxu0 0.0
        %2706 = vmatmul.mubr.f32.gmra.mrb[0].mxu0 %v2424
        %v2707 = vpop.f32.mrb[0].mxu0
        %v2708 = vadd.f32 0.0, %v2707
        %v2709 = vpop.f32.mrb[0].mxu0
        %2710 = vmatprep.mubr.f32.mxu0 0.0
        %2711 = vmatmul.mubr.f32.gmra.mrb[0].mxu0 %v2427
        %v2712 = vpop.f32.mrb[0].mxu0
        %v2713 = vadd.f32 0.0, %v2712
        %v2714 = vpop.f32.mrb[0].mxu0
        %2715 = vmatprep.mubr.f32.mxu0 0.0
        %2716 = vmatmul.mubr.f32.gmra.mrb[0].mxu0 %v2430
        %v2717 = vpop.f32.mrb[0].mxu0
        %v2718 = vadd.f32 0.0, %v2717
        %v2719 = vpop.f32.mrb[0].mxu0
        %2720 = vmatprep.mubr.f32.mxu0 0.0
        %2721 = vmatmul.mubr.f32.gmra.mrb[0].mxu0 %v2433
        %v2722 = vpop.f32.mrb[0].mxu0
        %v2723 = vadd.f32 0.0, %v2722
        %v2724 = vpop.f32.mrb[0].mxu0
        %2725 = vmatprep.mubr.f32.mxu0 0.0
        %2726 = vmatmul.mubr.f32.gmra.mrb[0].mxu0 %v2436
        %v2727 = vpop.f32.mrb[0].mxu0
        %v2728 = vadd.f32 0.0, %v2727
        %v2729 = vpop.f32.mrb[0].mxu0
        %2730 = vmatprep.mubr.f32.mxu0 0.0
        %2731 = vmatmul.mubr.f32.gmra.mrb[0].mxu0 %v2439
        %v2732 = vpop.f32.mrb[0].mxu0
        %v2733 = vadd.f32 0.0, %v2732
        %v2734 = vpop.f32.mrb[0].mxu0
        %2735 = vmatprep.mubr.f32.mxu0 0.0
        %2736 = vmatmul.mubr.f32.gmra.mrb[0].mxu0 %v2442
        %v2737 = vpop.f32.mrb[0].mxu0
        %v2738 = vadd.f32 0.0, %v2737
        %v2739 = vpop.f32.mrb[0].mxu0
        %2740 = vmatprep.mubr.f32.mxu0 0.0
        %2741 = vmatmul.mubr.f32.gmra.mrb[0].mxu0 %v2445
        %v2742 = vpop.f32.mrb[0].mxu0
        %v2743 = vadd.f32 0.0, %v2742
        %v2744 = vpop.f32.mrb[0].mxu0
        %2745 = vmatprep.mubr.f32.mxu0 0.0
        %2746 = vmatmul.mubr.f32.gmra.mrb[0].mxu0 %v2448
        %v2747 = vpop.f32.mrb[0].mxu0
        %v2748 = vadd.f32 0.0, %v2747
        %v2749 = vpop.f32.mrb[0].mxu0
        %2750 = vmatprep.mubr.f32.mxu0 0.0
        %2751 = vmatmul.mubr.f32.gmra.mrb[0].mxu0 %v2451
        %v2752 = vpop.f32.mrb[0].mxu0
        %v2753 = vadd.f32 0.0, %v2752
        %v2754 = vpop.f32.mrb[0].mxu0
        %2755 = vmatprep.mubr.f32.mxu0 0.0
        %2756 = vmatmul.mubr.f32.gmra.mrb[0].mxu0 %v2454
        %v2757 = vpop.f32.mrb[0].mxu0
        %v2758 = vadd.f32 0.0, %v2757
        %v2759 = vpop.f32.mrb[0].mxu0
        %2760 = vmatprep.mubr.f32.mxu0 0.0
        %2761 = vmatmul.mubr.f32.gmra.mrb[0].mxu0 %v2457
        %v2762 = vpop.f32.mrb[0].mxu0
        %v2763 = vadd.f32 0.0, %v2762
        %v2764 = vpop.f32.mrb[0].mxu0
        %2765 = vmatprep.mubr.f32.mxu0 0.0
        %2766 = vmatmul.mubr.f32.gmra.mrb[0].mxu0 %v2460
        %v2767 = vpop.f32.mrb[0].mxu0
        %v2768 = vadd.f32 0.0, %v2767
        %v2769 = vpop.f32.mrb[0].mxu0
        %2770 = vmatprep.mubr.f32.mxu0 0.0
        %2771 = vmatmul.mubr.f32.gmra.mrb[0].mxu0 %v2463
        %v2772 = vpop.f32.mrb[0].mxu0
        %v2773 = vadd.f32 0.0, %v2772
        %v2774 = vpop.f32.mrb[0].mxu0
        %2775 = vdwg.mxu0
        %s2776 = scalar_lea.vmem %s4, 128
        %v2777 = vld [vmem:[%s2776] sm:$0xff]
        %v2778 = vld [vmem:[%s2776 + $0x8] sm:$0xff]
        %v2779 = vld [vmem:[%s2776 + $0x10] sm:$0xff]
        %v2780 = vld [vmem:[%s2776 + $0x18] sm:$0xff]
        %v2781 = vld [vmem:[%s2776 + $0x20] sm:$0xff]
        %v2782 = vld [vmem:[%s2776 + $0x28] sm:$0xff]
        %v2783 = vld [vmem:[%s2776 + $0x30] sm:$0xff]
        %v2784 = vld [vmem:[%s2776 + $0x38] sm:$0xff]
        %v2785 = vld [vmem:[%s2776 + $0x40] sm:$0xff]
        %v2786 = vld [vmem:[%s2776 + $0x48] sm:$0xff]
        %v2787 = vld [vmem:[%s2776 + $0x50] sm:$0xff]
        %v2788 = vld [vmem:[%s2776 + $0x58] sm:$0xff]
        %v2789 = vld [vmem:[%s2776 + $0x60] sm:$0xff]
        %v2790 = vld [vmem:[%s2776 + $0x68] sm:$0xff]
        %v2791 = vld [vmem:[%s2776 + $0x70] sm:$0xff]
        %v2792 = vld [vmem:[%s2776 + $0x78] sm:$0xff]
        %2793 = vmatprep.subr.mxu0 0.0
        %2794 = vmatpush1.msra.mxu0 %v2698
        %2795 = vmatprep.subr.mxu0 0.0
        %2796 = vmatpush1.msra.mxu0 %v2703
        %2797 = vmatprep.subr.mxu0 0.0
        %2798 = vmatpush1.msra.mxu0 %v2708
        %2799 = vmatprep.subr.mxu0 0.0
        %2800 = vmatpush1.msra.mxu0 %v2713
        %2801 = vmatprep.subr.mxu0 0.0
        %2802 = vmatpush1.msra.mxu0 %v2718
        %2803 = vmatprep.subr.mxu0 0.0
        %2804 = vmatpush1.msra.mxu0 %v2723
        %2805 = vmatprep.subr.mxu0 0.0
        %2806 = vmatpush1.msra.mxu0 %v2728
        %2807 = vmatprep.subr.mxu0 0.0
        %2808 = vmatpush1.msra.mxu0 %v2733
        %2809 = vmatprep.subr.mxu0 0.0
        %2810 = vmatpush1.msra.mxu0 %v2738
        %2811 = vmatprep.subr.mxu0 0.0
        %2812 = vmatpush1.msra.mxu0 %v2743
        %2813 = vmatprep.subr.mxu0 0.0
        %2814 = vmatpush1.msra.mxu0 %v2748
        %2815 = vmatprep.subr.mxu0 0.0
        %2816 = vmatpush1.msra.mxu0 %v2753
        %2817 = vmatprep.subr.mxu0 0.0
        %2818 = vmatpush1.msra.mxu0 %v2758
        %2819 = vmatprep.subr.mxu0 0.0
        %2820 = vmatpush1.msra.mxu0 %v2763
        %2821 = vmatprep.subr.mxu0 0.0
        %2822 = vmatpush1.msra.mxu0 %v2768
        %2823 = vmatprep.subr.mxu0 0.0
        %2824 = vmatpush1.msra.mxu0 %v2773
        %2825 = vmatprep.subr.mxu0 0.0
        %2826 = vmatpush1.msra.mxu0 0.0
        %2827 = vmatprep.subr.mxu0 0.0
        %2828 = vmatpush1.msra.mxu0 0.0
        %2829 = vmatprep.subr.mxu0 0.0
        %2830 = vmatpush1.msra.mxu0 0.0
        %2831 = vmatprep.subr.mxu0 0.0
        %2832 = vmatpush1.msra.mxu0 0.0
        %2833 = vmatprep.subr.mxu0 0.0
        %2834 = vmatpush1.msra.mxu0 0.0
        %2835 = vmatprep.subr.mxu0 0.0
        %2836 = vmatpush1.msra.mxu0 0.0
        %2837 = vmatprep.subr.mxu0 0.0
        %2838 = vmatpush1.msra.mxu0 0.0
        %2839 = vmatprep.subr.mxu0 0.0
        %2840 = vmatpush1.msra.mxu0 0.0
        %2841 = vmatprep.subr.mxu0 0.0
        %2842 = vmatpush1.msra.mxu0 0.0
        %2843 = vmatprep.subr.mxu0 0.0
        %2844 = vmatpush1.msra.mxu0 0.0
        %2845 = vmatprep.subr.mxu0 0.0
        %2846 = vmatpush1.msra.mxu0 0.0
        %2847 = vmatprep.subr.mxu0 0.0
        %2848 = vmatpush1.msra.mxu0 0.0
        %2849 = vmatprep.subr.mxu0 0.0
        %2850 = vmatpush1.msra.mxu0 0.0
        %2851 = vmatprep.subr.mxu0 0.0
        %2852 = vmatpush1.msra.mxu0 0.0
        %2853 = vmatprep.subr.mxu0 0.0
        %2854 = vmatpush1.msra.mxu0 0.0
        %2855 = vmatprep.subr.mxu0 0.0
        %2856 = vmatpush1.msra.mxu0 0.0
        %2857 = vmatprep.mubr.f32.mxu0 0.0
        %2858 = vmatmul.mubr.f32.gmra.mrb[0].mxu0 %v2777
        %v2859 = vpop.f32.mrb[0].mxu0
        %v2860 = vadd.f32 0.0, %v2859
        %v2861 = vpop.f32.mrb[0].mxu0
        %2862 = vmatprep.mubr.f32.mxu0 0.0
        %2863 = vmatmul.mubr.f32.gmra.mrb[0].mxu0 %v2778
        %v2864 = vpop.f32.mrb[0].mxu0
        %v2865 = vadd.f32 0.0, %v2864
        %v2866 = vpop.f32.mrb[0].mxu0
        %2867 = vmatprep.mubr.f32.mxu0 0.0
        %2868 = vmatmul.mubr.f32.gmra.mrb[0].mxu0 %v2779
        %v2869 = vpop.f32.mrb[0].mxu0
        %v2870 = vadd.f32 0.0, %v2869
        %v2871 = vpop.f32.mrb[0].mxu0
        %2872 = vmatprep.mubr.f32.mxu0 0.0
        %2873 = vmatmul.mubr.f32.gmra.mrb[0].mxu0 %v2780
        %v2874 = vpop.f32.mrb[0].mxu0
        %v2875 = vadd.f32 0.0, %v2874
        %v2876 = vpop.f32.mrb[0].mxu0
        %2877 = vmatprep.mubr.f32.mxu0 0.0
        %2878 = vmatmul.mubr.f32.gmra.mrb[0].mxu0 %v2781
        %v2879 = vpop.f32.mrb[0].mxu0
        %v2880 = vadd.f32 0.0, %v2879
        %v2881 = vpop.f32.mrb[0].mxu0
        %2882 = vmatprep.mubr.f32.mxu0 0.0
        %2883 = vmatmul.mubr.f32.gmra.mrb[0].mxu0 %v2782
        %v2884 = vpop.f32.mrb[0].mxu0
        %v2885 = vadd.f32 0.0, %v2884
        %v2886 = vpop.f32.mrb[0].mxu0
        %2887 = vmatprep.mubr.f32.mxu0 0.0
        %2888 = vmatmul.mubr.f32.gmra.mrb[0].mxu0 %v2783
        %v2889 = vpop.f32.mrb[0].mxu0
        %v2890 = vadd.f32 0.0, %v2889
        %v2891 = vpop.f32.mrb[0].mxu0
        %2892 = vmatprep.mubr.f32.mxu0 0.0
        %2893 = vmatmul.mubr.f32.gmra.mrb[0].mxu0 %v2784
        %v2894 = vpop.f32.mrb[0].mxu0
        %v2895 = vadd.f32 0.0, %v2894
        %v2896 = vpop.f32.mrb[0].mxu0
        %2897 = vmatprep.mubr.f32.mxu0 0.0
        %2898 = vmatmul.mubr.f32.gmra.mrb[0].mxu0 %v2785
        %v2899 = vpop.f32.mrb[0].mxu0
        %v2900 = vadd.f32 0.0, %v2899
        %v2901 = vpop.f32.mrb[0].mxu0
        %2902 = vmatprep.mubr.f32.mxu0 0.0
        %2903 = vmatmul.mubr.f32.gmra.mrb[0].mxu0 %v2786
        %v2904 = vpop.f32.mrb[0].mxu0
        %v2905 = vadd.f32 0.0, %v2904
        %v2906 = vpop.f32.mrb[0].mxu0
        %2907 = vmatprep.mubr.f32.mxu0 0.0
        %2908 = vmatmul.mubr.f32.gmra.mrb[0].mxu0 %v2787
        %v2909 = vpop.f32.mrb[0].mxu0
        %v2910 = vadd.f32 0.0, %v2909
        %v2911 = vpop.f32.mrb[0].mxu0
        %2912 = vmatprep.mubr.f32.mxu0 0.0
        %2913 = vmatmul.mubr.f32.gmra.mrb[0].mxu0 %v2788
        %v2914 = vpop.f32.mrb[0].mxu0
        %v2915 = vadd.f32 0.0, %v2914
        %v2916 = vpop.f32.mrb[0].mxu0
        %2917 = vmatprep.mubr.f32.mxu0 0.0
        %2918 = vmatmul.mubr.f32.gmra.mrb[0].mxu0 %v2789
        %v2919 = vpop.f32.mrb[0].mxu0
        %v2920 = vadd.f32 0.0, %v2919
        %v2921 = vpop.f32.mrb[0].mxu0
        %2922 = vmatprep.mubr.f32.mxu0 0.0
        %2923 = vmatmul.mubr.f32.gmra.mrb[0].mxu0 %v2790
        %v2924 = vpop.f32.mrb[0].mxu0
        %v2925 = vadd.f32 0.0, %v2924
        %v2926 = vpop.f32.mrb[0].mxu0
        %2927 = vmatprep.mubr.f32.mxu0 0.0
        %2928 = vmatmul.mubr.f32.gmra.mrb[0].mxu0 %v2791
        %v2929 = vpop.f32.mrb[0].mxu0
        %v2930 = vadd.f32 0.0, %v2929
        %v2931 = vpop.f32.mrb[0].mxu0
        %2932 = vmatprep.mubr.f32.mxu0 0.0
        %2933 = vmatmul.mubr.f32.gmra.mrb[0].mxu0 %v2792
        %v2934 = vpop.f32.mrb[0].mxu0
        %v2935 = vadd.f32 0.0, %v2934
        %v2936 = vpop.f32.mrb[0].mxu0
        %2937 = vdwg.mxu0
        %2938 = vmatprep.subr.mxu0 0.0
        %2939 = vmatpush1.msra.mxu0 %v2532
        %2940 = vmatprep.subr.mxu0 0.0
        %2941 = vmatpush1.msra.mxu0 %v2537
        %2942 = vmatprep.subr.mxu0 0.0
        %2943 = vmatpush1.msra.mxu0 %v2542
        %2944 = vmatprep.subr.mxu0 0.0
        %2945 = vmatpush1.msra.mxu0 %v2547
        %2946 = vmatprep.subr.mxu0 0.0
        %2947 = vmatpush1.msra.mxu0 %v2552
        %2948 = vmatprep.subr.mxu0 0.0
        %2949 = vmatpush1.msra.mxu0 %v2557
        %2950 = vmatprep.subr.mxu0 0.0
        %2951 = vmatpush1.msra.mxu0 %v2562
        %2952 = vmatprep.subr.mxu0 0.0
        %2953 = vmatpush1.msra.mxu0 %v2567
        %2954 = vmatprep.subr.mxu0 0.0
        %2955 = vmatpush1.msra.mxu0 %v2572
        %2956 = vmatprep.subr.mxu0 0.0
        %2957 = vmatpush1.msra.mxu0 %v2577
        %2958 = vmatprep.subr.mxu0 0.0
        %2959 = vmatpush1.msra.mxu0 %v2582
        %2960 = vmatprep.subr.mxu0 0.0
        %2961 = vmatpush1.msra.mxu0 %v2587
        %2962 = vmatprep.subr.mxu0 0.0
        %2963 = vmatpush1.msra.mxu0 %v2592
        %2964 = vmatprep.subr.mxu0 0.0
        %2965 = vmatpush1.msra.mxu0 %v2597
        %2966 = vmatprep.subr.mxu0 0.0
        %2967 = vmatpush1.msra.mxu0 %v2602
        %2968 = vmatprep.subr.mxu0 0.0
        %2969 = vmatpush1.msra.mxu0 %v2607
        %2970 = vmatprep.subr.mxu0 0.0
        %2971 = vmatpush1.msra.mxu0 0.0
        %2972 = vmatprep.subr.mxu0 0.0
        %2973 = vmatpush1.msra.mxu0 0.0
        %2974 = vmatprep.subr.mxu0 0.0
        %2975 = vmatpush1.msra.mxu0 0.0
        %2976 = vmatprep.subr.mxu0 0.0
        %2977 = vmatpush1.msra.mxu0 0.0
        %2978 = vmatprep.subr.mxu0 0.0
        %2979 = vmatpush1.msra.mxu0 0.0
        %2980 = vmatprep.subr.mxu0 0.0
        %2981 = vmatpush1.msra.mxu0 0.0
        %2982 = vmatprep.subr.mxu0 0.0
        %2983 = vmatpush1.msra.mxu0 0.0
        %2984 = vmatprep.subr.mxu0 0.0
        %2985 = vmatpush1.msra.mxu0 0.0
        %2986 = vmatprep.subr.mxu0 0.0
        %2987 = vmatpush1.msra.mxu0 0.0
        %2988 = vmatprep.subr.mxu0 0.0
        %2989 = vmatpush1.msra.mxu0 0.0
        %2990 = vmatprep.subr.mxu0 0.0
        %2991 = vmatpush1.msra.mxu0 0.0
        %2992 = vmatprep.subr.mxu0 0.0
        %2993 = vmatpush1.msra.mxu0 0.0
        %2994 = vmatprep.subr.mxu0 0.0
        %2995 = vmatpush1.msra.mxu0 0.0
        %2996 = vmatprep.subr.mxu0 0.0
        %2997 = vmatpush1.msra.mxu0 0.0
        %2998 = vmatprep.subr.mxu0 0.0
        %2999 = vmatpush1.msra.mxu0 0.0
        %3000 = vmatprep.subr.mxu0 0.0
        %3001 = vmatpush1.msra.mxu0 0.0
        %3002 = vmatprep.mubr.f32.mxu0 0.0
        %3003 = vmatmul.mubr.f32.gmra.mrb[0].mxu0 %v2610
        %v3004 = vpop.f32.mrb[0].mxu0
        %v3005 = vadd.f32 %v2860, %v3004
        %v3006 = vpop.f32.mrb[0].mxu0
        %3007 = vmatprep.mubr.f32.mxu0 0.0
        %3008 = vmatmul.mubr.f32.gmra.mrb[0].mxu0 %v2611
        %v3009 = vpop.f32.mrb[0].mxu0
        %v3010 = vadd.f32 %v2865, %v3009
        %v3011 = vpop.f32.mrb[0].mxu0
        %3012 = vmatprep.mubr.f32.mxu0 0.0
        %3013 = vmatmul.mubr.f32.gmra.mrb[0].mxu0 %v2612
        %v3014 = vpop.f32.mrb[0].mxu0
        %v3015 = vadd.f32 %v2870, %v3014
        %v3016 = vpop.f32.mrb[0].mxu0
        %3017 = vmatprep.mubr.f32.mxu0 0.0
        %3018 = vmatmul.mubr.f32.gmra.mrb[0].mxu0 %v2613
        %v3019 = vpop.f32.mrb[0].mxu0
        %v3020 = vadd.f32 %v2875, %v3019
        %v3021 = vpop.f32.mrb[0].mxu0
        %3022 = vmatprep.mubr.f32.mxu0 0.0
        %3023 = vmatmul.mubr.f32.gmra.mrb[0].mxu0 %v2614
        %v3024 = vpop.f32.mrb[0].mxu0
        %v3025 = vadd.f32 %v2880, %v3024
        %v3026 = vpop.f32.mrb[0].mxu0
        %3027 = vmatprep.mubr.f32.mxu0 0.0
        %3028 = vmatmul.mubr.f32.gmra.mrb[0].mxu0 %v2615
        %v3029 = vpop.f32.mrb[0].mxu0
        %v3030 = vadd.f32 %v2885, %v3029
        %v3031 = vpop.f32.mrb[0].mxu0
        %3032 = vmatprep.mubr.f32.mxu0 0.0
        %3033 = vmatmul.mubr.f32.gmra.mrb[0].mxu0 %v2616
        %v3034 = vpop.f32.mrb[0].mxu0
        %v3035 = vadd.f32 %v2890, %v3034
        %v3036 = vpop.f32.mrb[0].mxu0
        %3037 = vmatprep.mubr.f32.mxu0 0.0
        %3038 = vmatmul.mubr.f32.gmra.mrb[0].mxu0 %v2617
        %v3039 = vpop.f32.mrb[0].mxu0
        %v3040 = vadd.f32 %v2895, %v3039
        %v3041 = vpop.f32.mrb[0].mxu0
        %3042 = vmatprep.mubr.f32.mxu0 0.0
        %3043 = vmatmul.mubr.f32.gmra.mrb[0].mxu0 %v2618
        %v3044 = vpop.f32.mrb[0].mxu0
        %v3045 = vadd.f32 %v2900, %v3044
        %v3046 = vpop.f32.mrb[0].mxu0
        %3047 = vmatprep.mubr.f32.mxu0 0.0
        %3048 = vmatmul.mubr.f32.gmra.mrb[0].mxu0 %v2619
        %v3049 = vpop.f32.mrb[0].mxu0
        %v3050 = vadd.f32 %v2905, %v3049
        %v3051 = vpop.f32.mrb[0].mxu0
        %3052 = vmatprep.mubr.f32.mxu0 0.0
        %3053 = vmatmul.mubr.f32.gmra.mrb[0].mxu0 %v2620
        %v3054 = vpop.f32.mrb[0].mxu0
        %v3055 = vadd.f32 %v2910, %v3054
        %v3056 = vpop.f32.mrb[0].mxu0
        %3057 = vmatprep.mubr.f32.mxu0 0.0
        %3058 = vmatmul.mubr.f32.gmra.mrb[0].mxu0 %v2621
        %v3059 = vpop.f32.mrb[0].mxu0
        %v3060 = vadd.f32 %v2915, %v3059
        %v3061 = vpop.f32.mrb[0].mxu0
        %3062 = vmatprep.mubr.f32.mxu0 0.0
        %3063 = vmatmul.mubr.f32.gmra.mrb[0].mxu0 %v2622
        %v3064 = vpop.f32.mrb[0].mxu0
        %v3065 = vadd.f32 %v2920, %v3064
        %v3066 = vpop.f32.mrb[0].mxu0
        %3067 = vmatprep.mubr.f32.mxu0 0.0
        %3068 = vmatmul.mubr.f32.gmra.mrb[0].mxu0 %v2623
        %v3069 = vpop.f32.mrb[0].mxu0
        %v3070 = vadd.f32 %v2925, %v3069
        %v3071 = vpop.f32.mrb[0].mxu0
        %3072 = vmatprep.mubr.f32.mxu0 0.0
        %3073 = vmatmul.mubr.f32.gmra.mrb[0].mxu0 %v2624
        %v3074 = vpop.f32.mrb[0].mxu0
        %v3075 = vadd.f32 %v2930, %v3074
        %v3076 = vpop.f32.mrb[0].mxu0
        %3077 = vmatprep.mubr.f32.mxu0 0.0
        %3078 = vmatmul.mubr.f32.gmra.mrb[0].mxu0 %v2625
        %v3079 = vpop.f32.mrb[0].mxu0
        %v3080 = vadd.f32 %v2935, %v3079
        %v3081 = vpop.f32.mrb[0].mxu0
        %3082 = vdwg.mxu0
        %s3083 = scalar_lea.vmem [#allocation8], 64
        %v3084 = vld [vmem:[%s3083] sm:$0xff]
        %v3085 = vld [vmem:[%s3083 + $0x8] sm:$0xff]
        %v3086 = vld [vmem:[%s3083 + $0x10] sm:$0xff]
        %v3087 = vld [vmem:[%s3083 + $0x18] sm:$0xff]
        %3088 = vmatprep.subr.mxu0 0.0
        %3089 = vmatpush1.msra.mxu0 %v3084
        %3090 = vmatprep.subr.mxu0 0.0
        %3091 = vmatpush1.msra.mxu0 %v3085
        %3092 = vmatprep.subr.mxu0 0.0
        %3093 = vmatpush1.msra.mxu0 %v3086
        %3094 = vmatprep.subr.mxu0 0.0
        %3095 = vmatpush1.msra.mxu0 %v3087
        %3096 = vmatprep.subr.mxu0 0.0
        %3097 = vmatpush1.msra.mxu0 0.0
        %3098 = vmatprep.subr.mxu0 0.0
        %3099 = vmatpush1.msra.mxu0 0.0
        %3100 = vmatprep.subr.mxu0 0.0
        %3101 = vmatpush1.msra.mxu0 0.0
        %3102 = vmatprep.subr.mxu0 0.0
        %3103 = vmatpush1.msra.mxu0 0.0
        %3104 = vmatprep.subr.mxu0 0.0
        %3105 = vmatpush1.msra.mxu0 0.0
        %3106 = vmatprep.subr.mxu0 0.0
        %3107 = vmatpush1.msra.mxu0 0.0
        %3108 = vmatprep.subr.mxu0 0.0
        %3109 = vmatpush1.msra.mxu0 0.0
        %3110 = vmatprep.subr.mxu0 0.0
        %3111 = vmatpush1.msra.mxu0 0.0
        %3112 = vmatprep.subr.mxu0 0.0
        %3113 = vmatpush1.msra.mxu0 0.0
        %3114 = vmatprep.subr.mxu0 0.0
        %3115 = vmatpush1.msra.mxu0 0.0
        %3116 = vmatprep.subr.mxu0 0.0
        %3117 = vmatpush1.msra.mxu0 0.0
        %3118 = vmatprep.subr.mxu0 0.0
        %3119 = vmatpush1.msra.mxu0 0.0
        %3120 = vmatprep.subr.mxu0 0.0
        %3121 = vmatpush1.msra.mxu0 0.0
        %3122 = vmatprep.subr.mxu0 0.0
        %3123 = vmatpush1.msra.mxu0 0.0
        %3124 = vmatprep.subr.mxu0 0.0
        %3125 = vmatpush1.msra.mxu0 0.0
        %3126 = vmatprep.subr.mxu0 0.0
        %3127 = vmatpush1.msra.mxu0 0.0
        %3128 = vmatprep.subr.mxu0 0.0
        %3129 = vmatpush1.msra.mxu0 0.0
        %3130 = vmatprep.subr.mxu0 0.0
        %3131 = vmatpush1.msra.mxu0 0.0
        %3132 = vmatprep.subr.mxu0 0.0
        %3133 = vmatpush1.msra.mxu0 0.0
        %3134 = vmatprep.subr.mxu0 0.0
        %3135 = vmatpush1.msra.mxu0 0.0
        %3136 = vmatprep.subr.mxu0 0.0
        %3137 = vmatpush1.msra.mxu0 0.0
        %3138 = vmatprep.subr.mxu0 0.0
        %3139 = vmatpush1.msra.mxu0 0.0
        %3140 = vmatprep.subr.mxu0 0.0
        %3141 = vmatpush1.msra.mxu0 0.0
        %3142 = vmatprep.subr.mxu0 0.0
        %3143 = vmatpush1.msra.mxu0 0.0
        %3144 = vmatprep.subr.mxu0 0.0
        %3145 = vmatpush1.msra.mxu0 0.0
        %3146 = vmatprep.subr.mxu0 0.0
        %3147 = vmatpush1.msra.mxu0 0.0
        %3148 = vmatprep.subr.mxu0 0.0
        %3149 = vmatpush1.msra.mxu0 0.0
        %3150 = vmatprep.subr.mxu0 0.0
        %3151 = vmatpush1.msra.mxu0 0.0
        %3152 = vmatprep.mubr.f32.mxu0 0.0
        %3153 = vmatmul.mubr.f32.gmra.mrb[0].mxu0 %v2418
        %v3154 = vpop.f32.mrb[0].mxu0
        %v3155 = vadd.f32 0.0, %v3154
        %v3156 = vpop.f32.mrb[0].mxu0
        %3157 = vmatprep.mubr.f32.mxu0 0.0
        %3158 = vmatmul.mubr.f32.gmra.mrb[0].mxu0 %v2421
        %v3159 = vpop.f32.mrb[0].mxu0
        %v3160 = vadd.f32 0.0, %v3159
        %v3161 = vpop.f32.mrb[0].mxu0
        %3162 = vmatprep.mubr.f32.mxu0 0.0
        %3163 = vmatmul.mubr.f32.gmra.mrb[0].mxu0 %v2424
        %v3164 = vpop.f32.mrb[0].mxu0
        %v3165 = vadd.f32 0.0, %v3164
        %v3166 = vpop.f32.mrb[0].mxu0
        %3167 = vmatprep.mubr.f32.mxu0 0.0
        %3168 = vmatmul.mubr.f32.gmra.mrb[0].mxu0 %v2427
        %v3169 = vpop.f32.mrb[0].mxu0
        %v3170 = vadd.f32 0.0, %v3169
        %v3171 = vpop.f32.mrb[0].mxu0
        %3172 = vmatprep.mubr.f32.mxu0 0.0
        %3173 = vmatmul.mubr.f32.gmra.mrb[0].mxu0 %v2430
        %v3174 = vpop.f32.mrb[0].mxu0
        %v3175 = vadd.f32 0.0, %v3174
        %v3176 = vpop.f32.mrb[0].mxu0
        %3177 = vmatprep.mubr.f32.mxu0 0.0
        %3178 = vmatmul.mubr.f32.gmra.mrb[0].mxu0 %v2433
        %v3179 = vpop.f32.mrb[0].mxu0
        %v3180 = vadd.f32 0.0, %v3179
        %v3181 = vpop.f32.mrb[0].mxu0
        %3182 = vmatprep.mubr.f32.mxu0 0.0
        %3183 = vmatmul.mubr.f32.gmra.mrb[0].mxu0 %v2436
        %v3184 = vpop.f32.mrb[0].mxu0
        %v3185 = vadd.f32 0.0, %v3184
        %v3186 = vpop.f32.mrb[0].mxu0
        %3187 = vmatprep.mubr.f32.mxu0 0.0
        %3188 = vmatmul.mubr.f32.gmra.mrb[0].mxu0 %v2439
        %v3189 = vpop.f32.mrb[0].mxu0
        %v3190 = vadd.f32 0.0, %v3189
        %v3191 = vpop.f32.mrb[0].mxu0
        %3192 = vmatprep.mubr.f32.mxu0 0.0
        %3193 = vmatmul.mubr.f32.gmra.mrb[0].mxu0 %v2442
        %v3194 = vpop.f32.mrb[0].mxu0
        %v3195 = vadd.f32 0.0, %v3194
        %v3196 = vpop.f32.mrb[0].mxu0
        %3197 = vmatprep.mubr.f32.mxu0 0.0
        %3198 = vmatmul.mubr.f32.gmra.mrb[0].mxu0 %v2445
        %v3199 = vpop.f32.mrb[0].mxu0
        %v3200 = vadd.f32 0.0, %v3199
        %v3201 = vpop.f32.mrb[0].mxu0
        %3202 = vmatprep.mubr.f32.mxu0 0.0
        %3203 = vmatmul.mubr.f32.gmra.mrb[0].mxu0 %v2448
        %v3204 = vpop.f32.mrb[0].mxu0
        %v3205 = vadd.f32 0.0, %v3204
        %v3206 = vpop.f32.mrb[0].mxu0
        %3207 = vmatprep.mubr.f32.mxu0 0.0
        %3208 = vmatmul.mubr.f32.gmra.mrb[0].mxu0 %v2451
        %v3209 = vpop.f32.mrb[0].mxu0
        %v3210 = vadd.f32 0.0, %v3209
        %v3211 = vpop.f32.mrb[0].mxu0
        %3212 = vmatprep.mubr.f32.mxu0 0.0
        %3213 = vmatmul.mubr.f32.gmra.mrb[0].mxu0 %v2454
        %v3214 = vpop.f32.mrb[0].mxu0
        %v3215 = vadd.f32 0.0, %v3214
        %v3216 = vpop.f32.mrb[0].mxu0
        %3217 = vmatprep.mubr.f32.mxu0 0.0
        %3218 = vmatmul.mubr.f32.gmra.mrb[0].mxu0 %v2457
        %v3219 = vpop.f32.mrb[0].mxu0
        %v3220 = vadd.f32 0.0, %v3219
        %v3221 = vpop.f32.mrb[0].mxu0
        %3222 = vmatprep.mubr.f32.mxu0 0.0
        %3223 = vmatmul.mubr.f32.gmra.mrb[0].mxu0 %v2460
        %v3224 = vpop.f32.mrb[0].mxu0
        %v3225 = vadd.f32 0.0, %v3224
        %v3226 = vpop.f32.mrb[0].mxu0
        %3227 = vmatprep.mubr.f32.mxu0 0.0
        %3228 = vmatmul.mubr.f32.gmra.mrb[0].mxu0 %v2463
        %v3229 = vpop.f32.mrb[0].mxu0
        %v3230 = vadd.f32 0.0, %v3229
        %v3231 = vpop.f32.mrb[0].mxu0
        %3232 = vdwg.mxu0
        %s3233 = scalar_lea.vmem %s4, 256
        %v3234 = vld [vmem:[%s3233] sm:$0xff]
        %v3235 = vld [vmem:[%s3233 + $0x8] sm:$0xff]
        %v3236 = vld [vmem:[%s3233 + $0x10] sm:$0xff]
        %v3237 = vld [vmem:[%s3233 + $0x18] sm:$0xff]
        %v3238 = vld [vmem:[%s3233 + $0x20] sm:$0xff]
        %v3239 = vld [vmem:[%s3233 + $0x28] sm:$0xff]
        %v3240 = vld [vmem:[%s3233 + $0x30] sm:$0xff]
        %v3241 = vld [vmem:[%s3233 + $0x38] sm:$0xff]
        %v3242 = vld [vmem:[%s3233 + $0x40] sm:$0xff]
        %v3243 = vld [vmem:[%s3233 + $0x48] sm:$0xff]
        %v3244 = vld [vmem:[%s3233 + $0x50] sm:$0xff]
        %v3245 = vld [vmem:[%s3233 + $0x58] sm:$0xff]
        %v3246 = vld [vmem:[%s3233 + $0x60] sm:$0xff]
        %v3247 = vld [vmem:[%s3233 + $0x68] sm:$0xff]
        %v3248 = vld [vmem:[%s3233 + $0x70] sm:$0xff]
        %v3249 = vld [vmem:[%s3233 + $0x78] sm:$0xff]
        %3250 = vmatprep.subr.mxu0 0.0
        %3251 = vmatpush1.msra.mxu0 %v3155
        %3252 = vmatprep.subr.mxu0 0.0
        %3253 = vmatpush1.msra.mxu0 %v3160
        %3254 = vmatprep.subr.mxu0 0.0
        %3255 = vmatpush1.msra.mxu0 %v3165
        %3256 = vmatprep.subr.mxu0 0.0
        %3257 = vmatpush1.msra.mxu0 %v3170
        %3258 = vmatprep.subr.mxu0 0.0
        %3259 = vmatpush1.msra.mxu0 %v3175
        %3260 = vmatprep.subr.mxu0 0.0
        %3261 = vmatpush1.msra.mxu0 %v3180
        %3262 = vmatprep.subr.mxu0 0.0
        %3263 = vmatpush1.msra.mxu0 %v3185
        %3264 = vmatprep.subr.mxu0 0.0
        %3265 = vmatpush1.msra.mxu0 %v3190
        %3266 = vmatprep.subr.mxu0 0.0
        %3267 = vmatpush1.msra.mxu0 %v3195
        %3268 = vmatprep.subr.mxu0 0.0
        %3269 = vmatpush1.msra.mxu0 %v3200
        %3270 = vmatprep.subr.mxu0 0.0
        %3271 = vmatpush1.msra.mxu0 %v3205
        %3272 = vmatprep.subr.mxu0 0.0
        %3273 = vmatpush1.msra.mxu0 %v3210
        %3274 = vmatprep.subr.mxu0 0.0
        %3275 = vmatpush1.msra.mxu0 %v3215
        %3276 = vmatprep.subr.mxu0 0.0
        %3277 = vmatpush1.msra.mxu0 %v3220
        %3278 = vmatprep.subr.mxu0 0.0
        %3279 = vmatpush1.msra.mxu0 %v3225
        %3280 = vmatprep.subr.mxu0 0.0
        %3281 = vmatpush1.msra.mxu0 %v3230
        %3282 = vmatprep.subr.mxu0 0.0
        %3283 = vmatpush1.msra.mxu0 0.0
        %3284 = vmatprep.subr.mxu0 0.0
        %3285 = vmatpush1.msra.mxu0 0.0
        %3286 = vmatprep.subr.mxu0 0.0
        %3287 = vmatpush1.msra.mxu0 0.0
        %3288 = vmatprep.subr.mxu0 0.0
        %3289 = vmatpush1.msra.mxu0 0.0
        %3290 = vmatprep.subr.mxu0 0.0
        %3291 = vmatpush1.msra.mxu0 0.0
        %3292 = vmatprep.subr.mxu0 0.0
        %3293 = vmatpush1.msra.mxu0 0.0
        %3294 = vmatprep.subr.mxu0 0.0
        %3295 = vmatpush1.msra.mxu0 0.0
        %3296 = vmatprep.subr.mxu0 0.0
        %3297 = vmatpush1.msra.mxu0 0.0
        %3298 = vmatprep.subr.mxu0 0.0
        %3299 = vmatpush1.msra.mxu0 0.0
        %3300 = vmatprep.subr.mxu0 0.0
        %3301 = vmatpush1.msra.mxu0 0.0
        %3302 = vmatprep.subr.mxu0 0.0
        %3303 = vmatpush1.msra.mxu0 0.0
        %3304 = vmatprep.subr.mxu0 0.0
        %3305 = vmatpush1.msra.mxu0 0.0
        %3306 = vmatprep.subr.mxu0 0.0
        %3307 = vmatpush1.msra.mxu0 0.0
        %3308 = vmatprep.subr.mxu0 0.0
        %3309 = vmatpush1.msra.mxu0 0.0
        %3310 = vmatprep.subr.mxu0 0.0
        %3311 = vmatpush1.msra.mxu0 0.0
        %3312 = vmatprep.subr.mxu0 0.0
        %3313 = vmatpush1.msra.mxu0 0.0
        %3314 = vmatprep.mubr.f32.mxu0 0.0
        %3315 = vmatmul.mubr.f32.gmra.mrb[0].mxu0 %v3234
        %v3316 = vpop.f32.mrb[0].mxu0
        %v3317 = vadd.f32 0.0, %v3316
        %v3318 = vpop.f32.mrb[0].mxu0
        %3319 = vmatprep.mubr.f32.mxu0 0.0
        %3320 = vmatmul.mubr.f32.gmra.mrb[0].mxu0 %v3235
        %v3321 = vpop.f32.mrb[0].mxu0
        %v3322 = vadd.f32 0.0, %v3321
        %v3323 = vpop.f32.mrb[0].mxu0
        %3324 = vmatprep.mubr.f32.mxu0 0.0
        %3325 = vmatmul.mubr.f32.gmra.mrb[0].mxu0 %v3236
        %v3326 = vpop.f32.mrb[0].mxu0
        %v3327 = vadd.f32 0.0, %v3326
        %v3328 = vpop.f32.mrb[0].mxu0
        %3329 = vmatprep.mubr.f32.mxu0 0.0
        %3330 = vmatmul.mubr.f32.gmra.mrb[0].mxu0 %v3237
        %v3331 = vpop.f32.mrb[0].mxu0
        %v3332 = vadd.f32 0.0, %v3331
        %v3333 = vpop.f32.mrb[0].mxu0
        %3334 = vmatprep.mubr.f32.mxu0 0.0
        %3335 = vmatmul.mubr.f32.gmra.mrb[0].mxu0 %v3238
        %v3336 = vpop.f32.mrb[0].mxu0
        %v3337 = vadd.f32 0.0, %v3336
        %v3338 = vpop.f32.mrb[0].mxu0
        %3339 = vmatprep.mubr.f32.mxu0 0.0
        %3340 = vmatmul.mubr.f32.gmra.mrb[0].mxu0 %v3239
        %v3341 = vpop.f32.mrb[0].mxu0
        %v3342 = vadd.f32 0.0, %v3341
        %v3343 = vpop.f32.mrb[0].mxu0
        %3344 = vmatprep.mubr.f32.mxu0 0.0
        %3345 = vmatmul.mubr.f32.gmra.mrb[0].mxu0 %v3240
        %v3346 = vpop.f32.mrb[0].mxu0
        %v3347 = vadd.f32 0.0, %v3346
        %v3348 = vpop.f32.mrb[0].mxu0
        %3349 = vmatprep.mubr.f32.mxu0 0.0
        %3350 = vmatmul.mubr.f32.gmra.mrb[0].mxu0 %v3241
        %v3351 = vpop.f32.mrb[0].mxu0
        %v3352 = vadd.f32 0.0, %v3351
        %v3353 = vpop.f32.mrb[0].mxu0
        %3354 = vmatprep.mubr.f32.mxu0 0.0
        %3355 = vmatmul.mubr.f32.gmra.mrb[0].mxu0 %v3242
        %v3356 = vpop.f32.mrb[0].mxu0
        %v3357 = vadd.f32 0.0, %v3356
        %v3358 = vpop.f32.mrb[0].mxu0
        %3359 = vmatprep.mubr.f32.mxu0 0.0
        %3360 = vmatmul.mubr.f32.gmra.mrb[0].mxu0 %v3243
        %v3361 = vpop.f32.mrb[0].mxu0
        %v3362 = vadd.f32 0.0, %v3361
        %v3363 = vpop.f32.mrb[0].mxu0
        %3364 = vmatprep.mubr.f32.mxu0 0.0
        %3365 = vmatmul.mubr.f32.gmra.mrb[0].mxu0 %v3244
        %v3366 = vpop.f32.mrb[0].mxu0
        %v3367 = vadd.f32 0.0, %v3366
        %v3368 = vpop.f32.mrb[0].mxu0
        %3369 = vmatprep.mubr.f32.mxu0 0.0
        %3370 = vmatmul.mubr.f32.gmra.mrb[0].mxu0 %v3245
        %v3371 = vpop.f32.mrb[0].mxu0
        %v3372 = vadd.f32 0.0, %v3371
        %v3373 = vpop.f32.mrb[0].mxu0
        %3374 = vmatprep.mubr.f32.mxu0 0.0
        %3375 = vmatmul.mubr.f32.gmra.mrb[0].mxu0 %v3246
        %v3376 = vpop.f32.mrb[0].mxu0
        %v3377 = vadd.f32 0.0, %v3376
        %v3378 = vpop.f32.mrb[0].mxu0
        %3379 = vmatprep.mubr.f32.mxu0 0.0
        %3380 = vmatmul.mubr.f32.gmra.mrb[0].mxu0 %v3247
        %v3381 = vpop.f32.mrb[0].mxu0
        %v3382 = vadd.f32 0.0, %v3381
        %v3383 = vpop.f32.mrb[0].mxu0
        %3384 = vmatprep.mubr.f32.mxu0 0.0
        %3385 = vmatmul.mubr.f32.gmra.mrb[0].mxu0 %v3248
        %v3386 = vpop.f32.mrb[0].mxu0
        %v3387 = vadd.f32 0.0, %v3386
        %v3388 = vpop.f32.mrb[0].mxu0
        %3389 = vmatprep.mubr.f32.mxu0 0.0
        %3390 = vmatmul.mubr.f32.gmra.mrb[0].mxu0 %v3249
        %v3391 = vpop.f32.mrb[0].mxu0
        %v3392 = vadd.f32 0.0, %v3391
        %v3393 = vpop.f32.mrb[0].mxu0
        %3394 = vdwg.mxu0
        %v3395 = vadd.f32 %v3005, %v3317
        %v3396 = vadd.f32 %v3010, %v3322
        %v3397 = vadd.f32 %v3015, %v3327
        %v3398 = vadd.f32 %v3020, %v3332
        %v3399 = vadd.f32 %v3025, %v3337
        %v3400 = vadd.f32 %v3030, %v3342
        %v3401 = vadd.f32 %v3035, %v3347
        %v3402 = vadd.f32 %v3040, %v3352
        %v3403 = vadd.f32 %v3045, %v3357
        %v3404 = vadd.f32 %v3050, %v3362
        %v3405 = vadd.f32 %v3055, %v3367
        %v3406 = vadd.f32 %v3060, %v3372
        %v3407 = vadd.f32 %v3065, %v3377
        %v3408 = vadd.f32 %v3070, %v3382
        %v3409 = vadd.f32 %v3075, %v3387
        %v3410 = vadd.f32 %v3080, %v3392
        %v3411 = vld [vmem:[%s10] sm:$0xff]
        %v3412 = vld [vmem:[%s10 + $0x8] sm:$0xff]
        %v3413 = vld [vmem:[%s10 + $0x10] sm:$0xff]
        %v3414 = vld [vmem:[%s10 + $0x18] sm:$0xff]
        %v3415 = vld [vmem:[%s10 + $0x20] sm:$0xff]
        %v3416 = vld [vmem:[%s10 + $0x28] sm:$0xff]
        %v3417 = vld [vmem:[%s10 + $0x30] sm:$0xff]
        %v3418 = vld [vmem:[%s10 + $0x38] sm:$0xff]
        %v3419 = vld [vmem:[%s10 + $0x40] sm:$0xff]
        %v3420 = vld [vmem:[%s10 + $0x48] sm:$0xff]
        %v3421 = vld [vmem:[%s10 + $0x50] sm:$0xff]
        %v3422 = vld [vmem:[%s10 + $0x58] sm:$0xff]
        %v3423 = vld [vmem:[%s10 + $0x60] sm:$0xff]
        %v3424 = vld [vmem:[%s10 + $0x68] sm:$0xff]
        %v3425 = vld [vmem:[%s10 + $0x70] sm:$0xff]
        %v3426 = vld [vmem:[%s10 + $0x78] sm:$0xff]
        %v3427 = vadd.f32 %v3395, %v3411
        %v3428 = vadd.f32 %v3396, %v3412
        %v3429 = vadd.f32 %v3397, %v3413
        %v3430 = vadd.f32 %v3398, %v3414
        %v3431 = vadd.f32 %v3399, %v3415
        %v3432 = vadd.f32 %v3400, %v3416
        %v3433 = vadd.f32 %v3401, %v3417
        %v3434 = vadd.f32 %v3402, %v3418
        %v3435 = vadd.f32 %v3403, %v3419
        %v3436 = vadd.f32 %v3404, %v3420
        %v3437 = vadd.f32 %v3405, %v3421
        %v3438 = vadd.f32 %v3406, %v3422
        %v3439 = vadd.f32 %v3407, %v3423
        %v3440 = vadd.f32 %v3408, %v3424
        %v3441 = vadd.f32 %v3409, %v3425
        %v3442 = vadd.f32 %v3410, %v3426
        %v3443 = vmax.f32 %v3427, 0.0
        %v3444 = vmax.f32 %v3428, 0.0
        %v3445 = vmax.f32 %v3429, 0.0
        %v3446 = vmax.f32 %v3430, 0.0
        %v3447 = vmax.f32 %v3431, 0.0
        %v3448 = vmax.f32 %v3432, 0.0
        %v3449 = vmax.f32 %v3433, 0.0
        %v3450 = vmax.f32 %v3434, 0.0
        %v3451 = vmax.f32 %v3435, 0.0
        %v3452 = vmax.f32 %v3436, 0.0
        %v3453 = vmax.f32 %v3437, 0.0
        %v3454 = vmax.f32 %v3438, 0.0
        %v3455 = vmax.f32 %v3439, 0.0
        %v3456 = vmax.f32 %v3440, 0.0
        %v3457 = vmax.f32 %v3441, 0.0
        %v3458 = vmax.f32 %v3442, 0.0
        %3459 = vst.msk [vmem:[%s1217] sm:$0xff] %vm824, %v3443
        %3460 = vst.msk [vmem:[%s1217 + $0x8] sm:$0xff] %vm824, %v3444
        %3461 = vst.msk [vmem:[%s1217 + $0x10] sm:$0xff] %vm824, %v3445
        %3462 = vst.msk [vmem:[%s1217 + $0x18] sm:$0xff] %vm824, %v3446
        %3463 = vst.msk [vmem:[%s1217 + $0x20] sm:$0xff] %vm824, %v3447
        %3464 = vst.msk [vmem:[%s1217 + $0x28] sm:$0xff] %vm824, %v3448
        %3465 = vst.msk [vmem:[%s1217 + $0x30] sm:$0xff] %vm824, %v3449
        %3466 = vst.msk [vmem:[%s1217 + $0x38] sm:$0xff] %vm824, %v3450
        %3467 = vst.msk [vmem:[%s1217 + $0x40] sm:$0xff] %vm824, %v3451
        %3468 = vst.msk [vmem:[%s1217 + $0x48] sm:$0xff] %vm824, %v3452
        %3469 = vst.msk [vmem:[%s1217 + $0x50] sm:$0xff] %vm824, %v3453
        %3470 = vst.msk [vmem:[%s1217 + $0x58] sm:$0xff] %vm824, %v3454
        %3471 = vst.msk [vmem:[%s1217 + $0x60] sm:$0xff] %vm824, %v3455
        %3472 = vst.msk [vmem:[%s1217 + $0x68] sm:$0xff] %vm824, %v3456
        %3473 = vst.msk [vmem:[%s1217 + $0x70] sm:$0xff] %vm824, %v3457
        %3474 = vst.msk [vmem:[%s1217 + $0x78] sm:$0xff] %vm824, %v3458
        %v3475 = vld [vmem:[%s1234] sm:$0xff]
        %v3476 = vld [vmem:[%s1234 + $0x8] sm:$0xff]
        %v3477 = vld [vmem:[%s1234 + $0x10] sm:$0xff]
        %v3478 = vld [vmem:[%s1234 + $0x18] sm:$0xff]
        %v3479 = vld [vmem:[%s1234 + $0x20] sm:$0xff]
        %v3480 = vld [vmem:[%s1234 + $0x28] sm:$0xff]
        %v3481 = vld [vmem:[%s1234 + $0x30] sm:$0xff]
        %v3482 = vld [vmem:[%s1234 + $0x38] sm:$0xff]
        %v3483 = vld [vmem:[%s1234 + $0x40] sm:$0xff]
        %v3484 = vld [vmem:[%s1234 + $0x48] sm:$0xff]
        %v3485 = vld [vmem:[%s1234 + $0x50] sm:$0xff]
        %v3486 = vld [vmem:[%s1234 + $0x58] sm:$0xff]
        %v3487 = vld [vmem:[%s1234 + $0x60] sm:$0xff]
        %v3488 = vld [vmem:[%s1234 + $0x68] sm:$0xff]
        %v3489 = vld [vmem:[%s1234 + $0x70] sm:$0xff]
        %v3490 = vld [vmem:[%s1234 + $0x78] sm:$0xff]
        %v3491 = vld [vmem:[%s11] sm:$0xff]
        %v3492 = vld [vmem:[%s11 + $0x8] sm:$0xff]
        %v3493 = vld [vmem:[%s11 + $0x10] sm:$0xff]
        %v3494 = vld [vmem:[%s11 + $0x18] sm:$0xff]
        %v3495 = vld [vmem:[%s11 + $0x20] sm:$0xff]
        %v3496 = vld [vmem:[%s11 + $0x28] sm:$0xff]
        %v3497 = vld [vmem:[%s11 + $0x30] sm:$0xff]
        %v3498 = vld [vmem:[%s11 + $0x38] sm:$0xff]
        %v3499 = vld [vmem:[%s1255] sm:$0xff]
        %v3500 = vld [vmem:[%s1255 + $0x8] sm:$0xff]
        %v3501 = vld [vmem:[%s1255 + $0x10] sm:$0xff]
        %v3502 = vld [vmem:[%s1255 + $0x18] sm:$0xff]
        %v3503 = vld [vmem:[%s1255 + $0x20] sm:$0xff]
        %v3504 = vld [vmem:[%s1255 + $0x28] sm:$0xff]
        %v3505 = vld [vmem:[%s1255 + $0x30] sm:$0xff]
        %v3506 = vld [vmem:[%s1255 + $0x38] sm:$0xff]
        %v3507 = vld [vmem:[%s1255 + $0x40] sm:$0xff]
        %v3508 = vld [vmem:[%s1255 + $0x48] sm:$0xff]
        %v3509 = vld [vmem:[%s1255 + $0x50] sm:$0xff]
        %v3510 = vld [vmem:[%s1255 + $0x58] sm:$0xff]
        %v3511 = vld [vmem:[%s1255 + $0x60] sm:$0xff]
        %v3512 = vld [vmem:[%s1255 + $0x68] sm:$0xff]
        %v3513 = vld [vmem:[%s1255 + $0x70] sm:$0xff]
        %v3514 = vld [vmem:[%s1255 + $0x78] sm:$0xff]
        %s3515 = scalar_lea.vmem %s11, 64
        %v3516 = vld [vmem:[%s3515] sm:$0xff]
        %v3517 = vld [vmem:[%s3515 + $0x8] sm:$0xff]
        %v3518 = vld [vmem:[%s3515 + $0x10] sm:$0xff]
        %v3519 = vld [vmem:[%s3515 + $0x18] sm:$0xff]
        %v3520 = vld [vmem:[%s3515 + $0x20] sm:$0xff]
        %v3521 = vld [vmem:[%s3515 + $0x28] sm:$0xff]
        %v3522 = vld [vmem:[%s3515 + $0x30] sm:$0xff]
        %v3523 = vld [vmem:[%s3515 + $0x38] sm:$0xff]
        %v3525 = vsel %vm824, %v3499, 0
        %v3528 = vsel %vm824, %v3500, 0
        %v3531 = vsel %vm824, %v3501, 0
        %v3534 = vsel %vm824, %v3502, 0
        %v3537 = vsel %vm824, %v3503, 0
        %v3540 = vsel %vm824, %v3504, 0
        %v3543 = vsel %vm824, %v3505, 0
        %v3546 = vsel %vm824, %v3506, 0
        %v3549 = vsel %vm824, %v3507, 0
        %v3552 = vsel %vm824, %v3508, 0
        %v3555 = vsel %vm824, %v3509, 0
        %v3558 = vsel %vm824, %v3510, 0
        %v3561 = vsel %vm824, %v3511, 0
        %v3564 = vsel %vm824, %v3512, 0
        %v3567 = vsel %vm824, %v3513, 0
        %v3570 = vsel %vm824, %v3514, 0
        %3572 = vmatprep.subr.mxu0 0.0
        %3573 = vmatpush1.msra.mxu0 %v3516
        %3574 = vmatprep.subr.mxu0 0.0
        %3575 = vmatpush1.msra.mxu0 %v3517
        %3576 = vmatprep.subr.mxu0 0.0
        %3577 = vmatpush1.msra.mxu0 %v3518
        %3578 = vmatprep.subr.mxu0 0.0
        %3579 = vmatpush1.msra.mxu0 %v3519
        %3580 = vmatprep.subr.mxu0 0.0
        %3581 = vmatpush1.msra.mxu0 %v3520
        %3582 = vmatprep.subr.mxu0 0.0
        %3583 = vmatpush1.msra.mxu0 %v3521
        %3584 = vmatprep.subr.mxu0 0.0
        %3585 = vmatpush1.msra.mxu0 %v3522
        %3586 = vmatprep.subr.mxu0 0.0
        %3587 = vmatpush1.msra.mxu0 %v3523
        %3588 = vmatprep.subr.mxu0 0.0
        %3589 = vmatpush1.msra.mxu0 0.0
        %3590 = vmatprep.subr.mxu0 0.0
        %3591 = vmatpush1.msra.mxu0 0.0
        %3592 = vmatprep.subr.mxu0 0.0
        %3593 = vmatpush1.msra.mxu0 0.0
        %3594 = vmatprep.subr.mxu0 0.0
        %3595 = vmatpush1.msra.mxu0 0.0
        %3596 = vmatprep.subr.mxu0 0.0
        %3597 = vmatpush1.msra.mxu0 0.0
        %3598 = vmatprep.subr.mxu0 0.0
        %3599 = vmatpush1.msra.mxu0 0.0
        %3600 = vmatprep.subr.mxu0 0.0
        %3601 = vmatpush1.msra.mxu0 0.0
        %3602 = vmatprep.subr.mxu0 0.0
        %3603 = vmatpush1.msra.mxu0 0.0
        %3604 = vmatprep.subr.mxu0 0.0
        %3605 = vmatpush1.msra.mxu0 0.0
        %3606 = vmatprep.subr.mxu0 0.0
        %3607 = vmatpush1.msra.mxu0 0.0
        %3608 = vmatprep.subr.mxu0 0.0
        %3609 = vmatpush1.msra.mxu0 0.0
        %3610 = vmatprep.subr.mxu0 0.0
        %3611 = vmatpush1.msra.mxu0 0.0
        %3612 = vmatprep.subr.mxu0 0.0
        %3613 = vmatpush1.msra.mxu0 0.0
        %3614 = vmatprep.subr.mxu0 0.0
        %3615 = vmatpush1.msra.mxu0 0.0
        %3616 = vmatprep.subr.mxu0 0.0
        %3617 = vmatpush1.msra.mxu0 0.0
        %3618 = vmatprep.subr.mxu0 0.0
        %3619 = vmatpush1.msra.mxu0 0.0
        %3620 = vmatprep.subr.mxu0 0.0
        %3621 = vmatpush1.msra.mxu0 0.0
        %3622 = vmatprep.subr.mxu0 0.0
        %3623 = vmatpush1.msra.mxu0 0.0
        %3624 = vmatprep.subr.mxu0 0.0
        %3625 = vmatpush1.msra.mxu0 0.0
        %3626 = vmatprep.subr.mxu0 0.0
        %3627 = vmatpush1.msra.mxu0 0.0
        %3628 = vmatprep.subr.mxu0 0.0
        %3629 = vmatpush1.msra.mxu0 0.0
        %3630 = vmatprep.subr.mxu0 0.0
        %3631 = vmatpush1.msra.mxu0 0.0
        %3632 = vmatprep.subr.mxu0 0.0
        %3633 = vmatpush1.msra.mxu0 0.0
        %3634 = vmatprep.subr.mxu0 0.0
        %3635 = vmatpush1.msra.mxu0 0.0
        %3636 = vmatprep.mubr.f32.mxu0 0.0
        %3637 = vmatmul.mubr.f32.gmra.mrb[0].mxu0 %v3525
        %v3638 = vpop.f32.mrb[0].mxu0
        %v3639 = vadd.f32 0.0, %v3638
        %v3640 = vpop.f32.mrb[0].mxu0
        %3641 = vmatprep.mubr.f32.mxu0 0.0
        %3642 = vmatmul.mubr.f32.gmra.mrb[0].mxu0 %v3528
        %v3643 = vpop.f32.mrb[0].mxu0
        %v3644 = vadd.f32 0.0, %v3643
        %v3645 = vpop.f32.mrb[0].mxu0
        %3646 = vmatprep.mubr.f32.mxu0 0.0
        %3647 = vmatmul.mubr.f32.gmra.mrb[0].mxu0 %v3531
        %v3648 = vpop.f32.mrb[0].mxu0
        %v3649 = vadd.f32 0.0, %v3648
        %v3650 = vpop.f32.mrb[0].mxu0
        %3651 = vmatprep.mubr.f32.mxu0 0.0
        %3652 = vmatmul.mubr.f32.gmra.mrb[0].mxu0 %v3534
        %v3653 = vpop.f32.mrb[0].mxu0
        %v3654 = vadd.f32 0.0, %v3653
        %v3655 = vpop.f32.mrb[0].mxu0
        %3656 = vmatprep.mubr.f32.mxu0 0.0
        %3657 = vmatmul.mubr.f32.gmra.mrb[0].mxu0 %v3537
        %v3658 = vpop.f32.mrb[0].mxu0
        %v3659 = vadd.f32 0.0, %v3658
        %v3660 = vpop.f32.mrb[0].mxu0
        %3661 = vmatprep.mubr.f32.mxu0 0.0
        %3662 = vmatmul.mubr.f32.gmra.mrb[0].mxu0 %v3540
        %v3663 = vpop.f32.mrb[0].mxu0
        %v3664 = vadd.f32 0.0, %v3663
        %v3665 = vpop.f32.mrb[0].mxu0
        %3666 = vmatprep.mubr.f32.mxu0 0.0
        %3667 = vmatmul.mubr.f32.gmra.mrb[0].mxu0 %v3543
        %v3668 = vpop.f32.mrb[0].mxu0
        %v3669 = vadd.f32 0.0, %v3668
        %v3670 = vpop.f32.mrb[0].mxu0
        %3671 = vmatprep.mubr.f32.mxu0 0.0
        %3672 = vmatmul.mubr.f32.gmra.mrb[0].mxu0 %v3546
        %v3673 = vpop.f32.mrb[0].mxu0
        %v3674 = vadd.f32 0.0, %v3673
        %v3675 = vpop.f32.mrb[0].mxu0
        %3676 = vmatprep.mubr.f32.mxu0 0.0
        %3677 = vmatmul.mubr.f32.gmra.mrb[0].mxu0 %v3549
        %v3678 = vpop.f32.mrb[0].mxu0
        %v3679 = vadd.f32 0.0, %v3678
        %v3680 = vpop.f32.mrb[0].mxu0
        %3681 = vmatprep.mubr.f32.mxu0 0.0
        %3682 = vmatmul.mubr.f32.gmra.mrb[0].mxu0 %v3552
        %v3683 = vpop.f32.mrb[0].mxu0
        %v3684 = vadd.f32 0.0, %v3683
        %v3685 = vpop.f32.mrb[0].mxu0
        %3686 = vmatprep.mubr.f32.mxu0 0.0
        %3687 = vmatmul.mubr.f32.gmra.mrb[0].mxu0 %v3555
        %v3688 = vpop.f32.mrb[0].mxu0
        %v3689 = vadd.f32 0.0, %v3688
        %v3690 = vpop.f32.mrb[0].mxu0
        %3691 = vmatprep.mubr.f32.mxu0 0.0
        %3692 = vmatmul.mubr.f32.gmra.mrb[0].mxu0 %v3558
        %v3693 = vpop.f32.mrb[0].mxu0
        %v3694 = vadd.f32 0.0, %v3693
        %v3695 = vpop.f32.mrb[0].mxu0
        %3696 = vmatprep.mubr.f32.mxu0 0.0
        %3697 = vmatmul.mubr.f32.gmra.mrb[0].mxu0 %v3561
        %v3698 = vpop.f32.mrb[0].mxu0
        %v3699 = vadd.f32 0.0, %v3698
        %v3700 = vpop.f32.mrb[0].mxu0
        %3701 = vmatprep.mubr.f32.mxu0 0.0
        %3702 = vmatmul.mubr.f32.gmra.mrb[0].mxu0 %v3564
        %v3703 = vpop.f32.mrb[0].mxu0
        %v3704 = vadd.f32 0.0, %v3703
        %v3705 = vpop.f32.mrb[0].mxu0
        %3706 = vmatprep.mubr.f32.mxu0 0.0
        %3707 = vmatmul.mubr.f32.gmra.mrb[0].mxu0 %v3567
        %v3708 = vpop.f32.mrb[0].mxu0
        %v3709 = vadd.f32 0.0, %v3708
        %v3710 = vpop.f32.mrb[0].mxu0
        %3711 = vmatprep.mubr.f32.mxu0 0.0
        %3712 = vmatmul.mubr.f32.gmra.mrb[0].mxu0 %v3570
        %v3713 = vpop.f32.mrb[0].mxu0
        %v3714 = vadd.f32 0.0, %v3713
        %v3715 = vpop.f32.mrb[0].mxu0
        %3716 = vdwg.mxu0
        %v3718 = vsel %vm824, %v3475, 0
        %v3721 = vsel %vm824, %v3476, 0
        %v3724 = vsel %vm824, %v3477, 0
        %v3727 = vsel %vm824, %v3478, 0
        %v3730 = vsel %vm824, %v3479, 0
        %v3733 = vsel %vm824, %v3480, 0
        %v3736 = vsel %vm824, %v3481, 0
        %v3739 = vsel %vm824, %v3482, 0
        %v3742 = vsel %vm824, %v3483, 0
        %v3745 = vsel %vm824, %v3484, 0
        %v3748 = vsel %vm824, %v3485, 0
        %v3751 = vsel %vm824, %v3486, 0
        %v3754 = vsel %vm824, %v3487, 0
        %v3757 = vsel %vm824, %v3488, 0
        %v3760 = vsel %vm824, %v3489, 0
        %v3763 = vsel %vm824, %v3490, 0
        %3765 = vmatprep.subr.mxu0 0.0
        %3766 = vmatpush1.msra.mxu0 %v3491
        %3767 = vmatprep.subr.mxu0 0.0
        %3768 = vmatpush1.msra.mxu0 %v3492
        %3769 = vmatprep.subr.mxu0 0.0
        %3770 = vmatpush1.msra.mxu0 %v3493
        %3771 = vmatprep.subr.mxu0 0.0
        %3772 = vmatpush1.msra.mxu0 %v3494
        %3773 = vmatprep.subr.mxu0 0.0
        %3774 = vmatpush1.msra.mxu0 %v3495
        %3775 = vmatprep.subr.mxu0 0.0
        %3776 = vmatpush1.msra.mxu0 %v3496
        %3777 = vmatprep.subr.mxu0 0.0
        %3778 = vmatpush1.msra.mxu0 %v3497
        %3779 = vmatprep.subr.mxu0 0.0
        %3780 = vmatpush1.msra.mxu0 %v3498
        %3781 = vmatprep.subr.mxu0 0.0
        %3782 = vmatpush1.msra.mxu0 0.0
        %3783 = vmatprep.subr.mxu0 0.0
        %3784 = vmatpush1.msra.mxu0 0.0
        %3785 = vmatprep.subr.mxu0 0.0
        %3786 = vmatpush1.msra.mxu0 0.0
        %3787 = vmatprep.subr.mxu0 0.0
        %3788 = vmatpush1.msra.mxu0 0.0
        %3789 = vmatprep.subr.mxu0 0.0
        %3790 = vmatpush1.msra.mxu0 0.0
        %3791 = vmatprep.subr.mxu0 0.0
        %3792 = vmatpush1.msra.mxu0 0.0
        %3793 = vmatprep.subr.mxu0 0.0
        %3794 = vmatpush1.msra.mxu0 0.0
        %3795 = vmatprep.subr.mxu0 0.0
        %3796 = vmatpush1.msra.mxu0 0.0
        %3797 = vmatprep.subr.mxu0 0.0
        %3798 = vmatpush1.msra.mxu0 0.0
        %3799 = vmatprep.subr.mxu0 0.0
        %3800 = vmatpush1.msra.mxu0 0.0
        %3801 = vmatprep.subr.mxu0 0.0
        %3802 = vmatpush1.msra.mxu0 0.0
        %3803 = vmatprep.subr.mxu0 0.0
        %3804 = vmatpush1.msra.mxu0 0.0
        %3805 = vmatprep.subr.mxu0 0.0
        %3806 = vmatpush1.msra.mxu0 0.0
        %3807 = vmatprep.subr.mxu0 0.0
        %3808 = vmatpush1.msra.mxu0 0.0
        %3809 = vmatprep.subr.mxu0 0.0
        %3810 = vmatpush1.msra.mxu0 0.0
        %3811 = vmatprep.subr.mxu0 0.0
        %3812 = vmatpush1.msra.mxu0 0.0
        %3813 = vmatprep.subr.mxu0 0.0
        %3814 = vmatpush1.msra.mxu0 0.0
        %3815 = vmatprep.subr.mxu0 0.0
        %3816 = vmatpush1.msra.mxu0 0.0
        %3817 = vmatprep.subr.mxu0 0.0
        %3818 = vmatpush1.msra.mxu0 0.0
        %3819 = vmatprep.subr.mxu0 0.0
        %3820 = vmatpush1.msra.mxu0 0.0
        %3821 = vmatprep.subr.mxu0 0.0
        %3822 = vmatpush1.msra.mxu0 0.0
        %3823 = vmatprep.subr.mxu0 0.0
        %3824 = vmatpush1.msra.mxu0 0.0
        %3825 = vmatprep.subr.mxu0 0.0
        %3826 = vmatpush1.msra.mxu0 0.0
        %3827 = vmatprep.subr.mxu0 0.0
        %3828 = vmatpush1.msra.mxu0 0.0
        %3829 = vmatprep.mubr.f32.mxu0 0.0
        %3830 = vmatmul.mubr.f32.gmra.mrb[0].mxu0 %v3718
        %v3831 = vpop.f32.mrb[0].mxu0
        %v3832 = vadd.f32 %v3639, %v3831
        %v3833 = vpop.f32.mrb[0].mxu0
        %3834 = vmatprep.mubr.f32.mxu0 0.0
        %3835 = vmatmul.mubr.f32.gmra.mrb[0].mxu0 %v3721
        %v3836 = vpop.f32.mrb[0].mxu0
        %v3837 = vadd.f32 %v3644, %v3836
        %v3838 = vpop.f32.mrb[0].mxu0
        %3839 = vmatprep.mubr.f32.mxu0 0.0
        %3840 = vmatmul.mubr.f32.gmra.mrb[0].mxu0 %v3724
        %v3841 = vpop.f32.mrb[0].mxu0
        %v3842 = vadd.f32 %v3649, %v3841
        %v3843 = vpop.f32.mrb[0].mxu0
        %3844 = vmatprep.mubr.f32.mxu0 0.0
        %3845 = vmatmul.mubr.f32.gmra.mrb[0].mxu0 %v3727
        %v3846 = vpop.f32.mrb[0].mxu0
        %v3847 = vadd.f32 %v3654, %v3846
        %v3848 = vpop.f32.mrb[0].mxu0
        %3849 = vmatprep.mubr.f32.mxu0 0.0
        %3850 = vmatmul.mubr.f32.gmra.mrb[0].mxu0 %v3730
        %v3851 = vpop.f32.mrb[0].mxu0
        %v3852 = vadd.f32 %v3659, %v3851
        %v3853 = vpop.f32.mrb[0].mxu0
        %3854 = vmatprep.mubr.f32.mxu0 0.0
        %3855 = vmatmul.mubr.f32.gmra.mrb[0].mxu0 %v3733
        %v3856 = vpop.f32.mrb[0].mxu0
        %v3857 = vadd.f32 %v3664, %v3856
        %v3858 = vpop.f32.mrb[0].mxu0
        %3859 = vmatprep.mubr.f32.mxu0 0.0
        %3860 = vmatmul.mubr.f32.gmra.mrb[0].mxu0 %v3736
        %v3861 = vpop.f32.mrb[0].mxu0
        %v3862 = vadd.f32 %v3669, %v3861
        %v3863 = vpop.f32.mrb[0].mxu0
        %3864 = vmatprep.mubr.f32.mxu0 0.0
        %3865 = vmatmul.mubr.f32.gmra.mrb[0].mxu0 %v3739
        %v3866 = vpop.f32.mrb[0].mxu0
        %v3867 = vadd.f32 %v3674, %v3866
        %v3868 = vpop.f32.mrb[0].mxu0
        %3869 = vmatprep.mubr.f32.mxu0 0.0
        %3870 = vmatmul.mubr.f32.gmra.mrb[0].mxu0 %v3742
        %v3871 = vpop.f32.mrb[0].mxu0
        %v3872 = vadd.f32 %v3679, %v3871
        %v3873 = vpop.f32.mrb[0].mxu0
        %3874 = vmatprep.mubr.f32.mxu0 0.0
        %3875 = vmatmul.mubr.f32.gmra.mrb[0].mxu0 %v3745
        %v3876 = vpop.f32.mrb[0].mxu0
        %v3877 = vadd.f32 %v3684, %v3876
        %v3878 = vpop.f32.mrb[0].mxu0
        %3879 = vmatprep.mubr.f32.mxu0 0.0
        %3880 = vmatmul.mubr.f32.gmra.mrb[0].mxu0 %v3748
        %v3881 = vpop.f32.mrb[0].mxu0
        %v3882 = vadd.f32 %v3689, %v3881
        %v3883 = vpop.f32.mrb[0].mxu0
        %3884 = vmatprep.mubr.f32.mxu0 0.0
        %3885 = vmatmul.mubr.f32.gmra.mrb[0].mxu0 %v3751
        %v3886 = vpop.f32.mrb[0].mxu0
        %v3887 = vadd.f32 %v3694, %v3886
        %v3888 = vpop.f32.mrb[0].mxu0
        %3889 = vmatprep.mubr.f32.mxu0 0.0
        %3890 = vmatmul.mubr.f32.gmra.mrb[0].mxu0 %v3754
        %v3891 = vpop.f32.mrb[0].mxu0
        %v3892 = vadd.f32 %v3699, %v3891
        %v3893 = vpop.f32.mrb[0].mxu0
        %3894 = vmatprep.mubr.f32.mxu0 0.0
        %3895 = vmatmul.mubr.f32.gmra.mrb[0].mxu0 %v3757
        %v3896 = vpop.f32.mrb[0].mxu0
        %v3897 = vadd.f32 %v3704, %v3896
        %v3898 = vpop.f32.mrb[0].mxu0
        %3899 = vmatprep.mubr.f32.mxu0 0.0
        %3900 = vmatmul.mubr.f32.gmra.mrb[0].mxu0 %v3760
        %v3901 = vpop.f32.mrb[0].mxu0
        %v3902 = vadd.f32 %v3709, %v3901
        %v3903 = vpop.f32.mrb[0].mxu0
        %3904 = vmatprep.mubr.f32.mxu0 0.0
        %3905 = vmatmul.mubr.f32.gmra.mrb[0].mxu0 %v3763
        %v3906 = vpop.f32.mrb[0].mxu0
        %v3907 = vadd.f32 %v3714, %v3906
        %v3908 = vpop.f32.mrb[0].mxu0
        %3909 = vdwg.mxu0
        %v3910 = vld [vmem:[%s1217] sm:$0xff]
        %v3911 = vld [vmem:[%s1217 + $0x8] sm:$0xff]
        %v3912 = vld [vmem:[%s1217 + $0x10] sm:$0xff]
        %v3913 = vld [vmem:[%s1217 + $0x18] sm:$0xff]
        %v3914 = vld [vmem:[%s1217 + $0x20] sm:$0xff]
        %v3915 = vld [vmem:[%s1217 + $0x28] sm:$0xff]
        %v3916 = vld [vmem:[%s1217 + $0x30] sm:$0xff]
        %v3917 = vld [vmem:[%s1217 + $0x38] sm:$0xff]
        %v3918 = vld [vmem:[%s1217 + $0x40] sm:$0xff]
        %v3919 = vld [vmem:[%s1217 + $0x48] sm:$0xff]
        %v3920 = vld [vmem:[%s1217 + $0x50] sm:$0xff]
        %v3921 = vld [vmem:[%s1217 + $0x58] sm:$0xff]
        %v3922 = vld [vmem:[%s1217 + $0x60] sm:$0xff]
        %v3923 = vld [vmem:[%s1217 + $0x68] sm:$0xff]
        %v3924 = vld [vmem:[%s1217 + $0x70] sm:$0xff]
        %v3925 = vld [vmem:[%s1217 + $0x78] sm:$0xff]
        %s3926 = scalar_lea.vmem %s11, 128
        %v3927 = vld [vmem:[%s3926] sm:$0xff]
        %v3928 = vld [vmem:[%s3926 + $0x8] sm:$0xff]
        %v3929 = vld [vmem:[%s3926 + $0x10] sm:$0xff]
        %v3930 = vld [vmem:[%s3926 + $0x18] sm:$0xff]
        %v3931 = vld [vmem:[%s3926 + $0x20] sm:$0xff]
        %v3932 = vld [vmem:[%s3926 + $0x28] sm:$0xff]
        %v3933 = vld [vmem:[%s3926 + $0x30] sm:$0xff]
        %v3934 = vld [vmem:[%s3926 + $0x38] sm:$0xff]
        %v3936 = vsel %vm824, %v3910, 0
        %v3939 = vsel %vm824, %v3911, 0
        %v3942 = vsel %vm824, %v3912, 0
        %v3945 = vsel %vm824, %v3913, 0
        %v3948 = vsel %vm824, %v3914, 0
        %v3951 = vsel %vm824, %v3915, 0
        %v3954 = vsel %vm824, %v3916, 0
        %v3957 = vsel %vm824, %v3917, 0
        %v3960 = vsel %vm824, %v3918, 0
        %v3963 = vsel %vm824, %v3919, 0
        %v3966 = vsel %vm824, %v3920, 0
        %v3969 = vsel %vm824, %v3921, 0
        %v3972 = vsel %vm824, %v3922, 0
        %v3975 = vsel %vm824, %v3923, 0
        %v3978 = vsel %vm824, %v3924, 0
        %v3981 = vsel %vm824, %v3925, 0
        %3983 = vmatprep.subr.mxu0 0.0
        %3984 = vmatpush1.msra.mxu0 %v3927
        %3985 = vmatprep.subr.mxu0 0.0
        %3986 = vmatpush1.msra.mxu0 %v3928
        %3987 = vmatprep.subr.mxu0 0.0
        %3988 = vmatpush1.msra.mxu0 %v3929
        %3989 = vmatprep.subr.mxu0 0.0
        %3990 = vmatpush1.msra.mxu0 %v3930
        %3991 = vmatprep.subr.mxu0 0.0
        %3992 = vmatpush1.msra.mxu0 %v3931
        %3993 = vmatprep.subr.mxu0 0.0
        %3994 = vmatpush1.msra.mxu0 %v3932
        %3995 = vmatprep.subr.mxu0 0.0
        %3996 = vmatpush1.msra.mxu0 %v3933
        %3997 = vmatprep.subr.mxu0 0.0
        %3998 = vmatpush1.msra.mxu0 %v3934
        %3999 = vmatprep.subr.mxu0 0.0
        %4000 = vmatpush1.msra.mxu0 0.0
        %4001 = vmatprep.subr.mxu0 0.0
        %4002 = vmatpush1.msra.mxu0 0.0
        %4003 = vmatprep.subr.mxu0 0.0
        %4004 = vmatpush1.msra.mxu0 0.0
        %4005 = vmatprep.subr.mxu0 0.0
        %4006 = vmatpush1.msra.mxu0 0.0
        %4007 = vmatprep.subr.mxu0 0.0
        %4008 = vmatpush1.msra.mxu0 0.0
        %4009 = vmatprep.subr.mxu0 0.0
        %4010 = vmatpush1.msra.mxu0 0.0
        %4011 = vmatprep.subr.mxu0 0.0
        %4012 = vmatpush1.msra.mxu0 0.0
        %4013 = vmatprep.subr.mxu0 0.0
        %4014 = vmatpush1.msra.mxu0 0.0
        %4015 = vmatprep.subr.mxu0 0.0
        %4016 = vmatpush1.msra.mxu0 0.0
        %4017 = vmatprep.subr.mxu0 0.0
        %4018 = vmatpush1.msra.mxu0 0.0
        %4019 = vmatprep.subr.mxu0 0.0
        %4020 = vmatpush1.msra.mxu0 0.0
        %4021 = vmatprep.subr.mxu0 0.0
        %4022 = vmatpush1.msra.mxu0 0.0
        %4023 = vmatprep.subr.mxu0 0.0
        %4024 = vmatpush1.msra.mxu0 0.0
        %4025 = vmatprep.subr.mxu0 0.0
        %4026 = vmatpush1.msra.mxu0 0.0
        %4027 = vmatprep.subr.mxu0 0.0
        %4028 = vmatpush1.msra.mxu0 0.0
        %4029 = vmatprep.subr.mxu0 0.0
        %4030 = vmatpush1.msra.mxu0 0.0
        %4031 = vmatprep.subr.mxu0 0.0
        %4032 = vmatpush1.msra.mxu0 0.0
        %4033 = vmatprep.subr.mxu0 0.0
        %4034 = vmatpush1.msra.mxu0 0.0
        %4035 = vmatprep.subr.mxu0 0.0
        %4036 = vmatpush1.msra.mxu0 0.0
        %4037 = vmatprep.subr.mxu0 0.0
        %4038 = vmatpush1.msra.mxu0 0.0
        %4039 = vmatprep.subr.mxu0 0.0
        %4040 = vmatpush1.msra.mxu0 0.0
        %4041 = vmatprep.subr.mxu0 0.0
        %4042 = vmatpush1.msra.mxu0 0.0
        %4043 = vmatprep.subr.mxu0 0.0
        %4044 = vmatpush1.msra.mxu0 0.0
        %4045 = vmatprep.subr.mxu0 0.0
        %4046 = vmatpush1.msra.mxu0 0.0
        %4047 = vmatprep.mubr.f32.mxu0 0.0
        %4048 = vmatmul.mubr.f32.gmra.mrb[0].mxu0 %v3936
        %v4049 = vpop.f32.mrb[0].mxu0
        %v4050 = vadd.f32 0.0, %v4049
        %v4051 = vpop.f32.mrb[0].mxu0
        %4052 = vmatprep.mubr.f32.mxu0 0.0
        %4053 = vmatmul.mubr.f32.gmra.mrb[0].mxu0 %v3939
        %v4054 = vpop.f32.mrb[0].mxu0
        %v4055 = vadd.f32 0.0, %v4054
        %v4056 = vpop.f32.mrb[0].mxu0
        %4057 = vmatprep.mubr.f32.mxu0 0.0
        %4058 = vmatmul.mubr.f32.gmra.mrb[0].mxu0 %v3942
        %v4059 = vpop.f32.mrb[0].mxu0
        %v4060 = vadd.f32 0.0, %v4059
        %v4061 = vpop.f32.mrb[0].mxu0
        %4062 = vmatprep.mubr.f32.mxu0 0.0
        %4063 = vmatmul.mubr.f32.gmra.mrb[0].mxu0 %v3945
        %v4064 = vpop.f32.mrb[0].mxu0
        %v4065 = vadd.f32 0.0, %v4064
        %v4066 = vpop.f32.mrb[0].mxu0
        %4067 = vmatprep.mubr.f32.mxu0 0.0
        %4068 = vmatmul.mubr.f32.gmra.mrb[0].mxu0 %v3948
        %v4069 = vpop.f32.mrb[0].mxu0
        %v4070 = vadd.f32 0.0, %v4069
        %v4071 = vpop.f32.mrb[0].mxu0
        %4072 = vmatprep.mubr.f32.mxu0 0.0
        %4073 = vmatmul.mubr.f32.gmra.mrb[0].mxu0 %v3951
        %v4074 = vpop.f32.mrb[0].mxu0
        %v4075 = vadd.f32 0.0, %v4074
        %v4076 = vpop.f32.mrb[0].mxu0
        %4077 = vmatprep.mubr.f32.mxu0 0.0
        %4078 = vmatmul.mubr.f32.gmra.mrb[0].mxu0 %v3954
        %v4079 = vpop.f32.mrb[0].mxu0
        %v4080 = vadd.f32 0.0, %v4079
        %v4081 = vpop.f32.mrb[0].mxu0
        %4082 = vmatprep.mubr.f32.mxu0 0.0
        %4083 = vmatmul.mubr.f32.gmra.mrb[0].mxu0 %v3957
        %v4084 = vpop.f32.mrb[0].mxu0
        %v4085 = vadd.f32 0.0, %v4084
        %v4086 = vpop.f32.mrb[0].mxu0
        %4087 = vmatprep.mubr.f32.mxu0 0.0
        %4088 = vmatmul.mubr.f32.gmra.mrb[0].mxu0 %v3960
        %v4089 = vpop.f32.mrb[0].mxu0
        %v4090 = vadd.f32 0.0, %v4089
        %v4091 = vpop.f32.mrb[0].mxu0
        %4092 = vmatprep.mubr.f32.mxu0 0.0
        %4093 = vmatmul.mubr.f32.gmra.mrb[0].mxu0 %v3963
        %v4094 = vpop.f32.mrb[0].mxu0
        %v4095 = vadd.f32 0.0, %v4094
        %v4096 = vpop.f32.mrb[0].mxu0
        %4097 = vmatprep.mubr.f32.mxu0 0.0
        %4098 = vmatmul.mubr.f32.gmra.mrb[0].mxu0 %v3966
        %v4099 = vpop.f32.mrb[0].mxu0
        %v4100 = vadd.f32 0.0, %v4099
        %v4101 = vpop.f32.mrb[0].mxu0
        %4102 = vmatprep.mubr.f32.mxu0 0.0
        %4103 = vmatmul.mubr.f32.gmra.mrb[0].mxu0 %v3969
        %v4104 = vpop.f32.mrb[0].mxu0
        %v4105 = vadd.f32 0.0, %v4104
        %v4106 = vpop.f32.mrb[0].mxu0
        %4107 = vmatprep.mubr.f32.mxu0 0.0
        %4108 = vmatmul.mubr.f32.gmra.mrb[0].mxu0 %v3972
        %v4109 = vpop.f32.mrb[0].mxu0
        %v4110 = vadd.f32 0.0, %v4109
        %v4111 = vpop.f32.mrb[0].mxu0
        %4112 = vmatprep.mubr.f32.mxu0 0.0
        %4113 = vmatmul.mubr.f32.gmra.mrb[0].mxu0 %v3975
        %v4114 = vpop.f32.mrb[0].mxu0
        %v4115 = vadd.f32 0.0, %v4114
        %v4116 = vpop.f32.mrb[0].mxu0
        %4117 = vmatprep.mubr.f32.mxu0 0.0
        %4118 = vmatmul.mubr.f32.gmra.mrb[0].mxu0 %v3978
        %v4119 = vpop.f32.mrb[0].mxu0
        %v4120 = vadd.f32 0.0, %v4119
        %v4121 = vpop.f32.mrb[0].mxu0
        %4122 = vmatprep.mubr.f32.mxu0 0.0
        %4123 = vmatmul.mubr.f32.gmra.mrb[0].mxu0 %v3981
        %v4124 = vpop.f32.mrb[0].mxu0
        %v4125 = vadd.f32 0.0, %v4124
        %v4126 = vpop.f32.mrb[0].mxu0
        %4127 = vdwg.mxu0
        %v4128 = vadd.f32 %v3832, %v4050
        %v4129 = vadd.f32 %v3837, %v4055
        %v4130 = vadd.f32 %v3842, %v4060
        %v4131 = vadd.f32 %v3847, %v4065
        %v4132 = vadd.f32 %v3852, %v4070
        %v4133 = vadd.f32 %v3857, %v4075
        %v4134 = vadd.f32 %v3862, %v4080
        %v4135 = vadd.f32 %v3867, %v4085
        %v4136 = vadd.f32 %v3872, %v4090
        %v4137 = vadd.f32 %v3877, %v4095
        %v4138 = vadd.f32 %v3882, %v4100
        %v4139 = vadd.f32 %v3887, %v4105
        %v4140 = vadd.f32 %v3892, %v4110
        %v4141 = vadd.f32 %v3897, %v4115
        %v4142 = vadd.f32 %v3902, %v4120
        %v4143 = vadd.f32 %v3907, %v4125
        %v4144 = vld [vmem:[%s1893] sm:$0xff]
        %v4145 = vld [vmem:[%s1893 + $0x8] sm:$0xff]
        %v4146 = vld [vmem:[%s1893 + $0x10] sm:$0xff]
        %v4147 = vld [vmem:[%s1893 + $0x18] sm:$0xff]
        %v4148 = vld [vmem:[%s1893 + $0x20] sm:$0xff]
        %v4149 = vld [vmem:[%s1893 + $0x28] sm:$0xff]
        %v4150 = vld [vmem:[%s1893 + $0x30] sm:$0xff]
        %v4151 = vld [vmem:[%s1893 + $0x38] sm:$0xff]
        %v4152 = vld [vmem:[%s1893 + $0x40] sm:$0xff]
        %v4153 = vld [vmem:[%s1893 + $0x48] sm:$0xff]
        %v4154 = vld [vmem:[%s1893 + $0x50] sm:$0xff]
        %v4155 = vld [vmem:[%s1893 + $0x58] sm:$0xff]
        %v4156 = vld [vmem:[%s1893 + $0x60] sm:$0xff]
        %v4157 = vld [vmem:[%s1893 + $0x68] sm:$0xff]
        %v4158 = vld [vmem:[%s1893 + $0x70] sm:$0xff]
        %v4159 = vld [vmem:[%s1893 + $0x78] sm:$0xff]
        %s4160 = scalar_lea.vmem %s11, 192
        %v4161 = vld [vmem:[%s4160] sm:$0xff]
        %v4162 = vld [vmem:[%s4160 + $0x8] sm:$0xff]
        %v4163 = vld [vmem:[%s4160 + $0x10] sm:$0xff]
        %v4164 = vld [vmem:[%s4160 + $0x18] sm:$0xff]
        %v4165 = vld [vmem:[%s4160 + $0x20] sm:$0xff]
        %v4166 = vld [vmem:[%s4160 + $0x28] sm:$0xff]
        %v4167 = vld [vmem:[%s4160 + $0x30] sm:$0xff]
        %v4168 = vld [vmem:[%s4160 + $0x38] sm:$0xff]
        %v4170 = vsel %vm824, %v4144, 0
        %v4173 = vsel %vm824, %v4145, 0
        %v4176 = vsel %vm824, %v4146, 0
        %v4179 = vsel %vm824, %v4147, 0
        %v4182 = vsel %vm824, %v4148, 0
        %v4185 = vsel %vm824, %v4149, 0
        %v4188 = vsel %vm824, %v4150, 0
        %v4191 = vsel %vm824, %v4151, 0
        %v4194 = vsel %vm824, %v4152, 0
        %v4197 = vsel %vm824, %v4153, 0
        %v4200 = vsel %vm824, %v4154, 0
        %v4203 = vsel %vm824, %v4155, 0
        %v4206 = vsel %vm824, %v4156, 0
        %v4209 = vsel %vm824, %v4157, 0
        %v4212 = vsel %vm824, %v4158, 0
        %v4215 = vsel %vm824, %v4159, 0
        %4217 = vmatprep.subr.mxu0 0.0
        %4218 = vmatpush1.msra.mxu0 %v4161
        %4219 = vmatprep.subr.mxu0 0.0
        %4220 = vmatpush1.msra.mxu0 %v4162
        %4221 = vmatprep.subr.mxu0 0.0
        %4222 = vmatpush1.msra.mxu0 %v4163
        %4223 = vmatprep.subr.mxu0 0.0
        %4224 = vmatpush1.msra.mxu0 %v4164
        %4225 = vmatprep.subr.mxu0 0.0
        %4226 = vmatpush1.msra.mxu0 %v4165
        %4227 = vmatprep.subr.mxu0 0.0
        %4228 = vmatpush1.msra.mxu0 %v4166
        %4229 = vmatprep.subr.mxu0 0.0
        %4230 = vmatpush1.msra.mxu0 %v4167
        %4231 = vmatprep.subr.mxu0 0.0
        %4232 = vmatpush1.msra.mxu0 %v4168
        %4233 = vmatprep.subr.mxu0 0.0
        %4234 = vmatpush1.msra.mxu0 0.0
        %4235 = vmatprep.subr.mxu0 0.0
        %4236 = vmatpush1.msra.mxu0 0.0
        %4237 = vmatprep.subr.mxu0 0.0
        %4238 = vmatpush1.msra.mxu0 0.0
        %4239 = vmatprep.subr.mxu0 0.0
        %4240 = vmatpush1.msra.mxu0 0.0
        %4241 = vmatprep.subr.mxu0 0.0
        %4242 = vmatpush1.msra.mxu0 0.0
        %4243 = vmatprep.subr.mxu0 0.0
        %4244 = vmatpush1.msra.mxu0 0.0
        %4245 = vmatprep.subr.mxu0 0.0
        %4246 = vmatpush1.msra.mxu0 0.0
        %4247 = vmatprep.subr.mxu0 0.0
        %4248 = vmatpush1.msra.mxu0 0.0
        %4249 = vmatprep.subr.mxu0 0.0
        %4250 = vmatpush1.msra.mxu0 0.0
        %4251 = vmatprep.subr.mxu0 0.0
        %4252 = vmatpush1.msra.mxu0 0.0
        %4253 = vmatprep.subr.mxu0 0.0
        %4254 = vmatpush1.msra.mxu0 0.0
        %4255 = vmatprep.subr.mxu0 0.0
        %4256 = vmatpush1.msra.mxu0 0.0
        %4257 = vmatprep.subr.mxu0 0.0
        %4258 = vmatpush1.msra.mxu0 0.0
        %4259 = vmatprep.subr.mxu0 0.0
        %4260 = vmatpush1.msra.mxu0 0.0
        %4261 = vmatprep.subr.mxu0 0.0
        %4262 = vmatpush1.msra.mxu0 0.0
        %4263 = vmatprep.subr.mxu0 0.0
        %4264 = vmatpush1.msra.mxu0 0.0
        %4265 = vmatprep.subr.mxu0 0.0
        %4266 = vmatpush1.msra.mxu0 0.0
        %4267 = vmatprep.subr.mxu0 0.0
        %4268 = vmatpush1.msra.mxu0 0.0
        %4269 = vmatprep.subr.mxu0 0.0
        %4270 = vmatpush1.msra.mxu0 0.0
        %4271 = vmatprep.subr.mxu0 0.0
        %4272 = vmatpush1.msra.mxu0 0.0
        %4273 = vmatprep.subr.mxu0 0.0
        %4274 = vmatpush1.msra.mxu0 0.0
        %4275 = vmatprep.subr.mxu0 0.0
        %4276 = vmatpush1.msra.mxu0 0.0
        %4277 = vmatprep.subr.mxu0 0.0
        %4278 = vmatpush1.msra.mxu0 0.0
        %4279 = vmatprep.subr.mxu0 0.0
        %4280 = vmatpush1.msra.mxu0 0.0
        %4281 = vmatprep.mubr.f32.mxu0 0.0
        %4282 = vmatmul.mubr.f32.gmra.mrb[0].mxu0 %v4170
        %v4283 = vpop.f32.mrb[0].mxu0
        %v4284 = vadd.f32 0.0, %v4283
        %v4285 = vpop.f32.mrb[0].mxu0
        %4286 = vmatprep.mubr.f32.mxu0 0.0
        %4287 = vmatmul.mubr.f32.gmra.mrb[0].mxu0 %v4173
        %v4288 = vpop.f32.mrb[0].mxu0
        %v4289 = vadd.f32 0.0, %v4288
        %v4290 = vpop.f32.mrb[0].mxu0
        %4291 = vmatprep.mubr.f32.mxu0 0.0
        %4292 = vmatmul.mubr.f32.gmra.mrb[0].mxu0 %v4176
        %v4293 = vpop.f32.mrb[0].mxu0
        %v4294 = vadd.f32 0.0, %v4293
        %v4295 = vpop.f32.mrb[0].mxu0
        %4296 = vmatprep.mubr.f32.mxu0 0.0
        %4297 = vmatmul.mubr.f32.gmra.mrb[0].mxu0 %v4179
        %v4298 = vpop.f32.mrb[0].mxu0
        %v4299 = vadd.f32 0.0, %v4298
        %v4300 = vpop.f32.mrb[0].mxu0
        %4301 = vmatprep.mubr.f32.mxu0 0.0
        %4302 = vmatmul.mubr.f32.gmra.mrb[0].mxu0 %v4182
        %v4303 = vpop.f32.mrb[0].mxu0
        %v4304 = vadd.f32 0.0, %v4303
        %v4305 = vpop.f32.mrb[0].mxu0
        %4306 = vmatprep.mubr.f32.mxu0 0.0
        %4307 = vmatmul.mubr.f32.gmra.mrb[0].mxu0 %v4185
        %v4308 = vpop.f32.mrb[0].mxu0
        %v4309 = vadd.f32 0.0, %v4308
        %v4310 = vpop.f32.mrb[0].mxu0
        %4311 = vmatprep.mubr.f32.mxu0 0.0
        %4312 = vmatmul.mubr.f32.gmra.mrb[0].mxu0 %v4188
        %v4313 = vpop.f32.mrb[0].mxu0
        %v4314 = vadd.f32 0.0, %v4313
        %v4315 = vpop.f32.mrb[0].mxu0
        %4316 = vmatprep.mubr.f32.mxu0 0.0
        %4317 = vmatmul.mubr.f32.gmra.mrb[0].mxu0 %v4191
        %v4318 = vpop.f32.mrb[0].mxu0
        %v4319 = vadd.f32 0.0, %v4318
        %v4320 = vpop.f32.mrb[0].mxu0
        %4321 = vmatprep.mubr.f32.mxu0 0.0
        %4322 = vmatmul.mubr.f32.gmra.mrb[0].mxu0 %v4194
        %v4323 = vpop.f32.mrb[0].mxu0
        %v4324 = vadd.f32 0.0, %v4323
        %v4325 = vpop.f32.mrb[0].mxu0
        %4326 = vmatprep.mubr.f32.mxu0 0.0
        %4327 = vmatmul.mubr.f32.gmra.mrb[0].mxu0 %v4197
        %v4328 = vpop.f32.mrb[0].mxu0
        %v4329 = vadd.f32 0.0, %v4328
        %v4330 = vpop.f32.mrb[0].mxu0
        %4331 = vmatprep.mubr.f32.mxu0 0.0
        %4332 = vmatmul.mubr.f32.gmra.mrb[0].mxu0 %v4200
        %v4333 = vpop.f32.mrb[0].mxu0
        %v4334 = vadd.f32 0.0, %v4333
        %v4335 = vpop.f32.mrb[0].mxu0
        %4336 = vmatprep.mubr.f32.mxu0 0.0
        %4337 = vmatmul.mubr.f32.gmra.mrb[0].mxu0 %v4203
        %v4338 = vpop.f32.mrb[0].mxu0
        %v4339 = vadd.f32 0.0, %v4338
        %v4340 = vpop.f32.mrb[0].mxu0
        %4341 = vmatprep.mubr.f32.mxu0 0.0
        %4342 = vmatmul.mubr.f32.gmra.mrb[0].mxu0 %v4206
        %v4343 = vpop.f32.mrb[0].mxu0
        %v4344 = vadd.f32 0.0, %v4343
        %v4345 = vpop.f32.mrb[0].mxu0
        %4346 = vmatprep.mubr.f32.mxu0 0.0
        %4347 = vmatmul.mubr.f32.gmra.mrb[0].mxu0 %v4209
        %v4348 = vpop.f32.mrb[0].mxu0
        %v4349 = vadd.f32 0.0, %v4348
        %v4350 = vpop.f32.mrb[0].mxu0
        %4351 = vmatprep.mubr.f32.mxu0 0.0
        %4352 = vmatmul.mubr.f32.gmra.mrb[0].mxu0 %v4212
        %v4353 = vpop.f32.mrb[0].mxu0
        %v4354 = vadd.f32 0.0, %v4353
        %v4355 = vpop.f32.mrb[0].mxu0
        %4356 = vmatprep.mubr.f32.mxu0 0.0
        %4357 = vmatmul.mubr.f32.gmra.mrb[0].mxu0 %v4215
        %v4358 = vpop.f32.mrb[0].mxu0
        %v4359 = vadd.f32 0.0, %v4358
        %v4360 = vpop.f32.mrb[0].mxu0
        %4361 = vdwg.mxu0
        %v4362 = vadd.f32 %v4128, %v4284
        %v4363 = vadd.f32 %v4129, %v4289
        %v4364 = vadd.f32 %v4130, %v4294
        %v4365 = vadd.f32 %v4131, %v4299
        %v4366 = vadd.f32 %v4132, %v4304
        %v4367 = vadd.f32 %v4133, %v4309
        %v4368 = vadd.f32 %v4134, %v4314
        %v4369 = vadd.f32 %v4135, %v4319
        %v4370 = vadd.f32 %v4136, %v4324
        %v4371 = vadd.f32 %v4137, %v4329
        %v4372 = vadd.f32 %v4138, %v4334
        %v4373 = vadd.f32 %v4139, %v4339
        %v4374 = vadd.f32 %v4140, %v4344
        %v4375 = vadd.f32 %v4141, %v4349
        %v4376 = vadd.f32 %v4142, %v4354
        %v4377 = vadd.f32 %v4143, %v4359
        %v4378 = vld [vmem:[#allocation2] sm:$0xff]
        %v4379 = vld [vmem:[#allocation2 + $0x8] sm:$0xff]
        %v4380 = vld [vmem:[#allocation2 + $0x10] sm:$0xff]
        %v4381 = vld [vmem:[#allocation2 + $0x18] sm:$0xff]
        %v4382 = vld [vmem:[#allocation2 + $0x20] sm:$0xff]
        %v4383 = vld [vmem:[#allocation2 + $0x28] sm:$0xff]
        %v4384 = vld [vmem:[#allocation2 + $0x30] sm:$0xff]
        %v4385 = vld [vmem:[#allocation2 + $0x38] sm:$0xff]
        %v4386 = vld [vmem:[#allocation2 + $0x40] sm:$0xff]
        %v4387 = vld [vmem:[#allocation2 + $0x48] sm:$0xff]
        %v4388 = vld [vmem:[#allocation2 + $0x50] sm:$0xff]
        %v4389 = vld [vmem:[#allocation2 + $0x58] sm:$0xff]
        %v4390 = vld [vmem:[#allocation2 + $0x60] sm:$0xff]
        %v4391 = vld [vmem:[#allocation2 + $0x68] sm:$0xff]
        %v4392 = vld [vmem:[#allocation2 + $0x70] sm:$0xff]
        %v4393 = vld [vmem:[#allocation2 + $0x78] sm:$0xff]
        %s4394 = scalar_lea.vmem %s11, 256
        %v4395 = vld [vmem:[%s4394] sm:$0xff]
        %v4396 = vld [vmem:[%s4394 + $0x8] sm:$0xff]
        %v4397 = vld [vmem:[%s4394 + $0x10] sm:$0xff]
        %v4398 = vld [vmem:[%s4394 + $0x18] sm:$0xff]
        %v4399 = vld [vmem:[%s4394 + $0x20] sm:$0xff]
        %v4400 = vld [vmem:[%s4394 + $0x28] sm:$0xff]
        %v4401 = vld [vmem:[%s4394 + $0x30] sm:$0xff]
        %v4402 = vld [vmem:[%s4394 + $0x38] sm:$0xff]
        %v4404 = vsel %vm824, %v4378, 0
        %v4407 = vsel %vm824, %v4379, 0
        %v4410 = vsel %vm824, %v4380, 0
        %v4413 = vsel %vm824, %v4381, 0
        %v4416 = vsel %vm824, %v4382, 0
        %v4419 = vsel %vm824, %v4383, 0
        %v4422 = vsel %vm824, %v4384, 0
        %v4425 = vsel %vm824, %v4385, 0
        %v4428 = vsel %vm824, %v4386, 0
        %v4431 = vsel %vm824, %v4387, 0
        %v4434 = vsel %vm824, %v4388, 0
        %v4437 = vsel %vm824, %v4389, 0
        %v4440 = vsel %vm824, %v4390, 0
        %v4443 = vsel %vm824, %v4391, 0
        %v4446 = vsel %vm824, %v4392, 0
        %v4449 = vsel %vm824, %v4393, 0
        %4451 = vmatprep.subr.mxu0 0.0
        %4452 = vmatpush1.msra.mxu0 %v4395
        %4453 = vmatprep.subr.mxu0 0.0
        %4454 = vmatpush1.msra.mxu0 %v4396
        %4455 = vmatprep.subr.mxu0 0.0
        %4456 = vmatpush1.msra.mxu0 %v4397
        %4457 = vmatprep.subr.mxu0 0.0
        %4458 = vmatpush1.msra.mxu0 %v4398
        %4459 = vmatprep.subr.mxu0 0.0
        %4460 = vmatpush1.msra.mxu0 %v4399
        %4461 = vmatprep.subr.mxu0 0.0
        %4462 = vmatpush1.msra.mxu0 %v4400
        %4463 = vmatprep.subr.mxu0 0.0
        %4464 = vmatpush1.msra.mxu0 %v4401
        %4465 = vmatprep.subr.mxu0 0.0
        %4466 = vmatpush1.msra.mxu0 %v4402
        %4467 = vmatprep.subr.mxu0 0.0
        %4468 = vmatpush1.msra.mxu0 0.0
        %4469 = vmatprep.subr.mxu0 0.0
        %4470 = vmatpush1.msra.mxu0 0.0
        %4471 = vmatprep.subr.mxu0 0.0
        %4472 = vmatpush1.msra.mxu0 0.0
        %4473 = vmatprep.subr.mxu0 0.0
        %4474 = vmatpush1.msra.mxu0 0.0
        %4475 = vmatprep.subr.mxu0 0.0
        %4476 = vmatpush1.msra.mxu0 0.0
        %4477 = vmatprep.subr.mxu0 0.0
        %4478 = vmatpush1.msra.mxu0 0.0
        %4479 = vmatprep.subr.mxu0 0.0
        %4480 = vmatpush1.msra.mxu0 0.0
        %4481 = vmatprep.subr.mxu0 0.0
        %4482 = vmatpush1.msra.mxu0 0.0
        %4483 = vmatprep.subr.mxu0 0.0
        %4484 = vmatpush1.msra.mxu0 0.0
        %4485 = vmatprep.subr.mxu0 0.0
        %4486 = vmatpush1.msra.mxu0 0.0
        %4487 = vmatprep.subr.mxu0 0.0
        %4488 = vmatpush1.msra.mxu0 0.0
        %4489 = vmatprep.subr.mxu0 0.0
        %4490 = vmatpush1.msra.mxu0 0.0
        %4491 = vmatprep.subr.mxu0 0.0
        %4492 = vmatpush1.msra.mxu0 0.0
        %4493 = vmatprep.subr.mxu0 0.0
        %4494 = vmatpush1.msra.mxu0 0.0
        %4495 = vmatprep.subr.mxu0 0.0
        %4496 = vmatpush1.msra.mxu0 0.0
        %4497 = vmatprep.subr.mxu0 0.0
        %4498 = vmatpush1.msra.mxu0 0.0
        %4499 = vmatprep.subr.mxu0 0.0
        %4500 = vmatpush1.msra.mxu0 0.0
        %4501 = vmatprep.subr.mxu0 0.0
        %4502 = vmatpush1.msra.mxu0 0.0
        %4503 = vmatprep.subr.mxu0 0.0
        %4504 = vmatpush1.msra.mxu0 0.0
        %4505 = vmatprep.subr.mxu0 0.0
        %4506 = vmatpush1.msra.mxu0 0.0
        %4507 = vmatprep.subr.mxu0 0.0
        %4508 = vmatpush1.msra.mxu0 0.0
        %4509 = vmatprep.subr.mxu0 0.0
        %4510 = vmatpush1.msra.mxu0 0.0
        %4511 = vmatprep.subr.mxu0 0.0
        %4512 = vmatpush1.msra.mxu0 0.0
        %4513 = vmatprep.subr.mxu0 0.0
        %4514 = vmatpush1.msra.mxu0 0.0
        %4515 = vmatprep.mubr.f32.mxu0 0.0
        %4516 = vmatmul.mubr.f32.gmra.mrb[0].mxu0 %v4404
        %v4517 = vpop.f32.mrb[0].mxu0
        %v4518 = vadd.f32 0.0, %v4517
        %v4519 = vpop.f32.mrb[0].mxu0
        %4520 = vmatprep.mubr.f32.mxu0 0.0
        %4521 = vmatmul.mubr.f32.gmra.mrb[0].mxu0 %v4407
        %v4522 = vpop.f32.mrb[0].mxu0
        %v4523 = vadd.f32 0.0, %v4522
        %v4524 = vpop.f32.mrb[0].mxu0
        %4525 = vmatprep.mubr.f32.mxu0 0.0
        %4526 = vmatmul.mubr.f32.gmra.mrb[0].mxu0 %v4410
        %v4527 = vpop.f32.mrb[0].mxu0
        %v4528 = vadd.f32 0.0, %v4527
        %v4529 = vpop.f32.mrb[0].mxu0
        %4530 = vmatprep.mubr.f32.mxu0 0.0
        %4531 = vmatmul.mubr.f32.gmra.mrb[0].mxu0 %v4413
        %v4532 = vpop.f32.mrb[0].mxu0
        %v4533 = vadd.f32 0.0, %v4532
        %v4534 = vpop.f32.mrb[0].mxu0
        %4535 = vmatprep.mubr.f32.mxu0 0.0
        %4536 = vmatmul.mubr.f32.gmra.mrb[0].mxu0 %v4416
        %v4537 = vpop.f32.mrb[0].mxu0
        %v4538 = vadd.f32 0.0, %v4537
        %v4539 = vpop.f32.mrb[0].mxu0
        %4540 = vmatprep.mubr.f32.mxu0 0.0
        %4541 = vmatmul.mubr.f32.gmra.mrb[0].mxu0 %v4419
        %v4542 = vpop.f32.mrb[0].mxu0
        %v4543 = vadd.f32 0.0, %v4542
        %v4544 = vpop.f32.mrb[0].mxu0
        %4545 = vmatprep.mubr.f32.mxu0 0.0
        %4546 = vmatmul.mubr.f32.gmra.mrb[0].mxu0 %v4422
        %v4547 = vpop.f32.mrb[0].mxu0
        %v4548 = vadd.f32 0.0, %v4547
        %v4549 = vpop.f32.mrb[0].mxu0
        %4550 = vmatprep.mubr.f32.mxu0 0.0
        %4551 = vmatmul.mubr.f32.gmra.mrb[0].mxu0 %v4425
        %v4552 = vpop.f32.mrb[0].mxu0
        %v4553 = vadd.f32 0.0, %v4552
        %v4554 = vpop.f32.mrb[0].mxu0
        %4555 = vmatprep.mubr.f32.mxu0 0.0
        %4556 = vmatmul.mubr.f32.gmra.mrb[0].mxu0 %v4428
        %v4557 = vpop.f32.mrb[0].mxu0
        %v4558 = vadd.f32 0.0, %v4557
        %v4559 = vpop.f32.mrb[0].mxu0
        %4560 = vmatprep.mubr.f32.mxu0 0.0
        %4561 = vmatmul.mubr.f32.gmra.mrb[0].mxu0 %v4431
        %v4562 = vpop.f32.mrb[0].mxu0
        %v4563 = vadd.f32 0.0, %v4562
        %v4564 = vpop.f32.mrb[0].mxu0
        %4565 = vmatprep.mubr.f32.mxu0 0.0
        %4566 = vmatmul.mubr.f32.gmra.mrb[0].mxu0 %v4434
        %v4567 = vpop.f32.mrb[0].mxu0
        %v4568 = vadd.f32 0.0, %v4567
        %v4569 = vpop.f32.mrb[0].mxu0
        %4570 = vmatprep.mubr.f32.mxu0 0.0
        %4571 = vmatmul.mubr.f32.gmra.mrb[0].mxu0 %v4437
        %v4572 = vpop.f32.mrb[0].mxu0
        %v4573 = vadd.f32 0.0, %v4572
        %v4574 = vpop.f32.mrb[0].mxu0
        %4575 = vmatprep.mubr.f32.mxu0 0.0
        %4576 = vmatmul.mubr.f32.gmra.mrb[0].mxu0 %v4440
        %v4577 = vpop.f32.mrb[0].mxu0
        %v4578 = vadd.f32 0.0, %v4577
        %v4579 = vpop.f32.mrb[0].mxu0
        %4580 = vmatprep.mubr.f32.mxu0 0.0
        %4581 = vmatmul.mubr.f32.gmra.mrb[0].mxu0 %v4443
        %v4582 = vpop.f32.mrb[0].mxu0
        %v4583 = vadd.f32 0.0, %v4582
        %v4584 = vpop.f32.mrb[0].mxu0
        %4585 = vmatprep.mubr.f32.mxu0 0.0
        %4586 = vmatmul.mubr.f32.gmra.mrb[0].mxu0 %v4446
        %v4587 = vpop.f32.mrb[0].mxu0
        %v4588 = vadd.f32 0.0, %v4587
        %v4589 = vpop.f32.mrb[0].mxu0
        %4590 = vmatprep.mubr.f32.mxu0 0.0
        %4591 = vmatmul.mubr.f32.gmra.mrb[0].mxu0 %v4449
        %v4592 = vpop.f32.mrb[0].mxu0
        %v4593 = vadd.f32 0.0, %v4592
        %v4594 = vpop.f32.mrb[0].mxu0
        %4595 = vdwg.mxu0
        %v4596 = vadd.f32 %v4362, %v4518
        %v4597 = vadd.f32 %v4363, %v4523
        %v4598 = vadd.f32 %v4364, %v4528
        %v4599 = vadd.f32 %v4365, %v4533
        %v4600 = vadd.f32 %v4366, %v4538
        %v4601 = vadd.f32 %v4367, %v4543
        %v4602 = vadd.f32 %v4368, %v4548
        %v4603 = vadd.f32 %v4369, %v4553
        %v4604 = vadd.f32 %v4370, %v4558
        %v4605 = vadd.f32 %v4371, %v4563
        %v4606 = vadd.f32 %v4372, %v4568
        %v4607 = vadd.f32 %v4373, %v4573
        %v4608 = vadd.f32 %v4374, %v4578
        %v4609 = vadd.f32 %v4375, %v4583
        %v4610 = vadd.f32 %v4376, %v4588
        %v4611 = vadd.f32 %v4377, %v4593
        %v4612 = vld [vmem:[#allocation10] sm:$0x1]
        %v4614 = vlaneseq
        %v4615 = vshrl.u32 %v4614, 7
        %v4616 = vsub.s32 0, %v4615
        %v4617 = vrot.slane %v4612, %v4616
        %v4619 = vadd.f32 %v4596, %v4617
        %v4620 = vadd.f32 %v4597, %v4617
        %v4621 = vadd.f32 %v4598, %v4617
        %v4622 = vadd.f32 %v4599, %v4617
        %v4623 = vadd.f32 %v4600, %v4617
        %v4624 = vadd.f32 %v4601, %v4617
        %v4625 = vadd.f32 %v4602, %v4617
        %v4626 = vadd.f32 %v4603, %v4617
        %v4627 = vadd.f32 %v4604, %v4617
        %v4628 = vadd.f32 %v4605, %v4617
        %v4629 = vadd.f32 %v4606, %v4617
        %v4630 = vadd.f32 %v4607, %v4617
        %v4631 = vadd.f32 %v4608, %v4617
        %v4632 = vadd.f32 %v4609, %v4617
        %v4633 = vadd.f32 %v4610, %v4617
        %v4634 = vadd.f32 %v4611, %v4617
        %v4635 = vld [vmem:[#allocation11] sm:$0xff]
        %v4636 = vld [vmem:[#allocation11 + $0x8] sm:$0xff]
        %v4637 = vld [vmem:[#allocation11 + $0x10] sm:$0xff]
        %v4638 = vld [vmem:[#allocation11 + $0x18] sm:$0xff]
        %v4639 = vld [vmem:[#allocation13] sm:$0x1]
        %v4641 = vlaneseq
        %v4642 = vshrl.u32 %v4641, 7
        %v4643 = vsub.s32 0, %v4642
        %v4644 = vrot.slane %v4639, %v4643
        %4646 = vmatprep.subr.mxu0 0.0
        %4647 = vmatpush1.msra.mxu0 %v4635
        %4648 = vmatprep.subr.mxu0 0.0
        %4649 = vmatpush1.msra.mxu0 %v4636
        %4650 = vmatprep.subr.mxu0 0.0
        %4651 = vmatpush1.msra.mxu0 %v4637
        %4652 = vmatprep.subr.mxu0 0.0
        %4653 = vmatpush1.msra.mxu0 %v4638
        %4654 = vmatprep.subr.mxu0 0.0
        %4655 = vmatpush1.msra.mxu0 0.0
        %4656 = vmatprep.subr.mxu0 0.0
        %4657 = vmatpush1.msra.mxu0 0.0
        %4658 = vmatprep.subr.mxu0 0.0
        %4659 = vmatpush1.msra.mxu0 0.0
        %4660 = vmatprep.subr.mxu0 0.0
        %4661 = vmatpush1.msra.mxu0 0.0
        %4662 = vmatprep.subr.mxu0 0.0
        %4663 = vmatpush1.msra.mxu0 0.0
        %4664 = vmatprep.subr.mxu0 0.0
        %4665 = vmatpush1.msra.mxu0 0.0
        %4666 = vmatprep.subr.mxu0 0.0
        %4667 = vmatpush1.msra.mxu0 0.0
        %4668 = vmatprep.subr.mxu0 0.0
        %4669 = vmatpush1.msra.mxu0 0.0
        %4670 = vmatprep.subr.mxu0 0.0
        %4671 = vmatpush1.msra.mxu0 0.0
        %4672 = vmatprep.subr.mxu0 0.0
        %4673 = vmatpush1.msra.mxu0 0.0
        %4674 = vmatprep.subr.mxu0 0.0
        %4675 = vmatpush1.msra.mxu0 0.0
        %4676 = vmatprep.subr.mxu0 0.0
        %4677 = vmatpush1.msra.mxu0 0.0
        %4678 = vmatprep.subr.mxu0 0.0
        %4679 = vmatpush1.msra.mxu0 0.0
        %4680 = vmatprep.subr.mxu0 0.0
        %4681 = vmatpush1.msra.mxu0 0.0
        %4682 = vmatprep.subr.mxu0 0.0
        %4683 = vmatpush1.msra.mxu0 0.0
        %4684 = vmatprep.subr.mxu0 0.0
        %4685 = vmatpush1.msra.mxu0 0.0
        %4686 = vmatprep.subr.mxu0 0.0
        %4687 = vmatpush1.msra.mxu0 0.0
        %4688 = vmatprep.subr.mxu0 0.0
        %4689 = vmatpush1.msra.mxu0 0.0
        %4690 = vmatprep.subr.mxu0 0.0
        %4691 = vmatpush1.msra.mxu0 0.0
        %4692 = vmatprep.subr.mxu0 0.0
        %4693 = vmatpush1.msra.mxu0 0.0
        %4694 = vmatprep.subr.mxu0 0.0
        %4695 = vmatpush1.msra.mxu0 0.0
        %4696 = vmatprep.subr.mxu0 0.0
        %4697 = vmatpush1.msra.mxu0 0.0
        %4698 = vmatprep.subr.mxu0 0.0
        %4699 = vmatpush1.msra.mxu0 0.0
        %4700 = vmatprep.subr.mxu0 0.0
        %4701 = vmatpush1.msra.mxu0 0.0
        %4702 = vmatprep.subr.mxu0 0.0
        %4703 = vmatpush1.msra.mxu0 0.0
        %4704 = vmatprep.subr.mxu0 0.0
        %4705 = vmatpush1.msra.mxu0 0.0
        %4706 = vmatprep.subr.mxu0 0.0
        %4707 = vmatpush1.msra.mxu0 0.0
        %4708 = vmatprep.subr.mxu0 0.0
        %4709 = vmatpush1.msra.mxu0 0.0
        %4710 = vmatprep.mubr.f32.mxu0 0.0
        %4711 = vmatmul.mubr.f32.gmra.mrb[0].mxu0 %v2418
        %v4712 = vpop.f32.mrb[0].mxu0
        %v4713 = vadd.f32 %v4644, %v4712
        %v4714 = vpop.f32.mrb[0].mxu0
        %4715 = vmatprep.mubr.f32.mxu0 0.0
        %4716 = vmatmul.mubr.f32.gmra.mrb[0].mxu0 %v2421
        %v4717 = vpop.f32.mrb[0].mxu0
        %v4718 = vadd.f32 %v4644, %v4717
        %v4719 = vpop.f32.mrb[0].mxu0
        %4720 = vmatprep.mubr.f32.mxu0 0.0
        %4721 = vmatmul.mubr.f32.gmra.mrb[0].mxu0 %v2424
        %v4722 = vpop.f32.mrb[0].mxu0
        %v4723 = vadd.f32 %v4644, %v4722
        %v4724 = vpop.f32.mrb[0].mxu0
        %4725 = vmatprep.mubr.f32.mxu0 0.0
        %4726 = vmatmul.mubr.f32.gmra.mrb[0].mxu0 %v2427
        %v4727 = vpop.f32.mrb[0].mxu0
        %v4728 = vadd.f32 %v4644, %v4727
        %v4729 = vpop.f32.mrb[0].mxu0
        %4730 = vmatprep.mubr.f32.mxu0 0.0
        %4731 = vmatmul.mubr.f32.gmra.mrb[0].mxu0 %v2430
        %v4732 = vpop.f32.mrb[0].mxu0
        %v4733 = vadd.f32 %v4644, %v4732
        %v4734 = vpop.f32.mrb[0].mxu0
        %4735 = vmatprep.mubr.f32.mxu0 0.0
        %4736 = vmatmul.mubr.f32.gmra.mrb[0].mxu0 %v2433
        %v4737 = vpop.f32.mrb[0].mxu0
        %v4738 = vadd.f32 %v4644, %v4737
        %v4739 = vpop.f32.mrb[0].mxu0
        %4740 = vmatprep.mubr.f32.mxu0 0.0
        %4741 = vmatmul.mubr.f32.gmra.mrb[0].mxu0 %v2436
        %v4742 = vpop.f32.mrb[0].mxu0
        %v4743 = vadd.f32 %v4644, %v4742
        %v4744 = vpop.f32.mrb[0].mxu0
        %4745 = vmatprep.mubr.f32.mxu0 0.0
        %4746 = vmatmul.mubr.f32.gmra.mrb[0].mxu0 %v2439
        %v4747 = vpop.f32.mrb[0].mxu0
        %v4748 = vadd.f32 %v4644, %v4747
        %v4749 = vpop.f32.mrb[0].mxu0
        %4750 = vmatprep.mubr.f32.mxu0 0.0
        %4751 = vmatmul.mubr.f32.gmra.mrb[0].mxu0 %v2442
        %v4752 = vpop.f32.mrb[0].mxu0
        %v4753 = vadd.f32 %v4644, %v4752
        %v4754 = vpop.f32.mrb[0].mxu0
        %4755 = vmatprep.mubr.f32.mxu0 0.0
        %4756 = vmatmul.mubr.f32.gmra.mrb[0].mxu0 %v2445
        %v4757 = vpop.f32.mrb[0].mxu0
        %v4758 = vadd.f32 %v4644, %v4757
        %v4759 = vpop.f32.mrb[0].mxu0
        %4760 = vmatprep.mubr.f32.mxu0 0.0
        %4761 = vmatmul.mubr.f32.gmra.mrb[0].mxu0 %v2448
        %v4762 = vpop.f32.mrb[0].mxu0
        %v4763 = vadd.f32 %v4644, %v4762
        %v4764 = vpop.f32.mrb[0].mxu0
        %4765 = vmatprep.mubr.f32.mxu0 0.0
        %4766 = vmatmul.mubr.f32.gmra.mrb[0].mxu0 %v2451
        %v4767 = vpop.f32.mrb[0].mxu0
        %v4768 = vadd.f32 %v4644, %v4767
        %v4769 = vpop.f32.mrb[0].mxu0
        %4770 = vmatprep.mubr.f32.mxu0 0.0
        %4771 = vmatmul.mubr.f32.gmra.mrb[0].mxu0 %v2454
        %v4772 = vpop.f32.mrb[0].mxu0
        %v4773 = vadd.f32 %v4644, %v4772
        %v4774 = vpop.f32.mrb[0].mxu0
        %4775 = vmatprep.mubr.f32.mxu0 0.0
        %4776 = vmatmul.mubr.f32.gmra.mrb[0].mxu0 %v2457
        %v4777 = vpop.f32.mrb[0].mxu0
        %v4778 = vadd.f32 %v4644, %v4777
        %v4779 = vpop.f32.mrb[0].mxu0
        %4780 = vmatprep.mubr.f32.mxu0 0.0
        %4781 = vmatmul.mubr.f32.gmra.mrb[0].mxu0 %v2460
        %v4782 = vpop.f32.mrb[0].mxu0
        %v4783 = vadd.f32 %v4644, %v4782
        %v4784 = vpop.f32.mrb[0].mxu0
        %4785 = vmatprep.mubr.f32.mxu0 0.0
        %4786 = vmatmul.mubr.f32.gmra.mrb[0].mxu0 %v2463
        %v4787 = vpop.f32.mrb[0].mxu0
        %v4788 = vadd.f32 %v4644, %v4787
        %v4789 = vpop.f32.mrb[0].mxu0
        %4790 = vdwg.mxu0
        %v4791 = vadd.f32 %v4619, %v4713
        %v4792 = vadd.f32 %v4620, %v4718
        %v4793 = vadd.f32 %v4621, %v4723
        %v4794 = vadd.f32 %v4622, %v4728
        %v4795 = vadd.f32 %v4623, %v4733
        %v4796 = vadd.f32 %v4624, %v4738
        %v4797 = vadd.f32 %v4625, %v4743
        %v4798 = vadd.f32 %v4626, %v4748
        %v4799 = vadd.f32 %v4627, %v4753
        %v4800 = vadd.f32 %v4628, %v4758
        %v4801 = vadd.f32 %v4629, %v4763
        %v4802 = vadd.f32 %v4630, %v4768
        %v4803 = vadd.f32 %v4631, %v4773
        %v4804 = vadd.f32 %v4632, %v4778
        %v4805 = vadd.f32 %v4633, %v4783
        %v4806 = vadd.f32 %v4634, %v4788
        %v4807 = vmax.f32 %v4791, 0.0
        %v4808 = vmax.f32 %v4792, 0.0
        %v4809 = vmax.f32 %v4793, 0.0
        %v4810 = vmax.f32 %v4794, 0.0
        %v4811 = vmax.f32 %v4795, 0.0
        %v4812 = vmax.f32 %v4796, 0.0
        %v4813 = vmax.f32 %v4797, 0.0
        %v4814 = vmax.f32 %v4798, 0.0
        %v4815 = vmax.f32 %v4799, 0.0
        %v4816 = vmax.f32 %v4800, 0.0
        %v4817 = vmax.f32 %v4801, 0.0
        %v4818 = vmax.f32 %v4802, 0.0
        %v4819 = vmax.f32 %v4803, 0.0
        %v4820 = vmax.f32 %v4804, 0.0
        %v4821 = vmax.f32 %v4805, 0.0
        %v4822 = vmax.f32 %v4806, 0.0
        %v4823 = vld [vmem:[%s15] sm:$0xff]
        %v4824 = vld [vmem:[%s15 + $0x8] sm:$0xff]
        %v4825 = vld [vmem:[%s15 + $0x10] sm:$0xff]
        %v4826 = vld [vmem:[%s15 + $0x18] sm:$0xff]
        %v4827 = vld [vmem:[%s15 + $0x20] sm:$0xff]
        %v4828 = vld [vmem:[%s15 + $0x28] sm:$0xff]
        %v4829 = vld [vmem:[%s15 + $0x30] sm:$0xff]
        %v4830 = vld [vmem:[%s15 + $0x38] sm:$0xff]
        %v4832 = vsel %vm824, %v4807, 0
        %v4835 = vsel %vm824, %v4808, 0
        %v4838 = vsel %vm824, %v4809, 0
        %v4841 = vsel %vm824, %v4810, 0
        %v4844 = vsel %vm824, %v4811, 0
        %v4847 = vsel %vm824, %v4812, 0
        %v4850 = vsel %vm824, %v4813, 0
        %v4853 = vsel %vm824, %v4814, 0
        %v4856 = vsel %vm824, %v4815, 0
        %v4859 = vsel %vm824, %v4816, 0
        %v4862 = vsel %vm824, %v4817, 0
        %v4865 = vsel %vm824, %v4818, 0
        %v4868 = vsel %vm824, %v4819, 0
        %v4871 = vsel %vm824, %v4820, 0
        %v4874 = vsel %vm824, %v4821, 0
        %v4877 = vsel %vm824, %v4822, 0
        %4879 = vmatprep.subr.mxu0 0.0
        %4880 = vmatpush1.msra.mxu0 %v4823
        %4881 = vmatprep.subr.mxu0 0.0
        %4882 = vmatpush1.msra.mxu0 %v4824
        %4883 = vmatprep.subr.mxu0 0.0
        %4884 = vmatpush1.msra.mxu0 %v4825
        %4885 = vmatprep.subr.mxu0 0.0
        %4886 = vmatpush1.msra.mxu0 %v4826
        %4887 = vmatprep.subr.mxu0 0.0
        %4888 = vmatpush1.msra.mxu0 %v4827
        %4889 = vmatprep.subr.mxu0 0.0
        %4890 = vmatpush1.msra.mxu0 %v4828
        %4891 = vmatprep.subr.mxu0 0.0
        %4892 = vmatpush1.msra.mxu0 %v4829
        %4893 = vmatprep.subr.mxu0 0.0
        %4894 = vmatpush1.msra.mxu0 %v4830
        %4895 = vmatprep.subr.mxu0 0.0
        %4896 = vmatpush1.msra.mxu0 0.0
        %4897 = vmatprep.subr.mxu0 0.0
        %4898 = vmatpush1.msra.mxu0 0.0
        %4899 = vmatprep.subr.mxu0 0.0
        %4900 = vmatpush1.msra.mxu0 0.0
        %4901 = vmatprep.subr.mxu0 0.0
        %4902 = vmatpush1.msra.mxu0 0.0
        %4903 = vmatprep.subr.mxu0 0.0
        %4904 = vmatpush1.msra.mxu0 0.0
        %4905 = vmatprep.subr.mxu0 0.0
        %4906 = vmatpush1.msra.mxu0 0.0
        %4907 = vmatprep.subr.mxu0 0.0
        %4908 = vmatpush1.msra.mxu0 0.0
        %4909 = vmatprep.subr.mxu0 0.0
        %4910 = vmatpush1.msra.mxu0 0.0
        %4911 = vmatprep.subr.mxu0 0.0
        %4912 = vmatpush1.msra.mxu0 0.0
        %4913 = vmatprep.subr.mxu0 0.0
        %4914 = vmatpush1.msra.mxu0 0.0
        %4915 = vmatprep.subr.mxu0 0.0
        %4916 = vmatpush1.msra.mxu0 0.0
        %4917 = vmatprep.subr.mxu0 0.0
        %4918 = vmatpush1.msra.mxu0 0.0
        %4919 = vmatprep.subr.mxu0 0.0
        %4920 = vmatpush1.msra.mxu0 0.0
        %4921 = vmatprep.subr.mxu0 0.0
        %4922 = vmatpush1.msra.mxu0 0.0
        %4923 = vmatprep.subr.mxu0 0.0
        %4924 = vmatpush1.msra.mxu0 0.0
        %4925 = vmatprep.subr.mxu0 0.0
        %4926 = vmatpush1.msra.mxu0 0.0
        %4927 = vmatprep.subr.mxu0 0.0
        %4928 = vmatpush1.msra.mxu0 0.0
        %4929 = vmatprep.subr.mxu0 0.0
        %4930 = vmatpush1.msra.mxu0 0.0
        %4931 = vmatprep.subr.mxu0 0.0
        %4932 = vmatpush1.msra.mxu0 0.0
        %4933 = vmatprep.subr.mxu0 0.0
        %4934 = vmatpush1.msra.mxu0 0.0
        %4935 = vmatprep.subr.mxu0 0.0
        %4936 = vmatpush1.msra.mxu0 0.0
        %4937 = vmatprep.subr.mxu0 0.0
        %4938 = vmatpush1.msra.mxu0 0.0
        %4939 = vmatprep.subr.mxu0 0.0
        %4940 = vmatpush1.msra.mxu0 0.0
        %4941 = vmatprep.subr.mxu0 0.0
        %4942 = vmatpush1.msra.mxu0 0.0
        %4943 = vmatprep.mubr.f32.mxu0 0.0
        %4944 = vmatmul.mubr.f32.gmra.mrb[0].mxu0 %v4832
        %v4945 = vpop.f32.mrb[0].mxu0
        %v4946 = vadd.f32 0.0, %v4945
        %v4947 = vpop.f32.mrb[0].mxu0
        %4948 = vmatprep.mubr.f32.mxu0 0.0
        %4949 = vmatmul.mubr.f32.gmra.mrb[0].mxu0 %v4835
        %v4950 = vpop.f32.mrb[0].mxu0
        %v4951 = vadd.f32 0.0, %v4950
        %v4952 = vpop.f32.mrb[0].mxu0
        %4953 = vmatprep.mubr.f32.mxu0 0.0
        %4954 = vmatmul.mubr.f32.gmra.mrb[0].mxu0 %v4838
        %v4955 = vpop.f32.mrb[0].mxu0
        %v4956 = vadd.f32 0.0, %v4955
        %v4957 = vpop.f32.mrb[0].mxu0
        %4958 = vmatprep.mubr.f32.mxu0 0.0
        %4959 = vmatmul.mubr.f32.gmra.mrb[0].mxu0 %v4841
        %v4960 = vpop.f32.mrb[0].mxu0
        %v4961 = vadd.f32 0.0, %v4960
        %v4962 = vpop.f32.mrb[0].mxu0
        %4963 = vmatprep.mubr.f32.mxu0 0.0
        %4964 = vmatmul.mubr.f32.gmra.mrb[0].mxu0 %v4844
        %v4965 = vpop.f32.mrb[0].mxu0
        %v4966 = vadd.f32 0.0, %v4965
        %v4967 = vpop.f32.mrb[0].mxu0
        %4968 = vmatprep.mubr.f32.mxu0 0.0
        %4969 = vmatmul.mubr.f32.gmra.mrb[0].mxu0 %v4847
        %v4970 = vpop.f32.mrb[0].mxu0
        %v4971 = vadd.f32 0.0, %v4970
        %v4972 = vpop.f32.mrb[0].mxu0
        %4973 = vmatprep.mubr.f32.mxu0 0.0
        %4974 = vmatmul.mubr.f32.gmra.mrb[0].mxu0 %v4850
        %v4975 = vpop.f32.mrb[0].mxu0
        %v4976 = vadd.f32 0.0, %v4975
        %v4977 = vpop.f32.mrb[0].mxu0
        %4978 = vmatprep.mubr.f32.mxu0 0.0
        %4979 = vmatmul.mubr.f32.gmra.mrb[0].mxu0 %v4853
        %v4980 = vpop.f32.mrb[0].mxu0
        %v4981 = vadd.f32 0.0, %v4980
        %v4982 = vpop.f32.mrb[0].mxu0
        %4983 = vmatprep.mubr.f32.mxu0 0.0
        %4984 = vmatmul.mubr.f32.gmra.mrb[0].mxu0 %v4856
        %v4985 = vpop.f32.mrb[0].mxu0
        %v4986 = vadd.f32 0.0, %v4985
        %v4987 = vpop.f32.mrb[0].mxu0
        %4988 = vmatprep.mubr.f32.mxu0 0.0
        %4989 = vmatmul.mubr.f32.gmra.mrb[0].mxu0 %v4859
        %v4990 = vpop.f32.mrb[0].mxu0
        %v4991 = vadd.f32 0.0, %v4990
        %v4992 = vpop.f32.mrb[0].mxu0
        %4993 = vmatprep.mubr.f32.mxu0 0.0
        %4994 = vmatmul.mubr.f32.gmra.mrb[0].mxu0 %v4862
        %v4995 = vpop.f32.mrb[0].mxu0
        %v4996 = vadd.f32 0.0, %v4995
        %v4997 = vpop.f32.mrb[0].mxu0
        %4998 = vmatprep.mubr.f32.mxu0 0.0
        %4999 = vmatmul.mubr.f32.gmra.mrb[0].mxu0 %v4865
        %v5000 = vpop.f32.mrb[0].mxu0
        %v5001 = vadd.f32 0.0, %v5000
        %v5002 = vpop.f32.mrb[0].mxu0
        %5003 = vmatprep.mubr.f32.mxu0 0.0
        %5004 = vmatmul.mubr.f32.gmra.mrb[0].mxu0 %v4868
        %v5005 = vpop.f32.mrb[0].mxu0
        %v5006 = vadd.f32 0.0, %v5005
        %v5007 = vpop.f32.mrb[0].mxu0
        %5008 = vmatprep.mubr.f32.mxu0 0.0
        %5009 = vmatmul.mubr.f32.gmra.mrb[0].mxu0 %v4871
        %v5010 = vpop.f32.mrb[0].mxu0
        %v5011 = vadd.f32 0.0, %v5010
        %v5012 = vpop.f32.mrb[0].mxu0
        %5013 = vmatprep.mubr.f32.mxu0 0.0
        %5014 = vmatmul.mubr.f32.gmra.mrb[0].mxu0 %v4874
        %v5015 = vpop.f32.mrb[0].mxu0
        %v5016 = vadd.f32 0.0, %v5015
        %v5017 = vpop.f32.mrb[0].mxu0
        %5018 = vmatprep.mubr.f32.mxu0 0.0
        %5019 = vmatmul.mubr.f32.gmra.mrb[0].mxu0 %v4877
        %v5020 = vpop.f32.mrb[0].mxu0
        %v5021 = vadd.f32 0.0, %v5020
        %v5022 = vpop.f32.mrb[0].mxu0
        %5023 = vdwg.mxu0
        %v5024 = vld [vmem:[%s4] sm:$0xff]
        %v5025 = vld [vmem:[%s4 + $0x8] sm:$0xff]
        %v5026 = vld [vmem:[%s4 + $0x10] sm:$0xff]
        %v5027 = vld [vmem:[%s4 + $0x18] sm:$0xff]
        %v5028 = vld [vmem:[%s4 + $0x20] sm:$0xff]
        %v5029 = vld [vmem:[%s4 + $0x28] sm:$0xff]
        %v5030 = vld [vmem:[%s4 + $0x30] sm:$0xff]
        %v5031 = vld [vmem:[%s4 + $0x38] sm:$0xff]
        %v5032 = vld [vmem:[%s4 + $0x40] sm:$0xff]
        %v5033 = vld [vmem:[%s4 + $0x48] sm:$0xff]
        %v5034 = vld [vmem:[%s4 + $0x50] sm:$0xff]
        %v5035 = vld [vmem:[%s4 + $0x58] sm:$0xff]
        %v5036 = vld [vmem:[%s4 + $0x60] sm:$0xff]
        %v5037 = vld [vmem:[%s4 + $0x68] sm:$0xff]
        %v5038 = vld [vmem:[%s4 + $0x70] sm:$0xff]
        %v5039 = vld [vmem:[%s4 + $0x78] sm:$0xff]
        %s5040 = scalar_lea.vmem %s15, 64
        %v5041 = vld [vmem:[%s5040] sm:$0xff]
        %v5042 = vld [vmem:[%s5040 + $0x8] sm:$0xff]
        %v5043 = vld [vmem:[%s5040 + $0x10] sm:$0xff]
        %v5044 = vld [vmem:[%s5040 + $0x18] sm:$0xff]
        %v5045 = vld [vmem:[%s5040 + $0x20] sm:$0xff]
        %v5046 = vld [vmem:[%s5040 + $0x28] sm:$0xff]
        %v5047 = vld [vmem:[%s5040 + $0x30] sm:$0xff]
        %v5048 = vld [vmem:[%s5040 + $0x38] sm:$0xff]
        %5049 = vmatprep.subr.mxu0 0.0
        %5050 = vmatpush1.msra.mxu0 %v5041
        %5051 = vmatprep.subr.mxu0 0.0
        %5052 = vmatpush1.msra.mxu0 %v5042
        %5053 = vmatprep.subr.mxu0 0.0
        %5054 = vmatpush1.msra.mxu0 %v5043
        %5055 = vmatprep.subr.mxu0 0.0
        %5056 = vmatpush1.msra.mxu0 %v5044
        %5057 = vmatprep.subr.mxu0 0.0
        %5058 = vmatpush1.msra.mxu0 %v5045
        %5059 = vmatprep.subr.mxu0 0.0
        %5060 = vmatpush1.msra.mxu0 %v5046
        %5061 = vmatprep.subr.mxu0 0.0
        %5062 = vmatpush1.msra.mxu0 %v5047
        %5063 = vmatprep.subr.mxu0 0.0
        %5064 = vmatpush1.msra.mxu0 %v5048
        %5065 = vmatprep.subr.mxu0 0.0
        %5066 = vmatpush1.msra.mxu0 0.0
        %5067 = vmatprep.subr.mxu0 0.0
        %5068 = vmatpush1.msra.mxu0 0.0
        %5069 = vmatprep.subr.mxu0 0.0
        %5070 = vmatpush1.msra.mxu0 0.0
        %5071 = vmatprep.subr.mxu0 0.0
        %5072 = vmatpush1.msra.mxu0 0.0
        %5073 = vmatprep.subr.mxu0 0.0
        %5074 = vmatpush1.msra.mxu0 0.0
        %5075 = vmatprep.subr.mxu0 0.0
        %5076 = vmatpush1.msra.mxu0 0.0
        %5077 = vmatprep.subr.mxu0 0.0
        %5078 = vmatpush1.msra.mxu0 0.0
        %5079 = vmatprep.subr.mxu0 0.0
        %5080 = vmatpush1.msra.mxu0 0.0
        %5081 = vmatprep.subr.mxu0 0.0
        %5082 = vmatpush1.msra.mxu0 0.0
        %5083 = vmatprep.subr.mxu0 0.0
        %5084 = vmatpush1.msra.mxu0 0.0
        %5085 = vmatprep.subr.mxu0 0.0
        %5086 = vmatpush1.msra.mxu0 0.0
        %5087 = vmatprep.subr.mxu0 0.0
        %5088 = vmatpush1.msra.mxu0 0.0
        %5089 = vmatprep.subr.mxu0 0.0
        %5090 = vmatpush1.msra.mxu0 0.0
        %5091 = vmatprep.subr.mxu0 0.0
        %5092 = vmatpush1.msra.mxu0 0.0
        %5093 = vmatprep.subr.mxu0 0.0
        %5094 = vmatpush1.msra.mxu0 0.0
        %5095 = vmatprep.subr.mxu0 0.0
        %5096 = vmatpush1.msra.mxu0 0.0
        %5097 = vmatprep.subr.mxu0 0.0
        %5098 = vmatpush1.msra.mxu0 0.0
        %5099 = vmatprep.subr.mxu0 0.0
        %5100 = vmatpush1.msra.mxu0 0.0
        %5101 = vmatprep.subr.mxu0 0.0
        %5102 = vmatpush1.msra.mxu0 0.0
        %5103 = vmatprep.subr.mxu0 0.0
        %5104 = vmatpush1.msra.mxu0 0.0
        %5105 = vmatprep.subr.mxu0 0.0
        %5106 = vmatpush1.msra.mxu0 0.0
        %5107 = vmatprep.subr.mxu0 0.0
        %5108 = vmatpush1.msra.mxu0 0.0
        %5109 = vmatprep.subr.mxu0 0.0
        %5110 = vmatpush1.msra.mxu0 0.0
        %5111 = vmatprep.subr.mxu0 0.0
        %5112 = vmatpush1.msra.mxu0 0.0
        %5113 = vmatprep.mubr.f32.mxu0 0.0
        %5114 = vmatmul.mubr.f32.gmra.mrb[0].mxu0 %v4832
        %v5115 = vpop.f32.mrb[0].mxu0
        %v5116 = vadd.f32 0.0, %v5115
        %v5117 = vpop.f32.mrb[0].mxu0
        %5118 = vmatprep.mubr.f32.mxu0 0.0
        %5119 = vmatmul.mubr.f32.gmra.mrb[0].mxu0 %v4835
        %v5120 = vpop.f32.mrb[0].mxu0
        %v5121 = vadd.f32 0.0, %v5120
        %v5122 = vpop.f32.mrb[0].mxu0
        %5123 = vmatprep.mubr.f32.mxu0 0.0
        %5124 = vmatmul.mubr.f32.gmra.mrb[0].mxu0 %v4838
        %v5125 = vpop.f32.mrb[0].mxu0
        %v5126 = vadd.f32 0.0, %v5125
        %v5127 = vpop.f32.mrb[0].mxu0
        %5128 = vmatprep.mubr.f32.mxu0 0.0
        %5129 = vmatmul.mubr.f32.gmra.mrb[0].mxu0 %v4841
        %v5130 = vpop.f32.mrb[0].mxu0
        %v5131 = vadd.f32 0.0, %v5130
        %v5132 = vpop.f32.mrb[0].mxu0
        %5133 = vmatprep.mubr.f32.mxu0 0.0
        %5134 = vmatmul.mubr.f32.gmra.mrb[0].mxu0 %v4844
        %v5135 = vpop.f32.mrb[0].mxu0
        %v5136 = vadd.f32 0.0, %v5135
        %v5137 = vpop.f32.mrb[0].mxu0
        %5138 = vmatprep.mubr.f32.mxu0 0.0
        %5139 = vmatmul.mubr.f32.gmra.mrb[0].mxu0 %v4847
        %v5140 = vpop.f32.mrb[0].mxu0
        %v5141 = vadd.f32 0.0, %v5140
        %v5142 = vpop.f32.mrb[0].mxu0
        %5143 = vmatprep.mubr.f32.mxu0 0.0
        %5144 = vmatmul.mubr.f32.gmra.mrb[0].mxu0 %v4850
        %v5145 = vpop.f32.mrb[0].mxu0
        %v5146 = vadd.f32 0.0, %v5145
        %v5147 = vpop.f32.mrb[0].mxu0
        %5148 = vmatprep.mubr.f32.mxu0 0.0
        %5149 = vmatmul.mubr.f32.gmra.mrb[0].mxu0 %v4853
        %v5150 = vpop.f32.mrb[0].mxu0
        %v5151 = vadd.f32 0.0, %v5150
        %v5152 = vpop.f32.mrb[0].mxu0
        %5153 = vmatprep.mubr.f32.mxu0 0.0
        %5154 = vmatmul.mubr.f32.gmra.mrb[0].mxu0 %v4856
        %v5155 = vpop.f32.mrb[0].mxu0
        %v5156 = vadd.f32 0.0, %v5155
        %v5157 = vpop.f32.mrb[0].mxu0
        %5158 = vmatprep.mubr.f32.mxu0 0.0
        %5159 = vmatmul.mubr.f32.gmra.mrb[0].mxu0 %v4859
        %v5160 = vpop.f32.mrb[0].mxu0
        %v5161 = vadd.f32 0.0, %v5160
        %v5162 = vpop.f32.mrb[0].mxu0
        %5163 = vmatprep.mubr.f32.mxu0 0.0
        %5164 = vmatmul.mubr.f32.gmra.mrb[0].mxu0 %v4862
        %v5165 = vpop.f32.mrb[0].mxu0
        %v5166 = vadd.f32 0.0, %v5165
        %v5167 = vpop.f32.mrb[0].mxu0
        %5168 = vmatprep.mubr.f32.mxu0 0.0
        %5169 = vmatmul.mubr.f32.gmra.mrb[0].mxu0 %v4865
        %v5170 = vpop.f32.mrb[0].mxu0
        %v5171 = vadd.f32 0.0, %v5170
        %v5172 = vpop.f32.mrb[0].mxu0
        %5173 = vmatprep.mubr.f32.mxu0 0.0
        %5174 = vmatmul.mubr.f32.gmra.mrb[0].mxu0 %v4868
        %v5175 = vpop.f32.mrb[0].mxu0
        %v5176 = vadd.f32 0.0, %v5175
        %v5177 = vpop.f32.mrb[0].mxu0
        %5178 = vmatprep.mubr.f32.mxu0 0.0
        %5179 = vmatmul.mubr.f32.gmra.mrb[0].mxu0 %v4871
        %v5180 = vpop.f32.mrb[0].mxu0
        %v5181 = vadd.f32 0.0, %v5180
        %v5182 = vpop.f32.mrb[0].mxu0
        %5183 = vmatprep.mubr.f32.mxu0 0.0
        %5184 = vmatmul.mubr.f32.gmra.mrb[0].mxu0 %v4874
        %v5185 = vpop.f32.mrb[0].mxu0
        %v5186 = vadd.f32 0.0, %v5185
        %v5187 = vpop.f32.mrb[0].mxu0
        %5188 = vmatprep.mubr.f32.mxu0 0.0
        %5189 = vmatmul.mubr.f32.gmra.mrb[0].mxu0 %v4877
        %v5190 = vpop.f32.mrb[0].mxu0
        %v5191 = vadd.f32 0.0, %v5190
        %v5192 = vpop.f32.mrb[0].mxu0
        %5193 = vdwg.mxu0
        %v5194 = vld [vmem:[%s2776] sm:$0xff]
        %v5195 = vld [vmem:[%s2776 + $0x8] sm:$0xff]
        %v5196 = vld [vmem:[%s2776 + $0x10] sm:$0xff]
        %v5197 = vld [vmem:[%s2776 + $0x18] sm:$0xff]
        %v5198 = vld [vmem:[%s2776 + $0x20] sm:$0xff]
        %v5199 = vld [vmem:[%s2776 + $0x28] sm:$0xff]
        %v5200 = vld [vmem:[%s2776 + $0x30] sm:$0xff]
        %v5201 = vld [vmem:[%s2776 + $0x38] sm:$0xff]
        %v5202 = vld [vmem:[%s2776 + $0x40] sm:$0xff]
        %v5203 = vld [vmem:[%s2776 + $0x48] sm:$0xff]
        %v5204 = vld [vmem:[%s2776 + $0x50] sm:$0xff]
        %v5205 = vld [vmem:[%s2776 + $0x58] sm:$0xff]
        %v5206 = vld [vmem:[%s2776 + $0x60] sm:$0xff]
        %v5207 = vld [vmem:[%s2776 + $0x68] sm:$0xff]
        %v5208 = vld [vmem:[%s2776 + $0x70] sm:$0xff]
        %v5209 = vld [vmem:[%s2776 + $0x78] sm:$0xff]
        %5210 = vmatprep.subr.mxu0 0.0
        %5211 = vmatpush1.msra.mxu0 %v5116
        %5212 = vmatprep.subr.mxu0 0.0
        %5213 = vmatpush1.msra.mxu0 %v5121
        %5214 = vmatprep.subr.mxu0 0.0
        %5215 = vmatpush1.msra.mxu0 %v5126
        %5216 = vmatprep.subr.mxu0 0.0
        %5217 = vmatpush1.msra.mxu0 %v5131
        %5218 = vmatprep.subr.mxu0 0.0
        %5219 = vmatpush1.msra.mxu0 %v5136
        %5220 = vmatprep.subr.mxu0 0.0
        %5221 = vmatpush1.msra.mxu0 %v5141
        %5222 = vmatprep.subr.mxu0 0.0
        %5223 = vmatpush1.msra.mxu0 %v5146
        %5224 = vmatprep.subr.mxu0 0.0
        %5225 = vmatpush1.msra.mxu0 %v5151
        %5226 = vmatprep.subr.mxu0 0.0
        %5227 = vmatpush1.msra.mxu0 %v5156
        %5228 = vmatprep.subr.mxu0 0.0
        %5229 = vmatpush1.msra.mxu0 %v5161
        %5230 = vmatprep.subr.mxu0 0.0
        %5231 = vmatpush1.msra.mxu0 %v5166
        %5232 = vmatprep.subr.mxu0 0.0
        %5233 = vmatpush1.msra.mxu0 %v5171
        %5234 = vmatprep.subr.mxu0 0.0
        %5235 = vmatpush1.msra.mxu0 %v5176
        %5236 = vmatprep.subr.mxu0 0.0
        %5237 = vmatpush1.msra.mxu0 %v5181
        %5238 = vmatprep.subr.mxu0 0.0
        %5239 = vmatpush1.msra.mxu0 %v5186
        %5240 = vmatprep.subr.mxu0 0.0
        %5241 = vmatpush1.msra.mxu0 %v5191
        %5242 = vmatprep.subr.mxu0 0.0
        %5243 = vmatpush1.msra.mxu0 0.0
        %5244 = vmatprep.subr.mxu0 0.0
        %5245 = vmatpush1.msra.mxu0 0.0
        %5246 = vmatprep.subr.mxu0 0.0
        %5247 = vmatpush1.msra.mxu0 0.0
        %5248 = vmatprep.subr.mxu0 0.0
        %5249 = vmatpush1.msra.mxu0 0.0
        %5250 = vmatprep.subr.mxu0 0.0
        %5251 = vmatpush1.msra.mxu0 0.0
        %5252 = vmatprep.subr.mxu0 0.0
        %5253 = vmatpush1.msra.mxu0 0.0
        %5254 = vmatprep.subr.mxu0 0.0
        %5255 = vmatpush1.msra.mxu0 0.0
        %5256 = vmatprep.subr.mxu0 0.0
        %5257 = vmatpush1.msra.mxu0 0.0
        %5258 = vmatprep.subr.mxu0 0.0
        %5259 = vmatpush1.msra.mxu0 0.0
        %5260 = vmatprep.subr.mxu0 0.0
        %5261 = vmatpush1.msra.mxu0 0.0
        %5262 = vmatprep.subr.mxu0 0.0
        %5263 = vmatpush1.msra.mxu0 0.0
        %5264 = vmatprep.subr.mxu0 0.0
        %5265 = vmatpush1.msra.mxu0 0.0
        %5266 = vmatprep.subr.mxu0 0.0
        %5267 = vmatpush1.msra.mxu0 0.0
        %5268 = vmatprep.subr.mxu0 0.0
        %5269 = vmatpush1.msra.mxu0 0.0
        %5270 = vmatprep.subr.mxu0 0.0
        %5271 = vmatpush1.msra.mxu0 0.0
        %5272 = vmatprep.subr.mxu0 0.0
        %5273 = vmatpush1.msra.mxu0 0.0
        %5274 = vmatprep.mubr.f32.mxu0 0.0
        %5275 = vmatmul.mubr.f32.gmra.mrb[0].mxu0 %v5194
        %v5276 = vpop.f32.mrb[0].mxu0
        %v5277 = vadd.f32 0.0, %v5276
        %v5278 = vpop.f32.mrb[0].mxu0
        %5279 = vmatprep.mubr.f32.mxu0 0.0
        %5280 = vmatmul.mubr.f32.gmra.mrb[0].mxu0 %v5195
        %v5281 = vpop.f32.mrb[0].mxu0
        %v5282 = vadd.f32 0.0, %v5281
        %v5283 = vpop.f32.mrb[0].mxu0
        %5284 = vmatprep.mubr.f32.mxu0 0.0
        %5285 = vmatmul.mubr.f32.gmra.mrb[0].mxu0 %v5196
        %v5286 = vpop.f32.mrb[0].mxu0
        %v5287 = vadd.f32 0.0, %v5286
        %v5288 = vpop.f32.mrb[0].mxu0
        %5289 = vmatprep.mubr.f32.mxu0 0.0
        %5290 = vmatmul.mubr.f32.gmra.mrb[0].mxu0 %v5197
        %v5291 = vpop.f32.mrb[0].mxu0
        %v5292 = vadd.f32 0.0, %v5291
        %v5293 = vpop.f32.mrb[0].mxu0
        %5294 = vmatprep.mubr.f32.mxu0 0.0
        %5295 = vmatmul.mubr.f32.gmra.mrb[0].mxu0 %v5198
        %v5296 = vpop.f32.mrb[0].mxu0
        %v5297 = vadd.f32 0.0, %v5296
        %v5298 = vpop.f32.mrb[0].mxu0
        %5299 = vmatprep.mubr.f32.mxu0 0.0
        %5300 = vmatmul.mubr.f32.gmra.mrb[0].mxu0 %v5199
        %v5301 = vpop.f32.mrb[0].mxu0
        %v5302 = vadd.f32 0.0, %v5301
        %v5303 = vpop.f32.mrb[0].mxu0
        %5304 = vmatprep.mubr.f32.mxu0 0.0
        %5305 = vmatmul.mubr.f32.gmra.mrb[0].mxu0 %v5200
        %v5306 = vpop.f32.mrb[0].mxu0
        %v5307 = vadd.f32 0.0, %v5306
        %v5308 = vpop.f32.mrb[0].mxu0
        %5309 = vmatprep.mubr.f32.mxu0 0.0
        %5310 = vmatmul.mubr.f32.gmra.mrb[0].mxu0 %v5201
        %v5311 = vpop.f32.mrb[0].mxu0
        %v5312 = vadd.f32 0.0, %v5311
        %v5313 = vpop.f32.mrb[0].mxu0
        %5314 = vmatprep.mubr.f32.mxu0 0.0
        %5315 = vmatmul.mubr.f32.gmra.mrb[0].mxu0 %v5202
        %v5316 = vpop.f32.mrb[0].mxu0
        %v5317 = vadd.f32 0.0, %v5316
        %v5318 = vpop.f32.mrb[0].mxu0
        %5319 = vmatprep.mubr.f32.mxu0 0.0
        %5320 = vmatmul.mubr.f32.gmra.mrb[0].mxu0 %v5203
        %v5321 = vpop.f32.mrb[0].mxu0
        %v5322 = vadd.f32 0.0, %v5321
        %v5323 = vpop.f32.mrb[0].mxu0
        %5324 = vmatprep.mubr.f32.mxu0 0.0
        %5325 = vmatmul.mubr.f32.gmra.mrb[0].mxu0 %v5204
        %v5326 = vpop.f32.mrb[0].mxu0
        %v5327 = vadd.f32 0.0, %v5326
        %v5328 = vpop.f32.mrb[0].mxu0
        %5329 = vmatprep.mubr.f32.mxu0 0.0
        %5330 = vmatmul.mubr.f32.gmra.mrb[0].mxu0 %v5205
        %v5331 = vpop.f32.mrb[0].mxu0
        %v5332 = vadd.f32 0.0, %v5331
        %v5333 = vpop.f32.mrb[0].mxu0
        %5334 = vmatprep.mubr.f32.mxu0 0.0
        %5335 = vmatmul.mubr.f32.gmra.mrb[0].mxu0 %v5206
        %v5336 = vpop.f32.mrb[0].mxu0
        %v5337 = vadd.f32 0.0, %v5336
        %v5338 = vpop.f32.mrb[0].mxu0
        %5339 = vmatprep.mubr.f32.mxu0 0.0
        %5340 = vmatmul.mubr.f32.gmra.mrb[0].mxu0 %v5207
        %v5341 = vpop.f32.mrb[0].mxu0
        %v5342 = vadd.f32 0.0, %v5341
        %v5343 = vpop.f32.mrb[0].mxu0
        %5344 = vmatprep.mubr.f32.mxu0 0.0
        %5345 = vmatmul.mubr.f32.gmra.mrb[0].mxu0 %v5208
        %v5346 = vpop.f32.mrb[0].mxu0
        %v5347 = vadd.f32 0.0, %v5346
        %v5348 = vpop.f32.mrb[0].mxu0
        %5349 = vmatprep.mubr.f32.mxu0 0.0
        %5350 = vmatmul.mubr.f32.gmra.mrb[0].mxu0 %v5209
        %v5351 = vpop.f32.mrb[0].mxu0
        %v5352 = vadd.f32 0.0, %v5351
        %v5353 = vpop.f32.mrb[0].mxu0
        %5354 = vdwg.mxu0
        %5355 = vmatprep.subr.mxu0 0.0
        %5356 = vmatpush1.msra.mxu0 %v4946
        %5357 = vmatprep.subr.mxu0 0.0
        %5358 = vmatpush1.msra.mxu0 %v4951
        %5359 = vmatprep.subr.mxu0 0.0
        %5360 = vmatpush1.msra.mxu0 %v4956
        %5361 = vmatprep.subr.mxu0 0.0
        %5362 = vmatpush1.msra.mxu0 %v4961
        %5363 = vmatprep.subr.mxu0 0.0
        %5364 = vmatpush1.msra.mxu0 %v4966
        %5365 = vmatprep.subr.mxu0 0.0
        %5366 = vmatpush1.msra.mxu0 %v4971
        %5367 = vmatprep.subr.mxu0 0.0
        %5368 = vmatpush1.msra.mxu0 %v4976
        %5369 = vmatprep.subr.mxu0 0.0
        %5370 = vmatpush1.msra.mxu0 %v4981
        %5371 = vmatprep.subr.mxu0 0.0
        %5372 = vmatpush1.msra.mxu0 %v4986
        %5373 = vmatprep.subr.mxu0 0.0
        %5374 = vmatpush1.msra.mxu0 %v4991
        %5375 = vmatprep.subr.mxu0 0.0
        %5376 = vmatpush1.msra.mxu0 %v4996
        %5377 = vmatprep.subr.mxu0 0.0
        %5378 = vmatpush1.msra.mxu0 %v5001
        %5379 = vmatprep.subr.mxu0 0.0
        %5380 = vmatpush1.msra.mxu0 %v5006
        %5381 = vmatprep.subr.mxu0 0.0
        %5382 = vmatpush1.msra.mxu0 %v5011
        %5383 = vmatprep.subr.mxu0 0.0
        %5384 = vmatpush1.msra.mxu0 %v5016
        %5385 = vmatprep.subr.mxu0 0.0
        %5386 = vmatpush1.msra.mxu0 %v5021
        %5387 = vmatprep.subr.mxu0 0.0
        %5388 = vmatpush1.msra.mxu0 0.0
        %5389 = vmatprep.subr.mxu0 0.0
        %5390 = vmatpush1.msra.mxu0 0.0
        %5391 = vmatprep.subr.mxu0 0.0
        %5392 = vmatpush1.msra.mxu0 0.0
        %5393 = vmatprep.subr.mxu0 0.0
        %5394 = vmatpush1.msra.mxu0 0.0
        %5395 = vmatprep.subr.mxu0 0.0
        %5396 = vmatpush1.msra.mxu0 0.0
        %5397 = vmatprep.subr.mxu0 0.0
        %5398 = vmatpush1.msra.mxu0 0.0
        %5399 = vmatprep.subr.mxu0 0.0
        %5400 = vmatpush1.msra.mxu0 0.0
        %5401 = vmatprep.subr.mxu0 0.0
        %5402 = vmatpush1.msra.mxu0 0.0
        %5403 = vmatprep.subr.mxu0 0.0
        %5404 = vmatpush1.msra.mxu0 0.0
        %5405 = vmatprep.subr.mxu0 0.0
        %5406 = vmatpush1.msra.mxu0 0.0
        %5407 = vmatprep.subr.mxu0 0.0
        %5408 = vmatpush1.msra.mxu0 0.0
        %5409 = vmatprep.subr.mxu0 0.0
        %5410 = vmatpush1.msra.mxu0 0.0
        %5411 = vmatprep.subr.mxu0 0.0
        %5412 = vmatpush1.msra.mxu0 0.0
        %5413 = vmatprep.subr.mxu0 0.0
        %5414 = vmatpush1.msra.mxu0 0.0
        %5415 = vmatprep.subr.mxu0 0.0
        %5416 = vmatpush1.msra.mxu0 0.0
        %5417 = vmatprep.subr.mxu0 0.0
        %5418 = vmatpush1.msra.mxu0 0.0
        %5419 = vmatprep.mubr.f32.mxu0 0.0
        %5420 = vmatmul.mubr.f32.gmra.mrb[0].mxu0 %v5024
        %v5421 = vpop.f32.mrb[0].mxu0
        %v5422 = vadd.f32 %v5277, %v5421
        %v5423 = vpop.f32.mrb[0].mxu0
        %5424 = vmatprep.mubr.f32.mxu0 0.0
        %5425 = vmatmul.mubr.f32.gmra.mrb[0].mxu0 %v5025
        %v5426 = vpop.f32.mrb[0].mxu0
        %v5427 = vadd.f32 %v5282, %v5426
        %v5428 = vpop.f32.mrb[0].mxu0
        %5429 = vmatprep.mubr.f32.mxu0 0.0
        %5430 = vmatmul.mubr.f32.gmra.mrb[0].mxu0 %v5026
        %v5431 = vpop.f32.mrb[0].mxu0
        %v5432 = vadd.f32 %v5287, %v5431
        %v5433 = vpop.f32.mrb[0].mxu0
        %5434 = vmatprep.mubr.f32.mxu0 0.0
        %5435 = vmatmul.mubr.f32.gmra.mrb[0].mxu0 %v5027
        %v5436 = vpop.f32.mrb[0].mxu0
        %v5437 = vadd.f32 %v5292, %v5436
        %v5438 = vpop.f32.mrb[0].mxu0
        %5439 = vmatprep.mubr.f32.mxu0 0.0
        %5440 = vmatmul.mubr.f32.gmra.mrb[0].mxu0 %v5028
        %v5441 = vpop.f32.mrb[0].mxu0
        %v5442 = vadd.f32 %v5297, %v5441
        %v5443 = vpop.f32.mrb[0].mxu0
        %5444 = vmatprep.mubr.f32.mxu0 0.0
        %5445 = vmatmul.mubr.f32.gmra.mrb[0].mxu0 %v5029
        %v5446 = vpop.f32.mrb[0].mxu0
        %v5447 = vadd.f32 %v5302, %v5446
        %v5448 = vpop.f32.mrb[0].mxu0
        %5449 = vmatprep.mubr.f32.mxu0 0.0
        %5450 = vmatmul.mubr.f32.gmra.mrb[0].mxu0 %v5030
        %v5451 = vpop.f32.mrb[0].mxu0
        %v5452 = vadd.f32 %v5307, %v5451
        %v5453 = vpop.f32.mrb[0].mxu0
        %5454 = vmatprep.mubr.f32.mxu0 0.0
        %5455 = vmatmul.mubr.f32.gmra.mrb[0].mxu0 %v5031
        %v5456 = vpop.f32.mrb[0].mxu0
        %v5457 = vadd.f32 %v5312, %v5456
        %v5458 = vpop.f32.mrb[0].mxu0
        %5459 = vmatprep.mubr.f32.mxu0 0.0
        %5460 = vmatmul.mubr.f32.gmra.mrb[0].mxu0 %v5032
        %v5461 = vpop.f32.mrb[0].mxu0
        %v5462 = vadd.f32 %v5317, %v5461
        %v5463 = vpop.f32.mrb[0].mxu0
        %5464 = vmatprep.mubr.f32.mxu0 0.0
        %5465 = vmatmul.mubr.f32.gmra.mrb[0].mxu0 %v5033
        %v5466 = vpop.f32.mrb[0].mxu0
        %v5467 = vadd.f32 %v5322, %v5466
        %v5468 = vpop.f32.mrb[0].mxu0
        %5469 = vmatprep.mubr.f32.mxu0 0.0
        %5470 = vmatmul.mubr.f32.gmra.mrb[0].mxu0 %v5034
        %v5471 = vpop.f32.mrb[0].mxu0
        %v5472 = vadd.f32 %v5327, %v5471
        %v5473 = vpop.f32.mrb[0].mxu0
        %5474 = vmatprep.mubr.f32.mxu0 0.0
        %5475 = vmatmul.mubr.f32.gmra.mrb[0].mxu0 %v5035
        %v5476 = vpop.f32.mrb[0].mxu0
        %v5477 = vadd.f32 %v5332, %v5476
        %v5478 = vpop.f32.mrb[0].mxu0
        %5479 = vmatprep.mubr.f32.mxu0 0.0
        %5480 = vmatmul.mubr.f32.gmra.mrb[0].mxu0 %v5036
        %v5481 = vpop.f32.mrb[0].mxu0
        %v5482 = vadd.f32 %v5337, %v5481
        %v5483 = vpop.f32.mrb[0].mxu0
        %5484 = vmatprep.mubr.f32.mxu0 0.0
        %5485 = vmatmul.mubr.f32.gmra.mrb[0].mxu0 %v5037
        %v5486 = vpop.f32.mrb[0].mxu0
        %v5487 = vadd.f32 %v5342, %v5486
        %v5488 = vpop.f32.mrb[0].mxu0
        %5489 = vmatprep.mubr.f32.mxu0 0.0
        %5490 = vmatmul.mubr.f32.gmra.mrb[0].mxu0 %v5038
        %v5491 = vpop.f32.mrb[0].mxu0
        %v5492 = vadd.f32 %v5347, %v5491
        %v5493 = vpop.f32.mrb[0].mxu0
        %5494 = vmatprep.mubr.f32.mxu0 0.0
        %5495 = vmatmul.mubr.f32.gmra.mrb[0].mxu0 %v5039
        %v5496 = vpop.f32.mrb[0].mxu0
        %v5497 = vadd.f32 %v5352, %v5496
        %v5498 = vpop.f32.mrb[0].mxu0
        %5499 = vdwg.mxu0
        %s5500 = scalar_lea.vmem %s15, 128
        %v5501 = vld [vmem:[%s5500] sm:$0xff]
        %v5502 = vld [vmem:[%s5500 + $0x8] sm:$0xff]
        %v5503 = vld [vmem:[%s5500 + $0x10] sm:$0xff]
        %v5504 = vld [vmem:[%s5500 + $0x18] sm:$0xff]
        %v5505 = vld [vmem:[%s5500 + $0x20] sm:$0xff]
        %v5506 = vld [vmem:[%s5500 + $0x28] sm:$0xff]
        %v5507 = vld [vmem:[%s5500 + $0x30] sm:$0xff]
        %v5508 = vld [vmem:[%s5500 + $0x38] sm:$0xff]
        %5509 = vmatprep.subr.mxu0 0.0
        %5510 = vmatpush1.msra.mxu0 %v5501
        %5511 = vmatprep.subr.mxu0 0.0
        %5512 = vmatpush1.msra.mxu0 %v5502
        %5513 = vmatprep.subr.mxu0 0.0
        %5514 = vmatpush1.msra.mxu0 %v5503
        %5515 = vmatprep.subr.mxu0 0.0
        %5516 = vmatpush1.msra.mxu0 %v5504
        %5517 = vmatprep.subr.mxu0 0.0
        %5518 = vmatpush1.msra.mxu0 %v5505
        %5519 = vmatprep.subr.mxu0 0.0
        %5520 = vmatpush1.msra.mxu0 %v5506
        %5521 = vmatprep.subr.mxu0 0.0
        %5522 = vmatpush1.msra.mxu0 %v5507
        %5523 = vmatprep.subr.mxu0 0.0
        %5524 = vmatpush1.msra.mxu0 %v5508
        %5525 = vmatprep.subr.mxu0 0.0
        %5526 = vmatpush1.msra.mxu0 0.0
        %5527 = vmatprep.subr.mxu0 0.0
        %5528 = vmatpush1.msra.mxu0 0.0
        %5529 = vmatprep.subr.mxu0 0.0
        %5530 = vmatpush1.msra.mxu0 0.0
        %5531 = vmatprep.subr.mxu0 0.0
        %5532 = vmatpush1.msra.mxu0 0.0
        %5533 = vmatprep.subr.mxu0 0.0
        %5534 = vmatpush1.msra.mxu0 0.0
        %5535 = vmatprep.subr.mxu0 0.0
        %5536 = vmatpush1.msra.mxu0 0.0
        %5537 = vmatprep.subr.mxu0 0.0
        %5538 = vmatpush1.msra.mxu0 0.0
        %5539 = vmatprep.subr.mxu0 0.0
        %5540 = vmatpush1.msra.mxu0 0.0
        %5541 = vmatprep.subr.mxu0 0.0
        %5542 = vmatpush1.msra.mxu0 0.0
        %5543 = vmatprep.subr.mxu0 0.0
        %5544 = vmatpush1.msra.mxu0 0.0
        %5545 = vmatprep.subr.mxu0 0.0
        %5546 = vmatpush1.msra.mxu0 0.0
        %5547 = vmatprep.subr.mxu0 0.0
        %5548 = vmatpush1.msra.mxu0 0.0
        %5549 = vmatprep.subr.mxu0 0.0
        %5550 = vmatpush1.msra.mxu0 0.0
        %5551 = vmatprep.subr.mxu0 0.0
        %5552 = vmatpush1.msra.mxu0 0.0
        %5553 = vmatprep.subr.mxu0 0.0
        %5554 = vmatpush1.msra.mxu0 0.0
        %5555 = vmatprep.subr.mxu0 0.0
        %5556 = vmatpush1.msra.mxu0 0.0
        %5557 = vmatprep.subr.mxu0 0.0
        %5558 = vmatpush1.msra.mxu0 0.0
        %5559 = vmatprep.subr.mxu0 0.0
        %5560 = vmatpush1.msra.mxu0 0.0
        %5561 = vmatprep.subr.mxu0 0.0
        %5562 = vmatpush1.msra.mxu0 0.0
        %5563 = vmatprep.subr.mxu0 0.0
        %5564 = vmatpush1.msra.mxu0 0.0
        %5565 = vmatprep.subr.mxu0 0.0
        %5566 = vmatpush1.msra.mxu0 0.0
        %5567 = vmatprep.subr.mxu0 0.0
        %5568 = vmatpush1.msra.mxu0 0.0
        %5569 = vmatprep.subr.mxu0 0.0
        %5570 = vmatpush1.msra.mxu0 0.0
        %5571 = vmatprep.subr.mxu0 0.0
        %5572 = vmatpush1.msra.mxu0 0.0
        %5573 = vmatprep.mubr.f32.mxu0 0.0
        %5574 = vmatmul.mubr.f32.gmra.mrb[0].mxu0 %v4832
        %v5575 = vpop.f32.mrb[0].mxu0
        %v5576 = vadd.f32 0.0, %v5575
        %v5577 = vpop.f32.mrb[0].mxu0
        %5578 = vmatprep.mubr.f32.mxu0 0.0
        %5579 = vmatmul.mubr.f32.gmra.mrb[0].mxu0 %v4835
        %v5580 = vpop.f32.mrb[0].mxu0
        %v5581 = vadd.f32 0.0, %v5580
        %v5582 = vpop.f32.mrb[0].mxu0
        %5583 = vmatprep.mubr.f32.mxu0 0.0
        %5584 = vmatmul.mubr.f32.gmra.mrb[0].mxu0 %v4838
        %v5585 = vpop.f32.mrb[0].mxu0
        %v5586 = vadd.f32 0.0, %v5585
        %v5587 = vpop.f32.mrb[0].mxu0
        %5588 = vmatprep.mubr.f32.mxu0 0.0
        %5589 = vmatmul.mubr.f32.gmra.mrb[0].mxu0 %v4841
        %v5590 = vpop.f32.mrb[0].mxu0
        %v5591 = vadd.f32 0.0, %v5590
        %v5592 = vpop.f32.mrb[0].mxu0
        %5593 = vmatprep.mubr.f32.mxu0 0.0
        %5594 = vmatmul.mubr.f32.gmra.mrb[0].mxu0 %v4844
        %v5595 = vpop.f32.mrb[0].mxu0
        %v5596 = vadd.f32 0.0, %v5595
        %v5597 = vpop.f32.mrb[0].mxu0
        %5598 = vmatprep.mubr.f32.mxu0 0.0
        %5599 = vmatmul.mubr.f32.gmra.mrb[0].mxu0 %v4847
        %v5600 = vpop.f32.mrb[0].mxu0
        %v5601 = vadd.f32 0.0, %v5600
        %v5602 = vpop.f32.mrb[0].mxu0
        %5603 = vmatprep.mubr.f32.mxu0 0.0
        %5604 = vmatmul.mubr.f32.gmra.mrb[0].mxu0 %v4850
        %v5605 = vpop.f32.mrb[0].mxu0
        %v5606 = vadd.f32 0.0, %v5605
        %v5607 = vpop.f32.mrb[0].mxu0
        %5608 = vmatprep.mubr.f32.mxu0 0.0
        %5609 = vmatmul.mubr.f32.gmra.mrb[0].mxu0 %v4853
        %v5610 = vpop.f32.mrb[0].mxu0
        %v5611 = vadd.f32 0.0, %v5610
        %v5612 = vpop.f32.mrb[0].mxu0
        %5613 = vmatprep.mubr.f32.mxu0 0.0
        %5614 = vmatmul.mubr.f32.gmra.mrb[0].mxu0 %v4856
        %v5615 = vpop.f32.mrb[0].mxu0
        %v5616 = vadd.f32 0.0, %v5615
        %v5617 = vpop.f32.mrb[0].mxu0
        %5618 = vmatprep.mubr.f32.mxu0 0.0
        %5619 = vmatmul.mubr.f32.gmra.mrb[0].mxu0 %v4859
        %v5620 = vpop.f32.mrb[0].mxu0
        %v5621 = vadd.f32 0.0, %v5620
        %v5622 = vpop.f32.mrb[0].mxu0
        %5623 = vmatprep.mubr.f32.mxu0 0.0
        %5624 = vmatmul.mubr.f32.gmra.mrb[0].mxu0 %v4862
        %v5625 = vpop.f32.mrb[0].mxu0
        %v5626 = vadd.f32 0.0, %v5625
        %v5627 = vpop.f32.mrb[0].mxu0
        %5628 = vmatprep.mubr.f32.mxu0 0.0
        %5629 = vmatmul.mubr.f32.gmra.mrb[0].mxu0 %v4865
        %v5630 = vpop.f32.mrb[0].mxu0
        %v5631 = vadd.f32 0.0, %v5630
        %v5632 = vpop.f32.mrb[0].mxu0
        %5633 = vmatprep.mubr.f32.mxu0 0.0
        %5634 = vmatmul.mubr.f32.gmra.mrb[0].mxu0 %v4868
        %v5635 = vpop.f32.mrb[0].mxu0
        %v5636 = vadd.f32 0.0, %v5635
        %v5637 = vpop.f32.mrb[0].mxu0
        %5638 = vmatprep.mubr.f32.mxu0 0.0
        %5639 = vmatmul.mubr.f32.gmra.mrb[0].mxu0 %v4871
        %v5640 = vpop.f32.mrb[0].mxu0
        %v5641 = vadd.f32 0.0, %v5640
        %v5642 = vpop.f32.mrb[0].mxu0
        %5643 = vmatprep.mubr.f32.mxu0 0.0
        %5644 = vmatmul.mubr.f32.gmra.mrb[0].mxu0 %v4874
        %v5645 = vpop.f32.mrb[0].mxu0
        %v5646 = vadd.f32 0.0, %v5645
        %v5647 = vpop.f32.mrb[0].mxu0
        %5648 = vmatprep.mubr.f32.mxu0 0.0
        %5649 = vmatmul.mubr.f32.gmra.mrb[0].mxu0 %v4877
        %v5650 = vpop.f32.mrb[0].mxu0
        %v5651 = vadd.f32 0.0, %v5650
        %v5652 = vpop.f32.mrb[0].mxu0
        %5653 = vdwg.mxu0
        %v5654 = vld [vmem:[%s3233] sm:$0xff]
        %v5655 = vld [vmem:[%s3233 + $0x8] sm:$0xff]
        %v5656 = vld [vmem:[%s3233 + $0x10] sm:$0xff]
        %v5657 = vld [vmem:[%s3233 + $0x18] sm:$0xff]
        %v5658 = vld [vmem:[%s3233 + $0x20] sm:$0xff]
        %v5659 = vld [vmem:[%s3233 + $0x28] sm:$0xff]
        %v5660 = vld [vmem:[%s3233 + $0x30] sm:$0xff]
        %v5661 = vld [vmem:[%s3233 + $0x38] sm:$0xff]
        %v5662 = vld [vmem:[%s3233 + $0x40] sm:$0xff]
        %v5663 = vld [vmem:[%s3233 + $0x48] sm:$0xff]
        %v5664 = vld [vmem:[%s3233 + $0x50] sm:$0xff]
        %v5665 = vld [vmem:[%s3233 + $0x58] sm:$0xff]
        %v5666 = vld [vmem:[%s3233 + $0x60] sm:$0xff]
        %v5667 = vld [vmem:[%s3233 + $0x68] sm:$0xff]
        %v5668 = vld [vmem:[%s3233 + $0x70] sm:$0xff]
        %v5669 = vld [vmem:[%s3233 + $0x78] sm:$0xff]
        %5670 = vmatprep.subr.mxu0 0.0
        %5671 = vmatpush1.msra.mxu0 %v5576
        %5672 = vmatprep.subr.mxu0 0.0
        %5673 = vmatpush1.msra.mxu0 %v5581
        %5674 = vmatprep.subr.mxu0 0.0
        %5675 = vmatpush1.msra.mxu0 %v5586
        %5676 = vmatprep.subr.mxu0 0.0
        %5677 = vmatpush1.msra.mxu0 %v5591
        %5678 = vmatprep.subr.mxu0 0.0
        %5679 = vmatpush1.msra.mxu0 %v5596
        %5680 = vmatprep.subr.mxu0 0.0
        %5681 = vmatpush1.msra.mxu0 %v5601
        %5682 = vmatprep.subr.mxu0 0.0
        %5683 = vmatpush1.msra.mxu0 %v5606
        %5684 = vmatprep.subr.mxu0 0.0
        %5685 = vmatpush1.msra.mxu0 %v5611
        %5686 = vmatprep.subr.mxu0 0.0
        %5687 = vmatpush1.msra.mxu0 %v5616
        %5688 = vmatprep.subr.mxu0 0.0
        %5689 = vmatpush1.msra.mxu0 %v5621
        %5690 = vmatprep.subr.mxu0 0.0
        %5691 = vmatpush1.msra.mxu0 %v5626
        %5692 = vmatprep.subr.mxu0 0.0
        %5693 = vmatpush1.msra.mxu0 %v5631
        %5694 = vmatprep.subr.mxu0 0.0
        %5695 = vmatpush1.msra.mxu0 %v5636
        %5696 = vmatprep.subr.mxu0 0.0
        %5697 = vmatpush1.msra.mxu0 %v5641
        %5698 = vmatprep.subr.mxu0 0.0
        %5699 = vmatpush1.msra.mxu0 %v5646
        %5700 = vmatprep.subr.mxu0 0.0
        %5701 = vmatpush1.msra.mxu0 %v5651
        %5702 = vmatprep.subr.mxu0 0.0
        %5703 = vmatpush1.msra.mxu0 0.0
        %5704 = vmatprep.subr.mxu0 0.0
        %5705 = vmatpush1.msra.mxu0 0.0
        %5706 = vmatprep.subr.mxu0 0.0
        %5707 = vmatpush1.msra.mxu0 0.0
        %5708 = vmatprep.subr.mxu0 0.0
        %5709 = vmatpush1.msra.mxu0 0.0
        %5710 = vmatprep.subr.mxu0 0.0
        %5711 = vmatpush1.msra.mxu0 0.0
        %5712 = vmatprep.subr.mxu0 0.0
        %5713 = vmatpush1.msra.mxu0 0.0
        %5714 = vmatprep.subr.mxu0 0.0
        %5715 = vmatpush1.msra.mxu0 0.0
        %5716 = vmatprep.subr.mxu0 0.0
        %5717 = vmatpush1.msra.mxu0 0.0
        %5718 = vmatprep.subr.mxu0 0.0
        %5719 = vmatpush1.msra.mxu0 0.0
        %5720 = vmatprep.subr.mxu0 0.0
        %5721 = vmatpush1.msra.mxu0 0.0
        %5722 = vmatprep.subr.mxu0 0.0
        %5723 = vmatpush1.msra.mxu0 0.0
        %5724 = vmatprep.subr.mxu0 0.0
        %5725 = vmatpush1.msra.mxu0 0.0
        %5726 = vmatprep.subr.mxu0 0.0
        %5727 = vmatpush1.msra.mxu0 0.0
        %5728 = vmatprep.subr.mxu0 0.0
        %5729 = vmatpush1.msra.mxu0 0.0
        %5730 = vmatprep.subr.mxu0 0.0
        %5731 = vmatpush1.msra.mxu0 0.0
        %5732 = vmatprep.subr.mxu0 0.0
        %5733 = vmatpush1.msra.mxu0 0.0
        %5734 = vmatprep.mubr.f32.mxu0 0.0
        %5735 = vmatmul.mubr.f32.gmra.mrb[0].mxu0 %v5654
        %v5736 = vpop.f32.mrb[0].mxu0
        %v5737 = vadd.f32 0.0, %v5736
        %v5738 = vpop.f32.mrb[0].mxu0
        %5739 = vmatprep.mubr.f32.mxu0 0.0
        %5740 = vmatmul.mubr.f32.gmra.mrb[0].mxu0 %v5655
        %v5741 = vpop.f32.mrb[0].mxu0
        %v5742 = vadd.f32 0.0, %v5741
        %v5743 = vpop.f32.mrb[0].mxu0
        %5744 = vmatprep.mubr.f32.mxu0 0.0
        %5745 = vmatmul.mubr.f32.gmra.mrb[0].mxu0 %v5656
        %v5746 = vpop.f32.mrb[0].mxu0
        %v5747 = vadd.f32 0.0, %v5746
        %v5748 = vpop.f32.mrb[0].mxu0
        %5749 = vmatprep.mubr.f32.mxu0 0.0
        %5750 = vmatmul.mubr.f32.gmra.mrb[0].mxu0 %v5657
        %v5751 = vpop.f32.mrb[0].mxu0
        %v5752 = vadd.f32 0.0, %v5751
        %v5753 = vpop.f32.mrb[0].mxu0
        %5754 = vmatprep.mubr.f32.mxu0 0.0
        %5755 = vmatmul.mubr.f32.gmra.mrb[0].mxu0 %v5658
        %v5756 = vpop.f32.mrb[0].mxu0
        %v5757 = vadd.f32 0.0, %v5756
        %v5758 = vpop.f32.mrb[0].mxu0
        %5759 = vmatprep.mubr.f32.mxu0 0.0
        %5760 = vmatmul.mubr.f32.gmra.mrb[0].mxu0 %v5659
        %v5761 = vpop.f32.mrb[0].mxu0
        %v5762 = vadd.f32 0.0, %v5761
        %v5763 = vpop.f32.mrb[0].mxu0
        %5764 = vmatprep.mubr.f32.mxu0 0.0
        %5765 = vmatmul.mubr.f32.gmra.mrb[0].mxu0 %v5660
        %v5766 = vpop.f32.mrb[0].mxu0
        %v5767 = vadd.f32 0.0, %v5766
        %v5768 = vpop.f32.mrb[0].mxu0
        %5769 = vmatprep.mubr.f32.mxu0 0.0
        %5770 = vmatmul.mubr.f32.gmra.mrb[0].mxu0 %v5661
        %v5771 = vpop.f32.mrb[0].mxu0
        %v5772 = vadd.f32 0.0, %v5771
        %v5773 = vpop.f32.mrb[0].mxu0
        %5774 = vmatprep.mubr.f32.mxu0 0.0
        %5775 = vmatmul.mubr.f32.gmra.mrb[0].mxu0 %v5662
        %v5776 = vpop.f32.mrb[0].mxu0
        %v5777 = vadd.f32 0.0, %v5776
        %v5778 = vpop.f32.mrb[0].mxu0
        %5779 = vmatprep.mubr.f32.mxu0 0.0
        %5780 = vmatmul.mubr.f32.gmra.mrb[0].mxu0 %v5663
        %v5781 = vpop.f32.mrb[0].mxu0
        %v5782 = vadd.f32 0.0, %v5781
        %v5783 = vpop.f32.mrb[0].mxu0
        %5784 = vmatprep.mubr.f32.mxu0 0.0
        %5785 = vmatmul.mubr.f32.gmra.mrb[0].mxu0 %v5664
        %v5786 = vpop.f32.mrb[0].mxu0
        %v5787 = vadd.f32 0.0, %v5786
        %v5788 = vpop.f32.mrb[0].mxu0
        %5789 = vmatprep.mubr.f32.mxu0 0.0
        %5790 = vmatmul.mubr.f32.gmra.mrb[0].mxu0 %v5665
        %v5791 = vpop.f32.mrb[0].mxu0
        %v5792 = vadd.f32 0.0, %v5791
        %v5793 = vpop.f32.mrb[0].mxu0
        %5794 = vmatprep.mubr.f32.mxu0 0.0
        %5795 = vmatmul.mubr.f32.gmra.mrb[0].mxu0 %v5666
        %v5796 = vpop.f32.mrb[0].mxu0
        %v5797 = vadd.f32 0.0, %v5796
        %v5798 = vpop.f32.mrb[0].mxu0
        %5799 = vmatprep.mubr.f32.mxu0 0.0
        %5800 = vmatmul.mubr.f32.gmra.mrb[0].mxu0 %v5667
        %v5801 = vpop.f32.mrb[0].mxu0
        %v5802 = vadd.f32 0.0, %v5801
        %v5803 = vpop.f32.mrb[0].mxu0
        %5804 = vmatprep.mubr.f32.mxu0 0.0
        %5805 = vmatmul.mubr.f32.gmra.mrb[0].mxu0 %v5668
        %v5806 = vpop.f32.mrb[0].mxu0
        %v5807 = vadd.f32 0.0, %v5806
        %v5808 = vpop.f32.mrb[0].mxu0
        %5809 = vmatprep.mubr.f32.mxu0 0.0
        %5810 = vmatmul.mubr.f32.gmra.mrb[0].mxu0 %v5669
        %v5811 = vpop.f32.mrb[0].mxu0
        %v5812 = vadd.f32 0.0, %v5811
        %v5813 = vpop.f32.mrb[0].mxu0
        %5814 = vdwg.mxu0
        %v5815 = vadd.f32 %v5422, %v5737
        %v5816 = vadd.f32 %v5427, %v5742
        %v5817 = vadd.f32 %v5432, %v5747
        %v5818 = vadd.f32 %v5437, %v5752
        %v5819 = vadd.f32 %v5442, %v5757
        %v5820 = vadd.f32 %v5447, %v5762
        %v5821 = vadd.f32 %v5452, %v5767
        %v5822 = vadd.f32 %v5457, %v5772
        %v5823 = vadd.f32 %v5462, %v5777
        %v5824 = vadd.f32 %v5467, %v5782
        %v5825 = vadd.f32 %v5472, %v5787
        %v5826 = vadd.f32 %v5477, %v5792
        %v5827 = vadd.f32 %v5482, %v5797
        %v5828 = vadd.f32 %v5487, %v5802
        %v5829 = vadd.f32 %v5492, %v5807
        %v5830 = vadd.f32 %v5497, %v5812
        %v5831 = vld [vmem:[%s16] sm:$0xff]
        %v5832 = vld [vmem:[%s16 + $0x8] sm:$0xff]
        %v5833 = vld [vmem:[%s16 + $0x10] sm:$0xff]
        %v5834 = vld [vmem:[%s16 + $0x18] sm:$0xff]
        %v5835 = vld [vmem:[%s16 + $0x20] sm:$0xff]
        %v5836 = vld [vmem:[%s16 + $0x28] sm:$0xff]
        %v5837 = vld [vmem:[%s16 + $0x30] sm:$0xff]
        %v5838 = vld [vmem:[%s16 + $0x38] sm:$0xff]
        %v5839 = vld [vmem:[%s16 + $0x40] sm:$0xff]
        %v5840 = vld [vmem:[%s16 + $0x48] sm:$0xff]
        %v5841 = vld [vmem:[%s16 + $0x50] sm:$0xff]
        %v5842 = vld [vmem:[%s16 + $0x58] sm:$0xff]
        %v5843 = vld [vmem:[%s16 + $0x60] sm:$0xff]
        %v5844 = vld [vmem:[%s16 + $0x68] sm:$0xff]
        %v5845 = vld [vmem:[%s16 + $0x70] sm:$0xff]
        %v5846 = vld [vmem:[%s16 + $0x78] sm:$0xff]
        %v5847 = vadd.f32 %v5815, %v5831
        %v5848 = vadd.f32 %v5816, %v5832
        %v5849 = vadd.f32 %v5817, %v5833
        %v5850 = vadd.f32 %v5818, %v5834
        %v5851 = vadd.f32 %v5819, %v5835
        %v5852 = vadd.f32 %v5820, %v5836
        %v5853 = vadd.f32 %v5821, %v5837
        %v5854 = vadd.f32 %v5822, %v5838
        %v5855 = vadd.f32 %v5823, %v5839
        %v5856 = vadd.f32 %v5824, %v5840
        %v5857 = vadd.f32 %v5825, %v5841
        %v5858 = vadd.f32 %v5826, %v5842
        %v5859 = vadd.f32 %v5827, %v5843
        %v5860 = vadd.f32 %v5828, %v5844
        %v5861 = vadd.f32 %v5829, %v5845
        %v5862 = vadd.f32 %v5830, %v5846
        %v5863 = vmax.f32 %v5847, 0.0
        %v5864 = vmax.f32 %v5848, 0.0
        %v5865 = vmax.f32 %v5849, 0.0
        %v5866 = vmax.f32 %v5850, 0.0
        %v5867 = vmax.f32 %v5851, 0.0
        %v5868 = vmax.f32 %v5852, 0.0
        %v5869 = vmax.f32 %v5853, 0.0
        %v5870 = vmax.f32 %v5854, 0.0
        %v5871 = vmax.f32 %v5855, 0.0
        %v5872 = vmax.f32 %v5856, 0.0
        %v5873 = vmax.f32 %v5857, 0.0
        %v5874 = vmax.f32 %v5858, 0.0
        %v5875 = vmax.f32 %v5859, 0.0
        %v5876 = vmax.f32 %v5860, 0.0
        %v5877 = vmax.f32 %v5861, 0.0
        %v5878 = vmax.f32 %v5862, 0.0
        %vm5879 = vcmask 64512
        %5880 = vst.msk [vmem:[%s1217] sm:$0xff] %vm5879, %v5863
        %5881 = vst.msk [vmem:[%s1217 + $0x8] sm:$0xff] %vm5879, %v5864
        %5882 = vst.msk [vmem:[%s1217 + $0x10] sm:$0xff] %vm5879, %v5865
        %5883 = vst.msk [vmem:[%s1217 + $0x18] sm:$0xff] %vm5879, %v5866
        %5884 = vst.msk [vmem:[%s1217 + $0x20] sm:$0xff] %vm5879, %v5867
        %5885 = vst.msk [vmem:[%s1217 + $0x28] sm:$0xff] %vm5879, %v5868
        %5886 = vst.msk [vmem:[%s1217 + $0x30] sm:$0xff] %vm5879, %v5869
        %5887 = vst.msk [vmem:[%s1217 + $0x38] sm:$0xff] %vm5879, %v5870
        %5888 = vst.msk [vmem:[%s1217 + $0x40] sm:$0xff] %vm5879, %v5871
        %5889 = vst.msk [vmem:[%s1217 + $0x48] sm:$0xff] %vm5879, %v5872
        %5890 = vst.msk [vmem:[%s1217 + $0x50] sm:$0xff] %vm5879, %v5873
        %5891 = vst.msk [vmem:[%s1217 + $0x58] sm:$0xff] %vm5879, %v5874
        %5892 = vst.msk [vmem:[%s1217 + $0x60] sm:$0xff] %vm5879, %v5875
        %5893 = vst.msk [vmem:[%s1217 + $0x68] sm:$0xff] %vm5879, %v5876
        %5894 = vst.msk [vmem:[%s1217 + $0x70] sm:$0xff] %vm5879, %v5877
        %5895 = vst.msk [vmem:[%s1217 + $0x78] sm:$0xff] %vm5879, %v5878
        %v5896 = vld [vmem:[%s1234] sm:$0xff]
        %v5897 = vld [vmem:[%s1234 + $0x8] sm:$0xff]
        %v5898 = vld [vmem:[%s1234 + $0x10] sm:$0xff]
        %v5899 = vld [vmem:[%s1234 + $0x18] sm:$0xff]
        %v5900 = vld [vmem:[%s1234 + $0x20] sm:$0xff]
        %v5901 = vld [vmem:[%s1234 + $0x28] sm:$0xff]
        %v5902 = vld [vmem:[%s1234 + $0x30] sm:$0xff]
        %v5903 = vld [vmem:[%s1234 + $0x38] sm:$0xff]
        %v5904 = vld [vmem:[%s1234 + $0x40] sm:$0xff]
        %v5905 = vld [vmem:[%s1234 + $0x48] sm:$0xff]
        %v5906 = vld [vmem:[%s1234 + $0x50] sm:$0xff]
        %v5907 = vld [vmem:[%s1234 + $0x58] sm:$0xff]
        %v5908 = vld [vmem:[%s1234 + $0x60] sm:$0xff]
        %v5909 = vld [vmem:[%s1234 + $0x68] sm:$0xff]
        %v5910 = vld [vmem:[%s1234 + $0x70] sm:$0xff]
        %v5911 = vld [vmem:[%s1234 + $0x78] sm:$0xff]
        %v5912 = vld [vmem:[%s17] sm:$0xff]
        %v5913 = vld [vmem:[%s1255] sm:$0xff]
        %v5914 = vld [vmem:[%s1255 + $0x8] sm:$0xff]
        %v5915 = vld [vmem:[%s1255 + $0x10] sm:$0xff]
        %v5916 = vld [vmem:[%s1255 + $0x18] sm:$0xff]
        %v5917 = vld [vmem:[%s1255 + $0x20] sm:$0xff]
        %v5918 = vld [vmem:[%s1255 + $0x28] sm:$0xff]
        %v5919 = vld [vmem:[%s1255 + $0x30] sm:$0xff]
        %v5920 = vld [vmem:[%s1255 + $0x38] sm:$0xff]
        %v5921 = vld [vmem:[%s1255 + $0x40] sm:$0xff]
        %v5922 = vld [vmem:[%s1255 + $0x48] sm:$0xff]
        %v5923 = vld [vmem:[%s1255 + $0x50] sm:$0xff]
        %v5924 = vld [vmem:[%s1255 + $0x58] sm:$0xff]
        %v5925 = vld [vmem:[%s1255 + $0x60] sm:$0xff]
        %v5926 = vld [vmem:[%s1255 + $0x68] sm:$0xff]
        %v5927 = vld [vmem:[%s1255 + $0x70] sm:$0xff]
        %v5928 = vld [vmem:[%s1255 + $0x78] sm:$0xff]
        %s5929 = scalar_lea.vmem %s17, 8
        %v5930 = vld [vmem:[%s5929] sm:$0xff]
        %v5932 = vsel %vm5879, %v5913, 0
        %v5935 = vsel %vm5879, %v5914, 0
        %v5938 = vsel %vm5879, %v5915, 0
        %v5941 = vsel %vm5879, %v5916, 0
        %v5944 = vsel %vm5879, %v5917, 0
        %v5947 = vsel %vm5879, %v5918, 0
        %v5950 = vsel %vm5879, %v5919, 0
        %v5953 = vsel %vm5879, %v5920, 0
        %v5956 = vsel %vm5879, %v5921, 0
        %v5959 = vsel %vm5879, %v5922, 0
        %v5962 = vsel %vm5879, %v5923, 0
        %v5965 = vsel %vm5879, %v5924, 0
        %v5968 = vsel %vm5879, %v5925, 0
        %v5971 = vsel %vm5879, %v5926, 0
        %v5974 = vsel %vm5879, %v5927, 0
        %v5977 = vsel %vm5879, %v5928, 0
        %5979 = vmatprep.subr.mxu0 0.0
        %5980 = vmatpush1.msra.mxu0 %v5930
        %5981 = vmatprep.subr.mxu0 0.0
        %5982 = vmatpush1.msra.mxu0 0.0
        %5983 = vmatprep.subr.mxu0 0.0
        %5984 = vmatpush1.msra.mxu0 0.0
        %5985 = vmatprep.subr.mxu0 0.0
        %5986 = vmatpush1.msra.mxu0 0.0
        %5987 = vmatprep.subr.mxu0 0.0
        %5988 = vmatpush1.msra.mxu0 0.0
        %5989 = vmatprep.subr.mxu0 0.0
        %5990 = vmatpush1.msra.mxu0 0.0
        %5991 = vmatprep.subr.mxu0 0.0
        %5992 = vmatpush1.msra.mxu0 0.0
        %5993 = vmatprep.subr.mxu0 0.0
        %5994 = vmatpush1.msra.mxu0 0.0
        %5995 = vmatprep.subr.mxu0 0.0
        %5996 = vmatpush1.msra.mxu0 0.0
        %5997 = vmatprep.subr.mxu0 0.0
        %5998 = vmatpush1.msra.mxu0 0.0
        %5999 = vmatprep.subr.mxu0 0.0
        %6000 = vmatpush1.msra.mxu0 0.0
        %6001 = vmatprep.subr.mxu0 0.0
        %6002 = vmatpush1.msra.mxu0 0.0
        %6003 = vmatprep.subr.mxu0 0.0
        %6004 = vmatpush1.msra.mxu0 0.0
        %6005 = vmatprep.subr.mxu0 0.0
        %6006 = vmatpush1.msra.mxu0 0.0
        %6007 = vmatprep.subr.mxu0 0.0
        %6008 = vmatpush1.msra.mxu0 0.0
        %6009 = vmatprep.subr.mxu0 0.0
        %6010 = vmatpush1.msra.mxu0 0.0
        %6011 = vmatprep.subr.mxu0 0.0
        %6012 = vmatpush1.msra.mxu0 0.0
        %6013 = vmatprep.subr.mxu0 0.0
        %6014 = vmatpush1.msra.mxu0 0.0
        %6015 = vmatprep.subr.mxu0 0.0
        %6016 = vmatpush1.msra.mxu0 0.0
        %6017 = vmatprep.subr.mxu0 0.0
        %6018 = vmatpush1.msra.mxu0 0.0
        %6019 = vmatprep.subr.mxu0 0.0
        %6020 = vmatpush1.msra.mxu0 0.0
        %6021 = vmatprep.subr.mxu0 0.0
        %6022 = vmatpush1.msra.mxu0 0.0
        %6023 = vmatprep.subr.mxu0 0.0
        %6024 = vmatpush1.msra.mxu0 0.0
        %6025 = vmatprep.subr.mxu0 0.0
        %6026 = vmatpush1.msra.mxu0 0.0
        %6027 = vmatprep.subr.mxu0 0.0
        %6028 = vmatpush1.msra.mxu0 0.0
        %6029 = vmatprep.subr.mxu0 0.0
        %6030 = vmatpush1.msra.mxu0 0.0
        %6031 = vmatprep.subr.mxu0 0.0
        %6032 = vmatpush1.msra.mxu0 0.0
        %6033 = vmatprep.subr.mxu0 0.0
        %6034 = vmatpush1.msra.mxu0 0.0
        %6035 = vmatprep.subr.mxu0 0.0
        %6036 = vmatpush1.msra.mxu0 0.0
        %6037 = vmatprep.subr.mxu0 0.0
        %6038 = vmatpush1.msra.mxu0 0.0
        %6039 = vmatprep.subr.mxu0 0.0
        %6040 = vmatpush1.msra.mxu0 0.0
        %6041 = vmatprep.subr.mxu0 0.0
        %6042 = vmatpush1.msra.mxu0 0.0
        %6043 = vmatprep.mubr.f32.mxu0 0.0
        %6044 = vmatmul.mubr.f32.gmra.mrb[0].mxu0 %v5932
        %v6045 = vpop.f32.mrb[0].mxu0
        %v6046 = vadd.f32 0.0, %v6045
        %v6047 = vpop.f32.mrb[0].mxu0
        %6048 = vmatprep.mubr.f32.mxu0 0.0
        %6049 = vmatmul.mubr.f32.gmra.mrb[0].mxu0 %v5935
        %v6050 = vpop.f32.mrb[0].mxu0
        %v6051 = vadd.f32 0.0, %v6050
        %v6052 = vpop.f32.mrb[0].mxu0
        %6053 = vmatprep.mubr.f32.mxu0 0.0
        %6054 = vmatmul.mubr.f32.gmra.mrb[0].mxu0 %v5938
        %v6055 = vpop.f32.mrb[0].mxu0
        %v6056 = vadd.f32 0.0, %v6055
        %v6057 = vpop.f32.mrb[0].mxu0
        %6058 = vmatprep.mubr.f32.mxu0 0.0
        %6059 = vmatmul.mubr.f32.gmra.mrb[0].mxu0 %v5941
        %v6060 = vpop.f32.mrb[0].mxu0
        %v6061 = vadd.f32 0.0, %v6060
        %v6062 = vpop.f32.mrb[0].mxu0
        %6063 = vmatprep.mubr.f32.mxu0 0.0
        %6064 = vmatmul.mubr.f32.gmra.mrb[0].mxu0 %v5944
        %v6065 = vpop.f32.mrb[0].mxu0
        %v6066 = vadd.f32 0.0, %v6065
        %v6067 = vpop.f32.mrb[0].mxu0
        %6068 = vmatprep.mubr.f32.mxu0 0.0
        %6069 = vmatmul.mubr.f32.gmra.mrb[0].mxu0 %v5947
        %v6070 = vpop.f32.mrb[0].mxu0
        %v6071 = vadd.f32 0.0, %v6070
        %v6072 = vpop.f32.mrb[0].mxu0
        %6073 = vmatprep.mubr.f32.mxu0 0.0
        %6074 = vmatmul.mubr.f32.gmra.mrb[0].mxu0 %v5950
        %v6075 = vpop.f32.mrb[0].mxu0
        %v6076 = vadd.f32 0.0, %v6075
        %v6077 = vpop.f32.mrb[0].mxu0
        %6078 = vmatprep.mubr.f32.mxu0 0.0
        %6079 = vmatmul.mubr.f32.gmra.mrb[0].mxu0 %v5953
        %v6080 = vpop.f32.mrb[0].mxu0
        %v6081 = vadd.f32 0.0, %v6080
        %v6082 = vpop.f32.mrb[0].mxu0
        %6083 = vmatprep.mubr.f32.mxu0 0.0
        %6084 = vmatmul.mubr.f32.gmra.mrb[0].mxu0 %v5956
        %v6085 = vpop.f32.mrb[0].mxu0
        %v6086 = vadd.f32 0.0, %v6085
        %v6087 = vpop.f32.mrb[0].mxu0
        %6088 = vmatprep.mubr.f32.mxu0 0.0
        %6089 = vmatmul.mubr.f32.gmra.mrb[0].mxu0 %v5959
        %v6090 = vpop.f32.mrb[0].mxu0
        %v6091 = vadd.f32 0.0, %v6090
        %v6092 = vpop.f32.mrb[0].mxu0
        %6093 = vmatprep.mubr.f32.mxu0 0.0
        %6094 = vmatmul.mubr.f32.gmra.mrb[0].mxu0 %v5962
        %v6095 = vpop.f32.mrb[0].mxu0
        %v6096 = vadd.f32 0.0, %v6095
        %v6097 = vpop.f32.mrb[0].mxu0
        %6098 = vmatprep.mubr.f32.mxu0 0.0
        %6099 = vmatmul.mubr.f32.gmra.mrb[0].mxu0 %v5965
        %v6100 = vpop.f32.mrb[0].mxu0
        %v6101 = vadd.f32 0.0, %v6100
        %v6102 = vpop.f32.mrb[0].mxu0
        %6103 = vmatprep.mubr.f32.mxu0 0.0
        %6104 = vmatmul.mubr.f32.gmra.mrb[0].mxu0 %v5968
        %v6105 = vpop.f32.mrb[0].mxu0
        %v6106 = vadd.f32 0.0, %v6105
        %v6107 = vpop.f32.mrb[0].mxu0
        %6108 = vmatprep.mubr.f32.mxu0 0.0
        %6109 = vmatmul.mubr.f32.gmra.mrb[0].mxu0 %v5971
        %v6110 = vpop.f32.mrb[0].mxu0
        %v6111 = vadd.f32 0.0, %v6110
        %v6112 = vpop.f32.mrb[0].mxu0
        %6113 = vmatprep.mubr.f32.mxu0 0.0
        %6114 = vmatmul.mubr.f32.gmra.mrb[0].mxu0 %v5974
        %v6115 = vpop.f32.mrb[0].mxu0
        %v6116 = vadd.f32 0.0, %v6115
        %v6117 = vpop.f32.mrb[0].mxu0
        %6118 = vmatprep.mubr.f32.mxu0 0.0
        %6119 = vmatmul.mubr.f32.gmra.mrb[0].mxu0 %v5977
        %v6120 = vpop.f32.mrb[0].mxu0
        %v6121 = vadd.f32 0.0, %v6120
        %v6122 = vpop.f32.mrb[0].mxu0
        %6123 = vdwg.mxu0
        %v6125 = vsel %vm5879, %v5896, 0
        %v6128 = vsel %vm5879, %v5897, 0
        %v6131 = vsel %vm5879, %v5898, 0
        %v6134 = vsel %vm5879, %v5899, 0
        %v6137 = vsel %vm5879, %v5900, 0
        %v6140 = vsel %vm5879, %v5901, 0
        %v6143 = vsel %vm5879, %v5902, 0
        %v6146 = vsel %vm5879, %v5903, 0
        %v6149 = vsel %vm5879, %v5904, 0
        %v6152 = vsel %vm5879, %v5905, 0
        %v6155 = vsel %vm5879, %v5906, 0
        %v6158 = vsel %vm5879, %v5907, 0
        %v6161 = vsel %vm5879, %v5908, 0
        %v6164 = vsel %vm5879, %v5909, 0
        %v6167 = vsel %vm5879, %v5910, 0
        %v6170 = vsel %vm5879, %v5911, 0
        %6172 = vmatprep.subr.mxu0 0.0
        %6173 = vmatpush1.msra.mxu0 %v5912
        %6174 = vmatprep.subr.mxu0 0.0
        %6175 = vmatpush1.msra.mxu0 0.0
        %6176 = vmatprep.subr.mxu0 0.0
        %6177 = vmatpush1.msra.mxu0 0.0
        %6178 = vmatprep.subr.mxu0 0.0
        %6179 = vmatpush1.msra.mxu0 0.0
        %6180 = vmatprep.subr.mxu0 0.0
        %6181 = vmatpush1.msra.mxu0 0.0
        %6182 = vmatprep.subr.mxu0 0.0
        %6183 = vmatpush1.msra.mxu0 0.0
        %6184 = vmatprep.subr.mxu0 0.0
        %6185 = vmatpush1.msra.mxu0 0.0
        %6186 = vmatprep.subr.mxu0 0.0
        %6187 = vmatpush1.msra.mxu0 0.0
        %6188 = vmatprep.subr.mxu0 0.0
        %6189 = vmatpush1.msra.mxu0 0.0
        %6190 = vmatprep.subr.mxu0 0.0
        %6191 = vmatpush1.msra.mxu0 0.0
        %6192 = vmatprep.subr.mxu0 0.0
        %6193 = vmatpush1.msra.mxu0 0.0
        %6194 = vmatprep.subr.mxu0 0.0
        %6195 = vmatpush1.msra.mxu0 0.0
        %6196 = vmatprep.subr.mxu0 0.0
        %6197 = vmatpush1.msra.mxu0 0.0
        %6198 = vmatprep.subr.mxu0 0.0
        %6199 = vmatpush1.msra.mxu0 0.0
        %6200 = vmatprep.subr.mxu0 0.0
        %6201 = vmatpush1.msra.mxu0 0.0
        %6202 = vmatprep.subr.mxu0 0.0
        %6203 = vmatpush1.msra.mxu0 0.0
        %6204 = vmatprep.subr.mxu0 0.0
        %6205 = vmatpush1.msra.mxu0 0.0
        %6206 = vmatprep.subr.mxu0 0.0
        %6207 = vmatpush1.msra.mxu0 0.0
        %6208 = vmatprep.subr.mxu0 0.0
        %6209 = vmatpush1.msra.mxu0 0.0
        %6210 = vmatprep.subr.mxu0 0.0
        %6211 = vmatpush1.msra.mxu0 0.0
        %6212 = vmatprep.subr.mxu0 0.0
        %6213 = vmatpush1.msra.mxu0 0.0
        %6214 = vmatprep.subr.mxu0 0.0
        %6215 = vmatpush1.msra.mxu0 0.0
        %6216 = vmatprep.subr.mxu0 0.0
        %6217 = vmatpush1.msra.mxu0 0.0
        %6218 = vmatprep.subr.mxu0 0.0
        %6219 = vmatpush1.msra.mxu0 0.0
        %6220 = vmatprep.subr.mxu0 0.0
        %6221 = vmatpush1.msra.mxu0 0.0
        %6222 = vmatprep.subr.mxu0 0.0
        %6223 = vmatpush1.msra.mxu0 0.0
        %6224 = vmatprep.subr.mxu0 0.0
        %6225 = vmatpush1.msra.mxu0 0.0
        %6226 = vmatprep.subr.mxu0 0.0
        %6227 = vmatpush1.msra.mxu0 0.0
        %6228 = vmatprep.subr.mxu0 0.0
        %6229 = vmatpush1.msra.mxu0 0.0
        %6230 = vmatprep.subr.mxu0 0.0
        %6231 = vmatpush1.msra.mxu0 0.0
        %6232 = vmatprep.subr.mxu0 0.0
        %6233 = vmatpush1.msra.mxu0 0.0
        %6234 = vmatprep.subr.mxu0 0.0
        %6235 = vmatpush1.msra.mxu0 0.0
        %6236 = vmatprep.mubr.f32.mxu0 0.0
        %6237 = vmatmul.mubr.f32.gmra.mrb[0].mxu0 %v6125
        %v6238 = vpop.f32.mrb[0].mxu0
        %v6239 = vadd.f32 %v6046, %v6238
        %v6240 = vpop.f32.mrb[0].mxu0
        %6241 = vmatprep.mubr.f32.mxu0 0.0
        %6242 = vmatmul.mubr.f32.gmra.mrb[0].mxu0 %v6128
        %v6243 = vpop.f32.mrb[0].mxu0
        %v6244 = vadd.f32 %v6051, %v6243
        %v6245 = vpop.f32.mrb[0].mxu0
        %6246 = vmatprep.mubr.f32.mxu0 0.0
        %6247 = vmatmul.mubr.f32.gmra.mrb[0].mxu0 %v6131
        %v6248 = vpop.f32.mrb[0].mxu0
        %v6249 = vadd.f32 %v6056, %v6248
        %v6250 = vpop.f32.mrb[0].mxu0
        %6251 = vmatprep.mubr.f32.mxu0 0.0
        %6252 = vmatmul.mubr.f32.gmra.mrb[0].mxu0 %v6134
        %v6253 = vpop.f32.mrb[0].mxu0
        %v6254 = vadd.f32 %v6061, %v6253
        %v6255 = vpop.f32.mrb[0].mxu0
        %6256 = vmatprep.mubr.f32.mxu0 0.0
        %6257 = vmatmul.mubr.f32.gmra.mrb[0].mxu0 %v6137
        %v6258 = vpop.f32.mrb[0].mxu0
        %v6259 = vadd.f32 %v6066, %v6258
        %v6260 = vpop.f32.mrb[0].mxu0
        %6261 = vmatprep.mubr.f32.mxu0 0.0
        %6262 = vmatmul.mubr.f32.gmra.mrb[0].mxu0 %v6140
        %v6263 = vpop.f32.mrb[0].mxu0
        %v6264 = vadd.f32 %v6071, %v6263
        %v6265 = vpop.f32.mrb[0].mxu0
        %6266 = vmatprep.mubr.f32.mxu0 0.0
        %6267 = vmatmul.mubr.f32.gmra.mrb[0].mxu0 %v6143
        %v6268 = vpop.f32.mrb[0].mxu0
        %v6269 = vadd.f32 %v6076, %v6268
        %v6270 = vpop.f32.mrb[0].mxu0
        %6271 = vmatprep.mubr.f32.mxu0 0.0
        %6272 = vmatmul.mubr.f32.gmra.mrb[0].mxu0 %v6146
        %v6273 = vpop.f32.mrb[0].mxu0
        %v6274 = vadd.f32 %v6081, %v6273
        %v6275 = vpop.f32.mrb[0].mxu0
        %6276 = vmatprep.mubr.f32.mxu0 0.0
        %6277 = vmatmul.mubr.f32.gmra.mrb[0].mxu0 %v6149
        %v6278 = vpop.f32.mrb[0].mxu0
        %v6279 = vadd.f32 %v6086, %v6278
        %v6280 = vpop.f32.mrb[0].mxu0
        %6281 = vmatprep.mubr.f32.mxu0 0.0
        %6282 = vmatmul.mubr.f32.gmra.mrb[0].mxu0 %v6152
        %v6283 = vpop.f32.mrb[0].mxu0
        %v6284 = vadd.f32 %v6091, %v6283
        %v6285 = vpop.f32.mrb[0].mxu0
        %6286 = vmatprep.mubr.f32.mxu0 0.0
        %6287 = vmatmul.mubr.f32.gmra.mrb[0].mxu0 %v6155
        %v6288 = vpop.f32.mrb[0].mxu0
        %v6289 = vadd.f32 %v6096, %v6288
        %v6290 = vpop.f32.mrb[0].mxu0
        %6291 = vmatprep.mubr.f32.mxu0 0.0
        %6292 = vmatmul.mubr.f32.gmra.mrb[0].mxu0 %v6158
        %v6293 = vpop.f32.mrb[0].mxu0
        %v6294 = vadd.f32 %v6101, %v6293
        %v6295 = vpop.f32.mrb[0].mxu0
        %6296 = vmatprep.mubr.f32.mxu0 0.0
        %6297 = vmatmul.mubr.f32.gmra.mrb[0].mxu0 %v6161
        %v6298 = vpop.f32.mrb[0].mxu0
        %v6299 = vadd.f32 %v6106, %v6298
        %v6300 = vpop.f32.mrb[0].mxu0
        %6301 = vmatprep.mubr.f32.mxu0 0.0
        %6302 = vmatmul.mubr.f32.gmra.mrb[0].mxu0 %v6164
        %v6303 = vpop.f32.mrb[0].mxu0
        %v6304 = vadd.f32 %v6111, %v6303
        %v6305 = vpop.f32.mrb[0].mxu0
        %6306 = vmatprep.mubr.f32.mxu0 0.0
        %6307 = vmatmul.mubr.f32.gmra.mrb[0].mxu0 %v6167
        %v6308 = vpop.f32.mrb[0].mxu0
        %v6309 = vadd.f32 %v6116, %v6308
        %v6310 = vpop.f32.mrb[0].mxu0
        %6311 = vmatprep.mubr.f32.mxu0 0.0
        %6312 = vmatmul.mubr.f32.gmra.mrb[0].mxu0 %v6170
        %v6313 = vpop.f32.mrb[0].mxu0
        %v6314 = vadd.f32 %v6121, %v6313
        %v6315 = vpop.f32.mrb[0].mxu0
        %6316 = vdwg.mxu0
        %v6317 = vld [vmem:[%s1217] sm:$0xff]
        %v6318 = vld [vmem:[%s1217 + $0x8] sm:$0xff]
        %v6319 = vld [vmem:[%s1217 + $0x10] sm:$0xff]
        %v6320 = vld [vmem:[%s1217 + $0x18] sm:$0xff]
        %v6321 = vld [vmem:[%s1217 + $0x20] sm:$0xff]
        %v6322 = vld [vmem:[%s1217 + $0x28] sm:$0xff]
        %v6323 = vld [vmem:[%s1217 + $0x30] sm:$0xff]
        %v6324 = vld [vmem:[%s1217 + $0x38] sm:$0xff]
        %v6325 = vld [vmem:[%s1217 + $0x40] sm:$0xff]
        %v6326 = vld [vmem:[%s1217 + $0x48] sm:$0xff]
        %v6327 = vld [vmem:[%s1217 + $0x50] sm:$0xff]
        %v6328 = vld [vmem:[%s1217 + $0x58] sm:$0xff]
        %v6329 = vld [vmem:[%s1217 + $0x60] sm:$0xff]
        %v6330 = vld [vmem:[%s1217 + $0x68] sm:$0xff]
        %v6331 = vld [vmem:[%s1217 + $0x70] sm:$0xff]
        %v6332 = vld [vmem:[%s1217 + $0x78] sm:$0xff]
        %s6333 = scalar_lea.vmem %s17, 16
        %v6334 = vld [vmem:[%s6333] sm:$0xff]
        %v6336 = vsel %vm5879, %v6317, 0
        %v6339 = vsel %vm5879, %v6318, 0
        %v6342 = vsel %vm5879, %v6319, 0
        %v6345 = vsel %vm5879, %v6320, 0
        %v6348 = vsel %vm5879, %v6321, 0
        %v6351 = vsel %vm5879, %v6322, 0
        %v6354 = vsel %vm5879, %v6323, 0
        %v6357 = vsel %vm5879, %v6324, 0
        %v6360 = vsel %vm5879, %v6325, 0
        %v6363 = vsel %vm5879, %v6326, 0
        %v6366 = vsel %vm5879, %v6327, 0
        %v6369 = vsel %vm5879, %v6328, 0
        %v6372 = vsel %vm5879, %v6329, 0
        %v6375 = vsel %vm5879, %v6330, 0
        %v6378 = vsel %vm5879, %v6331, 0
        %v6381 = vsel %vm5879, %v6332, 0
        %6383 = vmatprep.subr.mxu0 0.0
        %6384 = vmatpush1.msra.mxu0 %v6334
        %6385 = vmatprep.subr.mxu0 0.0
        %6386 = vmatpush1.msra.mxu0 0.0
        %6387 = vmatprep.subr.mxu0 0.0
        %6388 = vmatpush1.msra.mxu0 0.0
        %6389 = vmatprep.subr.mxu0 0.0
        %6390 = vmatpush1.msra.mxu0 0.0
        %6391 = vmatprep.subr.mxu0 0.0
        %6392 = vmatpush1.msra.mxu0 0.0
        %6393 = vmatprep.subr.mxu0 0.0
        %6394 = vmatpush1.msra.mxu0 0.0
        %6395 = vmatprep.subr.mxu0 0.0
        %6396 = vmatpush1.msra.mxu0 0.0
        %6397 = vmatprep.subr.mxu0 0.0
        %6398 = vmatpush1.msra.mxu0 0.0
        %6399 = vmatprep.subr.mxu0 0.0
        %6400 = vmatpush1.msra.mxu0 0.0
        %6401 = vmatprep.subr.mxu0 0.0
        %6402 = vmatpush1.msra.mxu0 0.0
        %6403 = vmatprep.subr.mxu0 0.0
        %6404 = vmatpush1.msra.mxu0 0.0
        %6405 = vmatprep.subr.mxu0 0.0
        %6406 = vmatpush1.msra.mxu0 0.0
        %6407 = vmatprep.subr.mxu0 0.0
        %6408 = vmatpush1.msra.mxu0 0.0
        %6409 = vmatprep.subr.mxu0 0.0
        %6410 = vmatpush1.msra.mxu0 0.0
        %6411 = vmatprep.subr.mxu0 0.0
        %6412 = vmatpush1.msra.mxu0 0.0
        %6413 = vmatprep.subr.mxu0 0.0
        %6414 = vmatpush1.msra.mxu0 0.0
        %6415 = vmatprep.subr.mxu0 0.0
        %6416 = vmatpush1.msra.mxu0 0.0
        %6417 = vmatprep.subr.mxu0 0.0
        %6418 = vmatpush1.msra.mxu0 0.0
        %6419 = vmatprep.subr.mxu0 0.0
        %6420 = vmatpush1.msra.mxu0 0.0
        %6421 = vmatprep.subr.mxu0 0.0
        %6422 = vmatpush1.msra.mxu0 0.0
        %6423 = vmatprep.subr.mxu0 0.0
        %6424 = vmatpush1.msra.mxu0 0.0
        %6425 = vmatprep.subr.mxu0 0.0
        %6426 = vmatpush1.msra.mxu0 0.0
        %6427 = vmatprep.subr.mxu0 0.0
        %6428 = vmatpush1.msra.mxu0 0.0
        %6429 = vmatprep.subr.mxu0 0.0
        %6430 = vmatpush1.msra.mxu0 0.0
        %6431 = vmatprep.subr.mxu0 0.0
        %6432 = vmatpush1.msra.mxu0 0.0
        %6433 = vmatprep.subr.mxu0 0.0
        %6434 = vmatpush1.msra.mxu0 0.0
        %6435 = vmatprep.subr.mxu0 0.0
        %6436 = vmatpush1.msra.mxu0 0.0
        %6437 = vmatprep.subr.mxu0 0.0
        %6438 = vmatpush1.msra.mxu0 0.0
        %6439 = vmatprep.subr.mxu0 0.0
        %6440 = vmatpush1.msra.mxu0 0.0
        %6441 = vmatprep.subr.mxu0 0.0
        %6442 = vmatpush1.msra.mxu0 0.0
        %6443 = vmatprep.subr.mxu0 0.0
        %6444 = vmatpush1.msra.mxu0 0.0
        %6445 = vmatprep.subr.mxu0 0.0
        %6446 = vmatpush1.msra.mxu0 0.0
        %6447 = vmatprep.mubr.f32.mxu0 0.0
        %6448 = vmatmul.mubr.f32.gmra.mrb[0].mxu0 %v6336
        %v6449 = vpop.f32.mrb[0].mxu0
        %v6450 = vadd.f32 0.0, %v6449
        %v6451 = vpop.f32.mrb[0].mxu0
        %6452 = vmatprep.mubr.f32.mxu0 0.0
        %6453 = vmatmul.mubr.f32.gmra.mrb[0].mxu0 %v6339
        %v6454 = vpop.f32.mrb[0].mxu0
        %v6455 = vadd.f32 0.0, %v6454
        %v6456 = vpop.f32.mrb[0].mxu0
        %6457 = vmatprep.mubr.f32.mxu0 0.0
        %6458 = vmatmul.mubr.f32.gmra.mrb[0].mxu0 %v6342
        %v6459 = vpop.f32.mrb[0].mxu0
        %v6460 = vadd.f32 0.0, %v6459
        %v6461 = vpop.f32.mrb[0].mxu0
        %6462 = vmatprep.mubr.f32.mxu0 0.0
        %6463 = vmatmul.mubr.f32.gmra.mrb[0].mxu0 %v6345
        %v6464 = vpop.f32.mrb[0].mxu0
        %v6465 = vadd.f32 0.0, %v6464
        %v6466 = vpop.f32.mrb[0].mxu0
        %6467 = vmatprep.mubr.f32.mxu0 0.0
        %6468 = vmatmul.mubr.f32.gmra.mrb[0].mxu0 %v6348
        %v6469 = vpop.f32.mrb[0].mxu0
        %v6470 = vadd.f32 0.0, %v6469
        %v6471 = vpop.f32.mrb[0].mxu0
        %6472 = vmatprep.mubr.f32.mxu0 0.0
        %6473 = vmatmul.mubr.f32.gmra.mrb[0].mxu0 %v6351
        %v6474 = vpop.f32.mrb[0].mxu0
        %v6475 = vadd.f32 0.0, %v6474
        %v6476 = vpop.f32.mrb[0].mxu0
        %6477 = vmatprep.mubr.f32.mxu0 0.0
        %6478 = vmatmul.mubr.f32.gmra.mrb[0].mxu0 %v6354
        %v6479 = vpop.f32.mrb[0].mxu0
        %v6480 = vadd.f32 0.0, %v6479
        %v6481 = vpop.f32.mrb[0].mxu0
        %6482 = vmatprep.mubr.f32.mxu0 0.0
        %6483 = vmatmul.mubr.f32.gmra.mrb[0].mxu0 %v6357
        %v6484 = vpop.f32.mrb[0].mxu0
        %v6485 = vadd.f32 0.0, %v6484
        %v6486 = vpop.f32.mrb[0].mxu0
        %6487 = vmatprep.mubr.f32.mxu0 0.0
        %6488 = vmatmul.mubr.f32.gmra.mrb[0].mxu0 %v6360
        %v6489 = vpop.f32.mrb[0].mxu0
        %v6490 = vadd.f32 0.0, %v6489
        %v6491 = vpop.f32.mrb[0].mxu0
        %6492 = vmatprep.mubr.f32.mxu0 0.0
        %6493 = vmatmul.mubr.f32.gmra.mrb[0].mxu0 %v6363
        %v6494 = vpop.f32.mrb[0].mxu0
        %v6495 = vadd.f32 0.0, %v6494
        %v6496 = vpop.f32.mrb[0].mxu0
        %6497 = vmatprep.mubr.f32.mxu0 0.0
        %6498 = vmatmul.mubr.f32.gmra.mrb[0].mxu0 %v6366
        %v6499 = vpop.f32.mrb[0].mxu0
        %v6500 = vadd.f32 0.0, %v6499
        %v6501 = vpop.f32.mrb[0].mxu0
        %6502 = vmatprep.mubr.f32.mxu0 0.0
        %6503 = vmatmul.mubr.f32.gmra.mrb[0].mxu0 %v6369
        %v6504 = vpop.f32.mrb[0].mxu0
        %v6505 = vadd.f32 0.0, %v6504
        %v6506 = vpop.f32.mrb[0].mxu0
        %6507 = vmatprep.mubr.f32.mxu0 0.0
        %6508 = vmatmul.mubr.f32.gmra.mrb[0].mxu0 %v6372
        %v6509 = vpop.f32.mrb[0].mxu0
        %v6510 = vadd.f32 0.0, %v6509
        %v6511 = vpop.f32.mrb[0].mxu0
        %6512 = vmatprep.mubr.f32.mxu0 0.0
        %6513 = vmatmul.mubr.f32.gmra.mrb[0].mxu0 %v6375
        %v6514 = vpop.f32.mrb[0].mxu0
        %v6515 = vadd.f32 0.0, %v6514
        %v6516 = vpop.f32.mrb[0].mxu0
        %6517 = vmatprep.mubr.f32.mxu0 0.0
        %6518 = vmatmul.mubr.f32.gmra.mrb[0].mxu0 %v6378
        %v6519 = vpop.f32.mrb[0].mxu0
        %v6520 = vadd.f32 0.0, %v6519
        %v6521 = vpop.f32.mrb[0].mxu0
        %6522 = vmatprep.mubr.f32.mxu0 0.0
        %6523 = vmatmul.mubr.f32.gmra.mrb[0].mxu0 %v6381
        %v6524 = vpop.f32.mrb[0].mxu0
        %v6525 = vadd.f32 0.0, %v6524
        %v6526 = vpop.f32.mrb[0].mxu0
        %6527 = vdwg.mxu0
        %v6528 = vadd.f32 %v6239, %v6450
        %v6529 = vadd.f32 %v6244, %v6455
        %v6530 = vadd.f32 %v6249, %v6460
        %v6531 = vadd.f32 %v6254, %v6465
        %v6532 = vadd.f32 %v6259, %v6470
        %v6533 = vadd.f32 %v6264, %v6475
        %v6534 = vadd.f32 %v6269, %v6480
        %v6535 = vadd.f32 %v6274, %v6485
        %v6536 = vadd.f32 %v6279, %v6490
        %v6537 = vadd.f32 %v6284, %v6495
        %v6538 = vadd.f32 %v6289, %v6500
        %v6539 = vadd.f32 %v6294, %v6505
        %v6540 = vadd.f32 %v6299, %v6510
        %v6541 = vadd.f32 %v6304, %v6515
        %v6542 = vadd.f32 %v6309, %v6520
        %v6543 = vadd.f32 %v6314, %v6525
        %v6544 = vld [vmem:[%s1893] sm:$0xff]
        %v6545 = vld [vmem:[%s1893 + $0x8] sm:$0xff]
        %v6546 = vld [vmem:[%s1893 + $0x10] sm:$0xff]
        %v6547 = vld [vmem:[%s1893 + $0x18] sm:$0xff]
        %v6548 = vld [vmem:[%s1893 + $0x20] sm:$0xff]
        %v6549 = vld [vmem:[%s1893 + $0x28] sm:$0xff]
        %v6550 = vld [vmem:[%s1893 + $0x30] sm:$0xff]
        %v6551 = vld [vmem:[%s1893 + $0x38] sm:$0xff]
        %v6552 = vld [vmem:[%s1893 + $0x40] sm:$0xff]
        %v6553 = vld [vmem:[%s1893 + $0x48] sm:$0xff]
        %v6554 = vld [vmem:[%s1893 + $0x50] sm:$0xff]
        %v6555 = vld [vmem:[%s1893 + $0x58] sm:$0xff]
        %v6556 = vld [vmem:[%s1893 + $0x60] sm:$0xff]
        %v6557 = vld [vmem:[%s1893 + $0x68] sm:$0xff]
        %v6558 = vld [vmem:[%s1893 + $0x70] sm:$0xff]
        %v6559 = vld [vmem:[%s1893 + $0x78] sm:$0xff]
        %s6560 = scalar_lea.vmem %s17, 24
        %v6561 = vld [vmem:[%s6560] sm:$0xff]
        %v6563 = vsel %vm5879, %v6544, 0
        %v6566 = vsel %vm5879, %v6545, 0
        %v6569 = vsel %vm5879, %v6546, 0
        %v6572 = vsel %vm5879, %v6547, 0
        %v6575 = vsel %vm5879, %v6548, 0
        %v6578 = vsel %vm5879, %v6549, 0
        %v6581 = vsel %vm5879, %v6550, 0
        %v6584 = vsel %vm5879, %v6551, 0
        %v6587 = vsel %vm5879, %v6552, 0
        %v6590 = vsel %vm5879, %v6553, 0
        %v6593 = vsel %vm5879, %v6554, 0
        %v6596 = vsel %vm5879, %v6555, 0
        %v6599 = vsel %vm5879, %v6556, 0
        %v6602 = vsel %vm5879, %v6557, 0
        %v6605 = vsel %vm5879, %v6558, 0
        %v6608 = vsel %vm5879, %v6559, 0
        %6610 = vmatprep.subr.mxu0 0.0
        %6611 = vmatpush1.msra.mxu0 %v6561
        %6612 = vmatprep.subr.mxu0 0.0
        %6613 = vmatpush1.msra.mxu0 0.0
        %6614 = vmatprep.subr.mxu0 0.0
        %6615 = vmatpush1.msra.mxu0 0.0
        %6616 = vmatprep.subr.mxu0 0.0
        %6617 = vmatpush1.msra.mxu0 0.0
        %6618 = vmatprep.subr.mxu0 0.0
        %6619 = vmatpush1.msra.mxu0 0.0
        %6620 = vmatprep.subr.mxu0 0.0
        %6621 = vmatpush1.msra.mxu0 0.0
        %6622 = vmatprep.subr.mxu0 0.0
        %6623 = vmatpush1.msra.mxu0 0.0
        %6624 = vmatprep.subr.mxu0 0.0
        %6625 = vmatpush1.msra.mxu0 0.0
        %6626 = vmatprep.subr.mxu0 0.0
        %6627 = vmatpush1.msra.mxu0 0.0
        %6628 = vmatprep.subr.mxu0 0.0
        %6629 = vmatpush1.msra.mxu0 0.0
        %6630 = vmatprep.subr.mxu0 0.0
        %6631 = vmatpush1.msra.mxu0 0.0
        %6632 = vmatprep.subr.mxu0 0.0
        %6633 = vmatpush1.msra.mxu0 0.0
        %6634 = vmatprep.subr.mxu0 0.0
        %6635 = vmatpush1.msra.mxu0 0.0
        %6636 = vmatprep.subr.mxu0 0.0
        %6637 = vmatpush1.msra.mxu0 0.0
        %6638 = vmatprep.subr.mxu0 0.0
        %6639 = vmatpush1.msra.mxu0 0.0
        %6640 = vmatprep.subr.mxu0 0.0
        %6641 = vmatpush1.msra.mxu0 0.0
        %6642 = vmatprep.subr.mxu0 0.0
        %6643 = vmatpush1.msra.mxu0 0.0
        %6644 = vmatprep.subr.mxu0 0.0
        %6645 = vmatpush1.msra.mxu0 0.0
        %6646 = vmatprep.subr.mxu0 0.0
        %6647 = vmatpush1.msra.mxu0 0.0
        %6648 = vmatprep.subr.mxu0 0.0
        %6649 = vmatpush1.msra.mxu0 0.0
        %6650 = vmatprep.subr.mxu0 0.0
        %6651 = vmatpush1.msra.mxu0 0.0
        %6652 = vmatprep.subr.mxu0 0.0
        %6653 = vmatpush1.msra.mxu0 0.0
        %6654 = vmatprep.subr.mxu0 0.0
        %6655 = vmatpush1.msra.mxu0 0.0
        %6656 = vmatprep.subr.mxu0 0.0
        %6657 = vmatpush1.msra.mxu0 0.0
        %6658 = vmatprep.subr.mxu0 0.0
        %6659 = vmatpush1.msra.mxu0 0.0
        %6660 = vmatprep.subr.mxu0 0.0
        %6661 = vmatpush1.msra.mxu0 0.0
        %6662 = vmatprep.subr.mxu0 0.0
        %6663 = vmatpush1.msra.mxu0 0.0
        %6664 = vmatprep.subr.mxu0 0.0
        %6665 = vmatpush1.msra.mxu0 0.0
        %6666 = vmatprep.subr.mxu0 0.0
        %6667 = vmatpush1.msra.mxu0 0.0
        %6668 = vmatprep.subr.mxu0 0.0
        %6669 = vmatpush1.msra.mxu0 0.0
        %6670 = vmatprep.subr.mxu0 0.0
        %6671 = vmatpush1.msra.mxu0 0.0
        %6672 = vmatprep.subr.mxu0 0.0
        %6673 = vmatpush1.msra.mxu0 0.0
        %6674 = vmatprep.mubr.f32.mxu0 0.0
        %6675 = vmatmul.mubr.f32.gmra.mrb[0].mxu0 %v6563
        %v6676 = vpop.f32.mrb[0].mxu0
        %v6677 = vadd.f32 0.0, %v6676
        %v6678 = vpop.f32.mrb[0].mxu0
        %6679 = vmatprep.mubr.f32.mxu0 0.0
        %6680 = vmatmul.mubr.f32.gmra.mrb[0].mxu0 %v6566
        %v6681 = vpop.f32.mrb[0].mxu0
        %v6682 = vadd.f32 0.0, %v6681
        %v6683 = vpop.f32.mrb[0].mxu0
        %6684 = vmatprep.mubr.f32.mxu0 0.0
        %6685 = vmatmul.mubr.f32.gmra.mrb[0].mxu0 %v6569
        %v6686 = vpop.f32.mrb[0].mxu0
        %v6687 = vadd.f32 0.0, %v6686
        %v6688 = vpop.f32.mrb[0].mxu0
        %6689 = vmatprep.mubr.f32.mxu0 0.0
        %6690 = vmatmul.mubr.f32.gmra.mrb[0].mxu0 %v6572
        %v6691 = vpop.f32.mrb[0].mxu0
        %v6692 = vadd.f32 0.0, %v6691
        %v6693 = vpop.f32.mrb[0].mxu0
        %6694 = vmatprep.mubr.f32.mxu0 0.0
        %6695 = vmatmul.mubr.f32.gmra.mrb[0].mxu0 %v6575
        %v6696 = vpop.f32.mrb[0].mxu0
        %v6697 = vadd.f32 0.0, %v6696
        %v6698 = vpop.f32.mrb[0].mxu0
        %6699 = vmatprep.mubr.f32.mxu0 0.0
        %6700 = vmatmul.mubr.f32.gmra.mrb[0].mxu0 %v6578
        %v6701 = vpop.f32.mrb[0].mxu0
        %v6702 = vadd.f32 0.0, %v6701
        %v6703 = vpop.f32.mrb[0].mxu0
        %6704 = vmatprep.mubr.f32.mxu0 0.0
        %6705 = vmatmul.mubr.f32.gmra.mrb[0].mxu0 %v6581
        %v6706 = vpop.f32.mrb[0].mxu0
        %v6707 = vadd.f32 0.0, %v6706
        %v6708 = vpop.f32.mrb[0].mxu0
        %6709 = vmatprep.mubr.f32.mxu0 0.0
        %6710 = vmatmul.mubr.f32.gmra.mrb[0].mxu0 %v6584
        %v6711 = vpop.f32.mrb[0].mxu0
        %v6712 = vadd.f32 0.0, %v6711
        %v6713 = vpop.f32.mrb[0].mxu0
        %6714 = vmatprep.mubr.f32.mxu0 0.0
        %6715 = vmatmul.mubr.f32.gmra.mrb[0].mxu0 %v6587
        %v6716 = vpop.f32.mrb[0].mxu0
        %v6717 = vadd.f32 0.0, %v6716
        %v6718 = vpop.f32.mrb[0].mxu0
        %6719 = vmatprep.mubr.f32.mxu0 0.0
        %6720 = vmatmul.mubr.f32.gmra.mrb[0].mxu0 %v6590
        %v6721 = vpop.f32.mrb[0].mxu0
        %v6722 = vadd.f32 0.0, %v6721
        %v6723 = vpop.f32.mrb[0].mxu0
        %6724 = vmatprep.mubr.f32.mxu0 0.0
        %6725 = vmatmul.mubr.f32.gmra.mrb[0].mxu0 %v6593
        %v6726 = vpop.f32.mrb[0].mxu0
        %v6727 = vadd.f32 0.0, %v6726
        %v6728 = vpop.f32.mrb[0].mxu0
        %6729 = vmatprep.mubr.f32.mxu0 0.0
        %6730 = vmatmul.mubr.f32.gmra.mrb[0].mxu0 %v6596
        %v6731 = vpop.f32.mrb[0].mxu0
        %v6732 = vadd.f32 0.0, %v6731
        %v6733 = vpop.f32.mrb[0].mxu0
        %6734 = vmatprep.mubr.f32.mxu0 0.0
        %6735 = vmatmul.mubr.f32.gmra.mrb[0].mxu0 %v6599
        %v6736 = vpop.f32.mrb[0].mxu0
        %v6737 = vadd.f32 0.0, %v6736
        %v6738 = vpop.f32.mrb[0].mxu0
        %6739 = vmatprep.mubr.f32.mxu0 0.0
        %6740 = vmatmul.mubr.f32.gmra.mrb[0].mxu0 %v6602
        %v6741 = vpop.f32.mrb[0].mxu0
        %v6742 = vadd.f32 0.0, %v6741
        %v6743 = vpop.f32.mrb[0].mxu0
        %6744 = vmatprep.mubr.f32.mxu0 0.0
        %6745 = vmatmul.mubr.f32.gmra.mrb[0].mxu0 %v6605
        %v6746 = vpop.f32.mrb[0].mxu0
        %v6747 = vadd.f32 0.0, %v6746
        %v6748 = vpop.f32.mrb[0].mxu0
        %6749 = vmatprep.mubr.f32.mxu0 0.0
        %6750 = vmatmul.mubr.f32.gmra.mrb[0].mxu0 %v6608
        %v6751 = vpop.f32.mrb[0].mxu0
        %v6752 = vadd.f32 0.0, %v6751
        %v6753 = vpop.f32.mrb[0].mxu0
        %6754 = vdwg.mxu0
        %v6755 = vadd.f32 %v6528, %v6677
        %v6756 = vadd.f32 %v6529, %v6682
        %v6757 = vadd.f32 %v6530, %v6687
        %v6758 = vadd.f32 %v6531, %v6692
        %v6759 = vadd.f32 %v6532, %v6697
        %v6760 = vadd.f32 %v6533, %v6702
        %v6761 = vadd.f32 %v6534, %v6707
        %v6762 = vadd.f32 %v6535, %v6712
        %v6763 = vadd.f32 %v6536, %v6717
        %v6764 = vadd.f32 %v6537, %v6722
        %v6765 = vadd.f32 %v6538, %v6727
        %v6766 = vadd.f32 %v6539, %v6732
        %v6767 = vadd.f32 %v6540, %v6737
        %v6768 = vadd.f32 %v6541, %v6742
        %v6769 = vadd.f32 %v6542, %v6747
        %v6770 = vadd.f32 %v6543, %v6752
        %v6771 = vld [vmem:[#allocation2] sm:$0xff]
        %v6772 = vld [vmem:[#allocation2 + $0x8] sm:$0xff]
        %v6773 = vld [vmem:[#allocation2 + $0x10] sm:$0xff]
        %v6774 = vld [vmem:[#allocation2 + $0x18] sm:$0xff]
        %v6775 = vld [vmem:[#allocation2 + $0x20] sm:$0xff]
        %v6776 = vld [vmem:[#allocation2 + $0x28] sm:$0xff]
        %v6777 = vld [vmem:[#allocation2 + $0x30] sm:$0xff]
        %v6778 = vld [vmem:[#allocation2 + $0x38] sm:$0xff]
        %v6779 = vld [vmem:[#allocation2 + $0x40] sm:$0xff]
        %v6780 = vld [vmem:[#allocation2 + $0x48] sm:$0xff]
        %v6781 = vld [vmem:[#allocation2 + $0x50] sm:$0xff]
        %v6782 = vld [vmem:[#allocation2 + $0x58] sm:$0xff]
        %v6783 = vld [vmem:[#allocation2 + $0x60] sm:$0xff]
        %v6784 = vld [vmem:[#allocation2 + $0x68] sm:$0xff]
        %v6785 = vld [vmem:[#allocation2 + $0x70] sm:$0xff]
        %v6786 = vld [vmem:[#allocation2 + $0x78] sm:$0xff]
        %s6787 = scalar_lea.vmem %s17, 32
        %v6788 = vld [vmem:[%s6787] sm:$0xff]
        %v6790 = vsel %vm5879, %v6771, 0
        %v6793 = vsel %vm5879, %v6772, 0
        %v6796 = vsel %vm5879, %v6773, 0
        %v6799 = vsel %vm5879, %v6774, 0
        %v6802 = vsel %vm5879, %v6775, 0
        %v6805 = vsel %vm5879, %v6776, 0
        %v6808 = vsel %vm5879, %v6777, 0
        %v6811 = vsel %vm5879, %v6778, 0
        %v6814 = vsel %vm5879, %v6779, 0
        %v6817 = vsel %vm5879, %v6780, 0
        %v6820 = vsel %vm5879, %v6781, 0
        %v6823 = vsel %vm5879, %v6782, 0
        %v6826 = vsel %vm5879, %v6783, 0
        %v6829 = vsel %vm5879, %v6784, 0
        %v6832 = vsel %vm5879, %v6785, 0
        %v6835 = vsel %vm5879, %v6786, 0
        %6837 = vmatprep.subr.mxu0 0.0
        %6838 = vmatpush1.msra.mxu0 %v6788
        %6839 = vmatprep.subr.mxu0 0.0
        %6840 = vmatpush1.msra.mxu0 0.0
        %6841 = vmatprep.subr.mxu0 0.0
        %6842 = vmatpush1.msra.mxu0 0.0
        %6843 = vmatprep.subr.mxu0 0.0
        %6844 = vmatpush1.msra.mxu0 0.0
        %6845 = vmatprep.subr.mxu0 0.0
        %6846 = vmatpush1.msra.mxu0 0.0
        %6847 = vmatprep.subr.mxu0 0.0
        %6848 = vmatpush1.msra.mxu0 0.0
        %6849 = vmatprep.subr.mxu0 0.0
        %6850 = vmatpush1.msra.mxu0 0.0
        %6851 = vmatprep.subr.mxu0 0.0
        %6852 = vmatpush1.msra.mxu0 0.0
        %6853 = vmatprep.subr.mxu0 0.0
        %6854 = vmatpush1.msra.mxu0 0.0
        %6855 = vmatprep.subr.mxu0 0.0
        %6856 = vmatpush1.msra.mxu0 0.0
        %6857 = vmatprep.subr.mxu0 0.0
        %6858 = vmatpush1.msra.mxu0 0.0
        %6859 = vmatprep.subr.mxu0 0.0
        %6860 = vmatpush1.msra.mxu0 0.0
        %6861 = vmatprep.subr.mxu0 0.0
        %6862 = vmatpush1.msra.mxu0 0.0
        %6863 = vmatprep.subr.mxu0 0.0
        %6864 = vmatpush1.msra.mxu0 0.0
        %6865 = vmatprep.subr.mxu0 0.0
        %6866 = vmatpush1.msra.mxu0 0.0
        %6867 = vmatprep.subr.mxu0 0.0
        %6868 = vmatpush1.msra.mxu0 0.0
        %6869 = vmatprep.subr.mxu0 0.0
        %6870 = vmatpush1.msra.mxu0 0.0
        %6871 = vmatprep.subr.mxu0 0.0
        %6872 = vmatpush1.msra.mxu0 0.0
        %6873 = vmatprep.subr.mxu0 0.0
        %6874 = vmatpush1.msra.mxu0 0.0
        %6875 = vmatprep.subr.mxu0 0.0
        %6876 = vmatpush1.msra.mxu0 0.0
        %6877 = vmatprep.subr.mxu0 0.0
        %6878 = vmatpush1.msra.mxu0 0.0
        %6879 = vmatprep.subr.mxu0 0.0
        %6880 = vmatpush1.msra.mxu0 0.0
        %6881 = vmatprep.subr.mxu0 0.0
        %6882 = vmatpush1.msra.mxu0 0.0
        %6883 = vmatprep.subr.mxu0 0.0
        %6884 = vmatpush1.msra.mxu0 0.0
        %6885 = vmatprep.subr.mxu0 0.0
        %6886 = vmatpush1.msra.mxu0 0.0
        %6887 = vmatprep.subr.mxu0 0.0
        %6888 = vmatpush1.msra.mxu0 0.0
        %6889 = vmatprep.subr.mxu0 0.0
        %6890 = vmatpush1.msra.mxu0 0.0
        %6891 = vmatprep.subr.mxu0 0.0
        %6892 = vmatpush1.msra.mxu0 0.0
        %6893 = vmatprep.subr.mxu0 0.0
        %6894 = vmatpush1.msra.mxu0 0.0
        %6895 = vmatprep.subr.mxu0 0.0
        %6896 = vmatpush1.msra.mxu0 0.0
        %6897 = vmatprep.subr.mxu0 0.0
        %6898 = vmatpush1.msra.mxu0 0.0
        %6899 = vmatprep.subr.mxu0 0.0
        %6900 = vmatpush1.msra.mxu0 0.0
        %6901 = vmatprep.mubr.f32.mxu0 0.0
        %6902 = vmatmul.mubr.f32.gmra.mrb[0].mxu0 %v6790
        %v6903 = vpop.f32.mrb[0].mxu0
        %v6904 = vadd.f32 0.0, %v6903
        %v6905 = vpop.f32.mrb[0].mxu0
        %6906 = vmatprep.mubr.f32.mxu0 0.0
        %6907 = vmatmul.mubr.f32.gmra.mrb[0].mxu0 %v6793
        %v6908 = vpop.f32.mrb[0].mxu0
        %v6909 = vadd.f32 0.0, %v6908
        %v6910 = vpop.f32.mrb[0].mxu0
        %6911 = vmatprep.mubr.f32.mxu0 0.0
        %6912 = vmatmul.mubr.f32.gmra.mrb[0].mxu0 %v6796
        %v6913 = vpop.f32.mrb[0].mxu0
        %v6914 = vadd.f32 0.0, %v6913
        %v6915 = vpop.f32.mrb[0].mxu0
        %6916 = vmatprep.mubr.f32.mxu0 0.0
        %6917 = vmatmul.mubr.f32.gmra.mrb[0].mxu0 %v6799
        %v6918 = vpop.f32.mrb[0].mxu0
        %v6919 = vadd.f32 0.0, %v6918
        %v6920 = vpop.f32.mrb[0].mxu0
        %6921 = vmatprep.mubr.f32.mxu0 0.0
        %6922 = vmatmul.mubr.f32.gmra.mrb[0].mxu0 %v6802
        %v6923 = vpop.f32.mrb[0].mxu0
        %v6924 = vadd.f32 0.0, %v6923
        %v6925 = vpop.f32.mrb[0].mxu0
        %6926 = vmatprep.mubr.f32.mxu0 0.0
        %6927 = vmatmul.mubr.f32.gmra.mrb[0].mxu0 %v6805
        %v6928 = vpop.f32.mrb[0].mxu0
        %v6929 = vadd.f32 0.0, %v6928
        %v6930 = vpop.f32.mrb[0].mxu0
        %6931 = vmatprep.mubr.f32.mxu0 0.0
        %6932 = vmatmul.mubr.f32.gmra.mrb[0].mxu0 %v6808
        %v6933 = vpop.f32.mrb[0].mxu0
        %v6934 = vadd.f32 0.0, %v6933
        %v6935 = vpop.f32.mrb[0].mxu0
        %6936 = vmatprep.mubr.f32.mxu0 0.0
        %6937 = vmatmul.mubr.f32.gmra.mrb[0].mxu0 %v6811
        %v6938 = vpop.f32.mrb[0].mxu0
        %v6939 = vadd.f32 0.0, %v6938
        %v6940 = vpop.f32.mrb[0].mxu0
        %6941 = vmatprep.mubr.f32.mxu0 0.0
        %6942 = vmatmul.mubr.f32.gmra.mrb[0].mxu0 %v6814
        %v6943 = vpop.f32.mrb[0].mxu0
        %v6944 = vadd.f32 0.0, %v6943
        %v6945 = vpop.f32.mrb[0].mxu0
        %6946 = vmatprep.mubr.f32.mxu0 0.0
        %6947 = vmatmul.mubr.f32.gmra.mrb[0].mxu0 %v6817
        %v6948 = vpop.f32.mrb[0].mxu0
        %v6949 = vadd.f32 0.0, %v6948
        %v6950 = vpop.f32.mrb[0].mxu0
        %6951 = vmatprep.mubr.f32.mxu0 0.0
        %6952 = vmatmul.mubr.f32.gmra.mrb[0].mxu0 %v6820
        %v6953 = vpop.f32.mrb[0].mxu0
        %v6954 = vadd.f32 0.0, %v6953
        %v6955 = vpop.f32.mrb[0].mxu0
        %6956 = vmatprep.mubr.f32.mxu0 0.0
        %6957 = vmatmul.mubr.f32.gmra.mrb[0].mxu0 %v6823
        %v6958 = vpop.f32.mrb[0].mxu0
        %v6959 = vadd.f32 0.0, %v6958
        %v6960 = vpop.f32.mrb[0].mxu0
        %6961 = vmatprep.mubr.f32.mxu0 0.0
        %6962 = vmatmul.mubr.f32.gmra.mrb[0].mxu0 %v6826
        %v6963 = vpop.f32.mrb[0].mxu0
        %v6964 = vadd.f32 0.0, %v6963
        %v6965 = vpop.f32.mrb[0].mxu0
        %6966 = vmatprep.mubr.f32.mxu0 0.0
        %6967 = vmatmul.mubr.f32.gmra.mrb[0].mxu0 %v6829
        %v6968 = vpop.f32.mrb[0].mxu0
        %v6969 = vadd.f32 0.0, %v6968
        %v6970 = vpop.f32.mrb[0].mxu0
        %6971 = vmatprep.mubr.f32.mxu0 0.0
        %6972 = vmatmul.mubr.f32.gmra.mrb[0].mxu0 %v6832
        %v6973 = vpop.f32.mrb[0].mxu0
        %v6974 = vadd.f32 0.0, %v6973
        %v6975 = vpop.f32.mrb[0].mxu0
        %6976 = vmatprep.mubr.f32.mxu0 0.0
        %6977 = vmatmul.mubr.f32.gmra.mrb[0].mxu0 %v6835
        %v6978 = vpop.f32.mrb[0].mxu0
        %v6979 = vadd.f32 0.0, %v6978
        %v6980 = vpop.f32.mrb[0].mxu0
        %6981 = vdwg.mxu0
        %v6982 = vadd.f32 %v6755, %v6904
        %v6983 = vadd.f32 %v6756, %v6909
        %v6984 = vadd.f32 %v6757, %v6914
        %v6985 = vadd.f32 %v6758, %v6919
        %v6986 = vadd.f32 %v6759, %v6924
        %v6987 = vadd.f32 %v6760, %v6929
        %v6988 = vadd.f32 %v6761, %v6934
        %v6989 = vadd.f32 %v6762, %v6939
        %v6990 = vadd.f32 %v6763, %v6944
        %v6991 = vadd.f32 %v6764, %v6949
        %v6992 = vadd.f32 %v6765, %v6954
        %v6993 = vadd.f32 %v6766, %v6959
        %v6994 = vadd.f32 %v6767, %v6964
        %v6995 = vadd.f32 %v6768, %v6969
        %v6996 = vadd.f32 %v6769, %v6974
        %v6997 = vadd.f32 %v6770, %v6979
        %v6998 = vld [vmem:[#allocation14] sm:$0x1]
        %v7000 = vlaneseq
        %v7001 = vshrl.u32 %v7000, 7
        %v7002 = vsub.s32 0, %v7001
        %v7003 = vrot.slane %v6998, %v7002
        %v7005 = vadd.f32 %v6982, %v7003
        %v7006 = vadd.f32 %v6983, %v7003
        %v7007 = vadd.f32 %v6984, %v7003
        %v7008 = vadd.f32 %v6985, %v7003
        %v7009 = vadd.f32 %v6986, %v7003
        %v7010 = vadd.f32 %v6987, %v7003
        %v7011 = vadd.f32 %v6988, %v7003
        %v7012 = vadd.f32 %v6989, %v7003
        %v7013 = vadd.f32 %v6990, %v7003
        %v7014 = vadd.f32 %v6991, %v7003
        %v7015 = vadd.f32 %v6992, %v7003
        %v7016 = vadd.f32 %v6993, %v7003
        %v7017 = vadd.f32 %v6994, %v7003
        %v7018 = vadd.f32 %v6995, %v7003
        %v7019 = vadd.f32 %v6996, %v7003
        %v7020 = vadd.f32 %v6997, %v7003
        %v7021 = vld [vmem:[%s19] sm:$0xff]
        %v7022 = vld [vmem:[%s19 + $0x8] sm:$0xff]
        %v7023 = vld [vmem:[%s19 + $0x10] sm:$0xff]
        %v7024 = vld [vmem:[%s19 + $0x18] sm:$0xff]
        %v7025 = vld [vmem:[%s19 + $0x20] sm:$0xff]
        %v7026 = vld [vmem:[%s19 + $0x28] sm:$0xff]
        %v7027 = vld [vmem:[%s19 + $0x30] sm:$0xff]
        %v7028 = vld [vmem:[%s19 + $0x38] sm:$0xff]
        %v7029 = vld [vmem:[#allocation16] sm:$0x1]
        %v7031 = vlaneseq
        %v7032 = vshrl.u32 %v7031, 7
        %v7033 = vsub.s32 0, %v7032
        %v7034 = vrot.slane %v7029, %v7033
        %7036 = vmatprep.subr.mxu0 0.0
        %7037 = vmatpush1.msra.mxu0 %v7021
        %7038 = vmatprep.subr.mxu0 0.0
        %7039 = vmatpush1.msra.mxu0 %v7022
        %7040 = vmatprep.subr.mxu0 0.0
        %7041 = vmatpush1.msra.mxu0 %v7023
        %7042 = vmatprep.subr.mxu0 0.0
        %7043 = vmatpush1.msra.mxu0 %v7024
        %7044 = vmatprep.subr.mxu0 0.0
        %7045 = vmatpush1.msra.mxu0 %v7025
        %7046 = vmatprep.subr.mxu0 0.0
        %7047 = vmatpush1.msra.mxu0 %v7026
        %7048 = vmatprep.subr.mxu0 0.0
        %7049 = vmatpush1.msra.mxu0 %v7027
        %7050 = vmatprep.subr.mxu0 0.0
        %7051 = vmatpush1.msra.mxu0 %v7028
        %7052 = vmatprep.subr.mxu0 0.0
        %7053 = vmatpush1.msra.mxu0 0.0
        %7054 = vmatprep.subr.mxu0 0.0
        %7055 = vmatpush1.msra.mxu0 0.0
        %7056 = vmatprep.subr.mxu0 0.0
        %7057 = vmatpush1.msra.mxu0 0.0
        %7058 = vmatprep.subr.mxu0 0.0
        %7059 = vmatpush1.msra.mxu0 0.0
        %7060 = vmatprep.subr.mxu0 0.0
        %7061 = vmatpush1.msra.mxu0 0.0
        %7062 = vmatprep.subr.mxu0 0.0
        %7063 = vmatpush1.msra.mxu0 0.0
        %7064 = vmatprep.subr.mxu0 0.0
        %7065 = vmatpush1.msra.mxu0 0.0
        %7066 = vmatprep.subr.mxu0 0.0
        %7067 = vmatpush1.msra.mxu0 0.0
        %7068 = vmatprep.subr.mxu0 0.0
        %7069 = vmatpush1.msra.mxu0 0.0
        %7070 = vmatprep.subr.mxu0 0.0
        %7071 = vmatpush1.msra.mxu0 0.0
        %7072 = vmatprep.subr.mxu0 0.0
        %7073 = vmatpush1.msra.mxu0 0.0
        %7074 = vmatprep.subr.mxu0 0.0
        %7075 = vmatpush1.msra.mxu0 0.0
        %7076 = vmatprep.subr.mxu0 0.0
        %7077 = vmatpush1.msra.mxu0 0.0
        %7078 = vmatprep.subr.mxu0 0.0
        %7079 = vmatpush1.msra.mxu0 0.0
        %7080 = vmatprep.subr.mxu0 0.0
        %7081 = vmatpush1.msra.mxu0 0.0
        %7082 = vmatprep.subr.mxu0 0.0
        %7083 = vmatpush1.msra.mxu0 0.0
        %7084 = vmatprep.subr.mxu0 0.0
        %7085 = vmatpush1.msra.mxu0 0.0
        %7086 = vmatprep.subr.mxu0 0.0
        %7087 = vmatpush1.msra.mxu0 0.0
        %7088 = vmatprep.subr.mxu0 0.0
        %7089 = vmatpush1.msra.mxu0 0.0
        %7090 = vmatprep.subr.mxu0 0.0
        %7091 = vmatpush1.msra.mxu0 0.0
        %7092 = vmatprep.subr.mxu0 0.0
        %7093 = vmatpush1.msra.mxu0 0.0
        %7094 = vmatprep.subr.mxu0 0.0
        %7095 = vmatpush1.msra.mxu0 0.0
        %7096 = vmatprep.subr.mxu0 0.0
        %7097 = vmatpush1.msra.mxu0 0.0
        %7098 = vmatprep.subr.mxu0 0.0
        %7099 = vmatpush1.msra.mxu0 0.0
        %7100 = vmatprep.mubr.f32.mxu0 0.0
        %7101 = vmatmul.mubr.f32.gmra.mrb[0].mxu0 %v4832
        %v7102 = vpop.f32.mrb[0].mxu0
        %v7103 = vadd.f32 %v7034, %v7102
        %v7104 = vpop.f32.mrb[0].mxu0
        %7105 = vmatprep.mubr.f32.mxu0 0.0
        %7106 = vmatmul.mubr.f32.gmra.mrb[0].mxu0 %v4835
        %v7107 = vpop.f32.mrb[0].mxu0
        %v7108 = vadd.f32 %v7034, %v7107
        %v7109 = vpop.f32.mrb[0].mxu0
        %7110 = vmatprep.mubr.f32.mxu0 0.0
        %7111 = vmatmul.mubr.f32.gmra.mrb[0].mxu0 %v4838
        %v7112 = vpop.f32.mrb[0].mxu0
        %v7113 = vadd.f32 %v7034, %v7112
        %v7114 = vpop.f32.mrb[0].mxu0
        %7115 = vmatprep.mubr.f32.mxu0 0.0
        %7116 = vmatmul.mubr.f32.gmra.mrb[0].mxu0 %v4841
        %v7117 = vpop.f32.mrb[0].mxu0
        %v7118 = vadd.f32 %v7034, %v7117
        %v7119 = vpop.f32.mrb[0].mxu0
        %7120 = vmatprep.mubr.f32.mxu0 0.0
        %7121 = vmatmul.mubr.f32.gmra.mrb[0].mxu0 %v4844
        %v7122 = vpop.f32.mrb[0].mxu0
        %v7123 = vadd.f32 %v7034, %v7122
        %v7124 = vpop.f32.mrb[0].mxu0
        %7125 = vmatprep.mubr.f32.mxu0 0.0
        %7126 = vmatmul.mubr.f32.gmra.mrb[0].mxu0 %v4847
        %v7127 = vpop.f32.mrb[0].mxu0
        %v7128 = vadd.f32 %v7034, %v7127
        %v7129 = vpop.f32.mrb[0].mxu0
        %7130 = vmatprep.mubr.f32.mxu0 0.0
        %7131 = vmatmul.mubr.f32.gmra.mrb[0].mxu0 %v4850
        %v7132 = vpop.f32.mrb[0].mxu0
        %v7133 = vadd.f32 %v7034, %v7132
        %v7134 = vpop.f32.mrb[0].mxu0
        %7135 = vmatprep.mubr.f32.mxu0 0.0
        %7136 = vmatmul.mubr.f32.gmra.mrb[0].mxu0 %v4853
        %v7137 = vpop.f32.mrb[0].mxu0
        %v7138 = vadd.f32 %v7034, %v7137
        %v7139 = vpop.f32.mrb[0].mxu0
        %7140 = vmatprep.mubr.f32.mxu0 0.0
        %7141 = vmatmul.mubr.f32.gmra.mrb[0].mxu0 %v4856
        %v7142 = vpop.f32.mrb[0].mxu0
        %v7143 = vadd.f32 %v7034, %v7142
        %v7144 = vpop.f32.mrb[0].mxu0
        %7145 = vmatprep.mubr.f32.mxu0 0.0
        %7146 = vmatmul.mubr.f32.gmra.mrb[0].mxu0 %v4859
        %v7147 = vpop.f32.mrb[0].mxu0
        %v7148 = vadd.f32 %v7034, %v7147
        %v7149 = vpop.f32.mrb[0].mxu0
        %7150 = vmatprep.mubr.f32.mxu0 0.0
        %7151 = vmatmul.mubr.f32.gmra.mrb[0].mxu0 %v4862
        %v7152 = vpop.f32.mrb[0].mxu0
        %v7153 = vadd.f32 %v7034, %v7152
        %v7154 = vpop.f32.mrb[0].mxu0
        %7155 = vmatprep.mubr.f32.mxu0 0.0
        %7156 = vmatmul.mubr.f32.gmra.mrb[0].mxu0 %v4865
        %v7157 = vpop.f32.mrb[0].mxu0
        %v7158 = vadd.f32 %v7034, %v7157
        %v7159 = vpop.f32.mrb[0].mxu0
        %7160 = vmatprep.mubr.f32.mxu0 0.0
        %7161 = vmatmul.mubr.f32.gmra.mrb[0].mxu0 %v4868
        %v7162 = vpop.f32.mrb[0].mxu0
        %v7163 = vadd.f32 %v7034, %v7162
        %v7164 = vpop.f32.mrb[0].mxu0
        %7165 = vmatprep.mubr.f32.mxu0 0.0
        %7166 = vmatmul.mubr.f32.gmra.mrb[0].mxu0 %v4871
        %v7167 = vpop.f32.mrb[0].mxu0
        %v7168 = vadd.f32 %v7034, %v7167
        %v7169 = vpop.f32.mrb[0].mxu0
        %7170 = vmatprep.mubr.f32.mxu0 0.0
        %7171 = vmatmul.mubr.f32.gmra.mrb[0].mxu0 %v4874
        %v7172 = vpop.f32.mrb[0].mxu0
        %v7173 = vadd.f32 %v7034, %v7172
        %v7174 = vpop.f32.mrb[0].mxu0
        %7175 = vmatprep.mubr.f32.mxu0 0.0
        %7176 = vmatmul.mubr.f32.gmra.mrb[0].mxu0 %v4877
        %v7177 = vpop.f32.mrb[0].mxu0
        %v7178 = vadd.f32 %v7034, %v7177
        %v7179 = vpop.f32.mrb[0].mxu0
        %7180 = vdwg.mxu0
        %v7181 = vadd.f32 %v7005, %v7103
        %v7182 = vadd.f32 %v7006, %v7108
        %v7183 = vadd.f32 %v7007, %v7113
        %v7184 = vadd.f32 %v7008, %v7118
        %v7185 = vadd.f32 %v7009, %v7123
        %v7186 = vadd.f32 %v7010, %v7128
        %v7187 = vadd.f32 %v7011, %v7133
        %v7188 = vadd.f32 %v7012, %v7138
        %v7189 = vadd.f32 %v7013, %v7143
        %v7190 = vadd.f32 %v7014, %v7148
        %v7191 = vadd.f32 %v7015, %v7153
        %v7192 = vadd.f32 %v7016, %v7158
        %v7193 = vadd.f32 %v7017, %v7163
        %v7194 = vadd.f32 %v7018, %v7168
        %v7195 = vadd.f32 %v7019, %v7173
        %v7196 = vadd.f32 %v7020, %v7178
        %v7197 = vmax.f32 %v7181, 0.0
        %v7198 = vmax.f32 %v7182, 0.0
        %v7199 = vmax.f32 %v7183, 0.0
        %v7200 = vmax.f32 %v7184, 0.0
        %v7201 = vmax.f32 %v7185, 0.0
        %v7202 = vmax.f32 %v7186, 0.0
        %v7203 = vmax.f32 %v7187, 0.0
        %v7204 = vmax.f32 %v7188, 0.0
        %v7205 = vmax.f32 %v7189, 0.0
        %v7206 = vmax.f32 %v7190, 0.0
        %v7207 = vmax.f32 %v7191, 0.0
        %v7208 = vmax.f32 %v7192, 0.0
        %v7209 = vmax.f32 %v7193, 0.0
        %v7210 = vmax.f32 %v7194, 0.0
        %v7211 = vmax.f32 %v7195, 0.0
        %v7212 = vmax.f32 %v7196, 0.0
        %v7213 = vld [vmem:[%s21] sm:$0xff]
        %v7214 = vld [vmem:[%s21 + $0x8] sm:$0xff]
        %v7215 = vld [vmem:[%s21 + $0x10] sm:$0xff]
        %v7216 = vld [vmem:[%s21 + $0x18] sm:$0xff]
        %v7217 = vld [vmem:[%s21 + $0x20] sm:$0xff]
        %v7218 = vld [vmem:[%s21 + $0x28] sm:$0xff]
        %v7219 = vld [vmem:[%s21 + $0x30] sm:$0xff]
        %v7220 = vld [vmem:[%s21 + $0x38] sm:$0xff]
        %v7221 = vld [vmem:[%s21 + $0x40] sm:$0xff]
        %v7222 = vld [vmem:[%s21 + $0x48] sm:$0xff]
        %v7223 = vld [vmem:[%s21 + $0x50] sm:$0xff]
        %v7224 = vld [vmem:[%s21 + $0x58] sm:$0xff]
        %v7225 = vld [vmem:[%s21 + $0x60] sm:$0xff]
        %v7226 = vld [vmem:[%s21 + $0x68] sm:$0xff]
        %v7227 = vld [vmem:[%s21 + $0x70] sm:$0xff]
        %v7228 = vld [vmem:[%s21 + $0x78] sm:$0xff]
        %v7229 = vmul.f32 %v7197, %v7213
        %v7230 = vmul.f32 %v7198, %v7214
        %v7231 = vmul.f32 %v7199, %v7215
        %v7232 = vmul.f32 %v7200, %v7216
        %v7233 = vmul.f32 %v7201, %v7217
        %v7234 = vmul.f32 %v7202, %v7218
        %v7235 = vmul.f32 %v7203, %v7219
        %v7236 = vmul.f32 %v7204, %v7220
        %v7237 = vmul.f32 %v7205, %v7221
        %v7238 = vmul.f32 %v7206, %v7222
        %v7239 = vmul.f32 %v7207, %v7223
        %v7240 = vmul.f32 %v7208, %v7224
        %v7241 = vmul.f32 %v7209, %v7225
        %v7242 = vmul.f32 %v7210, %v7226
        %v7243 = vmul.f32 %v7211, %v7227
        %v7244 = vmul.f32 %v7212, %v7228
        %v7245 = vld [vmem:[%s22] sm:$0xff]
        %v7246 = vld [vmem:[%s22 + $0x8] sm:$0xff]
        %v7247 = vld [vmem:[%s22 + $0x10] sm:$0xff]
        %v7248 = vld [vmem:[%s22 + $0x18] sm:$0xff]
        %v7249 = vld [vmem:[%s22 + $0x20] sm:$0xff]
        %v7250 = vld [vmem:[%s22 + $0x28] sm:$0xff]
        %v7251 = vld [vmem:[%s22 + $0x30] sm:$0xff]
        %v7252 = vld [vmem:[%s22 + $0x38] sm:$0xff]
        %v7253 = vld [vmem:[%s22 + $0x40] sm:$0xff]
        %v7254 = vld [vmem:[%s22 + $0x48] sm:$0xff]
        %v7255 = vld [vmem:[%s22 + $0x50] sm:$0xff]
        %v7256 = vld [vmem:[%s22 + $0x58] sm:$0xff]
        %v7257 = vld [vmem:[%s22 + $0x60] sm:$0xff]
        %v7258 = vld [vmem:[%s22 + $0x68] sm:$0xff]
        %v7259 = vld [vmem:[%s22 + $0x70] sm:$0xff]
        %v7260 = vld [vmem:[%s22 + $0x78] sm:$0xff]
        %v7261 = vadd.f32 %v7229, %v7245
        %v7262 = vadd.f32 %v7230, %v7246
        %v7263 = vadd.f32 %v7231, %v7247
        %v7264 = vadd.f32 %v7232, %v7248
        %v7265 = vadd.f32 %v7233, %v7249
        %v7266 = vadd.f32 %v7234, %v7250
        %v7267 = vadd.f32 %v7235, %v7251
        %v7268 = vadd.f32 %v7236, %v7252
        %v7269 = vadd.f32 %v7237, %v7253
        %v7270 = vadd.f32 %v7238, %v7254
        %v7271 = vadd.f32 %v7239, %v7255
        %v7272 = vadd.f32 %v7240, %v7256
        %v7273 = vadd.f32 %v7241, %v7257
        %v7274 = vadd.f32 %v7242, %v7258
        %v7275 = vadd.f32 %v7243, %v7259
        %v7276 = vadd.f32 %v7244, %v7260
        %7277 = vxpose.xlu0.b32.start [1/16] %v7261, 128
        %7278 = vxpose.xlu0.b32.cont [2/16] %v7262, 128
        %7279 = vxpose.xlu0.b32.cont [3/16] %v7263, 128
        %7280 = vxpose.xlu0.b32.cont [4/16] %v7264, 128
        %7281 = vxpose.xlu0.b32.cont [5/16] %v7265, 128
        %7282 = vxpose.xlu0.b32.cont [6/16] %v7266, 128
        %7283 = vxpose.xlu0.b32.cont [7/16] %v7267, 128
        %7284 = vxpose.xlu0.b32.cont [8/16] %v7268, 128
        %7285 = vxpose.xlu0.b32.cont [9/16] %v7269, 128
        %7286 = vxpose.xlu0.b32.cont [10/16] %v7270, 128
        %7287 = vxpose.xlu0.b32.cont [11/16] %v7271, 128
        %7288 = vxpose.xlu0.b32.cont [12/16] %v7272, 128
        %7289 = vxpose.xlu0.b32.cont [13/16] %v7273, 128
        %7290 = vxpose.xlu0.b32.cont [14/16] %v7274, 128
        %7291 = vxpose.xlu0.b32.cont [15/16] %v7275, 128
        %7292 = vxpose.xlu0.b32.end [16/16] %v7276, 128
        %v7293 = vpop.trf.xlu0
        %v7294 = vpop.trf.xlu0
        %v7295 = vpop.trf.xlu0
        %v7296 = vpop.trf.xlu0
        %v7297 = vpop.trf.xlu0
        %v7298 = vpop.trf.xlu0
        %v7299 = vpop.trf.xlu0
        %v7300 = vpop.trf.xlu0
        %v7301 = vpop.trf.xlu0
        %v7302 = vpop.trf.xlu0
        %v7303 = vpop.trf.xlu0
        %v7304 = vpop.trf.xlu0
        %v7305 = vpop.trf.xlu0
        %v7306 = vpop.trf.xlu0
        %v7307 = vpop.trf.xlu0
        %v7308 = vpop.trf.xlu0
        %7309 = vst [vmem:[%s823] sm:$0xff] %v7293
        %p7310 = scmp.lt.s32.totalorder %s39, 1
        %s7311 = scalar_select %p7310, %s39, 1
        %s7312 = smul.addr %s7311, 8
        %s7313 = scalar_lea.vmem %s23, %s7312
        // Predicated region
        $region149: #{decoder_forward.1} parent=111 // pred_check
          %p7314 = pneg %p545
        $region150: #{decoder_forward.1} parent=111 // pred_check_branch
          %7316 = sbr.rel (%p7314) target = $region152
        $region151: #{decoder_forward.1} parent=111 // pred_region
          _
        $region152: #{decoder_forward.1} parent=111 // pred_fallthru
          _
      $region112: #{decoder_forward.1} parent=5 // pred_fallthru
        _
      %p7317 = scmp.le.s32.totalorder 2, %s34
      // Predicated region
      $region153: #{decoder_forward.1} parent=5 // pred_check
        %p7318 = pneg %p7317
      $region154: #{decoder_forward.1} parent=5 // pred_check_branch
        %7320 = sbr.rel (%p7318) target = $region156
      $region155: #{decoder_forward.1} parent=5 // pred_region
        %s7321 = ssub.s32 %s34, 2
        // Predicated region
        $region157: #{decoder_forward.1} parent=155 // pred_check
          %p7322 = pneg %p551
        $region158: #{decoder_forward.1} parent=155 // pred_check_branch
          %7324 = sbr.rel (%p7322) target = $region160
        $region159: #{decoder_forward.1} parent=155 // pred_region
          %p7325 = scmp.lt.s32.totalorder %s40, 1
          %s7326 = scalar_select %p7325, %s40, 1
          %s7327 = smul.addr %s7326, 8
          %s7328 = scalar_lea.vmem %s23, %s7327
        $region160: #{decoder_forward.1} parent=155 // pred_fallthru
          _
      $region156: #{decoder_forward.1} parent=5 // pred_fallthru
        _
    $region6: #{decoder_forward.1} parent=1 // loop_footer
      %s38 = sadd.s32 1, %s34
    $region7: #{decoder_forward.1} parent=1 // loop_footer_branch
      %33 = sbr.rel target = $region3
    $region8: #{decoder_forward.1} parent=1 // loop_exit
      _
    %7329 = vsyncpa [#allocation4], 1
    %s7330 = scalar_lea.sflag [#allocation4], 1
    %7331 = vsyncpa %s7330, 1
    %7332 = vsyncpa [#allocation6], 1
    %7333 = vsyncpa [#allocation9], 1
    %7334 = vsyncpa [#allocation12], 1
    %7335 = vsyncpa [#allocation15], 1

</llo_original>
